<compile_context>
chip_gen: v6e
topology: v6e:2x2x1
jax: 0.10.0
libtpu: 0.0.40
codegen_flags: <defaults>
</compile_context>

<pallas_src>
import functools

import jax
import jax.numpy as jnp
from jax.experimental import pallas as pl
from jax.experimental.pallas import tpu as pltpu

IN_DIM = 2
HIDDEN = 32
OUT_DIM = 1
N_HIDDEN_LAYERS = 8        # fc1..fc8 (fcInput / fcOutput handled separately)

N_SUBTILES = 4             # independent sub-chains interleaved to hide MXU latency
MIN_TILE_B = 512           # multiple of 512 so SUB_B = TILE_B/4 is a multiple of 128
MAX_TILE_B = 2048

_NT_DIMS = (((1,), (1,)), ((), ()))   # contract the last dim of both operands


def mlp_kernel(x_ref, win_ref, bin_ref, wh_ref, bh_ref, wout_ref, bout_ref,
               out_ref, *, sub_b, native_x):
    """One batch tile.  Activations are feature-major (features on sublanes, batch on
    lanes) so every hidden matmul and the final (1, sub_b) store is lane-dense."""
    bf16 = jnp.bfloat16
    w_in = win_ref[...]                                          # (HIDDEN, IN_DIM)  bf16
    w_out = wout_ref[...]                                        # (OUT_DIM, HIDDEN) bf16
    # Hoisted bias broadcasts (JAX does not CSE broadcast_in_dim).
    b_in = jnp.broadcast_to(bin_ref[...], (HIDDEN, sub_b))       # f32
    b_out = jnp.broadcast_to(bout_ref[...], (OUT_DIM, sub_b))    # f32

    # fcInput + ReLU: one independent chain per lane sub-tile.
    hs = []
    for s in range(N_SUBTILES):
        if native_x:
            # x tile arrives in native (TILE_B, IN_DIM) layout; contract IN_DIM of
            # both operands (NT matmul) -> (HIDDEN, sub_b), no wrapper transpose.
            xs = x_ref[s * sub_b:(s + 1) * sub_b, :].astype(bf16)
            h = jax.lax.dot_general(w_in, xs, dimension_numbers=_NT_DIMS,
                                    preferred_element_type=jnp.float32)
        else:
            xs = x_ref[:, s * sub_b:(s + 1) * sub_b].astype(bf16)
            h = jnp.dot(w_in, xs, preferred_element_type=jnp.float32)
        hs.append(jnp.maximum(h + b_in, 0.0))                    # (HIDDEN, sub_b) f32

    # fc1..fc8 + ReLU: bf16 MXU inputs, f32 accumulation / bias / ReLU.  Static unroll
    # keeps the 4 sub-chains' 32x32 matmuls independent and in flight.
    for i in range(N_HIDDEN_LAYERS):
        w = wh_ref[i]                                            # (HIDDEN, HIDDEN) bf16
        b = jnp.broadcast_to(bh_ref[i], (HIDDEN, sub_b))         # hoisted per layer
        hs = [jnp.maximum(
                  jnp.dot(w, h.astype(bf16),
                          preferred_element_type=jnp.float32) + b, 0.0)
              for h in hs]

    # fcOutput (no activation); lane-dense (OUT_DIM, sub_b) stores.
    for s, h in enumerate(hs):
        y = jnp.dot(w_out, h.astype(bf16),
                    preferred_element_type=jnp.float32) + b_out
        out_ref[:, s * sub_b:(s + 1) * sub_b] = y.astype(out_ref.dtype)


def _choose_tile_b(batch):
    # Multiple of 512 so each of the 4 sub-chains keeps full (128-lane) vregs; aim for
    # >= 2 grid steps so the "parallel" grid axis can shard across both v7x TCs.
    half = -(-batch // 2)
    t = -(-half // MIN_TILE_B) * MIN_TILE_B
    return max(MIN_TILE_B, min(MAX_TILE_B, t))


def _run_pallas(x_in, kparams, *, native_x, tile_b, n_tiles, b_pad):
    (w_in, b_in, w_hid, b_hid, w_out, b_out) = kparams
    sub_b = tile_b // N_SUBTILES
    kernel = functools.partial(mlp_kernel, sub_b=sub_b, native_x=native_x)

    if native_x:
        x_spec = pl.BlockSpec((tile_b, IN_DIM), lambda i: (i, 0))
    else:
        x_spec = pl.BlockSpec((IN_DIM, tile_b), lambda i: (0, i))

    flops = 2 * b_pad * (IN_DIM * HIDDEN
                         + N_HIDDEN_LAYERS * HIDDEN * HIDDEN
                         + HIDDEN * OUT_DIM)
    weight_bytes = (2 * (HIDDEN * IN_DIM + N_HIDDEN_LAYERS * HIDDEN * HIDDEN
                         + OUT_DIM * HIDDEN)
                    + 4 * (HIDDEN + N_HIDDEN_LAYERS * HIDDEN + OUT_DIM))
    bytes_accessed = 4 * b_pad * (IN_DIM + OUT_DIM) + weight_bytes

    return pl.pallas_call(
        kernel,
        out_shape=jax.ShapeDtypeStruct((OUT_DIM, b_pad), jnp.float32),
        grid=(n_tiles,),
        in_specs=[
            # Activations: tiled along the batch axis, pipelined HBM<->VMEM.
            x_spec,
            # Weights/biases: full arrays, constant index_map -> VMEM-resident.
            pl.BlockSpec((HIDDEN, IN_DIM), lambda i: (0, 0)),
            pl.BlockSpec((HIDDEN, 1), lambda i: (0, 0)),
            pl.BlockSpec((N_HIDDEN_LAYERS, HIDDEN, HIDDEN), lambda i: (0, 0, 0)),
            pl.BlockSpec((N_HIDDEN_LAYERS, HIDDEN, 1), lambda i: (0, 0, 0)),
            pl.BlockSpec((OUT_DIM, HIDDEN), lambda i: (0, 0)),
            pl.BlockSpec((OUT_DIM, 1), lambda i: (0, 0)),
        ],
        out_specs=pl.BlockSpec((OUT_DIM, tile_b), lambda i: (0, i)),
        compiler_params=pltpu.CompilerParams(
            dimension_semantics=("parallel",),          # independent batch tiles
            vmem_limit_bytes=32 * 1024 * 1024,
        ),
        cost_estimate=pl.CostEstimate(
            flops=flops, transcendentals=0, bytes_accessed=bytes_accessed),
    )(x_in, w_in, b_in, w_hid, b_hid, w_out, b_out)


_NATIVE_X_OK = None   # None = untested, True/False = cached result of NT lowering


def mlp_forward(x, params):
    """x: (B, 2) -> (B, 1). Matches PyTorch Net.forward (bf16 MXU inputs, f32 accum)."""
    global _NATIVE_X_OK
    (w_in, b_in, w_hid, b_hid, w_out, b_out) = params
    B = x.shape[0]
    tile_b = _choose_tile_b(B)
    n_tiles = pl.cdiv(B, tile_b)
    b_pad = n_tiles * tile_b

    x = x.astype(jnp.float32)
    # Weights ride the MXU in bf16 (tiny one-time cast); biases stay f32 for the VPU.
    kparams = (w_in.astype(jnp.bfloat16), b_in.astype(jnp.float32),
               w_hid.astype(jnp.bfloat16), b_hid.astype(jnp.float32),
               w_out.astype(jnp.bfloat16), b_out.astype(jnp.float32))

    if _NATIVE_X_OK is not False:
        try:
            x_in = x if b_pad == B else jnp.pad(x, ((0, b_pad - B), (0, 0)))
            out = _run_pallas(x_in, kparams, native_x=True,
                              tile_b=tile_b, n_tiles=n_tiles, b_pad=b_pad)
            _NATIVE_X_OK = True
            return out[:, :B].T
        except Exception:
            if _NATIVE_X_OK:          # genuine runtime failure on a known-good path
                raise
            _NATIVE_X_OK = False      # NT first-layer lowering rejected -> fall back

    # Fallback: feature-major input prepared in the wrapper (one extra HBM pass).
    # TODO(synk): drop this path once the NT dot_general first layer is validated on
    # all deployed toolchains.
    x_t = jnp.pad(x.T, ((0, 0), (0, b_pad - B)))
    out = _run_pallas(x_t, kparams, native_x=False,
                      tile_b=tile_b, n_tiles=n_tiles, b_pad=b_pad)
    return out[:, :B].T


def init_params(key):
    """torch.nn.Linear-style U(-1/sqrt(fan_in), 1/sqrt(fan_in)) init; torch layout
    (out_features, in_features), biases stored as columns."""
    ks = jax.random.split(key, 6)

    def uniform(k, shape, fan_in):
        lim = 1.0 / jnp.sqrt(jnp.float32(fan_in))
        return jax.random.uniform(k, shape, jnp.float32, -lim, lim)

    w_in = uniform(ks[0], (HIDDEN, IN_DIM), IN_DIM)                     # fcInput weight
    b_in = uniform(ks[1], (HIDDEN, 1), IN_DIM)                          # fcInput bias
    w_hid = uniform(ks[2], (N_HIDDEN_LAYERS, HIDDEN, HIDDEN), HIDDEN)   # fc1..fc8 weights
    b_hid = uniform(ks[3], (N_HIDDEN_LAYERS, HIDDEN, 1), HIDDEN)        # fc1..fc8 biases
    w_out = uniform(ks[4], (OUT_DIM, HIDDEN), HIDDEN)                   # fcOutput weight
    b_out = uniform(ks[5], (OUT_DIM, 1), HIDDEN)                        # fcOutput bias
    return (w_in, b_in, w_hid, b_hid, w_out, b_out)


def reference_forward(x, params):
    """Plain-JAX reference in standard (B, F) layout, mirroring the kernel numerics
    (bf16 MXU inputs, f32 accumulation, f32 bias/ReLU)."""
    (w_in, b_in, w_hid, b_hid, w_out, b_out) = params
    bf16, f32 = jnp.bfloat16, jnp.float32
    h = x.astype(f32)
    h = jnp.dot(h.astype(bf16), w_in.astype(bf16).T, preferred_element_type=f32)
    h = jnp.maximum(h + b_in[:, 0], 0.0)
    for i in range(N_HIDDEN_LAYERS):
        h = jnp.dot(h.astype(bf16), w_hid[i].astype(bf16).T, preferred_element_type=f32)
        h = jnp.maximum(h + b_hid[i, :, 0], 0.0)
    return jnp.dot(h.astype(bf16), w_out.astype(bf16).T,
                   preferred_element_type=f32) + b_out[:, 0]


if __name__ == "__main__":
    key = jax.random.PRNGKey(0)
    pkey, xkey = jax.random.split(key)
    params = init_params(pkey)

    B = 8  # small batch for the correctness check
    x = jax.random.normal(xkey, (B, IN_DIM), jnp.float32)

    out = jax.block_until_ready(mlp_forward(x, params))
    ref = reference_forward(x, params)

    assert out.shape == (B, OUT_DIM)
    # bf16 MXU inputs on both sides; only f32-accumulation-order differences remain.
    assert jnp.allclose(out, ref, atol=2e-3, rtol=2e-3), "mismatch vs reference"

    print("KERNEL_OK")
</pallas_src>

<mosaic_0001>
module attributes {stable_mosaic.version = 11 : i64} {
  func.func @mlp_kernel(%arg0: i32, %arg1: memref<512x2xf32, #tpu.memory_space<vmem>>, %arg2: memref<32x2xbf16, #tpu.memory_space<vmem>>, %arg3: memref<32x1xf32, #tpu.memory_space<vmem>>, %arg4: memref<8x32x32xbf16, #tpu.memory_space<vmem>>, %arg5: memref<8x32x1xf32, #tpu.memory_space<vmem>>, %arg6: memref<1x32xbf16, #tpu.memory_space<vmem>>, %arg7: memref<1x1xf32, #tpu.memory_space<vmem>>, %arg8: memref<1x512xf32, #tpu.memory_space<vmem>>) attributes {dimension_semantics = [#tpu.dimension_semantics<parallel>], iteration_bounds = array<i64: 1>, scalar_prefetch = 0 : i64, scratch_operands = 0 : i64, tpu.core_type = #tpu.core_type<tc>, window_params = [{transform_indices = @transform_0, window_bounds = array<i64: 512, 2>}, {pipeline_mode = #tpu.pipeline_mode<synchronous>, transform_indices = @transform_1, window_bounds = array<i64: 32, 2>}, {pipeline_mode = #tpu.pipeline_mode<synchronous>, transform_indices = @transform_2, window_bounds = array<i64: 32, 1>}, {pipeline_mode = #tpu.pipeline_mode<synchronous>, transform_indices = @transform_3, window_bounds = array<i64: 8, 32, 32>}, {pipeline_mode = #tpu.pipeline_mode<synchronous>, transform_indices = @transform_4, window_bounds = array<i64: 8, 32, 1>}, {pipeline_mode = #tpu.pipeline_mode<synchronous>, transform_indices = @transform_5, window_bounds = array<i64: 1, 32>}, {pipeline_mode = #tpu.pipeline_mode<synchronous>, transform_indices = @transform_6, window_bounds = array<i64: 1, 1>}, {transform_indices = @transform_7, window_bounds = array<i64: 1, 512>}]} {
    %c0 = arith.constant 0 : index
    %c0_0 = arith.constant 0 : index
    %0 = vector.load %arg2[%c0, %c0_0] : memref<32x2xbf16, #tpu.memory_space<vmem>>, vector<32x2xbf16>
    %c0_1 = arith.constant 0 : index
    %c0_2 = arith.constant 0 : index
    %1 = vector.load %arg6[%c0_1, %c0_2] : memref<1x32xbf16, #tpu.memory_space<vmem>>, vector<1x32xbf16>
    %c0_3 = arith.constant 0 : index
    %c0_4 = arith.constant 0 : index
    %2 = vector.load %arg3[%c0_3, %c0_4] : memref<32x1xf32, #tpu.memory_space<vmem>>, vector<32x1xf32>
    %3 = vector.shape_cast %2 : vector<32x1xf32> to vector<32x1xf32>
    %4 = vector.broadcast %3 : vector<32x1xf32> to vector<32x128xf32>
    %c0_5 = arith.constant 0 : index
    %c0_6 = arith.constant 0 : index
    %5 = vector.load %arg7[%c0_5, %c0_6] : memref<1x1xf32, #tpu.memory_space<vmem>>, vector<1x1xf32>
    %6 = vector.shape_cast %5 : vector<1x1xf32> to vector<1x1xf32>
    %7 = vector.broadcast %6 : vector<1x1xf32> to vector<1x128xf32>
    %c0_7 = arith.constant 0 : index
    %c0_8 = arith.constant 0 : index
    %8 = vector.load %arg1[%c0_7, %c0_8] : memref<512x2xf32, #tpu.memory_space<vmem>>, vector<128x2xf32>
    %9 = arith.truncf %8 : vector<128x2xf32> to vector<128x2xbf16>
    %cst = arith.constant dense<0.000000e+00> : vector<32x128xf32>
    %10 = tpu.matmul %0, %9, %cst {dimension_numbers = #tpu.dot_dimension_numbers<[1], [1], [0], [0], [0, 0, 1, 0], [], []>} : vector<32x2xbf16>, vector<128x2xbf16>, vector<32x128xf32> -> vector<32x128xf32>
    %11 = arith.addf %10, %4 : vector<32x128xf32>
    %cst_9 = arith.constant 0.000000e+00 : f32
    %12 = vector.broadcast %cst_9 : f32 to vector<32x128xf32>
    %13 = arith.maximumf %11, %12 : vector<32x128xf32>
    %c128 = arith.constant 128 : index
    %c0_10 = arith.constant 0 : index
    %14 = vector.load %arg1[%c128, %c0_10] : memref<512x2xf32, #tpu.memory_space<vmem>>, vector<128x2xf32>
    %15 = arith.truncf %14 : vector<128x2xf32> to vector<128x2xbf16>
    %cst_11 = arith.constant dense<0.000000e+00> : vector<32x128xf32>
    %16 = tpu.matmul %0, %15, %cst_11 {dimension_numbers = #tpu.dot_dimension_numbers<[1], [1], [0], [0], [0, 0, 1, 0], [], []>} : vector<32x2xbf16>, vector<128x2xbf16>, vector<32x128xf32> -> vector<32x128xf32>
    %17 = arith.addf %16, %4 : vector<32x128xf32>
    %cst_12 = arith.constant 0.000000e+00 : f32
    %18 = vector.broadcast %cst_12 : f32 to vector<32x128xf32>
    %19 = arith.maximumf %17, %18 : vector<32x128xf32>
    %c256 = arith.constant 256 : index
    %c0_13 = arith.constant 0 : index
    %20 = vector.load %arg1[%c256, %c0_13] : memref<512x2xf32, #tpu.memory_space<vmem>>, vector<128x2xf32>
    %21 = arith.truncf %20 : vector<128x2xf32> to vector<128x2xbf16>
    %cst_14 = arith.constant dense<0.000000e+00> : vector<32x128xf32>
    %22 = tpu.matmul %0, %21, %cst_14 {dimension_numbers = #tpu.dot_dimension_numbers<[1], [1], [0], [0], [0, 0, 1, 0], [], []>} : vector<32x2xbf16>, vector<128x2xbf16>, vector<32x128xf32> -> vector<32x128xf32>
    %23 = arith.addf %22, %4 : vector<32x128xf32>
    %cst_15 = arith.constant 0.000000e+00 : f32
    %24 = vector.broadcast %cst_15 : f32 to vector<32x128xf32>
    %25 = arith.maximumf %23, %24 : vector<32x128xf32>
    %c384 = arith.constant 384 : index
    %c0_16 = arith.constant 0 : index
    %26 = vector.load %arg1[%c384, %c0_16] : memref<512x2xf32, #tpu.memory_space<vmem>>, vector<128x2xf32>
    %27 = arith.truncf %26 : vector<128x2xf32> to vector<128x2xbf16>
    %cst_17 = arith.constant dense<0.000000e+00> : vector<32x128xf32>
    %28 = tpu.matmul %0, %27, %cst_17 {dimension_numbers = #tpu.dot_dimension_numbers<[1], [1], [0], [0], [0, 0, 1, 0], [], []>} : vector<32x2xbf16>, vector<128x2xbf16>, vector<32x128xf32> -> vector<32x128xf32>
    %29 = arith.addf %28, %4 : vector<32x128xf32>
    %cst_18 = arith.constant 0.000000e+00 : f32
    %30 = vector.broadcast %cst_18 : f32 to vector<32x128xf32>
    %31 = arith.maximumf %29, %30 : vector<32x128xf32>
    %c0_19 = arith.constant 0 : index
    %c0_20 = arith.constant 0 : index
    %c0_21 = arith.constant 0 : index
    %32 = vector.load %arg4[%c0_19, %c0_20, %c0_21] : memref<8x32x32xbf16, #tpu.memory_space<vmem>>, vector<1x32x32xbf16>
    %33 = vector.shape_cast %32 : vector<1x32x32xbf16> to vector<32x32xbf16>
    %c0_22 = arith.constant 0 : index
    %c0_23 = arith.constant 0 : index
    %c0_24 = arith.constant 0 : index
    %34 = vector.load %arg5[%c0_22, %c0_23, %c0_24] : memref<8x32x1xf32, #tpu.memory_space<vmem>>, vector<1x32x1xf32>
    %35 = vector.shape_cast %34 : vector<1x32x1xf32> to vector<32x1xf32>
    %36 = vector.shape_cast %35 : vector<32x1xf32> to vector<32x1xf32>
    %37 = vector.broadcast %36 : vector<32x1xf32> to vector<32x128xf32>
    %38 = arith.truncf %13 : vector<32x128xf32> to vector<32x128xbf16>
    %cst_25 = arith.constant dense<0.000000e+00> : vector<32x128xf32>
    %39 = tpu.matmul %33, %38, %cst_25 {dimension_numbers = #tpu.dot_dimension_numbers<[1], [0], [0], [1], [0, 0, 1, 1], [], []>} : vector<32x32xbf16>, vector<32x128xbf16>, vector<32x128xf32> -> vector<32x128xf32>
    %40 = arith.addf %39, %37 : vector<32x128xf32>
    %cst_26 = arith.constant 0.000000e+00 : f32
    %41 = vector.broadcast %cst_26 : f32 to vector<32x128xf32>
    %42 = arith.maximumf %40, %41 : vector<32x128xf32>
    %43 = arith.truncf %19 : vector<32x128xf32> to vector<32x128xbf16>
    %cst_27 = arith.constant dense<0.000000e+00> : vector<32x128xf32>
    %44 = tpu.matmul %33, %43, %cst_27 {dimension_numbers = #tpu.dot_dimension_numbers<[1], [0], [0], [1], [0, 0, 1, 1], [], []>} : vector<32x32xbf16>, vector<32x128xbf16>, vector<32x128xf32> -> vector<32x128xf32>
    %45 = arith.addf %44, %37 : vector<32x128xf32>
    %cst_28 = arith.constant 0.000000e+00 : f32
    %46 = vector.broadcast %cst_28 : f32 to vector<32x128xf32>
    %47 = arith.maximumf %45, %46 : vector<32x128xf32>
    %48 = arith.truncf %25 : vector<32x128xf32> to vector<32x128xbf16>
    %cst_29 = arith.constant dense<0.000000e+00> : vector<32x128xf32>
    %49 = tpu.matmul %33, %48, %cst_29 {dimension_numbers = #tpu.dot_dimension_numbers<[1], [0], [0], [1], [0, 0, 1, 1], [], []>} : vector<32x32xbf16>, vector<32x128xbf16>, vector<32x128xf32> -> vector<32x128xf32>
    %50 = arith.addf %49, %37 : vector<32x128xf32>
    %cst_30 = arith.constant 0.000000e+00 : f32
    %51 = vector.broadcast %cst_30 : f32 to vector<32x128xf32>
    %52 = arith.maximumf %50, %51 : vector<32x128xf32>
    %53 = arith.truncf %31 : vector<32x128xf32> to vector<32x128xbf16>
    %cst_31 = arith.constant dense<0.000000e+00> : vector<32x128xf32>
    %54 = tpu.matmul %33, %53, %cst_31 {dimension_numbers = #tpu.dot_dimension_numbers<[1], [0], [0], [1], [0, 0, 1, 1], [], []>} : vector<32x32xbf16>, vector<32x128xbf16>, vector<32x128xf32> -> vector<32x128xf32>
    %55 = arith.addf %54, %37 : vector<32x128xf32>
    %cst_32 = arith.constant 0.000000e+00 : f32
    %56 = vector.broadcast %cst_32 : f32 to vector<32x128xf32>
    %57 = arith.maximumf %55, %56 : vector<32x128xf32>
    %c1 = arith.constant 1 : index
    %c0_33 = arith.constant 0 : index
    %c0_34 = arith.constant 0 : index
    %58 = vector.load %arg4[%c1, %c0_33, %c0_34] : memref<8x32x32xbf16, #tpu.memory_space<vmem>>, vector<1x32x32xbf16>
    %59 = vector.shape_cast %58 : vector<1x32x32xbf16> to vector<32x32xbf16>
    %c1_35 = arith.constant 1 : index
    %c0_36 = arith.constant 0 : index
    %c0_37 = arith.constant 0 : index
    %60 = vector.load %arg5[%c1_35, %c0_36, %c0_37] : memref<8x32x1xf32, #tpu.memory_space<vmem>>, vector<1x32x1xf32>
    %61 = vector.shape_cast %60 : vector<1x32x1xf32> to vector<32x1xf32>
    %62 = vector.shape_cast %61 : vector<32x1xf32> to vector<32x1xf32>
    %63 = vector.broadcast %62 : vector<32x1xf32> to vector<32x128xf32>
    %64 = arith.truncf %42 : vector<32x128xf32> to vector<32x128xbf16>
    %cst_38 = arith.constant dense<0.000000e+00> : vector<32x128xf32>
    %65 = tpu.matmul %59, %64, %cst_38 {dimension_numbers = #tpu.dot_dimension_numbers<[1], [0], [0], [1], [0, 0, 1, 1], [], []>} : vector<32x32xbf16>, vector<32x128xbf16>, vector<32x128xf32> -> vector<32x128xf32>
    %66 = arith.addf %65, %63 : vector<32x128xf32>
    %cst_39 = arith.constant 0.000000e+00 : f32
    %67 = vector.broadcast %cst_39 : f32 to vector<32x128xf32>
    %68 = arith.maximumf %66, %67 : vector<32x128xf32>
    %69 = arith.truncf %47 : vector<32x128xf32> to vector<32x128xbf16>
    %cst_40 = arith.constant dense<0.000000e+00> : vector<32x128xf32>
    %70 = tpu.matmul %59, %69, %cst_40 {dimension_numbers = #tpu.dot_dimension_numbers<[1], [0], [0], [1], [0, 0, 1, 1], [], []>} : vector<32x32xbf16>, vector<32x128xbf16>, vector<32x128xf32> -> vector<32x128xf32>
    %71 = arith.addf %70, %63 : vector<32x128xf32>
    %cst_41 = arith.constant 0.000000e+00 : f32
    %72 = vector.broadcast %cst_41 : f32 to vector<32x128xf32>
    %73 = arith.maximumf %71, %72 : vector<32x128xf32>
    %74 = arith.truncf %52 : vector<32x128xf32> to vector<32x128xbf16>
    %cst_42 = arith.constant dense<0.000000e+00> : vector<32x128xf32>
    %75 = tpu.matmul %59, %74, %cst_42 {dimension_numbers = #tpu.dot_dimension_numbers<[1], [0], [0], [1], [0, 0, 1, 1], [], []>} : vector<32x32xbf16>, vector<32x128xbf16>, vector<32x128xf32> -> vector<32x128xf32>
    %76 = arith.addf %75, %63 : vector<32x128xf32>
    %cst_43 = arith.constant 0.000000e+00 : f32
    %77 = vector.broadcast %cst_43 : f32 to vector<32x128xf32>
    %78 = arith.maximumf %76, %77 : vector<32x128xf32>
    %79 = arith.truncf %57 : vector<32x128xf32> to vector<32x128xbf16>
    %cst_44 = arith.constant dense<0.000000e+00> : vector<32x128xf32>
    %80 = tpu.matmul %59, %79, %cst_44 {dimension_numbers = #tpu.dot_dimension_numbers<[1], [0], [0], [1], [0, 0, 1, 1], [], []>} : vector<32x32xbf16>, vector<32x128xbf16>, vector<32x128xf32> -> vector<32x128xf32>
    %81 = arith.addf %80, %63 : vector<32x128xf32>
    %cst_45 = arith.constant 0.000000e+00 : f32
    %82 = vector.broadcast %cst_45 : f32 to vector<32x128xf32>
    %83 = arith.maximumf %81, %82 : vector<32x128xf32>
    %c2 = arith.constant 2 : index
    %c0_46 = arith.constant 0 : index
    %c0_47 = arith.constant 0 : index
    %84 = vector.load %arg4[%c2, %c0_46, %c0_47] : memref<8x32x32xbf16, #tpu.memory_space<vmem>>, vector<1x32x32xbf16>
    %85 = vector.shape_cast %84 : vector<1x32x32xbf16> to vector<32x32xbf16>
    %c2_48 = arith.constant 2 : index
    %c0_49 = arith.constant 0 : index
    %c0_50 = arith.constant 0 : index
    %86 = vector.load %arg5[%c2_48, %c0_49, %c0_50] : memref<8x32x1xf32, #tpu.memory_space<vmem>>, vector<1x32x1xf32>
    %87 = vector.shape_cast %86 : vector<1x32x1xf32> to vector<32x1xf32>
    %88 = vector.shape_cast %87 : vector<32x1xf32> to vector<32x1xf32>
    %89 = vector.broadcast %88 : vector<32x1xf32> to vector<32x128xf32>
    %90 = arith.truncf %68 : vector<32x128xf32> to vector<32x128xbf16>
    %cst_51 = arith.constant dense<0.000000e+00> : vector<32x128xf32>
    %91 = tpu.matmul %85, %90, %cst_51 {dimension_numbers = #tpu.dot_dimension_numbers<[1], [0], [0], [1], [0, 0, 1, 1], [], []>} : vector<32x32xbf16>, vector<32x128xbf16>, vector<32x128xf32> -> vector<32x128xf32>
    %92 = arith.addf %91, %89 : vector<32x128xf32>
    %cst_52 = arith.constant 0.000000e+00 : f32
    %93 = vector.broadcast %cst_52 : f32 to vector<32x128xf32>
    %94 = arith.maximumf %92, %93 : vector<32x128xf32>
    %95 = arith.truncf %73 : vector<32x128xf32> to vector<32x128xbf16>
    %cst_53 = arith.constant dense<0.000000e+00> : vector<32x128xf32>
    %96 = tpu.matmul %85, %95, %cst_53 {dimension_numbers = #tpu.dot_dimension_numbers<[1], [0], [0], [1], [0, 0, 1, 1], [], []>} : vector<32x32xbf16>, vector<32x128xbf16>, vector<32x128xf32> -> vector<32x128xf32>
    %97 = arith.addf %96, %89 : vector<32x128xf32>
    %cst_54 = arith.constant 0.000000e+00 : f32
    %98 = vector.broadcast %cst_54 : f32 to vector<32x128xf32>
    %99 = arith.maximumf %97, %98 : vector<32x128xf32>
    %100 = arith.truncf %78 : vector<32x128xf32> to vector<32x128xbf16>
    %cst_55 = arith.constant dense<0.000000e+00> : vector<32x128xf32>
    %101 = tpu.matmul %85, %100, %cst_55 {dimension_numbers = #tpu.dot_dimension_numbers<[1], [0], [0], [1], [0, 0, 1, 1], [], []>} : vector<32x32xbf16>, vector<32x128xbf16>, vector<32x128xf32> -> vector<32x128xf32>
    %102 = arith.addf %101, %89 : vector<32x128xf32>
    %cst_56 = arith.constant 0.000000e+00 : f32
    %103 = vector.broadcast %cst_56 : f32 to vector<32x128xf32>
    %104 = arith.maximumf %102, %103 : vector<32x128xf32>
    %105 = arith.truncf %83 : vector<32x128xf32> to vector<32x128xbf16>
    %cst_57 = arith.constant dense<0.000000e+00> : vector<32x128xf32>
    %106 = tpu.matmul %85, %105, %cst_57 {dimension_numbers = #tpu.dot_dimension_numbers<[1], [0], [0], [1], [0, 0, 1, 1], [], []>} : vector<32x32xbf16>, vector<32x128xbf16>, vector<32x128xf32> -> vector<32x128xf32>
    %107 = arith.addf %106, %89 : vector<32x128xf32>
    %cst_58 = arith.constant 0.000000e+00 : f32
    %108 = vector.broadcast %cst_58 : f32 to vector<32x128xf32>
    %109 = arith.maximumf %107, %108 : vector<32x128xf32>
    %c3 = arith.constant 3 : index
    %c0_59 = arith.constant 0 : index
    %c0_60 = arith.constant 0 : index
    %110 = vector.load %arg4[%c3, %c0_59, %c0_60] : memref<8x32x32xbf16, #tpu.memory_space<vmem>>, vector<1x32x32xbf16>
    %111 = vector.shape_cast %110 : vector<1x32x32xbf16> to vector<32x32xbf16>
    %c3_61 = arith.constant 3 : index
    %c0_62 = arith.constant 0 : index
    %c0_63 = arith.constant 0 : index
    %112 = vector.load %arg5[%c3_61, %c0_62, %c0_63] : memref<8x32x1xf32, #tpu.memory_space<vmem>>, vector<1x32x1xf32>
    %113 = vector.shape_cast %112 : vector<1x32x1xf32> to vector<32x1xf32>
    %114 = vector.shape_cast %113 : vector<32x1xf32> to vector<32x1xf32>
    %115 = vector.broadcast %114 : vector<32x1xf32> to vector<32x128xf32>
    %116 = arith.truncf %94 : vector<32x128xf32> to vector<32x128xbf16>
    %cst_64 = arith.constant dense<0.000000e+00> : vector<32x128xf32>
    %117 = tpu.matmul %111, %116, %cst_64 {dimension_numbers = #tpu.dot_dimension_numbers<[1], [0], [0], [1], [0, 0, 1, 1], [], []>} : vector<32x32xbf16>, vector<32x128xbf16>, vector<32x128xf32> -> vector<32x128xf32>
    %118 = arith.addf %117, %115 : vector<32x128xf32>
    %cst_65 = arith.constant 0.000000e+00 : f32
    %119 = vector.broadcast %cst_65 : f32 to vector<32x128xf32>
    %120 = arith.maximumf %118, %119 : vector<32x128xf32>
    %121 = arith.truncf %99 : vector<32x128xf32> to vector<32x128xbf16>
    %cst_66 = arith.constant dense<0.000000e+00> : vector<32x128xf32>
    %122 = tpu.matmul %111, %121, %cst_66 {dimension_numbers = #tpu.dot_dimension_numbers<[1], [0], [0], [1], [0, 0, 1, 1], [], []>} : vector<32x32xbf16>, vector<32x128xbf16>, vector<32x128xf32> -> vector<32x128xf32>
    %123 = arith.addf %122, %115 : vector<32x128xf32>
    %cst_67 = arith.constant 0.000000e+00 : f32
    %124 = vector.broadcast %cst_67 : f32 to vector<32x128xf32>
    %125 = arith.maximumf %123, %124 : vector<32x128xf32>
    %126 = arith.truncf %104 : vector<32x128xf32> to vector<32x128xbf16>
    %cst_68 = arith.constant dense<0.000000e+00> : vector<32x128xf32>
    %127 = tpu.matmul %111, %126, %cst_68 {dimension_numbers = #tpu.dot_dimension_numbers<[1], [0], [0], [1], [0, 0, 1, 1], [], []>} : vector<32x32xbf16>, vector<32x128xbf16>, vector<32x128xf32> -> vector<32x128xf32>
    %128 = arith.addf %127, %115 : vector<32x128xf32>
    %cst_69 = arith.constant 0.000000e+00 : f32
    %129 = vector.broadcast %cst_69 : f32 to vector<32x128xf32>
    %130 = arith.maximumf %128, %129 : vector<32x128xf32>
    %131 = arith.truncf %109 : vector<32x128xf32> to vector<32x128xbf16>
    %cst_70 = arith.constant dense<0.000000e+00> : vector<32x128xf32>
    %132 = tpu.matmul %111, %131, %cst_70 {dimension_numbers = #tpu.dot_dimension_numbers<[1], [0], [0], [1], [0, 0, 1, 1], [], []>} : vector<32x32xbf16>, vector<32x128xbf16>, vector<32x128xf32> -> vector<32x128xf32>
    %133 = arith.addf %132, %115 : vector<32x128xf32>
    %cst_71 = arith.constant 0.000000e+00 : f32
    %134 = vector.broadcast %cst_71 : f32 to vector<32x128xf32>
    %135 = arith.maximumf %133, %134 : vector<32x128xf32>
    %c4 = arith.constant 4 : index
    %c0_72 = arith.constant 0 : index
    %c0_73 = arith.constant 0 : index
    %136 = vector.load %arg4[%c4, %c0_72, %c0_73] : memref<8x32x32xbf16, #tpu.memory_space<vmem>>, vector<1x32x32xbf16>
    %137 = vector.shape_cast %136 : vector<1x32x32xbf16> to vector<32x32xbf16>
    %c4_74 = arith.constant 4 : index
    %c0_75 = arith.constant 0 : index
    %c0_76 = arith.constant 0 : index
    %138 = vector.load %arg5[%c4_74, %c0_75, %c0_76] : memref<8x32x1xf32, #tpu.memory_space<vmem>>, vector<1x32x1xf32>
    %139 = vector.shape_cast %138 : vector<1x32x1xf32> to vector<32x1xf32>
    %140 = vector.shape_cast %139 : vector<32x1xf32> to vector<32x1xf32>
    %141 = vector.broadcast %140 : vector<32x1xf32> to vector<32x128xf32>
    %142 = arith.truncf %120 : vector<32x128xf32> to vector<32x128xbf16>
    %cst_77 = arith.constant dense<0.000000e+00> : vector<32x128xf32>
    %143 = tpu.matmul %137, %142, %cst_77 {dimension_numbers = #tpu.dot_dimension_numbers<[1], [0], [0], [1], [0, 0, 1, 1], [], []>} : vector<32x32xbf16>, vector<32x128xbf16>, vector<32x128xf32> -> vector<32x128xf32>
    %144 = arith.addf %143, %141 : vector<32x128xf32>
    %cst_78 = arith.constant 0.000000e+00 : f32
    %145 = vector.broadcast %cst_78 : f32 to vector<32x128xf32>
    %146 = arith.maximumf %144, %145 : vector<32x128xf32>
    %147 = arith.truncf %125 : vector<32x128xf32> to vector<32x128xbf16>
    %cst_79 = arith.constant dense<0.000000e+00> : vector<32x128xf32>
    %148 = tpu.matmul %137, %147, %cst_79 {dimension_numbers = #tpu.dot_dimension_numbers<[1], [0], [0], [1], [0, 0, 1, 1], [], []>} : vector<32x32xbf16>, vector<32x128xbf16>, vector<32x128xf32> -> vector<32x128xf32>
    %149 = arith.addf %148, %141 : vector<32x128xf32>
    %cst_80 = arith.constant 0.000000e+00 : f32
    %150 = vector.broadcast %cst_80 : f32 to vector<32x128xf32>
    %151 = arith.maximumf %149, %150 : vector<32x128xf32>
    %152 = arith.truncf %130 : vector<32x128xf32> to vector<32x128xbf16>
    %cst_81 = arith.constant dense<0.000000e+00> : vector<32x128xf32>
    %153 = tpu.matmul %137, %152, %cst_81 {dimension_numbers = #tpu.dot_dimension_numbers<[1], [0], [0], [1], [0, 0, 1, 1], [], []>} : vector<32x32xbf16>, vector<32x128xbf16>, vector<32x128xf32> -> vector<32x128xf32>
    %154 = arith.addf %153, %141 : vector<32x128xf32>
    %cst_82 = arith.constant 0.000000e+00 : f32
    %155 = vector.broadcast %cst_82 : f32 to vector<32x128xf32>
    %156 = arith.maximumf %154, %155 : vector<32x128xf32>
    %157 = arith.truncf %135 : vector<32x128xf32> to vector<32x128xbf16>
    %cst_83 = arith.constant dense<0.000000e+00> : vector<32x128xf32>
    %158 = tpu.matmul %137, %157, %cst_83 {dimension_numbers = #tpu.dot_dimension_numbers<[1], [0], [0], [1], [0, 0, 1, 1], [], []>} : vector<32x32xbf16>, vector<32x128xbf16>, vector<32x128xf32> -> vector<32x128xf32>
    %159 = arith.addf %158, %141 : vector<32x128xf32>
    %cst_84 = arith.constant 0.000000e+00 : f32
    %160 = vector.broadcast %cst_84 : f32 to vector<32x128xf32>
    %161 = arith.maximumf %159, %160 : vector<32x128xf32>
    %c5 = arith.constant 5 : index
    %c0_85 = arith.constant 0 : index
    %c0_86 = arith.constant 0 : index
    %162 = vector.load %arg4[%c5, %c0_85, %c0_86] : memref<8x32x32xbf16, #tpu.memory_space<vmem>>, vector<1x32x32xbf16>
    %163 = vector.shape_cast %162 : vector<1x32x32xbf16> to vector<32x32xbf16>
    %c5_87 = arith.constant 5 : index
    %c0_88 = arith.constant 0 : index
    %c0_89 = arith.constant 0 : index
    %164 = vector.load %arg5[%c5_87, %c0_88, %c0_89] : memref<8x32x1xf32, #tpu.memory_space<vmem>>, vector<1x32x1xf32>
    %165 = vector.shape_cast %164 : vector<1x32x1xf32> to vector<32x1xf32>
    %166 = vector.shape_cast %165 : vector<32x1xf32> to vector<32x1xf32>
    %167 = vector.broadcast %166 : vector<32x1xf32> to vector<32x128xf32>
    %168 = arith.truncf %146 : vector<32x128xf32> to vector<32x128xbf16>
    %cst_90 = arith.constant dense<0.000000e+00> : vector<32x128xf32>
    %169 = tpu.matmul %163, %168, %cst_90 {dimension_numbers = #tpu.dot_dimension_numbers<[1], [0], [0], [1], [0, 0, 1, 1], [], []>} : vector<32x32xbf16>, vector<32x128xbf16>, vector<32x128xf32> -> vector<32x128xf32>
    %170 = arith.addf %169, %167 : vector<32x128xf32>
    %cst_91 = arith.constant 0.000000e+00 : f32
    %171 = vector.broadcast %cst_91 : f32 to vector<32x128xf32>
    %172 = arith.maximumf %170, %171 : vector<32x128xf32>
    %173 = arith.truncf %151 : vector<32x128xf32> to vector<32x128xbf16>
    %cst_92 = arith.constant dense<0.000000e+00> : vector<32x128xf32>
    %174 = tpu.matmul %163, %173, %cst_92 {dimension_numbers = #tpu.dot_dimension_numbers<[1], [0], [0], [1], [0, 0, 1, 1], [], []>} : vector<32x32xbf16>, vector<32x128xbf16>, vector<32x128xf32> -> vector<32x128xf32>
    %175 = arith.addf %174, %167 : vector<32x128xf32>
    %cst_93 = arith.constant 0.000000e+00 : f32
    %176 = vector.broadcast %cst_93 : f32 to vector<32x128xf32>
    %177 = arith.maximumf %175, %176 : vector<32x128xf32>
    %178 = arith.truncf %156 : vector<32x128xf32> to vector<32x128xbf16>
    %cst_94 = arith.constant dense<0.000000e+00> : vector<32x128xf32>
    %179 = tpu.matmul %163, %178, %cst_94 {dimension_numbers = #tpu.dot_dimension_numbers<[1], [0], [0], [1], [0, 0, 1, 1], [], []>} : vector<32x32xbf16>, vector<32x128xbf16>, vector<32x128xf32> -> vector<32x128xf32>
    %180 = arith.addf %179, %167 : vector<32x128xf32>
    %cst_95 = arith.constant 0.000000e+00 : f32
    %181 = vector.broadcast %cst_95 : f32 to vector<32x128xf32>
    %182 = arith.maximumf %180, %181 : vector<32x128xf32>
    %183 = arith.truncf %161 : vector<32x128xf32> to vector<32x128xbf16>
    %cst_96 = arith.constant dense<0.000000e+00> : vector<32x128xf32>
    %184 = tpu.matmul %163, %183, %cst_96 {dimension_numbers = #tpu.dot_dimension_numbers<[1], [0], [0], [1], [0, 0, 1, 1], [], []>} : vector<32x32xbf16>, vector<32x128xbf16>, vector<32x128xf32> -> vector<32x128xf32>
    %185 = arith.addf %184, %167 : vector<32x128xf32>
    %cst_97 = arith.constant 0.000000e+00 : f32
    %186 = vector.broadcast %cst_97 : f32 to vector<32x128xf32>
    %187 = arith.maximumf %185, %186 : vector<32x128xf32>
    %c6 = arith.constant 6 : index
    %c0_98 = arith.constant 0 : index
    %c0_99 = arith.constant 0 : index
    %188 = vector.load %arg4[%c6, %c0_98, %c0_99] : memref<8x32x32xbf16, #tpu.memory_space<vmem>>, vector<1x32x32xbf16>
    %189 = vector.shape_cast %188 : vector<1x32x32xbf16> to vector<32x32xbf16>
    %c6_100 = arith.constant 6 : index
    %c0_101 = arith.constant 0 : index
    %c0_102 = arith.constant 0 : index
    %190 = vector.load %arg5[%c6_100, %c0_101, %c0_102] : memref<8x32x1xf32, #tpu.memory_space<vmem>>, vector<1x32x1xf32>
    %191 = vector.shape_cast %190 : vector<1x32x1xf32> to vector<32x1xf32>
    %192 = vector.shape_cast %191 : vector<32x1xf32> to vector<32x1xf32>
    %193 = vector.broadcast %192 : vector<32x1xf32> to vector<32x128xf32>
    %194 = arith.truncf %172 : vector<32x128xf32> to vector<32x128xbf16>
    %cst_103 = arith.constant dense<0.000000e+00> : vector<32x128xf32>
    %195 = tpu.matmul %189, %194, %cst_103 {dimension_numbers = #tpu.dot_dimension_numbers<[1], [0], [0], [1], [0, 0, 1, 1], [], []>} : vector<32x32xbf16>, vector<32x128xbf16>, vector<32x128xf32> -> vector<32x128xf32>
    %196 = arith.addf %195, %193 : vector<32x128xf32>
    %cst_104 = arith.constant 0.000000e+00 : f32
    %197 = vector.broadcast %cst_104 : f32 to vector<32x128xf32>
    %198 = arith.maximumf %196, %197 : vector<32x128xf32>
    %199 = arith.truncf %177 : vector<32x128xf32> to vector<32x128xbf16>
    %cst_105 = arith.constant dense<0.000000e+00> : vector<32x128xf32>
    %200 = tpu.matmul %189, %199, %cst_105 {dimension_numbers = #tpu.dot_dimension_numbers<[1], [0], [0], [1], [0, 0, 1, 1], [], []>} : vector<32x32xbf16>, vector<32x128xbf16>, vector<32x128xf32> -> vector<32x128xf32>
    %201 = arith.addf %200, %193 : vector<32x128xf32>
    %cst_106 = arith.constant 0.000000e+00 : f32
    %202 = vector.broadcast %cst_106 : f32 to vector<32x128xf32>
    %203 = arith.maximumf %201, %202 : vector<32x128xf32>
    %204 = arith.truncf %182 : vector<32x128xf32> to vector<32x128xbf16>
    %cst_107 = arith.constant dense<0.000000e+00> : vector<32x128xf32>
    %205 = tpu.matmul %189, %204, %cst_107 {dimension_numbers = #tpu.dot_dimension_numbers<[1], [0], [0], [1], [0, 0, 1, 1], [], []>} : vector<32x32xbf16>, vector<32x128xbf16>, vector<32x128xf32> -> vector<32x128xf32>
    %206 = arith.addf %205, %193 : vector<32x128xf32>
    %cst_108 = arith.constant 0.000000e+00 : f32
    %207 = vector.broadcast %cst_108 : f32 to vector<32x128xf32>
    %208 = arith.maximumf %206, %207 : vector<32x128xf32>
    %209 = arith.truncf %187 : vector<32x128xf32> to vector<32x128xbf16>
    %cst_109 = arith.constant dense<0.000000e+00> : vector<32x128xf32>
    %210 = tpu.matmul %189, %209, %cst_109 {dimension_numbers = #tpu.dot_dimension_numbers<[1], [0], [0], [1], [0, 0, 1, 1], [], []>} : vector<32x32xbf16>, vector<32x128xbf16>, vector<32x128xf32> -> vector<32x128xf32>
    %211 = arith.addf %210, %193 : vector<32x128xf32>
    %cst_110 = arith.constant 0.000000e+00 : f32
    %212 = vector.broadcast %cst_110 : f32 to vector<32x128xf32>
    %213 = arith.maximumf %211, %212 : vector<32x128xf32>
    %c7 = arith.constant 7 : index
    %c0_111 = arith.constant 0 : index
    %c0_112 = arith.constant 0 : index
    %214 = vector.load %arg4[%c7, %c0_111, %c0_112] : memref<8x32x32xbf16, #tpu.memory_space<vmem>>, vector<1x32x32xbf16>
    %215 = vector.shape_cast %214 : vector<1x32x32xbf16> to vector<32x32xbf16>
    %c7_113 = arith.constant 7 : index
    %c0_114 = arith.constant 0 : index
    %c0_115 = arith.constant 0 : index
    %216 = vector.load %arg5[%c7_113, %c0_114, %c0_115] : memref<8x32x1xf32, #tpu.memory_space<vmem>>, vector<1x32x1xf32>
    %217 = vector.shape_cast %216 : vector<1x32x1xf32> to vector<32x1xf32>
    %218 = vector.shape_cast %217 : vector<32x1xf32> to vector<32x1xf32>
    %219 = vector.broadcast %218 : vector<32x1xf32> to vector<32x128xf32>
    %220 = arith.truncf %198 : vector<32x128xf32> to vector<32x128xbf16>
    %cst_116 = arith.constant dense<0.000000e+00> : vector<32x128xf32>
    %221 = tpu.matmul %215, %220, %cst_116 {dimension_numbers = #tpu.dot_dimension_numbers<[1], [0], [0], [1], [0, 0, 1, 1], [], []>} : vector<32x32xbf16>, vector<32x128xbf16>, vector<32x128xf32> -> vector<32x128xf32>
    %222 = arith.addf %221, %219 : vector<32x128xf32>
    %cst_117 = arith.constant 0.000000e+00 : f32
    %223 = vector.broadcast %cst_117 : f32 to vector<32x128xf32>
    %224 = arith.maximumf %222, %223 : vector<32x128xf32>
    %225 = arith.truncf %203 : vector<32x128xf32> to vector<32x128xbf16>
    %cst_118 = arith.constant dense<0.000000e+00> : vector<32x128xf32>
    %226 = tpu.matmul %215, %225, %cst_118 {dimension_numbers = #tpu.dot_dimension_numbers<[1], [0], [0], [1], [0, 0, 1, 1], [], []>} : vector<32x32xbf16>, vector<32x128xbf16>, vector<32x128xf32> -> vector<32x128xf32>
    %227 = arith.addf %226, %219 : vector<32x128xf32>
    %cst_119 = arith.constant 0.000000e+00 : f32
    %228 = vector.broadcast %cst_119 : f32 to vector<32x128xf32>
    %229 = arith.maximumf %227, %228 : vector<32x128xf32>
    %230 = arith.truncf %208 : vector<32x128xf32> to vector<32x128xbf16>
    %cst_120 = arith.constant dense<0.000000e+00> : vector<32x128xf32>
    %231 = tpu.matmul %215, %230, %cst_120 {dimension_numbers = #tpu.dot_dimension_numbers<[1], [0], [0], [1], [0, 0, 1, 1], [], []>} : vector<32x32xbf16>, vector<32x128xbf16>, vector<32x128xf32> -> vector<32x128xf32>
    %232 = arith.addf %231, %219 : vector<32x128xf32>
    %cst_121 = arith.constant 0.000000e+00 : f32
    %233 = vector.broadcast %cst_121 : f32 to vector<32x128xf32>
    %234 = arith.maximumf %232, %233 : vector<32x128xf32>
    %235 = arith.truncf %213 : vector<32x128xf32> to vector<32x128xbf16>
    %cst_122 = arith.constant dense<0.000000e+00> : vector<32x128xf32>
    %236 = tpu.matmul %215, %235, %cst_122 {dimension_numbers = #tpu.dot_dimension_numbers<[1], [0], [0], [1], [0, 0, 1, 1], [], []>} : vector<32x32xbf16>, vector<32x128xbf16>, vector<32x128xf32> -> vector<32x128xf32>
    %237 = arith.addf %236, %219 : vector<32x128xf32>
    %cst_123 = arith.constant 0.000000e+00 : f32
    %238 = vector.broadcast %cst_123 : f32 to vector<32x128xf32>
    %239 = arith.maximumf %237, %238 : vector<32x128xf32>
    %240 = arith.truncf %224 : vector<32x128xf32> to vector<32x128xbf16>
    %cst_124 = arith.constant dense<0.000000e+00> : vector<1x128xf32>
    %241 = tpu.matmul %1, %240, %cst_124 {dimension_numbers = #tpu.dot_dimension_numbers<[1], [0], [0], [1], [0, 0, 1, 1], [], []>} : vector<1x32xbf16>, vector<32x128xbf16>, vector<1x128xf32> -> vector<1x128xf32>
    %242 = arith.addf %241, %7 : vector<1x128xf32>
    %c0_125 = arith.constant 0 : index
    %c0_126 = arith.constant 0 : index
    %243 = vector.load %arg8[%c0_125, %c0_126] : memref<1x512xf32, #tpu.memory_space<vmem>>, vector<1x128xf32>
    tpu.vector_store %arg8[%c0_125, %c0_126], %242 {strides = array<i32>} : memref<1x512xf32, #tpu.memory_space<vmem>>, vector<1x128xf32>,
    %244 = arith.truncf %229 : vector<32x128xf32> to vector<32x128xbf16>
    %cst_127 = arith.constant dense<0.000000e+00> : vector<1x128xf32>
    %245 = tpu.matmul %1, %244, %cst_127 {dimension_numbers = #tpu.dot_dimension_numbers<[1], [0], [0], [1], [0, 0, 1, 1], [], []>} : vector<1x32xbf16>, vector<32x128xbf16>, vector<1x128xf32> -> vector<1x128xf32>
    %246 = arith.addf %245, %7 : vector<1x128xf32>
    %c0_128 = arith.constant 0 : index
    %c128_129 = arith.constant 128 : index
    %247 = vector.load %arg8[%c0_128, %c128_129] : memref<1x512xf32, #tpu.memory_space<vmem>>, vector<1x128xf32>
    tpu.vector_store %arg8[%c0_128, %c128_129], %246 {strides = array<i32>} : memref<1x512xf32, #tpu.memory_space<vmem>>, vector<1x128xf32>,
    %248 = arith.truncf %234 : vector<32x128xf32> to vector<32x128xbf16>
    %cst_130 = arith.constant dense<0.000000e+00> : vector<1x128xf32>
    %249 = tpu.matmul %1, %248, %cst_130 {dimension_numbers = #tpu.dot_dimension_numbers<[1], [0], [0], [1], [0, 0, 1, 1], [], []>} : vector<1x32xbf16>, vector<32x128xbf16>, vector<1x128xf32> -> vector<1x128xf32>
    %250 = arith.addf %249, %7 : vector<1x128xf32>
    %c0_131 = arith.constant 0 : index
    %c256_132 = arith.constant 256 : index
    %251 = vector.load %arg8[%c0_131, %c256_132] : memref<1x512xf32, #tpu.memory_space<vmem>>, vector<1x128xf32>
    tpu.vector_store %arg8[%c0_131, %c256_132], %250 {strides = array<i32>} : memref<1x512xf32, #tpu.memory_space<vmem>>, vector<1x128xf32>,
    %252 = arith.truncf %239 : vector<32x128xf32> to vector<32x128xbf16>
    %cst_133 = arith.constant dense<0.000000e+00> : vector<1x128xf32>
    %253 = tpu.matmul %1, %252, %cst_133 {dimension_numbers = #tpu.dot_dimension_numbers<[1], [0], [0], [1], [0, 0, 1, 1], [], []>} : vector<1x32xbf16>, vector<32x128xbf16>, vector<1x128xf32> -> vector<1x128xf32>
    %254 = arith.addf %253, %7 : vector<1x128xf32>
    %c0_134 = arith.constant 0 : index
    %c384_135 = arith.constant 384 : index
    %255 = vector.load %arg8[%c0_134, %c384_135] : memref<1x512xf32, #tpu.memory_space<vmem>>, vector<1x128xf32>
    tpu.vector_store %arg8[%c0_134, %c384_135], %254 {strides = array<i32>} : memref<1x512xf32, #tpu.memory_space<vmem>>, vector<1x128xf32>,
    return
  }
  func.func @transform_0(%arg0: i32) -> (i32, i32) {
    %c0_i32 = arith.constant 0 : i32
    %c0_i32_0 = arith.constant 0 : i32
    return %arg0, %c0_i32 : i32, i32
  }
  func.func @transform_1(%arg0: i32) -> (i32, i32) {
    %c0_i32 = arith.constant 0 : i32
    %c0_i32_0 = arith.constant 0 : i32
    %c0_i32_1 = arith.constant 0 : i32
    return %c0_i32, %c0_i32_0 : i32, i32
  }
  func.func @transform_2(%arg0: i32) -> (i32, i32) {
    %c0_i32 = arith.constant 0 : i32
    %c0_i32_0 = arith.constant 0 : i32
    %c0_i32_1 = arith.constant 0 : i32
    return %c0_i32, %c0_i32_0 : i32, i32
  }
  func.func @transform_3(%arg0: i32) -> (i32, i32, i32) {
    %c0_i32 = arith.constant 0 : i32
    %c0_i32_0 = arith.constant 0 : i32
    %c0_i32_1 = arith.constant 0 : i32
    %c0_i32_2 = arith.constant 0 : i32
    return %c0_i32, %c0_i32_0, %c0_i32_1 : i32, i32, i32
  }
  func.func @transform_4(%arg0: i32) -> (i32, i32, i32) {
    %c0_i32 = arith.constant 0 : i32
    %c0_i32_0 = arith.constant 0 : i32
    %c0_i32_1 = arith.constant 0 : i32
    %c0_i32_2 = arith.constant 0 : i32
    return %c0_i32, %c0_i32_0, %c0_i32_1 : i32, i32, i32
  }
  func.func @transform_5(%arg0: i32) -> (i32, i32) {
    %c0_i32 = arith.constant 0 : i32
    %c0_i32_0 = arith.constant 0 : i32
    %c0_i32_1 = arith.constant 0 : i32
    return %c0_i32, %c0_i32_0 : i32, i32
  }
  func.func @transform_6(%arg0: i32) -> (i32, i32) {
    %c0_i32 = arith.constant 0 : i32
    %c0_i32_0 = arith.constant 0 : i32
    %c0_i32_1 = arith.constant 0 : i32
    return %c0_i32, %c0_i32_0 : i32, i32
  }
  func.func @transform_7(%arg0: i32) -> (i32, i32) {
    %c0_i32 = arith.constant 0 : i32
    %c0_i32_0 = arith.constant 0 : i32
    return %c0_i32, %arg0 : i32, i32
  }
}

module attributes {stable_mosaic.version = 11 : i64} {
  func.func @mlp_kernel(%arg0: i32, %arg1: memref<2x512xf32, #tpu.memory_space<vmem>>, %arg2: memref<32x2xbf16, #tpu.memory_space<vmem>>, %arg3: memref<32x1xf32, #tpu.memory_space<vmem>>, %arg4: memref<8x32x32xbf16, #tpu.memory_space<vmem>>, %arg5: memref<8x32x1xf32, #tpu.memory_space<vmem>>, %arg6: memref<1x32xbf16, #tpu.memory_space<vmem>>, %arg7: memref<1x1xf32, #tpu.memory_space<vmem>>, %arg8: memref<1x512xf32, #tpu.memory_space<vmem>>) attributes {dimension_semantics = [#tpu.dimension_semantics<parallel>], iteration_bounds = array<i64: 1>, scalar_prefetch = 0 : i64, scratch_operands = 0 : i64, tpu.core_type = #tpu.core_type<tc>, window_params = [{transform_indices = @transform_0, window_bounds = array<i64: 2, 512>}, {pipeline_mode = #tpu.pipeline_mode<synchronous>, transform_indices = @transform_1, window_bounds = array<i64: 32, 2>}, {pipeline_mode = #tpu.pipeline_mode<synchronous>, transform_indices = @transform_2, window_bounds = array<i64: 32, 1>}, {pipeline_mode = #tpu.pipeline_mode<synchronous>, transform_indices = @transform_3, window_bounds = array<i64: 8, 32, 32>}, {pipeline_mode = #tpu.pipeline_mode<synchronous>, transform_indices = @transform_4, window_bounds = array<i64: 8, 32, 1>}, {pipeline_mode = #tpu.pipeline_mode<synchronous>, transform_indices = @transform_5, window_bounds = array<i64: 1, 32>}, {pipeline_mode = #tpu.pipeline_mode<synchronous>, transform_indices = @transform_6, window_bounds = array<i64: 1, 1>}, {transform_indices = @transform_7, window_bounds = array<i64: 1, 512>}]} {
    %c0 = arith.constant 0 : index
    %c0_0 = arith.constant 0 : index
    %0 = vector.load %arg2[%c0, %c0_0] : memref<32x2xbf16, #tpu.memory_space<vmem>>, vector<32x2xbf16>
    %c0_1 = arith.constant 0 : index
    %c0_2 = arith.constant 0 : index
    %1 = vector.load %arg6[%c0_1, %c0_2] : memref<1x32xbf16, #tpu.memory_space<vmem>>, vector<1x32xbf16>
    %c0_3 = arith.constant 0 : index
    %c0_4 = arith.constant 0 : index
    %2 = vector.load %arg3[%c0_3, %c0_4] : memref<32x1xf32, #tpu.memory_space<vmem>>, vector<32x1xf32>
    %3 = vector.shape_cast %2 : vector<32x1xf32> to vector<32x1xf32>
    %4 = vector.broadcast %3 : vector<32x1xf32> to vector<32x128xf32>
    %c0_5 = arith.constant 0 : index
    %c0_6 = arith.constant 0 : index
    %5 = vector.load %arg7[%c0_5, %c0_6] : memref<1x1xf32, #tpu.memory_space<vmem>>, vector<1x1xf32>
    %6 = vector.shape_cast %5 : vector<1x1xf32> to vector<1x1xf32>
    %7 = vector.broadcast %6 : vector<1x1xf32> to vector<1x128xf32>
    %c0_7 = arith.constant 0 : index
    %c0_8 = arith.constant 0 : index
    %8 = vector.load %arg1[%c0_7, %c0_8] : memref<2x512xf32, #tpu.memory_space<vmem>>, vector<2x128xf32>
    %9 = arith.truncf %8 : vector<2x128xf32> to vector<2x128xbf16>
    %cst = arith.constant dense<0.000000e+00> : vector<32x128xf32>
    %10 = tpu.matmul %0, %9, %cst {dimension_numbers = #tpu.dot_dimension_numbers<[1], [0], [0], [1], [0, 0, 1, 1], [], []>} : vector<32x2xbf16>, vector<2x128xbf16>, vector<32x128xf32> -> vector<32x128xf32>
    %11 = arith.addf %10, %4 : vector<32x128xf32>
    %cst_9 = arith.constant 0.000000e+00 : f32
    %12 = vector.broadcast %cst_9 : f32 to vector<32x128xf32>
    %13 = arith.maximumf %11, %12 : vector<32x128xf32>
    %c0_10 = arith.constant 0 : index
    %c128 = arith.constant 128 : index
    %14 = vector.load %arg1[%c0_10, %c128] : memref<2x512xf32, #tpu.memory_space<vmem>>, vector<2x128xf32>
    %15 = arith.truncf %14 : vector<2x128xf32> to vector<2x128xbf16>
    %cst_11 = arith.constant dense<0.000000e+00> : vector<32x128xf32>
    %16 = tpu.matmul %0, %15, %cst_11 {dimension_numbers = #tpu.dot_dimension_numbers<[1], [0], [0], [1], [0, 0, 1, 1], [], []>} : vector<32x2xbf16>, vector<2x128xbf16>, vector<32x128xf32> -> vector<32x128xf32>
    %17 = arith.addf %16, %4 : vector<32x128xf32>
    %cst_12 = arith.constant 0.000000e+00 : f32
    %18 = vector.broadcast %cst_12 : f32 to vector<32x128xf32>
    %19 = arith.maximumf %17, %18 : vector<32x128xf32>
    %c0_13 = arith.constant 0 : index
    %c256 = arith.constant 256 : index
    %20 = vector.load %arg1[%c0_13, %c256] : memref<2x512xf32, #tpu.memory_space<vmem>>, vector<2x128xf32>
    %21 = arith.truncf %20 : vector<2x128xf32> to vector<2x128xbf16>
    %cst_14 = arith.constant dense<0.000000e+00> : vector<32x128xf32>
    %22 = tpu.matmul %0, %21, %cst_14 {dimension_numbers = #tpu.dot_dimension_numbers<[1], [0], [0], [1], [0, 0, 1, 1], [], []>} : vector<32x2xbf16>, vector<2x128xbf16>, vector<32x128xf32> -> vector<32x128xf32>
    %23 = arith.addf %22, %4 : vector<32x128xf32>
    %cst_15 = arith.constant 0.000000e+00 : f32
    %24 = vector.broadcast %cst_15 : f32 to vector<32x128xf32>
    %25 = arith.maximumf %23, %24 : vector<32x128xf32>
    %c0_16 = arith.constant 0 : index
    %c384 = arith.constant 384 : index
    %26 = vector.load %arg1[%c0_16, %c384] : memref<2x512xf32, #tpu.memory_space<vmem>>, vector<2x128xf32>
    %27 = arith.truncf %26 : vector<2x128xf32> to vector<2x128xbf16>
    %cst_17 = arith.constant dense<0.000000e+00> : vector<32x128xf32>
    %28 = tpu.matmul %0, %27, %cst_17 {dimension_numbers = #tpu.dot_dimension_numbers<[1], [0], [0], [1], [0, 0, 1, 1], [], []>} : vector<32x2xbf16>, vector<2x128xbf16>, vector<32x128xf32> -> vector<32x128xf32>
    %29 = arith.addf %28, %4 : vector<32x128xf32>
    %cst_18 = arith.constant 0.000000e+00 : f32
    %30 = vector.broadcast %cst_18 : f32 to vector<32x128xf32>
    %31 = arith.maximumf %29, %30 : vector<32x128xf32>
    %c0_19 = arith.constant 0 : index
    %c0_20 = arith.constant 0 : index
    %c0_21 = arith.constant 0 : index
    %32 = vector.load %arg4[%c0_19, %c0_20, %c0_21] : memref<8x32x32xbf16, #tpu.memory_space<vmem>>, vector<1x32x32xbf16>
    %33 = vector.shape_cast %32 : vector<1x32x32xbf16> to vector<32x32xbf16>
    %c0_22 = arith.constant 0 : index
    %c0_23 = arith.constant 0 : index
    %c0_24 = arith.constant 0 : index
    %34 = vector.load %arg5[%c0_22, %c0_23, %c0_24] : memref<8x32x1xf32, #tpu.memory_space<vmem>>, vector<1x32x1xf32>
    %35 = vector.shape_cast %34 : vector<1x32x1xf32> to vector<32x1xf32>
    %36 = vector.shape_cast %35 : vector<32x1xf32> to vector<32x1xf32>
    %37 = vector.broadcast %36 : vector<32x1xf32> to vector<32x128xf32>
    %38 = arith.truncf %13 : vector<32x128xf32> to vector<32x128xbf16>
    %cst_25 = arith.constant dense<0.000000e+00> : vector<32x128xf32>
    %39 = tpu.matmul %33, %38, %cst_25 {dimension_numbers = #tpu.dot_dimension_numbers<[1], [0], [0], [1], [0, 0, 1, 1], [], []>} : vector<32x32xbf16>, vector<32x128xbf16>, vector<32x128xf32> -> vector<32x128xf32>
    %40 = arith.addf %39, %37 : vector<32x128xf32>
    %cst_26 = arith.constant 0.000000e+00 : f32
    %41 = vector.broadcast %cst_26 : f32 to vector<32x128xf32>
    %42 = arith.maximumf %40, %41 : vector<32x128xf32>
    %43 = arith.truncf %19 : vector<32x128xf32> to vector<32x128xbf16>
    %cst_27 = arith.constant dense<0.000000e+00> : vector<32x128xf32>
    %44 = tpu.matmul %33, %43, %cst_27 {dimension_numbers = #tpu.dot_dimension_numbers<[1], [0], [0], [1], [0, 0, 1, 1], [], []>} : vector<32x32xbf16>, vector<32x128xbf16>, vector<32x128xf32> -> vector<32x128xf32>
    %45 = arith.addf %44, %37 : vector<32x128xf32>
    %cst_28 = arith.constant 0.000000e+00 : f32
    %46 = vector.broadcast %cst_28 : f32 to vector<32x128xf32>
    %47 = arith.maximumf %45, %46 : vector<32x128xf32>
    %48 = arith.truncf %25 : vector<32x128xf32> to vector<32x128xbf16>
    %cst_29 = arith.constant dense<0.000000e+00> : vector<32x128xf32>
    %49 = tpu.matmul %33, %48, %cst_29 {dimension_numbers = #tpu.dot_dimension_numbers<[1], [0], [0], [1], [0, 0, 1, 1], [], []>} : vector<32x32xbf16>, vector<32x128xbf16>, vector<32x128xf32> -> vector<32x128xf32>
    %50 = arith.addf %49, %37 : vector<32x128xf32>
    %cst_30 = arith.constant 0.000000e+00 : f32
    %51 = vector.broadcast %cst_30 : f32 to vector<32x128xf32>
    %52 = arith.maximumf %50, %51 : vector<32x128xf32>
    %53 = arith.truncf %31 : vector<32x128xf32> to vector<32x128xbf16>
    %cst_31 = arith.constant dense<0.000000e+00> : vector<32x128xf32>
    %54 = tpu.matmul %33, %53, %cst_31 {dimension_numbers = #tpu.dot_dimension_numbers<[1], [0], [0], [1], [0, 0, 1, 1], [], []>} : vector<32x32xbf16>, vector<32x128xbf16>, vector<32x128xf32> -> vector<32x128xf32>
    %55 = arith.addf %54, %37 : vector<32x128xf32>
    %cst_32 = arith.constant 0.000000e+00 : f32
    %56 = vector.broadcast %cst_32 : f32 to vector<32x128xf32>
    %57 = arith.maximumf %55, %56 : vector<32x128xf32>
    %c1 = arith.constant 1 : index
    %c0_33 = arith.constant 0 : index
    %c0_34 = arith.constant 0 : index
    %58 = vector.load %arg4[%c1, %c0_33, %c0_34] : memref<8x32x32xbf16, #tpu.memory_space<vmem>>, vector<1x32x32xbf16>
    %59 = vector.shape_cast %58 : vector<1x32x32xbf16> to vector<32x32xbf16>
    %c1_35 = arith.constant 1 : index
    %c0_36 = arith.constant 0 : index
    %c0_37 = arith.constant 0 : index
    %60 = vector.load %arg5[%c1_35, %c0_36, %c0_37] : memref<8x32x1xf32, #tpu.memory_space<vmem>>, vector<1x32x1xf32>
    %61 = vector.shape_cast %60 : vector<1x32x1xf32> to vector<32x1xf32>
    %62 = vector.shape_cast %61 : vector<32x1xf32> to vector<32x1xf32>
    %63 = vector.broadcast %62 : vector<32x1xf32> to vector<32x128xf32>
    %64 = arith.truncf %42 : vector<32x128xf32> to vector<32x128xbf16>
    %cst_38 = arith.constant dense<0.000000e+00> : vector<32x128xf32>
    %65 = tpu.matmul %59, %64, %cst_38 {dimension_numbers = #tpu.dot_dimension_numbers<[1], [0], [0], [1], [0, 0, 1, 1], [], []>} : vector<32x32xbf16>, vector<32x128xbf16>, vector<32x128xf32> -> vector<32x128xf32>
    %66 = arith.addf %65, %63 : vector<32x128xf32>
    %cst_39 = arith.constant 0.000000e+00 : f32
    %67 = vector.broadcast %cst_39 : f32 to vector<32x128xf32>
    %68 = arith.maximumf %66, %67 : vector<32x128xf32>
    %69 = arith.truncf %47 : vector<32x128xf32> to vector<32x128xbf16>
    %cst_40 = arith.constant dense<0.000000e+00> : vector<32x128xf32>
    %70 = tpu.matmul %59, %69, %cst_40 {dimension_numbers = #tpu.dot_dimension_numbers<[1], [0], [0], [1], [0, 0, 1, 1], [], []>} : vector<32x32xbf16>, vector<32x128xbf16>, vector<32x128xf32> -> vector<32x128xf32>
    %71 = arith.addf %70, %63 : vector<32x128xf32>
    %cst_41 = arith.constant 0.000000e+00 : f32
    %72 = vector.broadcast %cst_41 : f32 to vector<32x128xf32>
    %73 = arith.maximumf %71, %72 : vector<32x128xf32>
    %74 = arith.truncf %52 : vector<32x128xf32> to vector<32x128xbf16>
    %cst_42 = arith.constant dense<0.000000e+00> : vector<32x128xf32>
    %75 = tpu.matmul %59, %74, %cst_42 {dimension_numbers = #tpu.dot_dimension_numbers<[1], [0], [0], [1], [0, 0, 1, 1], [], []>} : vector<32x32xbf16>, vector<32x128xbf16>, vector<32x128xf32> -> vector<32x128xf32>
    %76 = arith.addf %75, %63 : vector<32x128xf32>
    %cst_43 = arith.constant 0.000000e+00 : f32
    %77 = vector.broadcast %cst_43 : f32 to vector<32x128xf32>
    %78 = arith.maximumf %76, %77 : vector<32x128xf32>
    %79 = arith.truncf %57 : vector<32x128xf32> to vector<32x128xbf16>
    %cst_44 = arith.constant dense<0.000000e+00> : vector<32x128xf32>
    %80 = tpu.matmul %59, %79, %cst_44 {dimension_numbers = #tpu.dot_dimension_numbers<[1], [0], [0], [1], [0, 0, 1, 1], [], []>} : vector<32x32xbf16>, vector<32x128xbf16>, vector<32x128xf32> -> vector<32x128xf32>
    %81 = arith.addf %80, %63 : vector<32x128xf32>
    %cst_45 = arith.constant 0.000000e+00 : f32
    %82 = vector.broadcast %cst_45 : f32 to vector<32x128xf32>
    %83 = arith.maximumf %81, %82 : vector<32x128xf32>
    %c2 = arith.constant 2 : index
    %c0_46 = arith.constant 0 : index
    %c0_47 = arith.constant 0 : index
    %84 = vector.load %arg4[%c2, %c0_46, %c0_47] : memref<8x32x32xbf16, #tpu.memory_space<vmem>>, vector<1x32x32xbf16>
    %85 = vector.shape_cast %84 : vector<1x32x32xbf16> to vector<32x32xbf16>
    %c2_48 = arith.constant 2 : index
    %c0_49 = arith.constant 0 : index
    %c0_50 = arith.constant 0 : index
    %86 = vector.load %arg5[%c2_48, %c0_49, %c0_50] : memref<8x32x1xf32, #tpu.memory_space<vmem>>, vector<1x32x1xf32>
    %87 = vector.shape_cast %86 : vector<1x32x1xf32> to vector<32x1xf32>
    %88 = vector.shape_cast %87 : vector<32x1xf32> to vector<32x1xf32>
    %89 = vector.broadcast %88 : vector<32x1xf32> to vector<32x128xf32>
    %90 = arith.truncf %68 : vector<32x128xf32> to vector<32x128xbf16>
    %cst_51 = arith.constant dense<0.000000e+00> : vector<32x128xf32>
    %91 = tpu.matmul %85, %90, %cst_51 {dimension_numbers = #tpu.dot_dimension_numbers<[1], [0], [0], [1], [0, 0, 1, 1], [], []>} : vector<32x32xbf16>, vector<32x128xbf16>, vector<32x128xf32> -> vector<32x128xf32>
    %92 = arith.addf %91, %89 : vector<32x128xf32>
    %cst_52 = arith.constant 0.000000e+00 : f32
    %93 = vector.broadcast %cst_52 : f32 to vector<32x128xf32>
    %94 = arith.maximumf %92, %93 : vector<32x128xf32>
    %95 = arith.truncf %73 : vector<32x128xf32> to vector<32x128xbf16>
    %cst_53 = arith.constant dense<0.000000e+00> : vector<32x128xf32>
    %96 = tpu.matmul %85, %95, %cst_53 {dimension_numbers = #tpu.dot_dimension_numbers<[1], [0], [0], [1], [0, 0, 1, 1], [], []>} : vector<32x32xbf16>, vector<32x128xbf16>, vector<32x128xf32> -> vector<32x128xf32>
    %97 = arith.addf %96, %89 : vector<32x128xf32>
    %cst_54 = arith.constant 0.000000e+00 : f32
    %98 = vector.broadcast %cst_54 : f32 to vector<32x128xf32>
    %99 = arith.maximumf %97, %98 : vector<32x128xf32>
    %100 = arith.truncf %78 : vector<32x128xf32> to vector<32x128xbf16>
    %cst_55 = arith.constant dense<0.000000e+00> : vector<32x128xf32>
    %101 = tpu.matmul %85, %100, %cst_55 {dimension_numbers = #tpu.dot_dimension_numbers<[1], [0], [0], [1], [0, 0, 1, 1], [], []>} : vector<32x32xbf16>, vector<32x128xbf16>, vector<32x128xf32> -> vector<32x128xf32>
    %102 = arith.addf %101, %89 : vector<32x128xf32>
    %cst_56 = arith.constant 0.000000e+00 : f32
    %103 = vector.broadcast %cst_56 : f32 to vector<32x128xf32>
    %104 = arith.maximumf %102, %103 : vector<32x128xf32>
    %105 = arith.truncf %83 : vector<32x128xf32> to vector<32x128xbf16>
    %cst_57 = arith.constant dense<0.000000e+00> : vector<32x128xf32>
    %106 = tpu.matmul %85, %105, %cst_57 {dimension_numbers = #tpu.dot_dimension_numbers<[1], [0], [0], [1], [0, 0, 1, 1], [], []>} : vector<32x32xbf16>, vector<32x128xbf16>, vector<32x128xf32> -> vector<32x128xf32>
    %107 = arith.addf %106, %89 : vector<32x128xf32>
    %cst_58 = arith.constant 0.000000e+00 : f32
    %108 = vector.broadcast %cst_58 : f32 to vector<32x128xf32>
    %109 = arith.maximumf %107, %108 : vector<32x128xf32>
    %c3 = arith.constant 3 : index
    %c0_59 = arith.constant 0 : index
    %c0_60 = arith.constant 0 : index
    %110 = vector.load %arg4[%c3, %c0_59, %c0_60] : memref<8x32x32xbf16, #tpu.memory_space<vmem>>, vector<1x32x32xbf16>
    %111 = vector.shape_cast %110 : vector<1x32x32xbf16> to vector<32x32xbf16>
    %c3_61 = arith.constant 3 : index
    %c0_62 = arith.constant 0 : index
    %c0_63 = arith.constant 0 : index
    %112 = vector.load %arg5[%c3_61, %c0_62, %c0_63] : memref<8x32x1xf32, #tpu.memory_space<vmem>>, vector<1x32x1xf32>
    %113 = vector.shape_cast %112 : vector<1x32x1xf32> to vector<32x1xf32>
    %114 = vector.shape_cast %113 : vector<32x1xf32> to vector<32x1xf32>
    %115 = vector.broadcast %114 : vector<32x1xf32> to vector<32x128xf32>
    %116 = arith.truncf %94 : vector<32x128xf32> to vector<32x128xbf16>
    %cst_64 = arith.constant dense<0.000000e+00> : vector<32x128xf32>
    %117 = tpu.matmul %111, %116, %cst_64 {dimension_numbers = #tpu.dot_dimension_numbers<[1], [0], [0], [1], [0, 0, 1, 1], [], []>} : vector<32x32xbf16>, vector<32x128xbf16>, vector<32x128xf32> -> vector<32x128xf32>
    %118 = arith.addf %117, %115 : vector<32x128xf32>
    %cst_65 = arith.constant 0.000000e+00 : f32
    %119 = vector.broadcast %cst_65 : f32 to vector<32x128xf32>
    %120 = arith.maximumf %118, %119 : vector<32x128xf32>
    %121 = arith.truncf %99 : vector<32x128xf32> to vector<32x128xbf16>
    %cst_66 = arith.constant dense<0.000000e+00> : vector<32x128xf32>
    %122 = tpu.matmul %111, %121, %cst_66 {dimension_numbers = #tpu.dot_dimension_numbers<[1], [0], [0], [1], [0, 0, 1, 1], [], []>} : vector<32x32xbf16>, vector<32x128xbf16>, vector<32x128xf32> -> vector<32x128xf32>
    %123 = arith.addf %122, %115 : vector<32x128xf32>
    %cst_67 = arith.constant 0.000000e+00 : f32
    %124 = vector.broadcast %cst_67 : f32 to vector<32x128xf32>
    %125 = arith.maximumf %123, %124 : vector<32x128xf32>
    %126 = arith.truncf %104 : vector<32x128xf32> to vector<32x128xbf16>
    %cst_68 = arith.constant dense<0.000000e+00> : vector<32x128xf32>
    %127 = tpu.matmul %111, %126, %cst_68 {dimension_numbers = #tpu.dot_dimension_numbers<[1], [0], [0], [1], [0, 0, 1, 1], [], []>} : vector<32x32xbf16>, vector<32x128xbf16>, vector<32x128xf32> -> vector<32x128xf32>
    %128 = arith.addf %127, %115 : vector<32x128xf32>
    %cst_69 = arith.constant 0.000000e+00 : f32
    %129 = vector.broadcast %cst_69 : f32 to vector<32x128xf32>
    %130 = arith.maximumf %128, %129 : vector<32x128xf32>
    %131 = arith.truncf %109 : vector<32x128xf32> to vector<32x128xbf16>
    %cst_70 = arith.constant dense<0.000000e+00> : vector<32x128xf32>
    %132 = tpu.matmul %111, %131, %cst_70 {dimension_numbers = #tpu.dot_dimension_numbers<[1], [0], [0], [1], [0, 0, 1, 1], [], []>} : vector<32x32xbf16>, vector<32x128xbf16>, vector<32x128xf32> -> vector<32x128xf32>
    %133 = arith.addf %132, %115 : vector<32x128xf32>
    %cst_71 = arith.constant 0.000000e+00 : f32
    %134 = vector.broadcast %cst_71 : f32 to vector<32x128xf32>
    %135 = arith.maximumf %133, %134 : vector<32x128xf32>
    %c4 = arith.constant 4 : index
    %c0_72 = arith.constant 0 : index
    %c0_73 = arith.constant 0 : index
    %136 = vector.load %arg4[%c4, %c0_72, %c0_73] : memref<8x32x32xbf16, #tpu.memory_space<vmem>>, vector<1x32x32xbf16>
    %137 = vector.shape_cast %136 : vector<1x32x32xbf16> to vector<32x32xbf16>
    %c4_74 = arith.constant 4 : index
    %c0_75 = arith.constant 0 : index
    %c0_76 = arith.constant 0 : index
    %138 = vector.load %arg5[%c4_74, %c0_75, %c0_76] : memref<8x32x1xf32, #tpu.memory_space<vmem>>, vector<1x32x1xf32>
    %139 = vector.shape_cast %138 : vector<1x32x1xf32> to vector<32x1xf32>
    %140 = vector.shape_cast %139 : vector<32x1xf32> to vector<32x1xf32>
    %141 = vector.broadcast %140 : vector<32x1xf32> to vector<32x128xf32>
    %142 = arith.truncf %120 : vector<32x128xf32> to vector<32x128xbf16>
    %cst_77 = arith.constant dense<0.000000e+00> : vector<32x128xf32>
    %143 = tpu.matmul %137, %142, %cst_77 {dimension_numbers = #tpu.dot_dimension_numbers<[1], [0], [0], [1], [0, 0, 1, 1], [], []>} : vector<32x32xbf16>, vector<32x128xbf16>, vector<32x128xf32> -> vector<32x128xf32>
    %144 = arith.addf %143, %141 : vector<32x128xf32>
    %cst_78 = arith.constant 0.000000e+00 : f32
    %145 = vector.broadcast %cst_78 : f32 to vector<32x128xf32>
    %146 = arith.maximumf %144, %145 : vector<32x128xf32>
    %147 = arith.truncf %125 : vector<32x128xf32> to vector<32x128xbf16>
    %cst_79 = arith.constant dense<0.000000e+00> : vector<32x128xf32>
    %148 = tpu.matmul %137, %147, %cst_79 {dimension_numbers = #tpu.dot_dimension_numbers<[1], [0], [0], [1], [0, 0, 1, 1], [], []>} : vector<32x32xbf16>, vector<32x128xbf16>, vector<32x128xf32> -> vector<32x128xf32>
    %149 = arith.addf %148, %141 : vector<32x128xf32>
    %cst_80 = arith.constant 0.000000e+00 : f32
    %150 = vector.broadcast %cst_80 : f32 to vector<32x128xf32>
    %151 = arith.maximumf %149, %150 : vector<32x128xf32>
    %152 = arith.truncf %130 : vector<32x128xf32> to vector<32x128xbf16>
    %cst_81 = arith.constant dense<0.000000e+00> : vector<32x128xf32>
    %153 = tpu.matmul %137, %152, %cst_81 {dimension_numbers = #tpu.dot_dimension_numbers<[1], [0], [0], [1], [0, 0, 1, 1], [], []>} : vector<32x32xbf16>, vector<32x128xbf16>, vector<32x128xf32> -> vector<32x128xf32>
    %154 = arith.addf %153, %141 : vector<32x128xf32>
    %cst_82 = arith.constant 0.000000e+00 : f32
    %155 = vector.broadcast %cst_82 : f32 to vector<32x128xf32>
    %156 = arith.maximumf %154, %155 : vector<32x128xf32>
    %157 = arith.truncf %135 : vector<32x128xf32> to vector<32x128xbf16>
    %cst_83 = arith.constant dense<0.000000e+00> : vector<32x128xf32>
    %158 = tpu.matmul %137, %157, %cst_83 {dimension_numbers = #tpu.dot_dimension_numbers<[1], [0], [0], [1], [0, 0, 1, 1], [], []>} : vector<32x32xbf16>, vector<32x128xbf16>, vector<32x128xf32> -> vector<32x128xf32>
    %159 = arith.addf %158, %141 : vector<32x128xf32>
    %cst_84 = arith.constant 0.000000e+00 : f32
    %160 = vector.broadcast %cst_84 : f32 to vector<32x128xf32>
    %161 = arith.maximumf %159, %160 : vector<32x128xf32>
    %c5 = arith.constant 5 : index
    %c0_85 = arith.constant 0 : index
    %c0_86 = arith.constant 0 : index
    %162 = vector.load %arg4[%c5, %c0_85, %c0_86] : memref<8x32x32xbf16, #tpu.memory_space<vmem>>, vector<1x32x32xbf16>
    %163 = vector.shape_cast %162 : vector<1x32x32xbf16> to vector<32x32xbf16>
    %c5_87 = arith.constant 5 : index
    %c0_88 = arith.constant 0 : index
    %c0_89 = arith.constant 0 : index
    %164 = vector.load %arg5[%c5_87, %c0_88, %c0_89] : memref<8x32x1xf32, #tpu.memory_space<vmem>>, vector<1x32x1xf32>
    %165 = vector.shape_cast %164 : vector<1x32x1xf32> to vector<32x1xf32>
    %166 = vector.shape_cast %165 : vector<32x1xf32> to vector<32x1xf32>
    %167 = vector.broadcast %166 : vector<32x1xf32> to vector<32x128xf32>
    %168 = arith.truncf %146 : vector<32x128xf32> to vector<32x128xbf16>
    %cst_90 = arith.constant dense<0.000000e+00> : vector<32x128xf32>
    %169 = tpu.matmul %163, %168, %cst_90 {dimension_numbers = #tpu.dot_dimension_numbers<[1], [0], [0], [1], [0, 0, 1, 1], [], []>} : vector<32x32xbf16>, vector<32x128xbf16>, vector<32x128xf32> -> vector<32x128xf32>
    %170 = arith.addf %169, %167 : vector<32x128xf32>
    %cst_91 = arith.constant 0.000000e+00 : f32
    %171 = vector.broadcast %cst_91 : f32 to vector<32x128xf32>
    %172 = arith.maximumf %170, %171 : vector<32x128xf32>
    %173 = arith.truncf %151 : vector<32x128xf32> to vector<32x128xbf16>
    %cst_92 = arith.constant dense<0.000000e+00> : vector<32x128xf32>
    %174 = tpu.matmul %163, %173, %cst_92 {dimension_numbers = #tpu.dot_dimension_numbers<[1], [0], [0], [1], [0, 0, 1, 1], [], []>} : vector<32x32xbf16>, vector<32x128xbf16>, vector<32x128xf32> -> vector<32x128xf32>
    %175 = arith.addf %174, %167 : vector<32x128xf32>
    %cst_93 = arith.constant 0.000000e+00 : f32
    %176 = vector.broadcast %cst_93 : f32 to vector<32x128xf32>
    %177 = arith.maximumf %175, %176 : vector<32x128xf32>
    %178 = arith.truncf %156 : vector<32x128xf32> to vector<32x128xbf16>
    %cst_94 = arith.constant dense<0.000000e+00> : vector<32x128xf32>
    %179 = tpu.matmul %163, %178, %cst_94 {dimension_numbers = #tpu.dot_dimension_numbers<[1], [0], [0], [1], [0, 0, 1, 1], [], []>} : vector<32x32xbf16>, vector<32x128xbf16>, vector<32x128xf32> -> vector<32x128xf32>
    %180 = arith.addf %179, %167 : vector<32x128xf32>
    %cst_95 = arith.constant 0.000000e+00 : f32
    %181 = vector.broadcast %cst_95 : f32 to vector<32x128xf32>
    %182 = arith.maximumf %180, %181 : vector<32x128xf32>
    %183 = arith.truncf %161 : vector<32x128xf32> to vector<32x128xbf16>
    %cst_96 = arith.constant dense<0.000000e+00> : vector<32x128xf32>
    %184 = tpu.matmul %163, %183, %cst_96 {dimension_numbers = #tpu.dot_dimension_numbers<[1], [0], [0], [1], [0, 0, 1, 1], [], []>} : vector<32x32xbf16>, vector<32x128xbf16>, vector<32x128xf32> -> vector<32x128xf32>
    %185 = arith.addf %184, %167 : vector<32x128xf32>
    %cst_97 = arith.constant 0.000000e+00 : f32
    %186 = vector.broadcast %cst_97 : f32 to vector<32x128xf32>
    %187 = arith.maximumf %185, %186 : vector<32x128xf32>
    %c6 = arith.constant 6 : index
    %c0_98 = arith.constant 0 : index
    %c0_99 = arith.constant 0 : index
    %188 = vector.load %arg4[%c6, %c0_98, %c0_99] : memref<8x32x32xbf16, #tpu.memory_space<vmem>>, vector<1x32x32xbf16>
    %189 = vector.shape_cast %188 : vector<1x32x32xbf16> to vector<32x32xbf16>
    %c6_100 = arith.constant 6 : index
    %c0_101 = arith.constant 0 : index
    %c0_102 = arith.constant 0 : index
    %190 = vector.load %arg5[%c6_100, %c0_101, %c0_102] : memref<8x32x1xf32, #tpu.memory_space<vmem>>, vector<1x32x1xf32>
    %191 = vector.shape_cast %190 : vector<1x32x1xf32> to vector<32x1xf32>
    %192 = vector.shape_cast %191 : vector<32x1xf32> to vector<32x1xf32>
    %193 = vector.broadcast %192 : vector<32x1xf32> to vector<32x128xf32>
    %194 = arith.truncf %172 : vector<32x128xf32> to vector<32x128xbf16>
    %cst_103 = arith.constant dense<0.000000e+00> : vector<32x128xf32>
    %195 = tpu.matmul %189, %194, %cst_103 {dimension_numbers = #tpu.dot_dimension_numbers<[1], [0], [0], [1], [0, 0, 1, 1], [], []>} : vector<32x32xbf16>, vector<32x128xbf16>, vector<32x128xf32> -> vector<32x128xf32>
    %196 = arith.addf %195, %193 : vector<32x128xf32>
    %cst_104 = arith.constant 0.000000e+00 : f32
    %197 = vector.broadcast %cst_104 : f32 to vector<32x128xf32>
    %198 = arith.maximumf %196, %197 : vector<32x128xf32>
    %199 = arith.truncf %177 : vector<32x128xf32> to vector<32x128xbf16>
    %cst_105 = arith.constant dense<0.000000e+00> : vector<32x128xf32>
    %200 = tpu.matmul %189, %199, %cst_105 {dimension_numbers = #tpu.dot_dimension_numbers<[1], [0], [0], [1], [0, 0, 1, 1], [], []>} : vector<32x32xbf16>, vector<32x128xbf16>, vector<32x128xf32> -> vector<32x128xf32>
    %201 = arith.addf %200, %193 : vector<32x128xf32>
    %cst_106 = arith.constant 0.000000e+00 : f32
    %202 = vector.broadcast %cst_106 : f32 to vector<32x128xf32>
    %203 = arith.maximumf %201, %202 : vector<32x128xf32>
    %204 = arith.truncf %182 : vector<32x128xf32> to vector<32x128xbf16>
    %cst_107 = arith.constant dense<0.000000e+00> : vector<32x128xf32>
    %205 = tpu.matmul %189, %204, %cst_107 {dimension_numbers = #tpu.dot_dimension_numbers<[1], [0], [0], [1], [0, 0, 1, 1], [], []>} : vector<32x32xbf16>, vector<32x128xbf16>, vector<32x128xf32> -> vector<32x128xf32>
    %206 = arith.addf %205, %193 : vector<32x128xf32>
    %cst_108 = arith.constant 0.000000e+00 : f32
    %207 = vector.broadcast %cst_108 : f32 to vector<32x128xf32>
    %208 = arith.maximumf %206, %207 : vector<32x128xf32>
    %209 = arith.truncf %187 : vector<32x128xf32> to vector<32x128xbf16>
    %cst_109 = arith.constant dense<0.000000e+00> : vector<32x128xf32>
    %210 = tpu.matmul %189, %209, %cst_109 {dimension_numbers = #tpu.dot_dimension_numbers<[1], [0], [0], [1], [0, 0, 1, 1], [], []>} : vector<32x32xbf16>, vector<32x128xbf16>, vector<32x128xf32> -> vector<32x128xf32>
    %211 = arith.addf %210, %193 : vector<32x128xf32>
    %cst_110 = arith.constant 0.000000e+00 : f32
    %212 = vector.broadcast %cst_110 : f32 to vector<32x128xf32>
    %213 = arith.maximumf %211, %212 : vector<32x128xf32>
    %c7 = arith.constant 7 : index
    %c0_111 = arith.constant 0 : index
    %c0_112 = arith.constant 0 : index
    %214 = vector.load %arg4[%c7, %c0_111, %c0_112] : memref<8x32x32xbf16, #tpu.memory_space<vmem>>, vector<1x32x32xbf16>
    %215 = vector.shape_cast %214 : vector<1x32x32xbf16> to vector<32x32xbf16>
    %c7_113 = arith.constant 7 : index
    %c0_114 = arith.constant 0 : index
    %c0_115 = arith.constant 0 : index
    %216 = vector.load %arg5[%c7_113, %c0_114, %c0_115] : memref<8x32x1xf32, #tpu.memory_space<vmem>>, vector<1x32x1xf32>
    %217 = vector.shape_cast %216 : vector<1x32x1xf32> to vector<32x1xf32>
    %218 = vector.shape_cast %217 : vector<32x1xf32> to vector<32x1xf32>
    %219 = vector.broadcast %218 : vector<32x1xf32> to vector<32x128xf32>
    %220 = arith.truncf %198 : vector<32x128xf32> to vector<32x128xbf16>
    %cst_116 = arith.constant dense<0.000000e+00> : vector<32x128xf32>
    %221 = tpu.matmul %215, %220, %cst_116 {dimension_numbers = #tpu.dot_dimension_numbers<[1], [0], [0], [1], [0, 0, 1, 1], [], []>} : vector<32x32xbf16>, vector<32x128xbf16>, vector<32x128xf32> -> vector<32x128xf32>
    %222 = arith.addf %221, %219 : vector<32x128xf32>
    %cst_117 = arith.constant 0.000000e+00 : f32
    %223 = vector.broadcast %cst_117 : f32 to vector<32x128xf32>
    %224 = arith.maximumf %222, %223 : vector<32x128xf32>
    %225 = arith.truncf %203 : vector<32x128xf32> to vector<32x128xbf16>
    %cst_118 = arith.constant dense<0.000000e+00> : vector<32x128xf32>
    %226 = tpu.matmul %215, %225, %cst_118 {dimension_numbers = #tpu.dot_dimension_numbers<[1], [0], [0], [1], [0, 0, 1, 1], [], []>} : vector<32x32xbf16>, vector<32x128xbf16>, vector<32x128xf32> -> vector<32x128xf32>
    %227 = arith.addf %226, %219 : vector<32x128xf32>
    %cst_119 = arith.constant 0.000000e+00 : f32
    %228 = vector.broadcast %cst_119 : f32 to vector<32x128xf32>
    %229 = arith.maximumf %227, %228 : vector<32x128xf32>
    %230 = arith.truncf %208 : vector<32x128xf32> to vector<32x128xbf16>
    %cst_120 = arith.constant dense<0.000000e+00> : vector<32x128xf32>
    %231 = tpu.matmul %215, %230, %cst_120 {dimension_numbers = #tpu.dot_dimension_numbers<[1], [0], [0], [1], [0, 0, 1, 1], [], []>} : vector<32x32xbf16>, vector<32x128xbf16>, vector<32x128xf32> -> vector<32x128xf32>
    %232 = arith.addf %231, %219 : vector<32x128xf32>
    %cst_121 = arith.constant 0.000000e+00 : f32
    %233 = vector.broadcast %cst_121 : f32 to vector<32x128xf32>
    %234 = arith.maximumf %232, %233 : vector<32x128xf32>
    %235 = arith.truncf %213 : vector<32x128xf32> to vector<32x128xbf16>
    %cst_122 = arith.constant dense<0.000000e+00> : vector<32x128xf32>
    %236 = tpu.matmul %215, %235, %cst_122 {dimension_numbers = #tpu.dot_dimension_numbers<[1], [0], [0], [1], [0, 0, 1, 1], [], []>} : vector<32x32xbf16>, vector<32x128xbf16>, vector<32x128xf32> -> vector<32x128xf32>
    %237 = arith.addf %236, %219 : vector<32x128xf32>
    %cst_123 = arith.constant 0.000000e+00 : f32
    %238 = vector.broadcast %cst_123 : f32 to vector<32x128xf32>
    %239 = arith.maximumf %237, %238 : vector<32x128xf32>
    %240 = arith.truncf %224 : vector<32x128xf32> to vector<32x128xbf16>
    %cst_124 = arith.constant dense<0.000000e+00> : vector<1x128xf32>
    %241 = tpu.matmul %1, %240, %cst_124 {dimension_numbers = #tpu.dot_dimension_numbers<[1], [0], [0], [1], [0, 0, 1, 1], [], []>} : vector<1x32xbf16>, vector<32x128xbf16>, vector<1x128xf32> -> vector<1x128xf32>
    %242 = arith.addf %241, %7 : vector<1x128xf32>
    %c0_125 = arith.constant 0 : index
    %c0_126 = arith.constant 0 : index
    %243 = vector.load %arg8[%c0_125, %c0_126] : memref<1x512xf32, #tpu.memory_space<vmem>>, vector<1x128xf32>
    tpu.vector_store %arg8[%c0_125, %c0_126], %242 {strides = array<i32>} : memref<1x512xf32, #tpu.memory_space<vmem>>, vector<1x128xf32>,
    %244 = arith.truncf %229 : vector<32x128xf32> to vector<32x128xbf16>
    %cst_127 = arith.constant dense<0.000000e+00> : vector<1x128xf32>
    %245 = tpu.matmul %1, %244, %cst_127 {dimension_numbers = #tpu.dot_dimension_numbers<[1], [0], [0], [1], [0, 0, 1, 1], [], []>} : vector<1x32xbf16>, vector<32x128xbf16>, vector<1x128xf32> -> vector<1x128xf32>
    %246 = arith.addf %245, %7 : vector<1x128xf32>
    %c0_128 = arith.constant 0 : index
    %c128_129 = arith.constant 128 : index
    %247 = vector.load %arg8[%c0_128, %c128_129] : memref<1x512xf32, #tpu.memory_space<vmem>>, vector<1x128xf32>
    tpu.vector_store %arg8[%c0_128, %c128_129], %246 {strides = array<i32>} : memref<1x512xf32, #tpu.memory_space<vmem>>, vector<1x128xf32>,
    %248 = arith.truncf %234 : vector<32x128xf32> to vector<32x128xbf16>
    %cst_130 = arith.constant dense<0.000000e+00> : vector<1x128xf32>
    %249 = tpu.matmul %1, %248, %cst_130 {dimension_numbers = #tpu.dot_dimension_numbers<[1], [0], [0], [1], [0, 0, 1, 1], [], []>} : vector<1x32xbf16>, vector<32x128xbf16>, vector<1x128xf32> -> vector<1x128xf32>
    %250 = arith.addf %249, %7 : vector<1x128xf32>
    %c0_131 = arith.constant 0 : index
    %c256_132 = arith.constant 256 : index
    %251 = vector.load %arg8[%c0_131, %c256_132] : memref<1x512xf32, #tpu.memory_space<vmem>>, vector<1x128xf32>
    tpu.vector_store %arg8[%c0_131, %c256_132], %250 {strides = array<i32>} : memref<1x512xf32, #tpu.memory_space<vmem>>, vector<1x128xf32>,
    %252 = arith.truncf %239 : vector<32x128xf32> to vector<32x128xbf16>
    %cst_133 = arith.constant dense<0.000000e+00> : vector<1x128xf32>
    %253 = tpu.matmul %1, %252, %cst_133 {dimension_numbers = #tpu.dot_dimension_numbers<[1], [0], [0], [1], [0, 0, 1, 1], [], []>} : vector<1x32xbf16>, vector<32x128xbf16>, vector<1x128xf32> -> vector<1x128xf32>
    %254 = arith.addf %253, %7 : vector<1x128xf32>
    %c0_134 = arith.constant 0 : index
    %c384_135 = arith.constant 384 : index
    %255 = vector.load %arg8[%c0_134, %c384_135] : memref<1x512xf32, #tpu.memory_space<vmem>>, vector<1x128xf32>
    tpu.vector_store %arg8[%c0_134, %c384_135], %254 {strides = array<i32>} : memref<1x512xf32, #tpu.memory_space<vmem>>, vector<1x128xf32>,
    return
  }
  func.func @transform_0(%arg0: i32) -> (i32, i32) {
    %c0_i32 = arith.constant 0 : i32
    %c0_i32_0 = arith.constant 0 : i32
    return %c0_i32, %arg0 : i32, i32
  }
  func.func @transform_1(%arg0: i32) -> (i32, i32) {
    %c0_i32 = arith.constant 0 : i32
    %c0_i32_0 = arith.constant 0 : i32
    %c0_i32_1 = arith.constant 0 : i32
    return %c0_i32, %c0_i32_0 : i32, i32
  }
  func.func @transform_2(%arg0: i32) -> (i32, i32) {
    %c0_i32 = arith.constant 0 : i32
    %c0_i32_0 = arith.constant 0 : i32
    %c0_i32_1 = arith.constant 0 : i32
    return %c0_i32, %c0_i32_0 : i32, i32
  }
  func.func @transform_3(%arg0: i32) -> (i32, i32, i32) {
    %c0_i32 = arith.constant 0 : i32
    %c0_i32_0 = arith.constant 0 : i32
    %c0_i32_1 = arith.constant 0 : i32
    %c0_i32_2 = arith.constant 0 : i32
    return %c0_i32, %c0_i32_0, %c0_i32_1 : i32, i32, i32
  }
  func.func @transform_4(%arg0: i32) -> (i32, i32, i32) {
    %c0_i32 = arith.constant 0 : i32
    %c0_i32_0 = arith.constant 0 : i32
    %c0_i32_1 = arith.constant 0 : i32
    %c0_i32_2 = arith.constant 0 : i32
    return %c0_i32, %c0_i32_0, %c0_i32_1 : i32, i32, i32
  }
  func.func @transform_5(%arg0: i32) -> (i32, i32) {
    %c0_i32 = arith.constant 0 : i32
    %c0_i32_0 = arith.constant 0 : i32
    %c0_i32_1 = arith.constant 0 : i32
    return %c0_i32, %c0_i32_0 : i32, i32
  }
  func.func @transform_6(%arg0: i32) -> (i32, i32) {
    %c0_i32 = arith.constant 0 : i32
    %c0_i32_0 = arith.constant 0 : i32
    %c0_i32_1 = arith.constant 0 : i32
    return %c0_i32, %c0_i32_0 : i32, i32
  }
  func.func @transform_7(%arg0: i32) -> (i32, i32) {
    %c0_i32 = arith.constant 0 : i32
    %c0_i32_0 = arith.constant 0 : i32
    return %c0_i32, %arg0 : i32, i32
  }
}

</mosaic_0001>

<llo_original>
// kernel: tpu_custom_call.1
$region0: #{tpu_custom_call.1}
  #allocation0 [shape = 'u32[]', space=smem, size = 0x4, offset = 0x4, fixed_abs, tag = 'smem constant byte address 0x4 - core index']
  #allocation1 [shape = 'u32[144,128]{1,0:T(1,128)}', space=vmem, size = 0x12000, scoped, tag = 'internal scratch']
  #allocation2 [shape = 'f32[1,1]{1,0:T(1,128)S(1)}', space=vmem, size = 0x200, scoped, tag = 'scoped memory for tpu_custom_call.1']
  %s0 = inlined_call_operand.vmem [shape: f32[512,2], index: 0, kind: input, shape index: {}]
  %s1 = inlined_call_operand.vmem [shape: bf16[32,2], index: 1, kind: input, shape index: {}]
  %s2 = inlined_call_operand.vmem [shape: f32[32,1], index: 2, kind: input, shape index: {}]
  %s3 = inlined_call_operand.vmem [shape: bf16[8,32,32], index: 3, kind: input, shape index: {}]
  %s4 = inlined_call_operand.vmem [shape: f32[8,32,1], index: 4, kind: input, shape index: {}]
  %s5 = inlined_call_operand.vmem [shape: bf16[1,32], index: 5, kind: input, shape index: {}]
  %s6 = inlined_call_operand.<no memory space> [shape: f32[1,1], index: 6, kind: input, shape index: {}]
  %s7 = inlined_call_operand.hbm [shape: f32[1,512], index: 7, kind: output, shape index: {}]
  %s8 = sld [smem:[#allocation0]]
  $region38: #{tpu_custom_call.1} parent=0
    _
  %s10 = ssub.s32 1, %s8
  %s11 = scalar_select 0, %s10, %s8
  %v12 = vstv %s6
  %13 = vst [vmem:[#allocation2] sm:$0x1] %v12
  $region1: #{tpu_custom_call.1} parent=0
    #allocation3 [shape = 'u8[2048]{0}', space=vmem, size = 0x800, scoped, tag = 'output window, operand 0, single buffered']
    #allocation4 [shape = 's32[1]{0}', space=sflag, size = 0x4, scoped, tag = 'scoped memory for tpu_custom_call.1']
    %14 = vsyncpa [#allocation4], 0
    // Predicated region
    $region2: #{tpu_custom_call.1} parent=1 // pred_check
      _
    $region3: #{tpu_custom_call.1} parent=1 // pred_check_branch
      %16 = sbr.rel (0) target = $region5
    $region4: #{tpu_custom_call.1} parent=1 // pred_region
      _
    $region5: #{tpu_custom_call.1} parent=1 // pred_fallthru
      _
    // Predicated region
    $region6: #{tpu_custom_call.1} parent=1 // pred_check
      _
    $region7: #{tpu_custom_call.1} parent=1 // pred_check_branch
      %18 = sbr.rel (0) target = $region9
    $region8: #{tpu_custom_call.1} parent=1 // pred_region
      _
    $region9: #{tpu_custom_call.1} parent=1 // pred_fallthru
      _
    // Predicated region
    $region10: #{tpu_custom_call.1} parent=1 // pred_check
      _
    $region11: #{tpu_custom_call.1} parent=1 // pred_check_branch
      %20 = sbr.rel (0) target = $region13
    $region12: #{tpu_custom_call.1} parent=1 // pred_region
      _
    $region13: #{tpu_custom_call.1} parent=1 // pred_fallthru
      _
    // Predicated region
    $region14: #{tpu_custom_call.1} parent=1 // pred_check
      _
    $region15: #{tpu_custom_call.1} parent=1 // pred_check_branch
      %22 = sbr.rel (0) target = $region17
    $region16: #{tpu_custom_call.1} parent=1 // pred_region
      _
    $region17: #{tpu_custom_call.1} parent=1 // pred_fallthru
      _
    // Predicated region
    $region18: #{tpu_custom_call.1} parent=1 // pred_check
      _
    $region19: #{tpu_custom_call.1} parent=1 // pred_check_branch
      %24 = sbr.rel (0) target = $region21
    $region20: #{tpu_custom_call.1} parent=1 // pred_region
      _
    $region21: #{tpu_custom_call.1} parent=1 // pred_fallthru
      _
    // Predicated region
    $region22: #{tpu_custom_call.1} parent=1 // pred_check
      _
    $region23: #{tpu_custom_call.1} parent=1 // pred_check_branch
      %26 = sbr.rel (0) target = $region25
    $region24: #{tpu_custom_call.1} parent=1 // pred_region
      _
    $region25: #{tpu_custom_call.1} parent=1 // pred_fallthru
      _
    // Predicated region
    $region26: #{tpu_custom_call.1} parent=1 // pred_check
      _
    $region27: #{tpu_custom_call.1} parent=1 // pred_check_branch
      %28 = sbr.rel (0) target = $region29
    $region28: #{tpu_custom_call.1} parent=1 // pred_region
      _
    $region29: #{tpu_custom_call.1} parent=1 // pred_fallthru
      _
    %v30 = vld [vmem:[%s1] sm:$0xf]
    %v31 = vld [vmem:[%s1 + $0x4] sm:$0xf]
    %v32 = vld [vmem:[%s1 + $0x8] sm:$0xf]
    %v33 = vld [vmem:[%s1 + $0xc] sm:$0xf]
    %v34 = vld [vmem:[%s5] sm:$0x1]
    %v35 = vld [vmem:[%s2] sm:$0xff]
    %v36 = vld [vmem:[%s2 + $0x8] sm:$0xff]
    %v37 = vld [vmem:[%s2 + $0x10] sm:$0xff]
    %v38 = vld [vmem:[%s2 + $0x18] sm:$0xff]
    %40 = vset.pattern.permute.xlu0 0
    %41 = vperm.xlu0 %40, %v35
    %v42 = vpop.permute.xlu0 %41
    %45 = vset.pattern.permute.xlu0 0
    %46 = vperm.xlu0 %45, %v36
    %v47 = vpop.permute.xlu0 %46
    %50 = vset.pattern.permute.xlu0 0
    %51 = vperm.xlu0 %50, %v37
    %v52 = vpop.permute.xlu0 %51
    %55 = vset.pattern.permute.xlu0 0
    %56 = vperm.xlu0 %55, %v38
    %v57 = vpop.permute.xlu0 %56
    %v59 = vld [vmem:[#allocation2] sm:$0x1]
    %61 = vset.pattern.permute.xlu0 0
    %62 = vperm.xlu0 %61, %v59
    %v63 = vpop.permute.xlu0 %62
    %v65 = vlaneseq
    %v66 = vshrl.u32 %v65, 7
    %v67 = vsub.s32 0, %v66
    %v68 = vrot.slane %v63, %v67
    %v69 = vld [vmem:[%s0] sm:$0xff]
    %v70 = vld [vmem:[%s0 + $0x8] sm:$0xff]
    %v71 = vld [vmem:[%s0 + $0x10] sm:$0xff]
    %v72 = vld [vmem:[%s0 + $0x18] sm:$0xff]
    %v73 = vld [vmem:[%s0 + $0x20] sm:$0xff]
    %v74 = vld [vmem:[%s0 + $0x28] sm:$0xff]
    %v75 = vld [vmem:[%s0 + $0x30] sm:$0xff]
    %v76 = vld [vmem:[%s0 + $0x38] sm:$0xff]
    %v77 = vld [vmem:[%s0 + $0x40] sm:$0xff]
    %v78 = vld [vmem:[%s0 + $0x48] sm:$0xff]
    %v79 = vld [vmem:[%s0 + $0x50] sm:$0xff]
    %v80 = vld [vmem:[%s0 + $0x58] sm:$0xff]
    %v81 = vld [vmem:[%s0 + $0x60] sm:$0xff]
    %v82 = vld [vmem:[%s0 + $0x68] sm:$0xff]
    %v83 = vld [vmem:[%s0 + $0x70] sm:$0xff]
    %v84 = vld [vmem:[%s0 + $0x78] sm:$0xff]
    %v85 = vpack.c.bf16 %v70, %v69
    %v86 = vpack.c.bf16 %v72, %v71
    %v87 = vpack.c.bf16 %v74, %v73
    %v88 = vpack.c.bf16 %v76, %v75
    %v89 = vpack.c.bf16 %v78, %v77
    %v90 = vpack.c.bf16 %v80, %v79
    %v91 = vpack.c.bf16 %v82, %v81
    %v92 = vpack.c.bf16 %v84, %v83
    %v97 = vunpack.c.l.b16 %v30
    %v98 = vunpack.c.l.b16 %v31
    %v99 = vunpack.c.l.b16 %v32
    %v100 = vunpack.c.l.b16 %v33
    %v101 = vpack.c.b16 %v98, %v97
    %v102 = vpack.c.b16 %v100, %v99
    %vm103 = vcmask 15360
    %v105 = vsel %vm103, %v101, 0
    %v108 = vsel %vm103, %v102, 0
    %v111 = vsel %vm103, %v85, 0
    %v114 = vsel %vm103, %v86, 0
    %v117 = vsel %vm103, %v87, 0
    %v120 = vsel %vm103, %v88, 0
    %v123 = vsel %vm103, %v89, 0
    %v126 = vsel %vm103, %v90, 0
    %v129 = vsel %vm103, %v91, 0
    %v132 = vsel %vm103, %v92, 0
    %134 = vmatprep.subr.bf16.mxu0 0
    %135 = vmatpush1.bf16.xpose.msra.mxu0 %v132
    %136 = vmatprep.subr.bf16.mxu0 0
    %137 = vmatpush1.bf16.xpose.msra.mxu0 %v129
    %138 = vmatprep.subr.bf16.mxu0 0
    %139 = vmatpush1.bf16.xpose.msra.mxu0 %v126
    %140 = vmatprep.subr.bf16.mxu0 0
    %141 = vmatpush1.bf16.xpose.msra.mxu0 %v123
    %142 = vmatprep.subr.bf16.mxu0 0
    %143 = vmatpush1.bf16.xpose.msra.mxu0 %v120
    %144 = vmatprep.subr.bf16.mxu0 0
    %145 = vmatpush1.bf16.xpose.msra.mxu0 %v117
    %146 = vmatprep.subr.bf16.mxu0 0
    %147 = vmatpush1.bf16.xpose.msra.mxu0 %v114
    %148 = vmatprep.subr.bf16.mxu0 0
    %149 = vmatpush1.bf16.xpose.msra.mxu0 %v111
    %150 = vmatprep.subr.bf16.mxu0 0
    %151 = vmatpush2.bf16.xpose.msra.mxu0 0
    %152 = vmatprep.subr.bf16.mxu0 0
    %153 = vmatpush2.bf16.xpose.msra.mxu0 0
    %154 = vmatprep.subr.bf16.mxu0 0
    %155 = vmatpush2.bf16.xpose.msra.mxu0 0
    %156 = vmatprep.subr.bf16.mxu0 0
    %157 = vmatpush2.bf16.xpose.msra.mxu0 0
    %158 = vmatprep.subr.bf16.mxu0 0
    %159 = vmatpush2.bf16.xpose.msra.mxu0 0
    %160 = vmatprep.subr.bf16.mxu0 0
    %161 = vmatpush2.bf16.xpose.msra.mxu0 0
    %162 = vmatprep.subr.bf16.mxu0 0
    %163 = vmatpush2.bf16.xpose.msra.mxu0 0
    %164 = vmatprep.subr.bf16.mxu0 0
    %165 = vmatpush2.bf16.xpose.msra.mxu0 0
    %166 = vmatprep.mubr.bf16.mxu0 0
    %167 = vmatmul.mubr.bf16.gmra.mxu0 %v105
    %v168 = vpop.f32.mrf.mxu0
    %v169 = vadd.f32 %v42, %v168
    %v170 = vpop.f32.mrf.mxu0
    %v171 = vpop.f32.mrf.mxu0
    %v172 = vadd.f32 %v47, %v171
    %v173 = vpop.f32.mrf.mxu0
    %174 = vmatprep.mubr.bf16.mxu0 0
    %175 = vmatmul.mubr.bf16.gmra.mxu0 %v108
    %v176 = vpop.f32.mrf.mxu0
    %v177 = vadd.f32 %v52, %v176
    %v178 = vpop.f32.mrf.mxu0
    %v179 = vpop.f32.mrf.mxu0
    %v180 = vadd.f32 %v57, %v179
    %v181 = vpop.f32.mrf.mxu0
    %182 = vdwg.mxu0
    %v183 = vmax.f32 %v169, 0.0
    %v184 = vmax.f32 %v172, 0.0
    %v185 = vmax.f32 %v177, 0.0
    %v186 = vmax.f32 %v180, 0.0
    %v187 = vld [vmem:[%s0 + $0x80] sm:$0xff]
    %v188 = vld [vmem:[%s0 + $0x88] sm:$0xff]
    %v189 = vld [vmem:[%s0 + $0x90] sm:$0xff]
    %v190 = vld [vmem:[%s0 + $0x98] sm:$0xff]
    %v191 = vld [vmem:[%s0 + $0xa0] sm:$0xff]
    %v192 = vld [vmem:[%s0 + $0xa8] sm:$0xff]
    %v193 = vld [vmem:[%s0 + $0xb0] sm:$0xff]
    %v194 = vld [vmem:[%s0 + $0xb8] sm:$0xff]
    %v195 = vld [vmem:[%s0 + $0xc0] sm:$0xff]
    %v196 = vld [vmem:[%s0 + $0xc8] sm:$0xff]
    %v197 = vld [vmem:[%s0 + $0xd0] sm:$0xff]
    %v198 = vld [vmem:[%s0 + $0xd8] sm:$0xff]
    %v199 = vld [vmem:[%s0 + $0xe0] sm:$0xff]
    %v200 = vld [vmem:[%s0 + $0xe8] sm:$0xff]
    %v201 = vld [vmem:[%s0 + $0xf0] sm:$0xff]
    %v202 = vld [vmem:[%s0 + $0xf8] sm:$0xff]
    %v203 = vpack.c.bf16 %v188, %v187
    %v204 = vpack.c.bf16 %v190, %v189
    %v205 = vpack.c.bf16 %v192, %v191
    %v206 = vpack.c.bf16 %v194, %v193
    %v207 = vpack.c.bf16 %v196, %v195
    %v208 = vpack.c.bf16 %v198, %v197
    %v209 = vpack.c.bf16 %v200, %v199
    %v210 = vpack.c.bf16 %v202, %v201
    %v212 = vsel %vm103, %v203, 0
    %v215 = vsel %vm103, %v204, 0
    %v218 = vsel %vm103, %v205, 0
    %v221 = vsel %vm103, %v206, 0
    %v224 = vsel %vm103, %v207, 0
    %v227 = vsel %vm103, %v208, 0
    %v230 = vsel %vm103, %v209, 0
    %v233 = vsel %vm103, %v210, 0
    %235 = vmatprep.subr.bf16.mxu0 0
    %236 = vmatpush1.bf16.xpose.msra.mxu0 %v233
    %237 = vmatprep.subr.bf16.mxu0 0
    %238 = vmatpush1.bf16.xpose.msra.mxu0 %v230
    %239 = vmatprep.subr.bf16.mxu0 0
    %240 = vmatpush1.bf16.xpose.msra.mxu0 %v227
    %241 = vmatprep.subr.bf16.mxu0 0
    %242 = vmatpush1.bf16.xpose.msra.mxu0 %v224
    %243 = vmatprep.subr.bf16.mxu0 0
    %244 = vmatpush1.bf16.xpose.msra.mxu0 %v221
    %245 = vmatprep.subr.bf16.mxu0 0
    %246 = vmatpush1.bf16.xpose.msra.mxu0 %v218
    %247 = vmatprep.subr.bf16.mxu0 0
    %248 = vmatpush1.bf16.xpose.msra.mxu0 %v215
    %249 = vmatprep.subr.bf16.mxu0 0
    %250 = vmatpush1.bf16.xpose.msra.mxu0 %v212
    %251 = vmatprep.subr.bf16.mxu0 0
    %252 = vmatpush2.bf16.xpose.msra.mxu0 0
    %253 = vmatprep.subr.bf16.mxu0 0
    %254 = vmatpush2.bf16.xpose.msra.mxu0 0
    %255 = vmatprep.subr.bf16.mxu0 0
    %256 = vmatpush2.bf16.xpose.msra.mxu0 0
    %257 = vmatprep.subr.bf16.mxu0 0
    %258 = vmatpush2.bf16.xpose.msra.mxu0 0
    %259 = vmatprep.subr.bf16.mxu0 0
    %260 = vmatpush2.bf16.xpose.msra.mxu0 0
    %261 = vmatprep.subr.bf16.mxu0 0
    %262 = vmatpush2.bf16.xpose.msra.mxu0 0
    %263 = vmatprep.subr.bf16.mxu0 0
    %264 = vmatpush2.bf16.xpose.msra.mxu0 0
    %265 = vmatprep.subr.bf16.mxu0 0
    %266 = vmatpush2.bf16.xpose.msra.mxu0 0
    %267 = vmatprep.mubr.bf16.mxu0 0
    %268 = vmatmul.mubr.bf16.gmra.mxu0 %v105
    %v269 = vpop.f32.mrf.mxu0
    %v270 = vadd.f32 %v42, %v269
    %v271 = vpop.f32.mrf.mxu0
    %v272 = vpop.f32.mrf.mxu0
    %v273 = vadd.f32 %v47, %v272
    %v274 = vpop.f32.mrf.mxu0
    %275 = vmatprep.mubr.bf16.mxu0 0
    %276 = vmatmul.mubr.bf16.gmra.mxu0 %v108
    %v277 = vpop.f32.mrf.mxu0
    %v278 = vadd.f32 %v52, %v277
    %v279 = vpop.f32.mrf.mxu0
    %v280 = vpop.f32.mrf.mxu0
    %v281 = vadd.f32 %v57, %v280
    %v282 = vpop.f32.mrf.mxu0
    %283 = vdwg.mxu0
    %v284 = vmax.f32 %v270, 0.0
    %v285 = vmax.f32 %v273, 0.0
    %v286 = vmax.f32 %v278, 0.0
    %v287 = vmax.f32 %v281, 0.0
    %v288 = vld [vmem:[%s0 + $0x100] sm:$0xff]
    %v289 = vld [vmem:[%s0 + $0x108] sm:$0xff]
    %v290 = vld [vmem:[%s0 + $0x110] sm:$0xff]
    %v291 = vld [vmem:[%s0 + $0x118] sm:$0xff]
    %v292 = vld [vmem:[%s0 + $0x120] sm:$0xff]
    %v293 = vld [vmem:[%s0 + $0x128] sm:$0xff]
    %v294 = vld [vmem:[%s0 + $0x130] sm:$0xff]
    %v295 = vld [vmem:[%s0 + $0x138] sm:$0xff]
    %v296 = vld [vmem:[%s0 + $0x140] sm:$0xff]
    %v297 = vld [vmem:[%s0 + $0x148] sm:$0xff]
    %v298 = vld [vmem:[%s0 + $0x150] sm:$0xff]
    %v299 = vld [vmem:[%s0 + $0x158] sm:$0xff]
    %v300 = vld [vmem:[%s0 + $0x160] sm:$0xff]
    %v301 = vld [vmem:[%s0 + $0x168] sm:$0xff]
    %v302 = vld [vmem:[%s0 + $0x170] sm:$0xff]
    %v303 = vld [vmem:[%s0 + $0x178] sm:$0xff]
    %v304 = vpack.c.bf16 %v289, %v288
    %v305 = vpack.c.bf16 %v291, %v290
    %v306 = vpack.c.bf16 %v293, %v292
    %v307 = vpack.c.bf16 %v295, %v294
    %v308 = vpack.c.bf16 %v297, %v296
    %v309 = vpack.c.bf16 %v299, %v298
    %v310 = vpack.c.bf16 %v301, %v300
    %v311 = vpack.c.bf16 %v303, %v302
    %v313 = vsel %vm103, %v304, 0
    %v316 = vsel %vm103, %v305, 0
    %v319 = vsel %vm103, %v306, 0
    %v322 = vsel %vm103, %v307, 0
    %v325 = vsel %vm103, %v308, 0
    %v328 = vsel %vm103, %v309, 0
    %v331 = vsel %vm103, %v310, 0
    %v334 = vsel %vm103, %v311, 0
    %336 = vmatprep.subr.bf16.mxu0 0
    %337 = vmatpush1.bf16.xpose.msra.mxu0 %v334
    %338 = vmatprep.subr.bf16.mxu0 0
    %339 = vmatpush1.bf16.xpose.msra.mxu0 %v331
    %340 = vmatprep.subr.bf16.mxu0 0
    %341 = vmatpush1.bf16.xpose.msra.mxu0 %v328
    %342 = vmatprep.subr.bf16.mxu0 0
    %343 = vmatpush1.bf16.xpose.msra.mxu0 %v325
    %344 = vmatprep.subr.bf16.mxu0 0
    %345 = vmatpush1.bf16.xpose.msra.mxu0 %v322
    %346 = vmatprep.subr.bf16.mxu0 0
    %347 = vmatpush1.bf16.xpose.msra.mxu0 %v319
    %348 = vmatprep.subr.bf16.mxu0 0
    %349 = vmatpush1.bf16.xpose.msra.mxu0 %v316
    %350 = vmatprep.subr.bf16.mxu0 0
    %351 = vmatpush1.bf16.xpose.msra.mxu0 %v313
    %352 = vmatprep.subr.bf16.mxu0 0
    %353 = vmatpush2.bf16.xpose.msra.mxu0 0
    %354 = vmatprep.subr.bf16.mxu0 0
    %355 = vmatpush2.bf16.xpose.msra.mxu0 0
    %356 = vmatprep.subr.bf16.mxu0 0
    %357 = vmatpush2.bf16.xpose.msra.mxu0 0
    %358 = vmatprep.subr.bf16.mxu0 0
    %359 = vmatpush2.bf16.xpose.msra.mxu0 0
    %360 = vmatprep.subr.bf16.mxu0 0
    %361 = vmatpush2.bf16.xpose.msra.mxu0 0
    %362 = vmatprep.subr.bf16.mxu0 0
    %363 = vmatpush2.bf16.xpose.msra.mxu0 0
    %364 = vmatprep.subr.bf16.mxu0 0
    %365 = vmatpush2.bf16.xpose.msra.mxu0 0
    %366 = vmatprep.subr.bf16.mxu0 0
    %367 = vmatpush2.bf16.xpose.msra.mxu0 0
    %368 = vmatprep.mubr.bf16.mxu0 0
    %369 = vmatmul.mubr.bf16.gmra.mxu0 %v105
    %v370 = vpop.f32.mrf.mxu0
    %v371 = vadd.f32 %v42, %v370
    %v372 = vpop.f32.mrf.mxu0
    %v373 = vpop.f32.mrf.mxu0
    %v374 = vadd.f32 %v47, %v373
    %v375 = vpop.f32.mrf.mxu0
    %376 = vmatprep.mubr.bf16.mxu0 0
    %377 = vmatmul.mubr.bf16.gmra.mxu0 %v108
    %v378 = vpop.f32.mrf.mxu0
    %v379 = vadd.f32 %v52, %v378
    %v380 = vpop.f32.mrf.mxu0
    %v381 = vpop.f32.mrf.mxu0
    %v382 = vadd.f32 %v57, %v381
    %v383 = vpop.f32.mrf.mxu0
    %384 = vdwg.mxu0
    %v385 = vmax.f32 %v371, 0.0
    %v386 = vmax.f32 %v374, 0.0
    %v387 = vmax.f32 %v379, 0.0
    %v388 = vmax.f32 %v382, 0.0
    %v389 = vld [vmem:[%s0 + $0x180] sm:$0xff]
    %v390 = vld [vmem:[%s0 + $0x188] sm:$0xff]
    %v391 = vld [vmem:[%s0 + $0x190] sm:$0xff]
    %v392 = vld [vmem:[%s0 + $0x198] sm:$0xff]
    %v393 = vld [vmem:[%s0 + $0x1a0] sm:$0xff]
    %v394 = vld [vmem:[%s0 + $0x1a8] sm:$0xff]
    %v395 = vld [vmem:[%s0 + $0x1b0] sm:$0xff]
    %v396 = vld [vmem:[%s0 + $0x1b8] sm:$0xff]
    %v397 = vld [vmem:[%s0 + $0x1c0] sm:$0xff]
    %v398 = vld [vmem:[%s0 + $0x1c8] sm:$0xff]
    %v399 = vld [vmem:[%s0 + $0x1d0] sm:$0xff]
    %v400 = vld [vmem:[%s0 + $0x1d8] sm:$0xff]
    %v401 = vld [vmem:[%s0 + $0x1e0] sm:$0xff]
    %v402 = vld [vmem:[%s0 + $0x1e8] sm:$0xff]
    %v403 = vld [vmem:[%s0 + $0x1f0] sm:$0xff]
    %v404 = vld [vmem:[%s0 + $0x1f8] sm:$0xff]
    %v405 = vpack.c.bf16 %v390, %v389
    %v406 = vpack.c.bf16 %v392, %v391
    %v407 = vpack.c.bf16 %v394, %v393
    %v408 = vpack.c.bf16 %v396, %v395
    %v409 = vpack.c.bf16 %v398, %v397
    %v410 = vpack.c.bf16 %v400, %v399
    %v411 = vpack.c.bf16 %v402, %v401
    %v412 = vpack.c.bf16 %v404, %v403
    %v414 = vsel %vm103, %v405, 0
    %v417 = vsel %vm103, %v406, 0
    %v420 = vsel %vm103, %v407, 0
    %v423 = vsel %vm103, %v408, 0
    %v426 = vsel %vm103, %v409, 0
    %v429 = vsel %vm103, %v410, 0
    %v432 = vsel %vm103, %v411, 0
    %v435 = vsel %vm103, %v412, 0
    %437 = vmatprep.subr.bf16.mxu0 0
    %438 = vmatpush1.bf16.xpose.msra.mxu0 %v435
    %439 = vmatprep.subr.bf16.mxu0 0
    %440 = vmatpush1.bf16.xpose.msra.mxu0 %v432
    %441 = vmatprep.subr.bf16.mxu0 0
    %442 = vmatpush1.bf16.xpose.msra.mxu0 %v429
    %443 = vmatprep.subr.bf16.mxu0 0
    %444 = vmatpush1.bf16.xpose.msra.mxu0 %v426
    %445 = vmatprep.subr.bf16.mxu0 0
    %446 = vmatpush1.bf16.xpose.msra.mxu0 %v423
    %447 = vmatprep.subr.bf16.mxu0 0
    %448 = vmatpush1.bf16.xpose.msra.mxu0 %v420
    %449 = vmatprep.subr.bf16.mxu0 0
    %450 = vmatpush1.bf16.xpose.msra.mxu0 %v417
    %451 = vmatprep.subr.bf16.mxu0 0
    %452 = vmatpush1.bf16.xpose.msra.mxu0 %v414
    %453 = vmatprep.subr.bf16.mxu0 0
    %454 = vmatpush2.bf16.xpose.msra.mxu0 0
    %455 = vmatprep.subr.bf16.mxu0 0
    %456 = vmatpush2.bf16.xpose.msra.mxu0 0
    %457 = vmatprep.subr.bf16.mxu0 0
    %458 = vmatpush2.bf16.xpose.msra.mxu0 0
    %459 = vmatprep.subr.bf16.mxu0 0
    %460 = vmatpush2.bf16.xpose.msra.mxu0 0
    %461 = vmatprep.subr.bf16.mxu0 0
    %462 = vmatpush2.bf16.xpose.msra.mxu0 0
    %463 = vmatprep.subr.bf16.mxu0 0
    %464 = vmatpush2.bf16.xpose.msra.mxu0 0
    %465 = vmatprep.subr.bf16.mxu0 0
    %466 = vmatpush2.bf16.xpose.msra.mxu0 0
    %467 = vmatprep.subr.bf16.mxu0 0
    %468 = vmatpush2.bf16.xpose.msra.mxu0 0
    %469 = vmatprep.mubr.bf16.mxu0 0
    %470 = vmatmul.mubr.bf16.gmra.mxu0 %v105
    %v471 = vpop.f32.mrf.mxu0
    %v472 = vadd.f32 %v42, %v471
    %v473 = vpop.f32.mrf.mxu0
    %v474 = vpop.f32.mrf.mxu0
    %v475 = vadd.f32 %v47, %v474
    %v476 = vpop.f32.mrf.mxu0
    %477 = vmatprep.mubr.bf16.mxu0 0
    %478 = vmatmul.mubr.bf16.gmra.mxu0 %v108
    %v479 = vpop.f32.mrf.mxu0
    %v480 = vadd.f32 %v52, %v479
    %v481 = vpop.f32.mrf.mxu0
    %v482 = vpop.f32.mrf.mxu0
    %v483 = vadd.f32 %v57, %v482
    %v484 = vpop.f32.mrf.mxu0
    %485 = vdwg.mxu0
    %v486 = vmax.f32 %v472, 0.0
    %v487 = vmax.f32 %v475, 0.0
    %v488 = vmax.f32 %v480, 0.0
    %v489 = vmax.f32 %v483, 0.0
    %v490 = vld [vmem:[%s3] sm:$0xf]
    %v491 = vld [vmem:[%s3 + $0x4] sm:$0xf]
    %v492 = vld [vmem:[%s3 + $0x8] sm:$0xf]
    %v493 = vld [vmem:[%s3 + $0xc] sm:$0xf]
    %v494 = vld [vmem:[%s4] sm:$0xff]
    %v495 = vld [vmem:[%s4 + $0x8] sm:$0xff]
    %v496 = vld [vmem:[%s4 + $0x10] sm:$0xff]
    %v497 = vld [vmem:[%s4 + $0x18] sm:$0xff]
    %499 = vset.pattern.permute.xlu0 0
    %500 = vperm.xlu0 %499, %v494
    %v501 = vpop.permute.xlu0 %500
    %504 = vset.pattern.permute.xlu0 0
    %505 = vperm.xlu0 %504, %v495
    %v506 = vpop.permute.xlu0 %505
    %509 = vset.pattern.permute.xlu0 0
    %510 = vperm.xlu0 %509, %v496
    %v511 = vpop.permute.xlu0 %510
    %514 = vset.pattern.permute.xlu0 0
    %515 = vperm.xlu0 %514, %v497
    %v516 = vpop.permute.xlu0 %515
    %v518 = vpack.c.bf16 %v184, %v183
    %v519 = vpack.c.bf16 %v186, %v185
    %v524 = vunpack.c.l.b16 %v490
    %v525 = vunpack.c.l.b16 %v491
    %v526 = vunpack.c.l.b16 %v492
    %v527 = vunpack.c.l.b16 %v493
    %v528 = vpack.c.b16 %v525, %v524
    %v529 = vpack.c.b16 %v527, %v526
    %vm530 = vcmask 261120
    %v532 = vsel %vm530, %v528, 0
    %v535 = vsel %vm530, %v529, 0
    %537 = vmatprep.subr.bf16.mxu0 0
    %538 = vmatpush1.bf16.msra.mxu0 0
    %539 = vmatprep.subr.bf16.mxu0 0
    %540 = vmatpush1.bf16.msra.mxu0 0
    %541 = vmatprep.subr.bf16.mxu0 0
    %542 = vmatpush1.bf16.msra.mxu0 0
    %543 = vmatprep.subr.bf16.mxu0 0
    %544 = vmatpush1.bf16.msra.mxu0 0
    %545 = vmatprep.subr.bf16.mxu0 0
    %546 = vmatpush1.bf16.msra.mxu0 0
    %547 = vmatprep.subr.bf16.mxu0 0
    %548 = vmatpush1.bf16.msra.mxu0 0
    %549 = vmatprep.subr.bf16.mxu0 0
    %550 = vmatpush1.bf16.msra.mxu0 %v519
    %551 = vmatprep.subr.bf16.mxu0 0
    %552 = vmatpush1.bf16.msra.mxu0 %v518
    %553 = vmatprep.subr.bf16.mxu0 0
    %554 = vmatpush2.bf16.msra.mxu0 0
    %555 = vmatprep.subr.bf16.mxu0 0
    %556 = vmatpush2.bf16.msra.mxu0 0
    %557 = vmatprep.subr.bf16.mxu0 0
    %558 = vmatpush2.bf16.msra.mxu0 0
    %559 = vmatprep.subr.bf16.mxu0 0
    %560 = vmatpush2.bf16.msra.mxu0 0
    %561 = vmatprep.subr.bf16.mxu0 0
    %562 = vmatpush2.bf16.msra.mxu0 0
    %563 = vmatprep.subr.bf16.mxu0 0
    %564 = vmatpush2.bf16.msra.mxu0 0
    %565 = vmatprep.subr.bf16.mxu0 0
    %566 = vmatpush2.bf16.msra.mxu0 0
    %567 = vmatprep.subr.bf16.mxu0 0
    %568 = vmatpush2.bf16.msra.mxu0 0
    %569 = vmatprep.mubr.bf16.mxu0 0
    %570 = vmatmul.mubr.bf16.gmra.mxu0 %v532
    %v571 = vpop.f32.mrf.mxu0
    %v572 = vadd.f32 %v501, %v571
    %v573 = vpop.f32.mrf.mxu0
    %v574 = vpop.f32.mrf.mxu0
    %v575 = vadd.f32 %v506, %v574
    %v576 = vpop.f32.mrf.mxu0
    %577 = vmatprep.mubr.bf16.mxu0 0
    %578 = vmatmul.mubr.bf16.gmra.mxu0 %v535
    %v579 = vpop.f32.mrf.mxu0
    %v580 = vadd.f32 %v511, %v579
    %v581 = vpop.f32.mrf.mxu0
    %v582 = vpop.f32.mrf.mxu0
    %v583 = vadd.f32 %v516, %v582
    %v584 = vpop.f32.mrf.mxu0
    %585 = vdwg.mxu0
    %v586 = vmax.f32 %v572, 0.0
    %v587 = vmax.f32 %v575, 0.0
    %v588 = vmax.f32 %v580, 0.0
    %v589 = vmax.f32 %v583, 0.0
    %v590 = vpack.c.bf16 %v285, %v284
    %v591 = vpack.c.bf16 %v287, %v286
    %592 = vmatprep.subr.bf16.mxu0 0
    %593 = vmatpush1.bf16.msra.mxu0 0
    %594 = vmatprep.subr.bf16.mxu0 0
    %595 = vmatpush1.bf16.msra.mxu0 0
    %596 = vmatprep.subr.bf16.mxu0 0
    %597 = vmatpush1.bf16.msra.mxu0 0
    %598 = vmatprep.subr.bf16.mxu0 0
    %599 = vmatpush1.bf16.msra.mxu0 0
    %600 = vmatprep.subr.bf16.mxu0 0
    %601 = vmatpush1.bf16.msra.mxu0 0
    %602 = vmatprep.subr.bf16.mxu0 0
    %603 = vmatpush1.bf16.msra.mxu0 0
    %604 = vmatprep.subr.bf16.mxu0 0
    %605 = vmatpush1.bf16.msra.mxu0 %v591
    %606 = vmatprep.subr.bf16.mxu0 0
    %607 = vmatpush1.bf16.msra.mxu0 %v590
    %608 = vmatprep.subr.bf16.mxu0 0
    %609 = vmatpush2.bf16.msra.mxu0 0
    %610 = vmatprep.subr.bf16.mxu0 0
    %611 = vmatpush2.bf16.msra.mxu0 0
    %612 = vmatprep.subr.bf16.mxu0 0
    %613 = vmatpush2.bf16.msra.mxu0 0
    %614 = vmatprep.subr.bf16.mxu0 0
    %615 = vmatpush2.bf16.msra.mxu0 0
    %616 = vmatprep.subr.bf16.mxu0 0
    %617 = vmatpush2.bf16.msra.mxu0 0
    %618 = vmatprep.subr.bf16.mxu0 0
    %619 = vmatpush2.bf16.msra.mxu0 0
    %620 = vmatprep.subr.bf16.mxu0 0
    %621 = vmatpush2.bf16.msra.mxu0 0
    %622 = vmatprep.subr.bf16.mxu0 0
    %623 = vmatpush2.bf16.msra.mxu0 0
    %624 = vmatprep.mubr.bf16.mxu0 0
    %625 = vmatmul.mubr.bf16.gmra.mxu0 %v532
    %v626 = vpop.f32.mrf.mxu0
    %v627 = vadd.f32 %v501, %v626
    %v628 = vpop.f32.mrf.mxu0
    %v629 = vpop.f32.mrf.mxu0
    %v630 = vadd.f32 %v506, %v629
    %v631 = vpop.f32.mrf.mxu0
    %632 = vmatprep.mubr.bf16.mxu0 0
    %633 = vmatmul.mubr.bf16.gmra.mxu0 %v535
    %v634 = vpop.f32.mrf.mxu0
    %v635 = vadd.f32 %v511, %v634
    %v636 = vpop.f32.mrf.mxu0
    %v637 = vpop.f32.mrf.mxu0
    %v638 = vadd.f32 %v516, %v637
    %v639 = vpop.f32.mrf.mxu0
    %640 = vdwg.mxu0
    %v641 = vmax.f32 %v627, 0.0
    %v642 = vmax.f32 %v630, 0.0
    %v643 = vmax.f32 %v635, 0.0
    %v644 = vmax.f32 %v638, 0.0
    %v645 = vpack.c.bf16 %v386, %v385
    %v646 = vpack.c.bf16 %v388, %v387
    %647 = vmatprep.subr.bf16.mxu0 0
    %648 = vmatpush1.bf16.msra.mxu0 0
    %649 = vmatprep.subr.bf16.mxu0 0
    %650 = vmatpush1.bf16.msra.mxu0 0
    %651 = vmatprep.subr.bf16.mxu0 0
    %652 = vmatpush1.bf16.msra.mxu0 0
    %653 = vmatprep.subr.bf16.mxu0 0
    %654 = vmatpush1.bf16.msra.mxu0 0
    %655 = vmatprep.subr.bf16.mxu0 0
    %656 = vmatpush1.bf16.msra.mxu0 0
    %657 = vmatprep.subr.bf16.mxu0 0
    %658 = vmatpush1.bf16.msra.mxu0 0
    %659 = vmatprep.subr.bf16.mxu0 0
    %660 = vmatpush1.bf16.msra.mxu0 %v646
    %661 = vmatprep.subr.bf16.mxu0 0
    %662 = vmatpush1.bf16.msra.mxu0 %v645
    %663 = vmatprep.subr.bf16.mxu0 0
    %664 = vmatpush2.bf16.msra.mxu0 0
    %665 = vmatprep.subr.bf16.mxu0 0
    %666 = vmatpush2.bf16.msra.mxu0 0
    %667 = vmatprep.subr.bf16.mxu0 0
    %668 = vmatpush2.bf16.msra.mxu0 0
    %669 = vmatprep.subr.bf16.mxu0 0
    %670 = vmatpush2.bf16.msra.mxu0 0
    %671 = vmatprep.subr.bf16.mxu0 0
    %672 = vmatpush2.bf16.msra.mxu0 0
    %673 = vmatprep.subr.bf16.mxu0 0
    %674 = vmatpush2.bf16.msra.mxu0 0
    %675 = vmatprep.subr.bf16.mxu0 0
    %676 = vmatpush2.bf16.msra.mxu0 0
    %677 = vmatprep.subr.bf16.mxu0 0
    %678 = vmatpush2.bf16.msra.mxu0 0
    %679 = vmatprep.mubr.bf16.mxu0 0
    %680 = vmatmul.mubr.bf16.gmra.mxu0 %v532
    %v681 = vpop.f32.mrf.mxu0
    %v682 = vadd.f32 %v501, %v681
    %v683 = vpop.f32.mrf.mxu0
    %v684 = vpop.f32.mrf.mxu0
    %v685 = vadd.f32 %v506, %v684
    %v686 = vpop.f32.mrf.mxu0
    %687 = vmatprep.mubr.bf16.mxu0 0
    %688 = vmatmul.mubr.bf16.gmra.mxu0 %v535
    %v689 = vpop.f32.mrf.mxu0
    %v690 = vadd.f32 %v511, %v689
    %v691 = vpop.f32.mrf.mxu0
    %v692 = vpop.f32.mrf.mxu0
    %v693 = vadd.f32 %v516, %v692
    %v694 = vpop.f32.mrf.mxu0
    %695 = vdwg.mxu0
    %v696 = vmax.f32 %v682, 0.0
    %v697 = vmax.f32 %v685, 0.0
    %v698 = vmax.f32 %v690, 0.0
    %v699 = vmax.f32 %v693, 0.0
    %v700 = vpack.c.bf16 %v487, %v486
    %v701 = vpack.c.bf16 %v489, %v488
    %702 = vmatprep.subr.bf16.mxu0 0
    %703 = vmatpush1.bf16.msra.mxu0 0
    %704 = vmatprep.subr.bf16.mxu0 0
    %705 = vmatpush1.bf16.msra.mxu0 0
    %706 = vmatprep.subr.bf16.mxu0 0
    %707 = vmatpush1.bf16.msra.mxu0 0
    %708 = vmatprep.subr.bf16.mxu0 0
    %709 = vmatpush1.bf16.msra.mxu0 0
    %710 = vmatprep.subr.bf16.mxu0 0
    %711 = vmatpush1.bf16.msra.mxu0 0
    %712 = vmatprep.subr.bf16.mxu0 0
    %713 = vmatpush1.bf16.msra.mxu0 0
    %714 = vmatprep.subr.bf16.mxu0 0
    %715 = vmatpush1.bf16.msra.mxu0 %v701
    %716 = vmatprep.subr.bf16.mxu0 0
    %717 = vmatpush1.bf16.msra.mxu0 %v700
    %718 = vmatprep.subr.bf16.mxu0 0
    %719 = vmatpush2.bf16.msra.mxu0 0
    %720 = vmatprep.subr.bf16.mxu0 0
    %721 = vmatpush2.bf16.msra.mxu0 0
    %722 = vmatprep.subr.bf16.mxu0 0
    %723 = vmatpush2.bf16.msra.mxu0 0
    %724 = vmatprep.subr.bf16.mxu0 0
    %725 = vmatpush2.bf16.msra.mxu0 0
    %726 = vmatprep.subr.bf16.mxu0 0
    %727 = vmatpush2.bf16.msra.mxu0 0
    %728 = vmatprep.subr.bf16.mxu0 0
    %729 = vmatpush2.bf16.msra.mxu0 0
    %730 = vmatprep.subr.bf16.mxu0 0
    %731 = vmatpush2.bf16.msra.mxu0 0
    %732 = vmatprep.subr.bf16.mxu0 0
    %733 = vmatpush2.bf16.msra.mxu0 0
    %734 = vmatprep.mubr.bf16.mxu0 0
    %735 = vmatmul.mubr.bf16.gmra.mxu0 %v532
    %v736 = vpop.f32.mrf.mxu0
    %v737 = vadd.f32 %v501, %v736
    %v738 = vpop.f32.mrf.mxu0
    %v739 = vpop.f32.mrf.mxu0
    %v740 = vadd.f32 %v506, %v739
    %v741 = vpop.f32.mrf.mxu0
    %742 = vmatprep.mubr.bf16.mxu0 0
    %743 = vmatmul.mubr.bf16.gmra.mxu0 %v535
    %v744 = vpop.f32.mrf.mxu0
    %v745 = vadd.f32 %v511, %v744
    %v746 = vpop.f32.mrf.mxu0
    %v747 = vpop.f32.mrf.mxu0
    %v748 = vadd.f32 %v516, %v747
    %v749 = vpop.f32.mrf.mxu0
    %750 = vdwg.mxu0
    %v751 = vmax.f32 %v737, 0.0
    %v752 = vmax.f32 %v740, 0.0
    %v753 = vmax.f32 %v745, 0.0
    %v754 = vmax.f32 %v748, 0.0
    %s755 = scalar_lea.vmem %s3, 16
    %v756 = vld [vmem:[%s755] sm:$0xf]
    %v757 = vld [vmem:[%s755 + $0x4] sm:$0xf]
    %v758 = vld [vmem:[%s755 + $0x8] sm:$0xf]
    %v759 = vld [vmem:[%s755 + $0xc] sm:$0xf]
    %s760 = scalar_lea.vmem %s4, 32
    %v761 = vld [vmem:[%s760] sm:$0xff]
    %v762 = vld [vmem:[%s760 + $0x8] sm:$0xff]
    %v763 = vld [vmem:[%s760 + $0x10] sm:$0xff]
    %v764 = vld [vmem:[%s760 + $0x18] sm:$0xff]
    %766 = vset.pattern.permute.xlu0 0
    %767 = vperm.xlu0 %766, %v761
    %v768 = vpop.permute.xlu0 %767
    %771 = vset.pattern.permute.xlu0 0
    %772 = vperm.xlu0 %771, %v762
    %v773 = vpop.permute.xlu0 %772
    %776 = vset.pattern.permute.xlu0 0
    %777 = vperm.xlu0 %776, %v763
    %v778 = vpop.permute.xlu0 %777
    %781 = vset.pattern.permute.xlu0 0
    %782 = vperm.xlu0 %781, %v764
    %v783 = vpop.permute.xlu0 %782
    %v785 = vpack.c.bf16 %v587, %v586
    %v786 = vpack.c.bf16 %v589, %v588
    %v791 = vunpack.c.l.b16 %v756
    %v792 = vunpack.c.l.b16 %v757
    %v793 = vunpack.c.l.b16 %v758
    %v794 = vunpack.c.l.b16 %v759
    %v795 = vpack.c.b16 %v792, %v791
    %v796 = vpack.c.b16 %v794, %v793
    %v798 = vsel %vm530, %v795, 0
    %v801 = vsel %vm530, %v796, 0
    %803 = vmatprep.subr.bf16.mxu0 0
    %804 = vmatpush1.bf16.msra.mxu0 0
    %805 = vmatprep.subr.bf16.mxu0 0
    %806 = vmatpush1.bf16.msra.mxu0 0
    %807 = vmatprep.subr.bf16.mxu0 0
    %808 = vmatpush1.bf16.msra.mxu0 0
    %809 = vmatprep.subr.bf16.mxu0 0
    %810 = vmatpush1.bf16.msra.mxu0 0
    %811 = vmatprep.subr.bf16.mxu0 0
    %812 = vmatpush1.bf16.msra.mxu0 0
    %813 = vmatprep.subr.bf16.mxu0 0
    %814 = vmatpush1.bf16.msra.mxu0 0
    %815 = vmatprep.subr.bf16.mxu0 0
    %816 = vmatpush1.bf16.msra.mxu0 %v786
    %817 = vmatprep.subr.bf16.mxu0 0
    %818 = vmatpush1.bf16.msra.mxu0 %v785
    %819 = vmatprep.subr.bf16.mxu0 0
    %820 = vmatpush2.bf16.msra.mxu0 0
    %821 = vmatprep.subr.bf16.mxu0 0
    %822 = vmatpush2.bf16.msra.mxu0 0
    %823 = vmatprep.subr.bf16.mxu0 0
    %824 = vmatpush2.bf16.msra.mxu0 0
    %825 = vmatprep.subr.bf16.mxu0 0
    %826 = vmatpush2.bf16.msra.mxu0 0
    %827 = vmatprep.subr.bf16.mxu0 0
    %828 = vmatpush2.bf16.msra.mxu0 0
    %829 = vmatprep.subr.bf16.mxu0 0
    %830 = vmatpush2.bf16.msra.mxu0 0
    %831 = vmatprep.subr.bf16.mxu0 0
    %832 = vmatpush2.bf16.msra.mxu0 0
    %833 = vmatprep.subr.bf16.mxu0 0
    %834 = vmatpush2.bf16.msra.mxu0 0
    %835 = vmatprep.mubr.bf16.mxu0 0
    %836 = vmatmul.mubr.bf16.gmra.mxu0 %v798
    %v837 = vpop.f32.mrf.mxu0
    %v838 = vadd.f32 %v768, %v837
    %v839 = vpop.f32.mrf.mxu0
    %v840 = vpop.f32.mrf.mxu0
    %v841 = vadd.f32 %v773, %v840
    %v842 = vpop.f32.mrf.mxu0
    %843 = vmatprep.mubr.bf16.mxu0 0
    %844 = vmatmul.mubr.bf16.gmra.mxu0 %v801
    %v845 = vpop.f32.mrf.mxu0
    %v846 = vadd.f32 %v778, %v845
    %v847 = vpop.f32.mrf.mxu0
    %v848 = vpop.f32.mrf.mxu0
    %v849 = vadd.f32 %v783, %v848
    %v850 = vpop.f32.mrf.mxu0
    %851 = vdwg.mxu0
    %v852 = vmax.f32 %v838, 0.0
    %v853 = vmax.f32 %v841, 0.0
    %v854 = vmax.f32 %v846, 0.0
    %v855 = vmax.f32 %v849, 0.0
    %v856 = vpack.c.bf16 %v642, %v641
    %v857 = vpack.c.bf16 %v644, %v643
    %858 = vmatprep.subr.bf16.mxu0 0
    %859 = vmatpush1.bf16.msra.mxu0 0
    %860 = vmatprep.subr.bf16.mxu0 0
    %861 = vmatpush1.bf16.msra.mxu0 0
    %862 = vmatprep.subr.bf16.mxu0 0
    %863 = vmatpush1.bf16.msra.mxu0 0
    %864 = vmatprep.subr.bf16.mxu0 0
    %865 = vmatpush1.bf16.msra.mxu0 0
    %866 = vmatprep.subr.bf16.mxu0 0
    %867 = vmatpush1.bf16.msra.mxu0 0
    %868 = vmatprep.subr.bf16.mxu0 0
    %869 = vmatpush1.bf16.msra.mxu0 0
    %870 = vmatprep.subr.bf16.mxu0 0
    %871 = vmatpush1.bf16.msra.mxu0 %v857
    %872 = vmatprep.subr.bf16.mxu0 0
    %873 = vmatpush1.bf16.msra.mxu0 %v856
    %874 = vmatprep.subr.bf16.mxu0 0
    %875 = vmatpush2.bf16.msra.mxu0 0
    %876 = vmatprep.subr.bf16.mxu0 0
    %877 = vmatpush2.bf16.msra.mxu0 0
    %878 = vmatprep.subr.bf16.mxu0 0
    %879 = vmatpush2.bf16.msra.mxu0 0
    %880 = vmatprep.subr.bf16.mxu0 0
    %881 = vmatpush2.bf16.msra.mxu0 0
    %882 = vmatprep.subr.bf16.mxu0 0
    %883 = vmatpush2.bf16.msra.mxu0 0
    %884 = vmatprep.subr.bf16.mxu0 0
    %885 = vmatpush2.bf16.msra.mxu0 0
    %886 = vmatprep.subr.bf16.mxu0 0
    %887 = vmatpush2.bf16.msra.mxu0 0
    %888 = vmatprep.subr.bf16.mxu0 0
    %889 = vmatpush2.bf16.msra.mxu0 0
    %890 = vmatprep.mubr.bf16.mxu0 0
    %891 = vmatmul.mubr.bf16.gmra.mxu0 %v798
    %v892 = vpop.f32.mrf.mxu0
    %v893 = vadd.f32 %v768, %v892
    %v894 = vpop.f32.mrf.mxu0
    %v895 = vpop.f32.mrf.mxu0
    %v896 = vadd.f32 %v773, %v895
    %v897 = vpop.f32.mrf.mxu0
    %898 = vmatprep.mubr.bf16.mxu0 0
    %899 = vmatmul.mubr.bf16.gmra.mxu0 %v801
    %v900 = vpop.f32.mrf.mxu0
    %v901 = vadd.f32 %v778, %v900
    %v902 = vpop.f32.mrf.mxu0
    %v903 = vpop.f32.mrf.mxu0
    %v904 = vadd.f32 %v783, %v903
    %v905 = vpop.f32.mrf.mxu0
    %906 = vdwg.mxu0
    %v907 = vmax.f32 %v893, 0.0
    %v908 = vmax.f32 %v896, 0.0
    %v909 = vmax.f32 %v901, 0.0
    %v910 = vmax.f32 %v904, 0.0
    %v911 = vpack.c.bf16 %v697, %v696
    %v912 = vpack.c.bf16 %v699, %v698
    %913 = vmatprep.subr.bf16.mxu0 0
    %914 = vmatpush1.bf16.msra.mxu0 0
    %915 = vmatprep.subr.bf16.mxu0 0
    %916 = vmatpush1.bf16.msra.mxu0 0
    %917 = vmatprep.subr.bf16.mxu0 0
    %918 = vmatpush1.bf16.msra.mxu0 0
    %919 = vmatprep.subr.bf16.mxu0 0
    %920 = vmatpush1.bf16.msra.mxu0 0
    %921 = vmatprep.subr.bf16.mxu0 0
    %922 = vmatpush1.bf16.msra.mxu0 0
    %923 = vmatprep.subr.bf16.mxu0 0
    %924 = vmatpush1.bf16.msra.mxu0 0
    %925 = vmatprep.subr.bf16.mxu0 0
    %926 = vmatpush1.bf16.msra.mxu0 %v912
    %927 = vmatprep.subr.bf16.mxu0 0
    %928 = vmatpush1.bf16.msra.mxu0 %v911
    %929 = vmatprep.subr.bf16.mxu0 0
    %930 = vmatpush2.bf16.msra.mxu0 0
    %931 = vmatprep.subr.bf16.mxu0 0
    %932 = vmatpush2.bf16.msra.mxu0 0
    %933 = vmatprep.subr.bf16.mxu0 0
    %934 = vmatpush2.bf16.msra.mxu0 0
    %935 = vmatprep.subr.bf16.mxu0 0
    %936 = vmatpush2.bf16.msra.mxu0 0
    %937 = vmatprep.subr.bf16.mxu0 0
    %938 = vmatpush2.bf16.msra.mxu0 0
    %939 = vmatprep.subr.bf16.mxu0 0
    %940 = vmatpush2.bf16.msra.mxu0 0
    %941 = vmatprep.subr.bf16.mxu0 0
    %942 = vmatpush2.bf16.msra.mxu0 0
    %943 = vmatprep.subr.bf16.mxu0 0
    %944 = vmatpush2.bf16.msra.mxu0 0
    %945 = vmatprep.mubr.bf16.mxu0 0
    %946 = vmatmul.mubr.bf16.gmra.mxu0 %v798
    %v947 = vpop.f32.mrf.mxu0
    %v948 = vadd.f32 %v768, %v947
    %v949 = vpop.f32.mrf.mxu0
    %v950 = vpop.f32.mrf.mxu0
    %v951 = vadd.f32 %v773, %v950
    %v952 = vpop.f32.mrf.mxu0
    %953 = vmatprep.mubr.bf16.mxu0 0
    %954 = vmatmul.mubr.bf16.gmra.mxu0 %v801
    %v955 = vpop.f32.mrf.mxu0
    %v956 = vadd.f32 %v778, %v955
    %v957 = vpop.f32.mrf.mxu0
    %v958 = vpop.f32.mrf.mxu0
    %v959 = vadd.f32 %v783, %v958
    %v960 = vpop.f32.mrf.mxu0
    %961 = vdwg.mxu0
    %v962 = vmax.f32 %v948, 0.0
    %v963 = vmax.f32 %v951, 0.0
    %v964 = vmax.f32 %v956, 0.0
    %v965 = vmax.f32 %v959, 0.0
    %v966 = vpack.c.bf16 %v752, %v751
    %v967 = vpack.c.bf16 %v754, %v753
    %968 = vmatprep.subr.bf16.mxu0 0
    %969 = vmatpush1.bf16.msra.mxu0 0
    %970 = vmatprep.subr.bf16.mxu0 0
    %971 = vmatpush1.bf16.msra.mxu0 0
    %972 = vmatprep.subr.bf16.mxu0 0
    %973 = vmatpush1.bf16.msra.mxu0 0
    %974 = vmatprep.subr.bf16.mxu0 0
    %975 = vmatpush1.bf16.msra.mxu0 0
    %976 = vmatprep.subr.bf16.mxu0 0
    %977 = vmatpush1.bf16.msra.mxu0 0
    %978 = vmatprep.subr.bf16.mxu0 0
    %979 = vmatpush1.bf16.msra.mxu0 0
    %980 = vmatprep.subr.bf16.mxu0 0
    %981 = vmatpush1.bf16.msra.mxu0 %v967
    %982 = vmatprep.subr.bf16.mxu0 0
    %983 = vmatpush1.bf16.msra.mxu0 %v966
    %984 = vmatprep.subr.bf16.mxu0 0
    %985 = vmatpush2.bf16.msra.mxu0 0
    %986 = vmatprep.subr.bf16.mxu0 0
    %987 = vmatpush2.bf16.msra.mxu0 0
    %988 = vmatprep.subr.bf16.mxu0 0
    %989 = vmatpush2.bf16.msra.mxu0 0
    %990 = vmatprep.subr.bf16.mxu0 0
    %991 = vmatpush2.bf16.msra.mxu0 0
    %992 = vmatprep.subr.bf16.mxu0 0
    %993 = vmatpush2.bf16.msra.mxu0 0
    %994 = vmatprep.subr.bf16.mxu0 0
    %995 = vmatpush2.bf16.msra.mxu0 0
    %996 = vmatprep.subr.bf16.mxu0 0
    %997 = vmatpush2.bf16.msra.mxu0 0
    %998 = vmatprep.subr.bf16.mxu0 0
    %999 = vmatpush2.bf16.msra.mxu0 0
    %1000 = vmatprep.mubr.bf16.mxu0 0
    %1001 = vmatmul.mubr.bf16.gmra.mxu0 %v798
    %v1002 = vpop.f32.mrf.mxu0
    %v1003 = vadd.f32 %v768, %v1002
    %v1004 = vpop.f32.mrf.mxu0
    %v1005 = vpop.f32.mrf.mxu0
    %v1006 = vadd.f32 %v773, %v1005
    %v1007 = vpop.f32.mrf.mxu0
    %1008 = vmatprep.mubr.bf16.mxu0 0
    %1009 = vmatmul.mubr.bf16.gmra.mxu0 %v801
    %v1010 = vpop.f32.mrf.mxu0
    %v1011 = vadd.f32 %v778, %v1010
    %v1012 = vpop.f32.mrf.mxu0
    %v1013 = vpop.f32.mrf.mxu0
    %v1014 = vadd.f32 %v783, %v1013
    %v1015 = vpop.f32.mrf.mxu0
    %1016 = vdwg.mxu0
    %v1017 = vmax.f32 %v1003, 0.0
    %v1018 = vmax.f32 %v1006, 0.0
    %v1019 = vmax.f32 %v1011, 0.0
    %v1020 = vmax.f32 %v1014, 0.0
    %s1021 = scalar_lea.vmem %s3, 32
    %v1022 = vld [vmem:[%s1021] sm:$0xf]
    %v1023 = vld [vmem:[%s1021 + $0x4] sm:$0xf]
    %v1024 = vld [vmem:[%s1021 + $0x8] sm:$0xf]
    %v1025 = vld [vmem:[%s1021 + $0xc] sm:$0xf]
    %s1026 = scalar_lea.vmem %s4, 64
    %v1027 = vld [vmem:[%s1026] sm:$0xff]
    %v1028 = vld [vmem:[%s1026 + $0x8] sm:$0xff]
    %v1029 = vld [vmem:[%s1026 + $0x10] sm:$0xff]
    %v1030 = vld [vmem:[%s1026 + $0x18] sm:$0xff]
    %1032 = vset.pattern.permute.xlu0 0
    %1033 = vperm.xlu0 %1032, %v1027
    %v1034 = vpop.permute.xlu0 %1033
    %1037 = vset.pattern.permute.xlu0 0
    %1038 = vperm.xlu0 %1037, %v1028
    %v1039 = vpop.permute.xlu0 %1038
    %1042 = vset.pattern.permute.xlu0 0
    %1043 = vperm.xlu0 %1042, %v1029
    %v1044 = vpop.permute.xlu0 %1043
    %1047 = vset.pattern.permute.xlu0 0
    %1048 = vperm.xlu0 %1047, %v1030
    %v1049 = vpop.permute.xlu0 %1048
    %v1051 = vpack.c.bf16 %v853, %v852
    %v1052 = vpack.c.bf16 %v855, %v854
    %v1057 = vunpack.c.l.b16 %v1022
    %v1058 = vunpack.c.l.b16 %v1023
    %v1059 = vunpack.c.l.b16 %v1024
    %v1060 = vunpack.c.l.b16 %v1025
    %v1061 = vpack.c.b16 %v1058, %v1057
    %v1062 = vpack.c.b16 %v1060, %v1059
    %v1064 = vsel %vm530, %v1061, 0
    %v1067 = vsel %vm530, %v1062, 0
    %1069 = vmatprep.subr.bf16.mxu0 0
    %1070 = vmatpush1.bf16.msra.mxu0 0
    %1071 = vmatprep.subr.bf16.mxu0 0
    %1072 = vmatpush1.bf16.msra.mxu0 0
    %1073 = vmatprep.subr.bf16.mxu0 0
    %1074 = vmatpush1.bf16.msra.mxu0 0
    %1075 = vmatprep.subr.bf16.mxu0 0
    %1076 = vmatpush1.bf16.msra.mxu0 0
    %1077 = vmatprep.subr.bf16.mxu0 0
    %1078 = vmatpush1.bf16.msra.mxu0 0
    %1079 = vmatprep.subr.bf16.mxu0 0
    %1080 = vmatpush1.bf16.msra.mxu0 0
    %1081 = vmatprep.subr.bf16.mxu0 0
    %1082 = vmatpush1.bf16.msra.mxu0 %v1052
    %1083 = vmatprep.subr.bf16.mxu0 0
    %1084 = vmatpush1.bf16.msra.mxu0 %v1051
    %1085 = vmatprep.subr.bf16.mxu0 0
    %1086 = vmatpush2.bf16.msra.mxu0 0
    %1087 = vmatprep.subr.bf16.mxu0 0
    %1088 = vmatpush2.bf16.msra.mxu0 0
    %1089 = vmatprep.subr.bf16.mxu0 0
    %1090 = vmatpush2.bf16.msra.mxu0 0
    %1091 = vmatprep.subr.bf16.mxu0 0
    %1092 = vmatpush2.bf16.msra.mxu0 0
    %1093 = vmatprep.subr.bf16.mxu0 0
    %1094 = vmatpush2.bf16.msra.mxu0 0
    %1095 = vmatprep.subr.bf16.mxu0 0
    %1096 = vmatpush2.bf16.msra.mxu0 0
    %1097 = vmatprep.subr.bf16.mxu0 0
    %1098 = vmatpush2.bf16.msra.mxu0 0
    %1099 = vmatprep.subr.bf16.mxu0 0
    %1100 = vmatpush2.bf16.msra.mxu0 0
    %1101 = vmatprep.mubr.bf16.mxu0 0
    %1102 = vmatmul.mubr.bf16.gmra.mxu0 %v1064
    %v1103 = vpop.f32.mrf.mxu0
    %v1104 = vadd.f32 %v1034, %v1103
    %v1105 = vpop.f32.mrf.mxu0
    %v1106 = vpop.f32.mrf.mxu0
    %v1107 = vadd.f32 %v1039, %v1106
    %v1108 = vpop.f32.mrf.mxu0
    %1109 = vmatprep.mubr.bf16.mxu0 0
    %1110 = vmatmul.mubr.bf16.gmra.mxu0 %v1067
    %v1111 = vpop.f32.mrf.mxu0
    %v1112 = vadd.f32 %v1044, %v1111
    %v1113 = vpop.f32.mrf.mxu0
    %v1114 = vpop.f32.mrf.mxu0
    %v1115 = vadd.f32 %v1049, %v1114
    %v1116 = vpop.f32.mrf.mxu0
    %1117 = vdwg.mxu0
    %v1118 = vmax.f32 %v1104, 0.0
    %v1119 = vmax.f32 %v1107, 0.0
    %v1120 = vmax.f32 %v1112, 0.0
    %v1121 = vmax.f32 %v1115, 0.0
    %v1122 = vpack.c.bf16 %v908, %v907
    %v1123 = vpack.c.bf16 %v910, %v909
    %1124 = vmatprep.subr.bf16.mxu0 0
    %1125 = vmatpush1.bf16.msra.mxu0 0
    %1126 = vmatprep.subr.bf16.mxu0 0
    %1127 = vmatpush1.bf16.msra.mxu0 0
    %1128 = vmatprep.subr.bf16.mxu0 0
    %1129 = vmatpush1.bf16.msra.mxu0 0
    %1130 = vmatprep.subr.bf16.mxu0 0
    %1131 = vmatpush1.bf16.msra.mxu0 0
    %1132 = vmatprep.subr.bf16.mxu0 0
    %1133 = vmatpush1.bf16.msra.mxu0 0
    %1134 = vmatprep.subr.bf16.mxu0 0
    %1135 = vmatpush1.bf16.msra.mxu0 0
    %1136 = vmatprep.subr.bf16.mxu0 0
    %1137 = vmatpush1.bf16.msra.mxu0 %v1123
    %1138 = vmatprep.subr.bf16.mxu0 0
    %1139 = vmatpush1.bf16.msra.mxu0 %v1122
    %1140 = vmatprep.subr.bf16.mxu0 0
    %1141 = vmatpush2.bf16.msra.mxu0 0
    %1142 = vmatprep.subr.bf16.mxu0 0
    %1143 = vmatpush2.bf16.msra.mxu0 0
    %1144 = vmatprep.subr.bf16.mxu0 0
    %1145 = vmatpush2.bf16.msra.mxu0 0
    %1146 = vmatprep.subr.bf16.mxu0 0
    %1147 = vmatpush2.bf16.msra.mxu0 0
    %1148 = vmatprep.subr.bf16.mxu0 0
    %1149 = vmatpush2.bf16.msra.mxu0 0
    %1150 = vmatprep.subr.bf16.mxu0 0
    %1151 = vmatpush2.bf16.msra.mxu0 0
    %1152 = vmatprep.subr.bf16.mxu0 0
    %1153 = vmatpush2.bf16.msra.mxu0 0
    %1154 = vmatprep.subr.bf16.mxu0 0
    %1155 = vmatpush2.bf16.msra.mxu0 0
    %1156 = vmatprep.mubr.bf16.mxu0 0
    %1157 = vmatmul.mubr.bf16.gmra.mxu0 %v1064
    %v1158 = vpop.f32.mrf.mxu0
    %v1159 = vadd.f32 %v1034, %v1158
    %v1160 = vpop.f32.mrf.mxu0
    %v1161 = vpop.f32.mrf.mxu0
    %v1162 = vadd.f32 %v1039, %v1161
    %v1163 = vpop.f32.mrf.mxu0
    %1164 = vmatprep.mubr.bf16.mxu0 0
    %1165 = vmatmul.mubr.bf16.gmra.mxu0 %v1067
    %v1166 = vpop.f32.mrf.mxu0
    %v1167 = vadd.f32 %v1044, %v1166
    %v1168 = vpop.f32.mrf.mxu0
    %v1169 = vpop.f32.mrf.mxu0
    %v1170 = vadd.f32 %v1049, %v1169
    %v1171 = vpop.f32.mrf.mxu0
    %1172 = vdwg.mxu0
    %v1173 = vmax.f32 %v1159, 0.0
    %v1174 = vmax.f32 %v1162, 0.0
    %v1175 = vmax.f32 %v1167, 0.0
    %v1176 = vmax.f32 %v1170, 0.0
    %v1177 = vpack.c.bf16 %v963, %v962
    %v1178 = vpack.c.bf16 %v965, %v964
    %1179 = vmatprep.subr.bf16.mxu0 0
    %1180 = vmatpush1.bf16.msra.mxu0 0
    %1181 = vmatprep.subr.bf16.mxu0 0
    %1182 = vmatpush1.bf16.msra.mxu0 0
    %1183 = vmatprep.subr.bf16.mxu0 0
    %1184 = vmatpush1.bf16.msra.mxu0 0
    %1185 = vmatprep.subr.bf16.mxu0 0
    %1186 = vmatpush1.bf16.msra.mxu0 0
    %1187 = vmatprep.subr.bf16.mxu0 0
    %1188 = vmatpush1.bf16.msra.mxu0 0
    %1189 = vmatprep.subr.bf16.mxu0 0
    %1190 = vmatpush1.bf16.msra.mxu0 0
    %1191 = vmatprep.subr.bf16.mxu0 0
    %1192 = vmatpush1.bf16.msra.mxu0 %v1178
    %1193 = vmatprep.subr.bf16.mxu0 0
    %1194 = vmatpush1.bf16.msra.mxu0 %v1177
    %1195 = vmatprep.subr.bf16.mxu0 0
    %1196 = vmatpush2.bf16.msra.mxu0 0
    %1197 = vmatprep.subr.bf16.mxu0 0
    %1198 = vmatpush2.bf16.msra.mxu0 0
    %1199 = vmatprep.subr.bf16.mxu0 0
    %1200 = vmatpush2.bf16.msra.mxu0 0
    %1201 = vmatprep.subr.bf16.mxu0 0
    %1202 = vmatpush2.bf16.msra.mxu0 0
    %1203 = vmatprep.subr.bf16.mxu0 0
    %1204 = vmatpush2.bf16.msra.mxu0 0
    %1205 = vmatprep.subr.bf16.mxu0 0
    %1206 = vmatpush2.bf16.msra.mxu0 0
    %1207 = vmatprep.subr.bf16.mxu0 0
    %1208 = vmatpush2.bf16.msra.mxu0 0
    %1209 = vmatprep.subr.bf16.mxu0 0
    %1210 = vmatpush2.bf16.msra.mxu0 0
    %1211 = vmatprep.mubr.bf16.mxu0 0
    %1212 = vmatmul.mubr.bf16.gmra.mxu0 %v1064
    %v1213 = vpop.f32.mrf.mxu0
    %v1214 = vadd.f32 %v1034, %v1213
    %v1215 = vpop.f32.mrf.mxu0
    %v1216 = vpop.f32.mrf.mxu0
    %v1217 = vadd.f32 %v1039, %v1216
    %v1218 = vpop.f32.mrf.mxu0
    %1219 = vmatprep.mubr.bf16.mxu0 0
    %1220 = vmatmul.mubr.bf16.gmra.mxu0 %v1067
    %v1221 = vpop.f32.mrf.mxu0
    %v1222 = vadd.f32 %v1044, %v1221
    %v1223 = vpop.f32.mrf.mxu0
    %v1224 = vpop.f32.mrf.mxu0
    %v1225 = vadd.f32 %v1049, %v1224
    %v1226 = vpop.f32.mrf.mxu0
    %1227 = vdwg.mxu0
    %v1228 = vmax.f32 %v1214, 0.0
    %v1229 = vmax.f32 %v1217, 0.0
    %v1230 = vmax.f32 %v1222, 0.0
    %v1231 = vmax.f32 %v1225, 0.0
    %v1232 = vpack.c.bf16 %v1018, %v1017
    %v1233 = vpack.c.bf16 %v1020, %v1019
    %1234 = vmatprep.subr.bf16.mxu0 0
    %1235 = vmatpush1.bf16.msra.mxu0 0
    %1236 = vmatprep.subr.bf16.mxu0 0
    %1237 = vmatpush1.bf16.msra.mxu0 0
    %1238 = vmatprep.subr.bf16.mxu0 0
    %1239 = vmatpush1.bf16.msra.mxu0 0
    %1240 = vmatprep.subr.bf16.mxu0 0
    %1241 = vmatpush1.bf16.msra.mxu0 0
    %1242 = vmatprep.subr.bf16.mxu0 0
    %1243 = vmatpush1.bf16.msra.mxu0 0
    %1244 = vmatprep.subr.bf16.mxu0 0
    %1245 = vmatpush1.bf16.msra.mxu0 0
    %1246 = vmatprep.subr.bf16.mxu0 0
    %1247 = vmatpush1.bf16.msra.mxu0 %v1233
    %1248 = vmatprep.subr.bf16.mxu0 0
    %1249 = vmatpush1.bf16.msra.mxu0 %v1232
    %1250 = vmatprep.subr.bf16.mxu0 0
    %1251 = vmatpush2.bf16.msra.mxu0 0
    %1252 = vmatprep.subr.bf16.mxu0 0
    %1253 = vmatpush2.bf16.msra.mxu0 0
    %1254 = vmatprep.subr.bf16.mxu0 0
    %1255 = vmatpush2.bf16.msra.mxu0 0
    %1256 = vmatprep.subr.bf16.mxu0 0
    %1257 = vmatpush2.bf16.msra.mxu0 0
    %1258 = vmatprep.subr.bf16.mxu0 0
    %1259 = vmatpush2.bf16.msra.mxu0 0
    %1260 = vmatprep.subr.bf16.mxu0 0
    %1261 = vmatpush2.bf16.msra.mxu0 0
    %1262 = vmatprep.subr.bf16.mxu0 0
    %1263 = vmatpush2.bf16.msra.mxu0 0
    %1264 = vmatprep.subr.bf16.mxu0 0
    %1265 = vmatpush2.bf16.msra.mxu0 0
    %1266 = vmatprep.mubr.bf16.mxu0 0
    %1267 = vmatmul.mubr.bf16.gmra.mxu0 %v1064
    %v1268 = vpop.f32.mrf.mxu0
    %v1269 = vadd.f32 %v1034, %v1268
    %v1270 = vpop.f32.mrf.mxu0
    %v1271 = vpop.f32.mrf.mxu0
    %v1272 = vadd.f32 %v1039, %v1271
    %v1273 = vpop.f32.mrf.mxu0
    %1274 = vmatprep.mubr.bf16.mxu0 0
    %1275 = vmatmul.mubr.bf16.gmra.mxu0 %v1067
    %v1276 = vpop.f32.mrf.mxu0
    %v1277 = vadd.f32 %v1044, %v1276
    %v1278 = vpop.f32.mrf.mxu0
    %v1279 = vpop.f32.mrf.mxu0
    %v1280 = vadd.f32 %v1049, %v1279
    %v1281 = vpop.f32.mrf.mxu0
    %1282 = vdwg.mxu0
    %v1283 = vmax.f32 %v1269, 0.0
    %v1284 = vmax.f32 %v1272, 0.0
    %v1285 = vmax.f32 %v1277, 0.0
    %v1286 = vmax.f32 %v1280, 0.0
    %s1287 = scalar_lea.vmem %s3, 48
    %v1288 = vld [vmem:[%s1287] sm:$0xf]
    %v1289 = vld [vmem:[%s1287 + $0x4] sm:$0xf]
    %v1290 = vld [vmem:[%s1287 + $0x8] sm:$0xf]
    %v1291 = vld [vmem:[%s1287 + $0xc] sm:$0xf]
    %s1292 = scalar_lea.vmem %s4, 96
    %v1293 = vld [vmem:[%s1292] sm:$0xff]
    %v1294 = vld [vmem:[%s1292 + $0x8] sm:$0xff]
    %v1295 = vld [vmem:[%s1292 + $0x10] sm:$0xff]
    %v1296 = vld [vmem:[%s1292 + $0x18] sm:$0xff]
    %1298 = vset.pattern.permute.xlu0 0
    %1299 = vperm.xlu0 %1298, %v1293
    %v1300 = vpop.permute.xlu0 %1299
    %1303 = vset.pattern.permute.xlu0 0
    %1304 = vperm.xlu0 %1303, %v1294
    %v1305 = vpop.permute.xlu0 %1304
    %1308 = vset.pattern.permute.xlu0 0
    %1309 = vperm.xlu0 %1308, %v1295
    %v1310 = vpop.permute.xlu0 %1309
    %1313 = vset.pattern.permute.xlu0 0
    %1314 = vperm.xlu0 %1313, %v1296
    %v1315 = vpop.permute.xlu0 %1314
    %v1317 = vpack.c.bf16 %v1119, %v1118
    %v1318 = vpack.c.bf16 %v1121, %v1120
    %v1323 = vunpack.c.l.b16 %v1288
    %v1324 = vunpack.c.l.b16 %v1289
    %v1325 = vunpack.c.l.b16 %v1290
    %v1326 = vunpack.c.l.b16 %v1291
    %v1327 = vpack.c.b16 %v1324, %v1323
    %v1328 = vpack.c.b16 %v1326, %v1325
    %v1330 = vsel %vm530, %v1327, 0
    %v1333 = vsel %vm530, %v1328, 0
    %1335 = vmatprep.subr.bf16.mxu0 0
    %1336 = vmatpush1.bf16.msra.mxu0 0
    %1337 = vmatprep.subr.bf16.mxu0 0
    %1338 = vmatpush1.bf16.msra.mxu0 0
    %1339 = vmatprep.subr.bf16.mxu0 0
    %1340 = vmatpush1.bf16.msra.mxu0 0
    %1341 = vmatprep.subr.bf16.mxu0 0
    %1342 = vmatpush1.bf16.msra.mxu0 0
    %1343 = vmatprep.subr.bf16.mxu0 0
    %1344 = vmatpush1.bf16.msra.mxu0 0
    %1345 = vmatprep.subr.bf16.mxu0 0
    %1346 = vmatpush1.bf16.msra.mxu0 0
    %1347 = vmatprep.subr.bf16.mxu0 0
    %1348 = vmatpush1.bf16.msra.mxu0 %v1318
    %1349 = vmatprep.subr.bf16.mxu0 0
    %1350 = vmatpush1.bf16.msra.mxu0 %v1317
    %1351 = vmatprep.subr.bf16.mxu0 0
    %1352 = vmatpush2.bf16.msra.mxu0 0
    %1353 = vmatprep.subr.bf16.mxu0 0
    %1354 = vmatpush2.bf16.msra.mxu0 0
    %1355 = vmatprep.subr.bf16.mxu0 0
    %1356 = vmatpush2.bf16.msra.mxu0 0
    %1357 = vmatprep.subr.bf16.mxu0 0
    %1358 = vmatpush2.bf16.msra.mxu0 0
    %1359 = vmatprep.subr.bf16.mxu0 0
    %1360 = vmatpush2.bf16.msra.mxu0 0
    %1361 = vmatprep.subr.bf16.mxu0 0
    %1362 = vmatpush2.bf16.msra.mxu0 0
    %1363 = vmatprep.subr.bf16.mxu0 0
    %1364 = vmatpush2.bf16.msra.mxu0 0
    %1365 = vmatprep.subr.bf16.mxu0 0
    %1366 = vmatpush2.bf16.msra.mxu0 0
    %1367 = vmatprep.mubr.bf16.mxu0 0
    %1368 = vmatmul.mubr.bf16.gmra.mxu0 %v1330
    %v1369 = vpop.f32.mrf.mxu0
    %v1370 = vadd.f32 %v1300, %v1369
    %v1371 = vpop.f32.mrf.mxu0
    %v1372 = vpop.f32.mrf.mxu0
    %v1373 = vadd.f32 %v1305, %v1372
    %v1374 = vpop.f32.mrf.mxu0
    %1375 = vmatprep.mubr.bf16.mxu0 0
    %1376 = vmatmul.mubr.bf16.gmra.mxu0 %v1333
    %v1377 = vpop.f32.mrf.mxu0
    %v1378 = vadd.f32 %v1310, %v1377
    %v1379 = vpop.f32.mrf.mxu0
    %v1380 = vpop.f32.mrf.mxu0
    %v1381 = vadd.f32 %v1315, %v1380
    %v1382 = vpop.f32.mrf.mxu0
    %1383 = vdwg.mxu0
    %v1384 = vmax.f32 %v1370, 0.0
    %v1385 = vmax.f32 %v1373, 0.0
    %v1386 = vmax.f32 %v1378, 0.0
    %v1387 = vmax.f32 %v1381, 0.0
    %v1388 = vpack.c.bf16 %v1174, %v1173
    %v1389 = vpack.c.bf16 %v1176, %v1175
    %1390 = vmatprep.subr.bf16.mxu0 0
    %1391 = vmatpush1.bf16.msra.mxu0 0
    %1392 = vmatprep.subr.bf16.mxu0 0
    %1393 = vmatpush1.bf16.msra.mxu0 0
    %1394 = vmatprep.subr.bf16.mxu0 0
    %1395 = vmatpush1.bf16.msra.mxu0 0
    %1396 = vmatprep.subr.bf16.mxu0 0
    %1397 = vmatpush1.bf16.msra.mxu0 0
    %1398 = vmatprep.subr.bf16.mxu0 0
    %1399 = vmatpush1.bf16.msra.mxu0 0
    %1400 = vmatprep.subr.bf16.mxu0 0
    %1401 = vmatpush1.bf16.msra.mxu0 0
    %1402 = vmatprep.subr.bf16.mxu0 0
    %1403 = vmatpush1.bf16.msra.mxu0 %v1389
    %1404 = vmatprep.subr.bf16.mxu0 0
    %1405 = vmatpush1.bf16.msra.mxu0 %v1388
    %1406 = vmatprep.subr.bf16.mxu0 0
    %1407 = vmatpush2.bf16.msra.mxu0 0
    %1408 = vmatprep.subr.bf16.mxu0 0
    %1409 = vmatpush2.bf16.msra.mxu0 0
    %1410 = vmatprep.subr.bf16.mxu0 0
    %1411 = vmatpush2.bf16.msra.mxu0 0
    %1412 = vmatprep.subr.bf16.mxu0 0
    %1413 = vmatpush2.bf16.msra.mxu0 0
    %1414 = vmatprep.subr.bf16.mxu0 0
    %1415 = vmatpush2.bf16.msra.mxu0 0
    %1416 = vmatprep.subr.bf16.mxu0 0
    %1417 = vmatpush2.bf16.msra.mxu0 0
    %1418 = vmatprep.subr.bf16.mxu0 0
    %1419 = vmatpush2.bf16.msra.mxu0 0
    %1420 = vmatprep.subr.bf16.mxu0 0
    %1421 = vmatpush2.bf16.msra.mxu0 0
    %1422 = vmatprep.mubr.bf16.mxu0 0
    %1423 = vmatmul.mubr.bf16.gmra.mxu0 %v1330
    %v1424 = vpop.f32.mrf.mxu0
    %v1425 = vadd.f32 %v1300, %v1424
    %v1426 = vpop.f32.mrf.mxu0
    %v1427 = vpop.f32.mrf.mxu0
    %v1428 = vadd.f32 %v1305, %v1427
    %v1429 = vpop.f32.mrf.mxu0
    %1430 = vmatprep.mubr.bf16.mxu0 0
    %1431 = vmatmul.mubr.bf16.gmra.mxu0 %v1333
    %v1432 = vpop.f32.mrf.mxu0
    %v1433 = vadd.f32 %v1310, %v1432
    %v1434 = vpop.f32.mrf.mxu0
    %v1435 = vpop.f32.mrf.mxu0
    %v1436 = vadd.f32 %v1315, %v1435
    %v1437 = vpop.f32.mrf.mxu0
    %1438 = vdwg.mxu0
    %v1439 = vmax.f32 %v1425, 0.0
    %v1440 = vmax.f32 %v1428, 0.0
    %v1441 = vmax.f32 %v1433, 0.0
    %v1442 = vmax.f32 %v1436, 0.0
    %v1443 = vpack.c.bf16 %v1229, %v1228
    %v1444 = vpack.c.bf16 %v1231, %v1230
    %1445 = vmatprep.subr.bf16.mxu0 0
    %1446 = vmatpush1.bf16.msra.mxu0 0
    %1447 = vmatprep.subr.bf16.mxu0 0
    %1448 = vmatpush1.bf16.msra.mxu0 0
    %1449 = vmatprep.subr.bf16.mxu0 0
    %1450 = vmatpush1.bf16.msra.mxu0 0
    %1451 = vmatprep.subr.bf16.mxu0 0
    %1452 = vmatpush1.bf16.msra.mxu0 0
    %1453 = vmatprep.subr.bf16.mxu0 0
    %1454 = vmatpush1.bf16.msra.mxu0 0
    %1455 = vmatprep.subr.bf16.mxu0 0
    %1456 = vmatpush1.bf16.msra.mxu0 0
    %1457 = vmatprep.subr.bf16.mxu0 0
    %1458 = vmatpush1.bf16.msra.mxu0 %v1444
    %1459 = vmatprep.subr.bf16.mxu0 0
    %1460 = vmatpush1.bf16.msra.mxu0 %v1443
    %1461 = vmatprep.subr.bf16.mxu0 0
    %1462 = vmatpush2.bf16.msra.mxu0 0
    %1463 = vmatprep.subr.bf16.mxu0 0
    %1464 = vmatpush2.bf16.msra.mxu0 0
    %1465 = vmatprep.subr.bf16.mxu0 0
    %1466 = vmatpush2.bf16.msra.mxu0 0
    %1467 = vmatprep.subr.bf16.mxu0 0
    %1468 = vmatpush2.bf16.msra.mxu0 0
    %1469 = vmatprep.subr.bf16.mxu0 0
    %1470 = vmatpush2.bf16.msra.mxu0 0
    %1471 = vmatprep.subr.bf16.mxu0 0
    %1472 = vmatpush2.bf16.msra.mxu0 0
    %1473 = vmatprep.subr.bf16.mxu0 0
    %1474 = vmatpush2.bf16.msra.mxu0 0
    %1475 = vmatprep.subr.bf16.mxu0 0
    %1476 = vmatpush2.bf16.msra.mxu0 0
    %1477 = vmatprep.mubr.bf16.mxu0 0
    %1478 = vmatmul.mubr.bf16.gmra.mxu0 %v1330
    %v1479 = vpop.f32.mrf.mxu0
    %v1480 = vadd.f32 %v1300, %v1479
    %v1481 = vpop.f32.mrf.mxu0
    %v1482 = vpop.f32.mrf.mxu0
    %v1483 = vadd.f32 %v1305, %v1482
    %v1484 = vpop.f32.mrf.mxu0
    %1485 = vmatprep.mubr.bf16.mxu0 0
    %1486 = vmatmul.mubr.bf16.gmra.mxu0 %v1333
    %v1487 = vpop.f32.mrf.mxu0
    %v1488 = vadd.f32 %v1310, %v1487
    %v1489 = vpop.f32.mrf.mxu0
    %v1490 = vpop.f32.mrf.mxu0
    %v1491 = vadd.f32 %v1315, %v1490
    %v1492 = vpop.f32.mrf.mxu0
    %1493 = vdwg.mxu0
    %v1494 = vmax.f32 %v1480, 0.0
    %v1495 = vmax.f32 %v1483, 0.0
    %v1496 = vmax.f32 %v1488, 0.0
    %v1497 = vmax.f32 %v1491, 0.0
    %v1498 = vpack.c.bf16 %v1284, %v1283
    %v1499 = vpack.c.bf16 %v1286, %v1285
    %1500 = vmatprep.subr.bf16.mxu0 0
    %1501 = vmatpush1.bf16.msra.mxu0 0
    %1502 = vmatprep.subr.bf16.mxu0 0
    %1503 = vmatpush1.bf16.msra.mxu0 0
    %1504 = vmatprep.subr.bf16.mxu0 0
    %1505 = vmatpush1.bf16.msra.mxu0 0
    %1506 = vmatprep.subr.bf16.mxu0 0
    %1507 = vmatpush1.bf16.msra.mxu0 0
    %1508 = vmatprep.subr.bf16.mxu0 0
    %1509 = vmatpush1.bf16.msra.mxu0 0
    %1510 = vmatprep.subr.bf16.mxu0 0
    %1511 = vmatpush1.bf16.msra.mxu0 0
    %1512 = vmatprep.subr.bf16.mxu0 0
    %1513 = vmatpush1.bf16.msra.mxu0 %v1499
    %1514 = vmatprep.subr.bf16.mxu0 0
    %1515 = vmatpush1.bf16.msra.mxu0 %v1498
    %1516 = vmatprep.subr.bf16.mxu0 0
    %1517 = vmatpush2.bf16.msra.mxu0 0
    %1518 = vmatprep.subr.bf16.mxu0 0
    %1519 = vmatpush2.bf16.msra.mxu0 0
    %1520 = vmatprep.subr.bf16.mxu0 0
    %1521 = vmatpush2.bf16.msra.mxu0 0
    %1522 = vmatprep.subr.bf16.mxu0 0
    %1523 = vmatpush2.bf16.msra.mxu0 0
    %1524 = vmatprep.subr.bf16.mxu0 0
    %1525 = vmatpush2.bf16.msra.mxu0 0
    %1526 = vmatprep.subr.bf16.mxu0 0
    %1527 = vmatpush2.bf16.msra.mxu0 0
    %1528 = vmatprep.subr.bf16.mxu0 0
    %1529 = vmatpush2.bf16.msra.mxu0 0
    %1530 = vmatprep.subr.bf16.mxu0 0
    %1531 = vmatpush2.bf16.msra.mxu0 0
    %1532 = vmatprep.mubr.bf16.mxu0 0
    %1533 = vmatmul.mubr.bf16.gmra.mxu0 %v1330
    %v1534 = vpop.f32.mrf.mxu0
    %v1535 = vadd.f32 %v1300, %v1534
    %v1536 = vpop.f32.mrf.mxu0
    %v1537 = vpop.f32.mrf.mxu0
    %v1538 = vadd.f32 %v1305, %v1537
    %v1539 = vpop.f32.mrf.mxu0
    %1540 = vmatprep.mubr.bf16.mxu0 0
    %1541 = vmatmul.mubr.bf16.gmra.mxu0 %v1333
    %v1542 = vpop.f32.mrf.mxu0
    %v1543 = vadd.f32 %v1310, %v1542
    %v1544 = vpop.f32.mrf.mxu0
    %v1545 = vpop.f32.mrf.mxu0
    %v1546 = vadd.f32 %v1315, %v1545
    %v1547 = vpop.f32.mrf.mxu0
    %1548 = vdwg.mxu0
    %v1549 = vmax.f32 %v1535, 0.0
    %v1550 = vmax.f32 %v1538, 0.0
    %v1551 = vmax.f32 %v1543, 0.0
    %v1552 = vmax.f32 %v1546, 0.0
    %s1553 = scalar_lea.vmem %s3, 64
    %v1554 = vld [vmem:[%s1553] sm:$0xf]
    %v1555 = vld [vmem:[%s1553 + $0x4] sm:$0xf]
    %v1556 = vld [vmem:[%s1553 + $0x8] sm:$0xf]
    %v1557 = vld [vmem:[%s1553 + $0xc] sm:$0xf]
    %s1558 = scalar_lea.vmem %s4, 128
    %v1559 = vld [vmem:[%s1558] sm:$0xff]
    %v1560 = vld [vmem:[%s1558 + $0x8] sm:$0xff]
    %v1561 = vld [vmem:[%s1558 + $0x10] sm:$0xff]
    %v1562 = vld [vmem:[%s1558 + $0x18] sm:$0xff]
    %1564 = vset.pattern.permute.xlu0 0
    %1565 = vperm.xlu0 %1564, %v1559
    %v1566 = vpop.permute.xlu0 %1565
    %1569 = vset.pattern.permute.xlu0 0
    %1570 = vperm.xlu0 %1569, %v1560
    %v1571 = vpop.permute.xlu0 %1570
    %1574 = vset.pattern.permute.xlu0 0
    %1575 = vperm.xlu0 %1574, %v1561
    %v1576 = vpop.permute.xlu0 %1575
    %1579 = vset.pattern.permute.xlu0 0
    %1580 = vperm.xlu0 %1579, %v1562
    %v1581 = vpop.permute.xlu0 %1580
    %v1583 = vpack.c.bf16 %v1385, %v1384
    %v1584 = vpack.c.bf16 %v1387, %v1386
    %v1589 = vunpack.c.l.b16 %v1554
    %v1590 = vunpack.c.l.b16 %v1555
    %v1591 = vunpack.c.l.b16 %v1556
    %v1592 = vunpack.c.l.b16 %v1557
    %v1593 = vpack.c.b16 %v1590, %v1589
    %v1594 = vpack.c.b16 %v1592, %v1591
    %v1596 = vsel %vm530, %v1593, 0
    %v1599 = vsel %vm530, %v1594, 0
    %1601 = vmatprep.subr.bf16.mxu0 0
    %1602 = vmatpush1.bf16.msra.mxu0 0
    %1603 = vmatprep.subr.bf16.mxu0 0
    %1604 = vmatpush1.bf16.msra.mxu0 0
    %1605 = vmatprep.subr.bf16.mxu0 0
    %1606 = vmatpush1.bf16.msra.mxu0 0
    %1607 = vmatprep.subr.bf16.mxu0 0
    %1608 = vmatpush1.bf16.msra.mxu0 0
    %1609 = vmatprep.subr.bf16.mxu0 0
    %1610 = vmatpush1.bf16.msra.mxu0 0
    %1611 = vmatprep.subr.bf16.mxu0 0
    %1612 = vmatpush1.bf16.msra.mxu0 0
    %1613 = vmatprep.subr.bf16.mxu0 0
    %1614 = vmatpush1.bf16.msra.mxu0 %v1584
    %1615 = vmatprep.subr.bf16.mxu0 0
    %1616 = vmatpush1.bf16.msra.mxu0 %v1583
    %1617 = vmatprep.subr.bf16.mxu0 0
    %1618 = vmatpush2.bf16.msra.mxu0 0
    %1619 = vmatprep.subr.bf16.mxu0 0
    %1620 = vmatpush2.bf16.msra.mxu0 0
    %1621 = vmatprep.subr.bf16.mxu0 0
    %1622 = vmatpush2.bf16.msra.mxu0 0
    %1623 = vmatprep.subr.bf16.mxu0 0
    %1624 = vmatpush2.bf16.msra.mxu0 0
    %1625 = vmatprep.subr.bf16.mxu0 0
    %1626 = vmatpush2.bf16.msra.mxu0 0
    %1627 = vmatprep.subr.bf16.mxu0 0
    %1628 = vmatpush2.bf16.msra.mxu0 0
    %1629 = vmatprep.subr.bf16.mxu0 0
    %1630 = vmatpush2.bf16.msra.mxu0 0
    %1631 = vmatprep.subr.bf16.mxu0 0
    %1632 = vmatpush2.bf16.msra.mxu0 0
    %1633 = vmatprep.mubr.bf16.mxu0 0
    %1634 = vmatmul.mubr.bf16.gmra.mxu0 %v1596
    %v1635 = vpop.f32.mrf.mxu0
    %v1636 = vadd.f32 %v1566, %v1635
    %v1637 = vpop.f32.mrf.mxu0
    %v1638 = vpop.f32.mrf.mxu0
    %v1639 = vadd.f32 %v1571, %v1638
    %v1640 = vpop.f32.mrf.mxu0
    %1641 = vmatprep.mubr.bf16.mxu0 0
    %1642 = vmatmul.mubr.bf16.gmra.mxu0 %v1599
    %v1643 = vpop.f32.mrf.mxu0
    %v1644 = vadd.f32 %v1576, %v1643
    %v1645 = vpop.f32.mrf.mxu0
    %v1646 = vpop.f32.mrf.mxu0
    %v1647 = vadd.f32 %v1581, %v1646
    %v1648 = vpop.f32.mrf.mxu0
    %1649 = vdwg.mxu0
    %v1650 = vmax.f32 %v1636, 0.0
    %v1651 = vmax.f32 %v1639, 0.0
    %v1652 = vmax.f32 %v1644, 0.0
    %v1653 = vmax.f32 %v1647, 0.0
    %v1654 = vpack.c.bf16 %v1440, %v1439
    %v1655 = vpack.c.bf16 %v1442, %v1441
    %1656 = vmatprep.subr.bf16.mxu0 0
    %1657 = vmatpush1.bf16.msra.mxu0 0
    %1658 = vmatprep.subr.bf16.mxu0 0
    %1659 = vmatpush1.bf16.msra.mxu0 0
    %1660 = vmatprep.subr.bf16.mxu0 0
    %1661 = vmatpush1.bf16.msra.mxu0 0
    %1662 = vmatprep.subr.bf16.mxu0 0
    %1663 = vmatpush1.bf16.msra.mxu0 0
    %1664 = vmatprep.subr.bf16.mxu0 0
    %1665 = vmatpush1.bf16.msra.mxu0 0
    %1666 = vmatprep.subr.bf16.mxu0 0
    %1667 = vmatpush1.bf16.msra.mxu0 0
    %1668 = vmatprep.subr.bf16.mxu0 0
    %1669 = vmatpush1.bf16.msra.mxu0 %v1655
    %1670 = vmatprep.subr.bf16.mxu0 0
    %1671 = vmatpush1.bf16.msra.mxu0 %v1654
    %1672 = vmatprep.subr.bf16.mxu0 0
    %1673 = vmatpush2.bf16.msra.mxu0 0
    %1674 = vmatprep.subr.bf16.mxu0 0
    %1675 = vmatpush2.bf16.msra.mxu0 0
    %1676 = vmatprep.subr.bf16.mxu0 0
    %1677 = vmatpush2.bf16.msra.mxu0 0
    %1678 = vmatprep.subr.bf16.mxu0 0
    %1679 = vmatpush2.bf16.msra.mxu0 0
    %1680 = vmatprep.subr.bf16.mxu0 0
    %1681 = vmatpush2.bf16.msra.mxu0 0
    %1682 = vmatprep.subr.bf16.mxu0 0
    %1683 = vmatpush2.bf16.msra.mxu0 0
    %1684 = vmatprep.subr.bf16.mxu0 0
    %1685 = vmatpush2.bf16.msra.mxu0 0
    %1686 = vmatprep.subr.bf16.mxu0 0
    %1687 = vmatpush2.bf16.msra.mxu0 0
    %1688 = vmatprep.mubr.bf16.mxu0 0
    %1689 = vmatmul.mubr.bf16.gmra.mxu0 %v1596
    %v1690 = vpop.f32.mrf.mxu0
    %v1691 = vadd.f32 %v1566, %v1690
    %v1692 = vpop.f32.mrf.mxu0
    %v1693 = vpop.f32.mrf.mxu0
    %v1694 = vadd.f32 %v1571, %v1693
    %v1695 = vpop.f32.mrf.mxu0
    %1696 = vmatprep.mubr.bf16.mxu0 0
    %1697 = vmatmul.mubr.bf16.gmra.mxu0 %v1599
    %v1698 = vpop.f32.mrf.mxu0
    %v1699 = vadd.f32 %v1576, %v1698
    %v1700 = vpop.f32.mrf.mxu0
    %v1701 = vpop.f32.mrf.mxu0
    %v1702 = vadd.f32 %v1581, %v1701
    %v1703 = vpop.f32.mrf.mxu0
    %1704 = vdwg.mxu0
    %v1705 = vmax.f32 %v1691, 0.0
    %v1706 = vmax.f32 %v1694, 0.0
    %v1707 = vmax.f32 %v1699, 0.0
    %v1708 = vmax.f32 %v1702, 0.0
    %v1709 = vpack.c.bf16 %v1495, %v1494
    %v1710 = vpack.c.bf16 %v1497, %v1496
    %1711 = vmatprep.subr.bf16.mxu0 0
    %1712 = vmatpush1.bf16.msra.mxu0 0
    %1713 = vmatprep.subr.bf16.mxu0 0
    %1714 = vmatpush1.bf16.msra.mxu0 0
    %1715 = vmatprep.subr.bf16.mxu0 0
    %1716 = vmatpush1.bf16.msra.mxu0 0
    %1717 = vmatprep.subr.bf16.mxu0 0
    %1718 = vmatpush1.bf16.msra.mxu0 0
    %1719 = vmatprep.subr.bf16.mxu0 0
    %1720 = vmatpush1.bf16.msra.mxu0 0
    %1721 = vmatprep.subr.bf16.mxu0 0
    %1722 = vmatpush1.bf16.msra.mxu0 0
    %1723 = vmatprep.subr.bf16.mxu0 0
    %1724 = vmatpush1.bf16.msra.mxu0 %v1710
    %1725 = vmatprep.subr.bf16.mxu0 0
    %1726 = vmatpush1.bf16.msra.mxu0 %v1709
    %1727 = vmatprep.subr.bf16.mxu0 0
    %1728 = vmatpush2.bf16.msra.mxu0 0
    %1729 = vmatprep.subr.bf16.mxu0 0
    %1730 = vmatpush2.bf16.msra.mxu0 0
    %1731 = vmatprep.subr.bf16.mxu0 0
    %1732 = vmatpush2.bf16.msra.mxu0 0
    %1733 = vmatprep.subr.bf16.mxu0 0
    %1734 = vmatpush2.bf16.msra.mxu0 0
    %1735 = vmatprep.subr.bf16.mxu0 0
    %1736 = vmatpush2.bf16.msra.mxu0 0
    %1737 = vmatprep.subr.bf16.mxu0 0
    %1738 = vmatpush2.bf16.msra.mxu0 0
    %1739 = vmatprep.subr.bf16.mxu0 0
    %1740 = vmatpush2.bf16.msra.mxu0 0
    %1741 = vmatprep.subr.bf16.mxu0 0
    %1742 = vmatpush2.bf16.msra.mxu0 0
    %1743 = vmatprep.mubr.bf16.mxu0 0
    %1744 = vmatmul.mubr.bf16.gmra.mxu0 %v1596
    %v1745 = vpop.f32.mrf.mxu0
    %v1746 = vadd.f32 %v1566, %v1745
    %v1747 = vpop.f32.mrf.mxu0
    %v1748 = vpop.f32.mrf.mxu0
    %v1749 = vadd.f32 %v1571, %v1748
    %v1750 = vpop.f32.mrf.mxu0
    %1751 = vmatprep.mubr.bf16.mxu0 0
    %1752 = vmatmul.mubr.bf16.gmra.mxu0 %v1599
    %v1753 = vpop.f32.mrf.mxu0
    %v1754 = vadd.f32 %v1576, %v1753
    %v1755 = vpop.f32.mrf.mxu0
    %v1756 = vpop.f32.mrf.mxu0
    %v1757 = vadd.f32 %v1581, %v1756
    %v1758 = vpop.f32.mrf.mxu0
    %1759 = vdwg.mxu0
    %v1760 = vmax.f32 %v1746, 0.0
    %v1761 = vmax.f32 %v1749, 0.0
    %v1762 = vmax.f32 %v1754, 0.0
    %v1763 = vmax.f32 %v1757, 0.0
    %v1764 = vpack.c.bf16 %v1550, %v1549
    %v1765 = vpack.c.bf16 %v1552, %v1551
    %1766 = vmatprep.subr.bf16.mxu0 0
    %1767 = vmatpush1.bf16.msra.mxu0 0
    %1768 = vmatprep.subr.bf16.mxu0 0
    %1769 = vmatpush1.bf16.msra.mxu0 0
    %1770 = vmatprep.subr.bf16.mxu0 0
    %1771 = vmatpush1.bf16.msra.mxu0 0
    %1772 = vmatprep.subr.bf16.mxu0 0
    %1773 = vmatpush1.bf16.msra.mxu0 0
    %1774 = vmatprep.subr.bf16.mxu0 0
    %1775 = vmatpush1.bf16.msra.mxu0 0
    %1776 = vmatprep.subr.bf16.mxu0 0
    %1777 = vmatpush1.bf16.msra.mxu0 0
    %1778 = vmatprep.subr.bf16.mxu0 0
    %1779 = vmatpush1.bf16.msra.mxu0 %v1765
    %1780 = vmatprep.subr.bf16.mxu0 0
    %1781 = vmatpush1.bf16.msra.mxu0 %v1764
    %1782 = vmatprep.subr.bf16.mxu0 0
    %1783 = vmatpush2.bf16.msra.mxu0 0
    %1784 = vmatprep.subr.bf16.mxu0 0
    %1785 = vmatpush2.bf16.msra.mxu0 0
    %1786 = vmatprep.subr.bf16.mxu0 0
    %1787 = vmatpush2.bf16.msra.mxu0 0
    %1788 = vmatprep.subr.bf16.mxu0 0
    %1789 = vmatpush2.bf16.msra.mxu0 0
    %1790 = vmatprep.subr.bf16.mxu0 0
    %1791 = vmatpush2.bf16.msra.mxu0 0
    %1792 = vmatprep.subr.bf16.mxu0 0
    %1793 = vmatpush2.bf16.msra.mxu0 0
    %1794 = vmatprep.subr.bf16.mxu0 0
    %1795 = vmatpush2.bf16.msra.mxu0 0
    %1796 = vmatprep.subr.bf16.mxu0 0
    %1797 = vmatpush2.bf16.msra.mxu0 0
    %1798 = vmatprep.mubr.bf16.mxu0 0
    %1799 = vmatmul.mubr.bf16.gmra.mxu0 %v1596
    %v1800 = vpop.f32.mrf.mxu0
    %v1801 = vadd.f32 %v1566, %v1800
    %v1802 = vpop.f32.mrf.mxu0
    %v1803 = vpop.f32.mrf.mxu0
    %v1804 = vadd.f32 %v1571, %v1803
    %v1805 = vpop.f32.mrf.mxu0
    %1806 = vmatprep.mubr.bf16.mxu0 0
    %1807 = vmatmul.mubr.bf16.gmra.mxu0 %v1599
    %v1808 = vpop.f32.mrf.mxu0
    %v1809 = vadd.f32 %v1576, %v1808
    %v1810 = vpop.f32.mrf.mxu0
    %v1811 = vpop.f32.mrf.mxu0
    %v1812 = vadd.f32 %v1581, %v1811
    %v1813 = vpop.f32.mrf.mxu0
    %1814 = vdwg.mxu0
    %v1815 = vmax.f32 %v1801, 0.0
    %v1816 = vmax.f32 %v1804, 0.0
    %v1817 = vmax.f32 %v1809, 0.0
    %v1818 = vmax.f32 %v1812, 0.0
    %s1819 = scalar_lea.vmem %s3, 80
    %v1820 = vld [vmem:[%s1819] sm:$0xf]
    %v1821 = vld [vmem:[%s1819 + $0x4] sm:$0xf]
    %v1822 = vld [vmem:[%s1819 + $0x8] sm:$0xf]
    %v1823 = vld [vmem:[%s1819 + $0xc] sm:$0xf]
    %s1824 = scalar_lea.vmem %s4, 160
    %v1825 = vld [vmem:[%s1824] sm:$0xff]
    %v1826 = vld [vmem:[%s1824 + $0x8] sm:$0xff]
    %v1827 = vld [vmem:[%s1824 + $0x10] sm:$0xff]
    %v1828 = vld [vmem:[%s1824 + $0x18] sm:$0xff]
    %1830 = vset.pattern.permute.xlu0 0
    %1831 = vperm.xlu0 %1830, %v1825
    %v1832 = vpop.permute.xlu0 %1831
    %1835 = vset.pattern.permute.xlu0 0
    %1836 = vperm.xlu0 %1835, %v1826
    %v1837 = vpop.permute.xlu0 %1836
    %1840 = vset.pattern.permute.xlu0 0
    %1841 = vperm.xlu0 %1840, %v1827
    %v1842 = vpop.permute.xlu0 %1841
    %1845 = vset.pattern.permute.xlu0 0
    %1846 = vperm.xlu0 %1845, %v1828
    %v1847 = vpop.permute.xlu0 %1846
    %v1849 = vpack.c.bf16 %v1651, %v1650
    %v1850 = vpack.c.bf16 %v1653, %v1652
    %v1855 = vunpack.c.l.b16 %v1820
    %v1856 = vunpack.c.l.b16 %v1821
    %v1857 = vunpack.c.l.b16 %v1822
    %v1858 = vunpack.c.l.b16 %v1823
    %v1859 = vpack.c.b16 %v1856, %v1855
    %v1860 = vpack.c.b16 %v1858, %v1857
    %v1862 = vsel %vm530, %v1859, 0
    %v1865 = vsel %vm530, %v1860, 0
    %1867 = vmatprep.subr.bf16.mxu0 0
    %1868 = vmatpush1.bf16.msra.mxu0 0
    %1869 = vmatprep.subr.bf16.mxu0 0
    %1870 = vmatpush1.bf16.msra.mxu0 0
    %1871 = vmatprep.subr.bf16.mxu0 0
    %1872 = vmatpush1.bf16.msra.mxu0 0
    %1873 = vmatprep.subr.bf16.mxu0 0
    %1874 = vmatpush1.bf16.msra.mxu0 0
    %1875 = vmatprep.subr.bf16.mxu0 0
    %1876 = vmatpush1.bf16.msra.mxu0 0
    %1877 = vmatprep.subr.bf16.mxu0 0
    %1878 = vmatpush1.bf16.msra.mxu0 0
    %1879 = vmatprep.subr.bf16.mxu0 0
    %1880 = vmatpush1.bf16.msra.mxu0 %v1850
    %1881 = vmatprep.subr.bf16.mxu0 0
    %1882 = vmatpush1.bf16.msra.mxu0 %v1849
    %1883 = vmatprep.subr.bf16.mxu0 0
    %1884 = vmatpush2.bf16.msra.mxu0 0
    %1885 = vmatprep.subr.bf16.mxu0 0
    %1886 = vmatpush2.bf16.msra.mxu0 0
    %1887 = vmatprep.subr.bf16.mxu0 0
    %1888 = vmatpush2.bf16.msra.mxu0 0
    %1889 = vmatprep.subr.bf16.mxu0 0
    %1890 = vmatpush2.bf16.msra.mxu0 0
    %1891 = vmatprep.subr.bf16.mxu0 0
    %1892 = vmatpush2.bf16.msra.mxu0 0
    %1893 = vmatprep.subr.bf16.mxu0 0
    %1894 = vmatpush2.bf16.msra.mxu0 0
    %1895 = vmatprep.subr.bf16.mxu0 0
    %1896 = vmatpush2.bf16.msra.mxu0 0
    %1897 = vmatprep.subr.bf16.mxu0 0
    %1898 = vmatpush2.bf16.msra.mxu0 0
    %1899 = vmatprep.mubr.bf16.mxu0 0
    %1900 = vmatmul.mubr.bf16.gmra.mxu0 %v1862
    %v1901 = vpop.f32.mrf.mxu0
    %v1902 = vadd.f32 %v1832, %v1901
    %v1903 = vpop.f32.mrf.mxu0
    %v1904 = vpop.f32.mrf.mxu0
    %v1905 = vadd.f32 %v1837, %v1904
    %v1906 = vpop.f32.mrf.mxu0
    %1907 = vmatprep.mubr.bf16.mxu0 0
    %1908 = vmatmul.mubr.bf16.gmra.mxu0 %v1865
    %v1909 = vpop.f32.mrf.mxu0
    %v1910 = vadd.f32 %v1842, %v1909
    %v1911 = vpop.f32.mrf.mxu0
    %v1912 = vpop.f32.mrf.mxu0
    %v1913 = vadd.f32 %v1847, %v1912
    %v1914 = vpop.f32.mrf.mxu0
    %1915 = vdwg.mxu0
    %v1916 = vmax.f32 %v1902, 0.0
    %v1917 = vmax.f32 %v1905, 0.0
    %v1918 = vmax.f32 %v1910, 0.0
    %v1919 = vmax.f32 %v1913, 0.0
    %v1920 = vpack.c.bf16 %v1706, %v1705
    %v1921 = vpack.c.bf16 %v1708, %v1707
    %1922 = vmatprep.subr.bf16.mxu0 0
    %1923 = vmatpush1.bf16.msra.mxu0 0
    %1924 = vmatprep.subr.bf16.mxu0 0
    %1925 = vmatpush1.bf16.msra.mxu0 0
    %1926 = vmatprep.subr.bf16.mxu0 0
    %1927 = vmatpush1.bf16.msra.mxu0 0
    %1928 = vmatprep.subr.bf16.mxu0 0
    %1929 = vmatpush1.bf16.msra.mxu0 0
    %1930 = vmatprep.subr.bf16.mxu0 0
    %1931 = vmatpush1.bf16.msra.mxu0 0
    %1932 = vmatprep.subr.bf16.mxu0 0
    %1933 = vmatpush1.bf16.msra.mxu0 0
    %1934 = vmatprep.subr.bf16.mxu0 0
    %1935 = vmatpush1.bf16.msra.mxu0 %v1921
    %1936 = vmatprep.subr.bf16.mxu0 0
    %1937 = vmatpush1.bf16.msra.mxu0 %v1920
    %1938 = vmatprep.subr.bf16.mxu0 0
    %1939 = vmatpush2.bf16.msra.mxu0 0
    %1940 = vmatprep.subr.bf16.mxu0 0
    %1941 = vmatpush2.bf16.msra.mxu0 0
    %1942 = vmatprep.subr.bf16.mxu0 0
    %1943 = vmatpush2.bf16.msra.mxu0 0
    %1944 = vmatprep.subr.bf16.mxu0 0
    %1945 = vmatpush2.bf16.msra.mxu0 0
    %1946 = vmatprep.subr.bf16.mxu0 0
    %1947 = vmatpush2.bf16.msra.mxu0 0
    %1948 = vmatprep.subr.bf16.mxu0 0
    %1949 = vmatpush2.bf16.msra.mxu0 0
    %1950 = vmatprep.subr.bf16.mxu0 0
    %1951 = vmatpush2.bf16.msra.mxu0 0
    %1952 = vmatprep.subr.bf16.mxu0 0
    %1953 = vmatpush2.bf16.msra.mxu0 0
    %1954 = vmatprep.mubr.bf16.mxu0 0
    %1955 = vmatmul.mubr.bf16.gmra.mxu0 %v1862
    %v1956 = vpop.f32.mrf.mxu0
    %v1957 = vadd.f32 %v1832, %v1956
    %v1958 = vpop.f32.mrf.mxu0
    %v1959 = vpop.f32.mrf.mxu0
    %v1960 = vadd.f32 %v1837, %v1959
    %v1961 = vpop.f32.mrf.mxu0
    %1962 = vmatprep.mubr.bf16.mxu0 0
    %1963 = vmatmul.mubr.bf16.gmra.mxu0 %v1865
    %v1964 = vpop.f32.mrf.mxu0
    %v1965 = vadd.f32 %v1842, %v1964
    %v1966 = vpop.f32.mrf.mxu0
    %v1967 = vpop.f32.mrf.mxu0
    %v1968 = vadd.f32 %v1847, %v1967
    %v1969 = vpop.f32.mrf.mxu0
    %1970 = vdwg.mxu0
    %v1971 = vmax.f32 %v1957, 0.0
    %v1972 = vmax.f32 %v1960, 0.0
    %v1973 = vmax.f32 %v1965, 0.0
    %v1974 = vmax.f32 %v1968, 0.0
    %v1975 = vpack.c.bf16 %v1761, %v1760
    %v1976 = vpack.c.bf16 %v1763, %v1762
    %1977 = vmatprep.subr.bf16.mxu0 0
    %1978 = vmatpush1.bf16.msra.mxu0 0
    %1979 = vmatprep.subr.bf16.mxu0 0
    %1980 = vmatpush1.bf16.msra.mxu0 0
    %1981 = vmatprep.subr.bf16.mxu0 0
    %1982 = vmatpush1.bf16.msra.mxu0 0
    %1983 = vmatprep.subr.bf16.mxu0 0
    %1984 = vmatpush1.bf16.msra.mxu0 0
    %1985 = vmatprep.subr.bf16.mxu0 0
    %1986 = vmatpush1.bf16.msra.mxu0 0
    %1987 = vmatprep.subr.bf16.mxu0 0
    %1988 = vmatpush1.bf16.msra.mxu0 0
    %1989 = vmatprep.subr.bf16.mxu0 0
    %1990 = vmatpush1.bf16.msra.mxu0 %v1976
    %1991 = vmatprep.subr.bf16.mxu0 0
    %1992 = vmatpush1.bf16.msra.mxu0 %v1975
    %1993 = vmatprep.subr.bf16.mxu0 0
    %1994 = vmatpush2.bf16.msra.mxu0 0
    %1995 = vmatprep.subr.bf16.mxu0 0
    %1996 = vmatpush2.bf16.msra.mxu0 0
    %1997 = vmatprep.subr.bf16.mxu0 0
    %1998 = vmatpush2.bf16.msra.mxu0 0
    %1999 = vmatprep.subr.bf16.mxu0 0
    %2000 = vmatpush2.bf16.msra.mxu0 0
    %2001 = vmatprep.subr.bf16.mxu0 0
    %2002 = vmatpush2.bf16.msra.mxu0 0
    %2003 = vmatprep.subr.bf16.mxu0 0
    %2004 = vmatpush2.bf16.msra.mxu0 0
    %2005 = vmatprep.subr.bf16.mxu0 0
    %2006 = vmatpush2.bf16.msra.mxu0 0
    %2007 = vmatprep.subr.bf16.mxu0 0
    %2008 = vmatpush2.bf16.msra.mxu0 0
    %2009 = vmatprep.mubr.bf16.mxu0 0
    %2010 = vmatmul.mubr.bf16.gmra.mxu0 %v1862
    %v2011 = vpop.f32.mrf.mxu0
    %v2012 = vadd.f32 %v1832, %v2011
    %v2013 = vpop.f32.mrf.mxu0
    %v2014 = vpop.f32.mrf.mxu0
    %v2015 = vadd.f32 %v1837, %v2014
    %v2016 = vpop.f32.mrf.mxu0
    %2017 = vmatprep.mubr.bf16.mxu0 0
    %2018 = vmatmul.mubr.bf16.gmra.mxu0 %v1865
    %v2019 = vpop.f32.mrf.mxu0
    %v2020 = vadd.f32 %v1842, %v2019
    %v2021 = vpop.f32.mrf.mxu0
    %v2022 = vpop.f32.mrf.mxu0
    %v2023 = vadd.f32 %v1847, %v2022
    %v2024 = vpop.f32.mrf.mxu0
    %2025 = vdwg.mxu0
    %v2026 = vmax.f32 %v2012, 0.0
    %v2027 = vmax.f32 %v2015, 0.0
    %v2028 = vmax.f32 %v2020, 0.0
    %v2029 = vmax.f32 %v2023, 0.0
    %v2030 = vpack.c.bf16 %v1816, %v1815
    %v2031 = vpack.c.bf16 %v1818, %v1817
    %2032 = vmatprep.subr.bf16.mxu0 0
    %2033 = vmatpush1.bf16.msra.mxu0 0
    %2034 = vmatprep.subr.bf16.mxu0 0
    %2035 = vmatpush1.bf16.msra.mxu0 0
    %2036 = vmatprep.subr.bf16.mxu0 0
    %2037 = vmatpush1.bf16.msra.mxu0 0
    %2038 = vmatprep.subr.bf16.mxu0 0
    %2039 = vmatpush1.bf16.msra.mxu0 0
    %2040 = vmatprep.subr.bf16.mxu0 0
    %2041 = vmatpush1.bf16.msra.mxu0 0
    %2042 = vmatprep.subr.bf16.mxu0 0
    %2043 = vmatpush1.bf16.msra.mxu0 0
    %2044 = vmatprep.subr.bf16.mxu0 0
    %2045 = vmatpush1.bf16.msra.mxu0 %v2031
    %2046 = vmatprep.subr.bf16.mxu0 0
    %2047 = vmatpush1.bf16.msra.mxu0 %v2030
    %2048 = vmatprep.subr.bf16.mxu0 0
    %2049 = vmatpush2.bf16.msra.mxu0 0
    %2050 = vmatprep.subr.bf16.mxu0 0
    %2051 = vmatpush2.bf16.msra.mxu0 0
    %2052 = vmatprep.subr.bf16.mxu0 0
    %2053 = vmatpush2.bf16.msra.mxu0 0
    %2054 = vmatprep.subr.bf16.mxu0 0
    %2055 = vmatpush2.bf16.msra.mxu0 0
    %2056 = vmatprep.subr.bf16.mxu0 0
    %2057 = vmatpush2.bf16.msra.mxu0 0
    %2058 = vmatprep.subr.bf16.mxu0 0
    %2059 = vmatpush2.bf16.msra.mxu0 0
    %2060 = vmatprep.subr.bf16.mxu0 0
    %2061 = vmatpush2.bf16.msra.mxu0 0
    %2062 = vmatprep.subr.bf16.mxu0 0
    %2063 = vmatpush2.bf16.msra.mxu0 0
    %2064 = vmatprep.mubr.bf16.mxu0 0
    %2065 = vmatmul.mubr.bf16.gmra.mxu0 %v1862
    %v2066 = vpop.f32.mrf.mxu0
    %v2067 = vadd.f32 %v1832, %v2066
    %v2068 = vpop.f32.mrf.mxu0
    %v2069 = vpop.f32.mrf.mxu0
    %v2070 = vadd.f32 %v1837, %v2069
    %v2071 = vpop.f32.mrf.mxu0
    %2072 = vmatprep.mubr.bf16.mxu0 0
    %2073 = vmatmul.mubr.bf16.gmra.mxu0 %v1865
    %v2074 = vpop.f32.mrf.mxu0
    %v2075 = vadd.f32 %v1842, %v2074
    %v2076 = vpop.f32.mrf.mxu0
    %v2077 = vpop.f32.mrf.mxu0
    %v2078 = vadd.f32 %v1847, %v2077
    %v2079 = vpop.f32.mrf.mxu0
    %2080 = vdwg.mxu0
    %v2081 = vmax.f32 %v2067, 0.0
    %v2082 = vmax.f32 %v2070, 0.0
    %v2083 = vmax.f32 %v2075, 0.0
    %v2084 = vmax.f32 %v2078, 0.0
    %s2085 = scalar_lea.vmem %s3, 96
    %v2086 = vld [vmem:[%s2085] sm:$0xf]
    %v2087 = vld [vmem:[%s2085 + $0x4] sm:$0xf]
    %v2088 = vld [vmem:[%s2085 + $0x8] sm:$0xf]
    %v2089 = vld [vmem:[%s2085 + $0xc] sm:$0xf]
    %s2090 = scalar_lea.vmem %s4, 192
    %v2091 = vld [vmem:[%s2090] sm:$0xff]
    %v2092 = vld [vmem:[%s2090 + $0x8] sm:$0xff]
    %v2093 = vld [vmem:[%s2090 + $0x10] sm:$0xff]
    %v2094 = vld [vmem:[%s2090 + $0x18] sm:$0xff]
    %2096 = vset.pattern.permute.xlu0 0
    %2097 = vperm.xlu0 %2096, %v2091
    %v2098 = vpop.permute.xlu0 %2097
    %2101 = vset.pattern.permute.xlu0 0
    %2102 = vperm.xlu0 %2101, %v2092
    %v2103 = vpop.permute.xlu0 %2102
    %2106 = vset.pattern.permute.xlu0 0
    %2107 = vperm.xlu0 %2106, %v2093
    %v2108 = vpop.permute.xlu0 %2107
    %2111 = vset.pattern.permute.xlu0 0
    %2112 = vperm.xlu0 %2111, %v2094
    %v2113 = vpop.permute.xlu0 %2112
    %v2115 = vpack.c.bf16 %v1917, %v1916
    %v2116 = vpack.c.bf16 %v1919, %v1918
    %v2121 = vunpack.c.l.b16 %v2086
    %v2122 = vunpack.c.l.b16 %v2087
    %v2123 = vunpack.c.l.b16 %v2088
    %v2124 = vunpack.c.l.b16 %v2089
    %v2125 = vpack.c.b16 %v2122, %v2121
    %v2126 = vpack.c.b16 %v2124, %v2123
    %v2128 = vsel %vm530, %v2125, 0
    %v2131 = vsel %vm530, %v2126, 0
    %2133 = vmatprep.subr.bf16.mxu0 0
    %2134 = vmatpush1.bf16.msra.mxu0 0
    %2135 = vmatprep.subr.bf16.mxu0 0
    %2136 = vmatpush1.bf16.msra.mxu0 0
    %2137 = vmatprep.subr.bf16.mxu0 0
    %2138 = vmatpush1.bf16.msra.mxu0 0
    %2139 = vmatprep.subr.bf16.mxu0 0
    %2140 = vmatpush1.bf16.msra.mxu0 0
    %2141 = vmatprep.subr.bf16.mxu0 0
    %2142 = vmatpush1.bf16.msra.mxu0 0
    %2143 = vmatprep.subr.bf16.mxu0 0
    %2144 = vmatpush1.bf16.msra.mxu0 0
    %2145 = vmatprep.subr.bf16.mxu0 0
    %2146 = vmatpush1.bf16.msra.mxu0 %v2116
    %2147 = vmatprep.subr.bf16.mxu0 0
    %2148 = vmatpush1.bf16.msra.mxu0 %v2115
    %2149 = vmatprep.subr.bf16.mxu0 0
    %2150 = vmatpush2.bf16.msra.mxu0 0
    %2151 = vmatprep.subr.bf16.mxu0 0
    %2152 = vmatpush2.bf16.msra.mxu0 0
    %2153 = vmatprep.subr.bf16.mxu0 0
    %2154 = vmatpush2.bf16.msra.mxu0 0
    %2155 = vmatprep.subr.bf16.mxu0 0
    %2156 = vmatpush2.bf16.msra.mxu0 0
    %2157 = vmatprep.subr.bf16.mxu0 0
    %2158 = vmatpush2.bf16.msra.mxu0 0
    %2159 = vmatprep.subr.bf16.mxu0 0
    %2160 = vmatpush2.bf16.msra.mxu0 0
    %2161 = vmatprep.subr.bf16.mxu0 0
    %2162 = vmatpush2.bf16.msra.mxu0 0
    %2163 = vmatprep.subr.bf16.mxu0 0
    %2164 = vmatpush2.bf16.msra.mxu0 0
    %2165 = vmatprep.mubr.bf16.mxu0 0
    %2166 = vmatmul.mubr.bf16.gmra.mxu0 %v2128
    %v2167 = vpop.f32.mrf.mxu0
    %v2168 = vadd.f32 %v2098, %v2167
    %v2169 = vpop.f32.mrf.mxu0
    %v2170 = vpop.f32.mrf.mxu0
    %v2171 = vadd.f32 %v2103, %v2170
    %v2172 = vpop.f32.mrf.mxu0
    %2173 = vmatprep.mubr.bf16.mxu0 0
    %2174 = vmatmul.mubr.bf16.gmra.mxu0 %v2131
    %v2175 = vpop.f32.mrf.mxu0
    %v2176 = vadd.f32 %v2108, %v2175
    %v2177 = vpop.f32.mrf.mxu0
    %v2178 = vpop.f32.mrf.mxu0
    %v2179 = vadd.f32 %v2113, %v2178
    %v2180 = vpop.f32.mrf.mxu0
    %2181 = vdwg.mxu0
    %v2182 = vmax.f32 %v2168, 0.0
    %v2183 = vmax.f32 %v2171, 0.0
    %v2184 = vmax.f32 %v2176, 0.0
    %v2185 = vmax.f32 %v2179, 0.0
    %v2186 = vpack.c.bf16 %v1972, %v1971
    %v2187 = vpack.c.bf16 %v1974, %v1973
    %2188 = vmatprep.subr.bf16.mxu0 0
    %2189 = vmatpush1.bf16.msra.mxu0 0
    %2190 = vmatprep.subr.bf16.mxu0 0
    %2191 = vmatpush1.bf16.msra.mxu0 0
    %2192 = vmatprep.subr.bf16.mxu0 0
    %2193 = vmatpush1.bf16.msra.mxu0 0
    %2194 = vmatprep.subr.bf16.mxu0 0
    %2195 = vmatpush1.bf16.msra.mxu0 0
    %2196 = vmatprep.subr.bf16.mxu0 0
    %2197 = vmatpush1.bf16.msra.mxu0 0
    %2198 = vmatprep.subr.bf16.mxu0 0
    %2199 = vmatpush1.bf16.msra.mxu0 0
    %2200 = vmatprep.subr.bf16.mxu0 0
    %2201 = vmatpush1.bf16.msra.mxu0 %v2187
    %2202 = vmatprep.subr.bf16.mxu0 0
    %2203 = vmatpush1.bf16.msra.mxu0 %v2186
    %2204 = vmatprep.subr.bf16.mxu0 0
    %2205 = vmatpush2.bf16.msra.mxu0 0
    %2206 = vmatprep.subr.bf16.mxu0 0
    %2207 = vmatpush2.bf16.msra.mxu0 0
    %2208 = vmatprep.subr.bf16.mxu0 0
    %2209 = vmatpush2.bf16.msra.mxu0 0
    %2210 = vmatprep.subr.bf16.mxu0 0
    %2211 = vmatpush2.bf16.msra.mxu0 0
    %2212 = vmatprep.subr.bf16.mxu0 0
    %2213 = vmatpush2.bf16.msra.mxu0 0
    %2214 = vmatprep.subr.bf16.mxu0 0
    %2215 = vmatpush2.bf16.msra.mxu0 0
    %2216 = vmatprep.subr.bf16.mxu0 0
    %2217 = vmatpush2.bf16.msra.mxu0 0
    %2218 = vmatprep.subr.bf16.mxu0 0
    %2219 = vmatpush2.bf16.msra.mxu0 0
    %2220 = vmatprep.mubr.bf16.mxu0 0
    %2221 = vmatmul.mubr.bf16.gmra.mxu0 %v2128
    %v2222 = vpop.f32.mrf.mxu0
    %v2223 = vadd.f32 %v2098, %v2222
    %v2224 = vpop.f32.mrf.mxu0
    %v2225 = vpop.f32.mrf.mxu0
    %v2226 = vadd.f32 %v2103, %v2225
    %v2227 = vpop.f32.mrf.mxu0
    %2228 = vmatprep.mubr.bf16.mxu0 0
    %2229 = vmatmul.mubr.bf16.gmra.mxu0 %v2131
    %v2230 = vpop.f32.mrf.mxu0
    %v2231 = vadd.f32 %v2108, %v2230
    %v2232 = vpop.f32.mrf.mxu0
    %v2233 = vpop.f32.mrf.mxu0
    %v2234 = vadd.f32 %v2113, %v2233
    %v2235 = vpop.f32.mrf.mxu0
    %2236 = vdwg.mxu0
    %v2237 = vmax.f32 %v2223, 0.0
    %v2238 = vmax.f32 %v2226, 0.0
    %v2239 = vmax.f32 %v2231, 0.0
    %v2240 = vmax.f32 %v2234, 0.0
    %v2241 = vpack.c.bf16 %v2027, %v2026
    %v2242 = vpack.c.bf16 %v2029, %v2028
    %2243 = vmatprep.subr.bf16.mxu0 0
    %2244 = vmatpush1.bf16.msra.mxu0 0
    %2245 = vmatprep.subr.bf16.mxu0 0
    %2246 = vmatpush1.bf16.msra.mxu0 0
    %2247 = vmatprep.subr.bf16.mxu0 0
    %2248 = vmatpush1.bf16.msra.mxu0 0
    %2249 = vmatprep.subr.bf16.mxu0 0
    %2250 = vmatpush1.bf16.msra.mxu0 0
    %2251 = vmatprep.subr.bf16.mxu0 0
    %2252 = vmatpush1.bf16.msra.mxu0 0
    %2253 = vmatprep.subr.bf16.mxu0 0
    %2254 = vmatpush1.bf16.msra.mxu0 0
    %2255 = vmatprep.subr.bf16.mxu0 0
    %2256 = vmatpush1.bf16.msra.mxu0 %v2242
    %2257 = vmatprep.subr.bf16.mxu0 0
    %2258 = vmatpush1.bf16.msra.mxu0 %v2241
    %2259 = vmatprep.subr.bf16.mxu0 0
    %2260 = vmatpush2.bf16.msra.mxu0 0
    %2261 = vmatprep.subr.bf16.mxu0 0
    %2262 = vmatpush2.bf16.msra.mxu0 0
    %2263 = vmatprep.subr.bf16.mxu0 0
    %2264 = vmatpush2.bf16.msra.mxu0 0
    %2265 = vmatprep.subr.bf16.mxu0 0
    %2266 = vmatpush2.bf16.msra.mxu0 0
    %2267 = vmatprep.subr.bf16.mxu0 0
    %2268 = vmatpush2.bf16.msra.mxu0 0
    %2269 = vmatprep.subr.bf16.mxu0 0
    %2270 = vmatpush2.bf16.msra.mxu0 0
    %2271 = vmatprep.subr.bf16.mxu0 0
    %2272 = vmatpush2.bf16.msra.mxu0 0
    %2273 = vmatprep.subr.bf16.mxu0 0
    %2274 = vmatpush2.bf16.msra.mxu0 0
    %2275 = vmatprep.mubr.bf16.mxu0 0
    %2276 = vmatmul.mubr.bf16.gmra.mxu0 %v2128
    %v2277 = vpop.f32.mrf.mxu0
    %v2278 = vadd.f32 %v2098, %v2277
    %v2279 = vpop.f32.mrf.mxu0
    %v2280 = vpop.f32.mrf.mxu0
    %v2281 = vadd.f32 %v2103, %v2280
    %v2282 = vpop.f32.mrf.mxu0
    %2283 = vmatprep.mubr.bf16.mxu0 0
    %2284 = vmatmul.mubr.bf16.gmra.mxu0 %v2131
    %v2285 = vpop.f32.mrf.mxu0
    %v2286 = vadd.f32 %v2108, %v2285
    %v2287 = vpop.f32.mrf.mxu0
    %v2288 = vpop.f32.mrf.mxu0
    %v2289 = vadd.f32 %v2113, %v2288
    %v2290 = vpop.f32.mrf.mxu0
    %2291 = vdwg.mxu0
    %v2292 = vmax.f32 %v2278, 0.0
    %v2293 = vmax.f32 %v2281, 0.0
    %v2294 = vmax.f32 %v2286, 0.0
    %v2295 = vmax.f32 %v2289, 0.0
    %v2296 = vpack.c.bf16 %v2082, %v2081
    %v2297 = vpack.c.bf16 %v2084, %v2083
    %2298 = vmatprep.subr.bf16.mxu0 0
    %2299 = vmatpush1.bf16.msra.mxu0 0
    %2300 = vmatprep.subr.bf16.mxu0 0
    %2301 = vmatpush1.bf16.msra.mxu0 0
    %2302 = vmatprep.subr.bf16.mxu0 0
    %2303 = vmatpush1.bf16.msra.mxu0 0
    %2304 = vmatprep.subr.bf16.mxu0 0
    %2305 = vmatpush1.bf16.msra.mxu0 0
    %2306 = vmatprep.subr.bf16.mxu0 0
    %2307 = vmatpush1.bf16.msra.mxu0 0
    %2308 = vmatprep.subr.bf16.mxu0 0
    %2309 = vmatpush1.bf16.msra.mxu0 0
    %2310 = vmatprep.subr.bf16.mxu0 0
    %2311 = vmatpush1.bf16.msra.mxu0 %v2297
    %2312 = vmatprep.subr.bf16.mxu0 0
    %2313 = vmatpush1.bf16.msra.mxu0 %v2296
    %2314 = vmatprep.subr.bf16.mxu0 0
    %2315 = vmatpush2.bf16.msra.mxu0 0
    %2316 = vmatprep.subr.bf16.mxu0 0
    %2317 = vmatpush2.bf16.msra.mxu0 0
    %2318 = vmatprep.subr.bf16.mxu0 0
    %2319 = vmatpush2.bf16.msra.mxu0 0
    %2320 = vmatprep.subr.bf16.mxu0 0
    %2321 = vmatpush2.bf16.msra.mxu0 0
    %2322 = vmatprep.subr.bf16.mxu0 0
    %2323 = vmatpush2.bf16.msra.mxu0 0
    %2324 = vmatprep.subr.bf16.mxu0 0
    %2325 = vmatpush2.bf16.msra.mxu0 0
    %2326 = vmatprep.subr.bf16.mxu0 0
    %2327 = vmatpush2.bf16.msra.mxu0 0
    %2328 = vmatprep.subr.bf16.mxu0 0
    %2329 = vmatpush2.bf16.msra.mxu0 0
    %2330 = vmatprep.mubr.bf16.mxu0 0
    %2331 = vmatmul.mubr.bf16.gmra.mxu0 %v2128
    %v2332 = vpop.f32.mrf.mxu0
    %v2333 = vadd.f32 %v2098, %v2332
    %v2334 = vpop.f32.mrf.mxu0
    %v2335 = vpop.f32.mrf.mxu0
    %v2336 = vadd.f32 %v2103, %v2335
    %v2337 = vpop.f32.mrf.mxu0
    %2338 = vmatprep.mubr.bf16.mxu0 0
    %2339 = vmatmul.mubr.bf16.gmra.mxu0 %v2131
    %v2340 = vpop.f32.mrf.mxu0
    %v2341 = vadd.f32 %v2108, %v2340
    %v2342 = vpop.f32.mrf.mxu0
    %v2343 = vpop.f32.mrf.mxu0
    %v2344 = vadd.f32 %v2113, %v2343
    %v2345 = vpop.f32.mrf.mxu0
    %2346 = vdwg.mxu0
    %v2347 = vmax.f32 %v2333, 0.0
    %v2348 = vmax.f32 %v2336, 0.0
    %v2349 = vmax.f32 %v2341, 0.0
    %v2350 = vmax.f32 %v2344, 0.0
    %s2351 = scalar_lea.vmem %s3, 112
    %v2352 = vld [vmem:[%s2351] sm:$0xf]
    %v2353 = vld [vmem:[%s2351 + $0x4] sm:$0xf]
    %v2354 = vld [vmem:[%s2351 + $0x8] sm:$0xf]
    %v2355 = vld [vmem:[%s2351 + $0xc] sm:$0xf]
    %s2356 = scalar_lea.vmem %s4, 224
    %v2357 = vld [vmem:[%s2356] sm:$0xff]
    %v2358 = vld [vmem:[%s2356 + $0x8] sm:$0xff]
    %v2359 = vld [vmem:[%s2356 + $0x10] sm:$0xff]
    %v2360 = vld [vmem:[%s2356 + $0x18] sm:$0xff]
    %2362 = vset.pattern.permute.xlu0 0
    %2363 = vperm.xlu0 %2362, %v2357
    %v2364 = vpop.permute.xlu0 %2363
    %2367 = vset.pattern.permute.xlu0 0
    %2368 = vperm.xlu0 %2367, %v2358
    %v2369 = vpop.permute.xlu0 %2368
    %2372 = vset.pattern.permute.xlu0 0
    %2373 = vperm.xlu0 %2372, %v2359
    %v2374 = vpop.permute.xlu0 %2373
    %2377 = vset.pattern.permute.xlu0 0
    %2378 = vperm.xlu0 %2377, %v2360
    %v2379 = vpop.permute.xlu0 %2378
    %v2381 = vpack.c.bf16 %v2183, %v2182
    %v2382 = vpack.c.bf16 %v2185, %v2184
    %v2387 = vunpack.c.l.b16 %v2352
    %v2388 = vunpack.c.l.b16 %v2353
    %v2389 = vunpack.c.l.b16 %v2354
    %v2390 = vunpack.c.l.b16 %v2355
    %v2391 = vpack.c.b16 %v2388, %v2387
    %v2392 = vpack.c.b16 %v2390, %v2389
    %v2394 = vsel %vm530, %v2391, 0
    %v2397 = vsel %vm530, %v2392, 0
    %2399 = vmatprep.subr.bf16.mxu0 0
    %2400 = vmatpush1.bf16.msra.mxu0 0
    %2401 = vmatprep.subr.bf16.mxu0 0
    %2402 = vmatpush1.bf16.msra.mxu0 0
    %2403 = vmatprep.subr.bf16.mxu0 0
    %2404 = vmatpush1.bf16.msra.mxu0 0
    %2405 = vmatprep.subr.bf16.mxu0 0
    %2406 = vmatpush1.bf16.msra.mxu0 0
    %2407 = vmatprep.subr.bf16.mxu0 0
    %2408 = vmatpush1.bf16.msra.mxu0 0
    %2409 = vmatprep.subr.bf16.mxu0 0
    %2410 = vmatpush1.bf16.msra.mxu0 0
    %2411 = vmatprep.subr.bf16.mxu0 0
    %2412 = vmatpush1.bf16.msra.mxu0 %v2382
    %2413 = vmatprep.subr.bf16.mxu0 0
    %2414 = vmatpush1.bf16.msra.mxu0 %v2381
    %2415 = vmatprep.subr.bf16.mxu0 0
    %2416 = vmatpush2.bf16.msra.mxu0 0
    %2417 = vmatprep.subr.bf16.mxu0 0
    %2418 = vmatpush2.bf16.msra.mxu0 0
    %2419 = vmatprep.subr.bf16.mxu0 0
    %2420 = vmatpush2.bf16.msra.mxu0 0
    %2421 = vmatprep.subr.bf16.mxu0 0
    %2422 = vmatpush2.bf16.msra.mxu0 0
    %2423 = vmatprep.subr.bf16.mxu0 0
    %2424 = vmatpush2.bf16.msra.mxu0 0
    %2425 = vmatprep.subr.bf16.mxu0 0
    %2426 = vmatpush2.bf16.msra.mxu0 0
    %2427 = vmatprep.subr.bf16.mxu0 0
    %2428 = vmatpush2.bf16.msra.mxu0 0
    %2429 = vmatprep.subr.bf16.mxu0 0
    %2430 = vmatpush2.bf16.msra.mxu0 0
    %2431 = vmatprep.mubr.bf16.mxu0 0
    %2432 = vmatmul.mubr.bf16.gmra.mxu0 %v2394
    %v2433 = vpop.f32.mrf.mxu0
    %v2434 = vadd.f32 %v2364, %v2433
    %v2435 = vpop.f32.mrf.mxu0
    %v2436 = vpop.f32.mrf.mxu0
    %v2437 = vadd.f32 %v2369, %v2436
    %v2438 = vpop.f32.mrf.mxu0
    %2439 = vmatprep.mubr.bf16.mxu0 0
    %2440 = vmatmul.mubr.bf16.gmra.mxu0 %v2397
    %v2441 = vpop.f32.mrf.mxu0
    %v2442 = vadd.f32 %v2374, %v2441
    %v2443 = vpop.f32.mrf.mxu0
    %v2444 = vpop.f32.mrf.mxu0
    %v2445 = vadd.f32 %v2379, %v2444
    %v2446 = vpop.f32.mrf.mxu0
    %2447 = vdwg.mxu0
    %v2448 = vmax.f32 %v2434, 0.0
    %v2449 = vmax.f32 %v2437, 0.0
    %v2450 = vmax.f32 %v2442, 0.0
    %v2451 = vmax.f32 %v2445, 0.0
    %v2452 = vpack.c.bf16 %v2238, %v2237
    %v2453 = vpack.c.bf16 %v2240, %v2239
    %2454 = vmatprep.subr.bf16.mxu0 0
    %2455 = vmatpush1.bf16.msra.mxu0 0
    %2456 = vmatprep.subr.bf16.mxu0 0
    %2457 = vmatpush1.bf16.msra.mxu0 0
    %2458 = vmatprep.subr.bf16.mxu0 0
    %2459 = vmatpush1.bf16.msra.mxu0 0
    %2460 = vmatprep.subr.bf16.mxu0 0
    %2461 = vmatpush1.bf16.msra.mxu0 0
    %2462 = vmatprep.subr.bf16.mxu0 0
    %2463 = vmatpush1.bf16.msra.mxu0 0
    %2464 = vmatprep.subr.bf16.mxu0 0
    %2465 = vmatpush1.bf16.msra.mxu0 0
    %2466 = vmatprep.subr.bf16.mxu0 0
    %2467 = vmatpush1.bf16.msra.mxu0 %v2453
    %2468 = vmatprep.subr.bf16.mxu0 0
    %2469 = vmatpush1.bf16.msra.mxu0 %v2452
    %2470 = vmatprep.subr.bf16.mxu0 0
    %2471 = vmatpush2.bf16.msra.mxu0 0
    %2472 = vmatprep.subr.bf16.mxu0 0
    %2473 = vmatpush2.bf16.msra.mxu0 0
    %2474 = vmatprep.subr.bf16.mxu0 0
    %2475 = vmatpush2.bf16.msra.mxu0 0
    %2476 = vmatprep.subr.bf16.mxu0 0
    %2477 = vmatpush2.bf16.msra.mxu0 0
    %2478 = vmatprep.subr.bf16.mxu0 0
    %2479 = vmatpush2.bf16.msra.mxu0 0
    %2480 = vmatprep.subr.bf16.mxu0 0
    %2481 = vmatpush2.bf16.msra.mxu0 0
    %2482 = vmatprep.subr.bf16.mxu0 0
    %2483 = vmatpush2.bf16.msra.mxu0 0
    %2484 = vmatprep.subr.bf16.mxu0 0
    %2485 = vmatpush2.bf16.msra.mxu0 0
    %2486 = vmatprep.mubr.bf16.mxu0 0
    %2487 = vmatmul.mubr.bf16.gmra.mxu0 %v2394
    %v2488 = vpop.f32.mrf.mxu0
    %v2489 = vadd.f32 %v2364, %v2488
    %v2490 = vpop.f32.mrf.mxu0
    %v2491 = vpop.f32.mrf.mxu0
    %v2492 = vadd.f32 %v2369, %v2491
    %v2493 = vpop.f32.mrf.mxu0
    %2494 = vmatprep.mubr.bf16.mxu0 0
    %2495 = vmatmul.mubr.bf16.gmra.mxu0 %v2397
    %v2496 = vpop.f32.mrf.mxu0
    %v2497 = vadd.f32 %v2374, %v2496
    %v2498 = vpop.f32.mrf.mxu0
    %v2499 = vpop.f32.mrf.mxu0
    %v2500 = vadd.f32 %v2379, %v2499
    %v2501 = vpop.f32.mrf.mxu0
    %2502 = vdwg.mxu0
    %v2503 = vmax.f32 %v2489, 0.0
    %v2504 = vmax.f32 %v2492, 0.0
    %v2505 = vmax.f32 %v2497, 0.0
    %v2506 = vmax.f32 %v2500, 0.0
    %v2507 = vpack.c.bf16 %v2293, %v2292
    %v2508 = vpack.c.bf16 %v2295, %v2294
    %2509 = vmatprep.subr.bf16.mxu0 0
    %2510 = vmatpush1.bf16.msra.mxu0 0
    %2511 = vmatprep.subr.bf16.mxu0 0
    %2512 = vmatpush1.bf16.msra.mxu0 0
    %2513 = vmatprep.subr.bf16.mxu0 0
    %2514 = vmatpush1.bf16.msra.mxu0 0
    %2515 = vmatprep.subr.bf16.mxu0 0
    %2516 = vmatpush1.bf16.msra.mxu0 0
    %2517 = vmatprep.subr.bf16.mxu0 0
    %2518 = vmatpush1.bf16.msra.mxu0 0
    %2519 = vmatprep.subr.bf16.mxu0 0
    %2520 = vmatpush1.bf16.msra.mxu0 0
    %2521 = vmatprep.subr.bf16.mxu0 0
    %2522 = vmatpush1.bf16.msra.mxu0 %v2508
    %2523 = vmatprep.subr.bf16.mxu0 0
    %2524 = vmatpush1.bf16.msra.mxu0 %v2507
    %2525 = vmatprep.subr.bf16.mxu0 0
    %2526 = vmatpush2.bf16.msra.mxu0 0
    %2527 = vmatprep.subr.bf16.mxu0 0
    %2528 = vmatpush2.bf16.msra.mxu0 0
    %2529 = vmatprep.subr.bf16.mxu0 0
    %2530 = vmatpush2.bf16.msra.mxu0 0
    %2531 = vmatprep.subr.bf16.mxu0 0
    %2532 = vmatpush2.bf16.msra.mxu0 0
    %2533 = vmatprep.subr.bf16.mxu0 0
    %2534 = vmatpush2.bf16.msra.mxu0 0
    %2535 = vmatprep.subr.bf16.mxu0 0
    %2536 = vmatpush2.bf16.msra.mxu0 0
    %2537 = vmatprep.subr.bf16.mxu0 0
    %2538 = vmatpush2.bf16.msra.mxu0 0
    %2539 = vmatprep.subr.bf16.mxu0 0
    %2540 = vmatpush2.bf16.msra.mxu0 0
    %2541 = vmatprep.mubr.bf16.mxu0 0
    %2542 = vmatmul.mubr.bf16.gmra.mxu0 %v2394
    %v2543 = vpop.f32.mrf.mxu0
    %v2544 = vadd.f32 %v2364, %v2543
    %v2545 = vpop.f32.mrf.mxu0
    %v2546 = vpop.f32.mrf.mxu0
    %v2547 = vadd.f32 %v2369, %v2546
    %v2548 = vpop.f32.mrf.mxu0
    %2549 = vmatprep.mubr.bf16.mxu0 0
    %2550 = vmatmul.mubr.bf16.gmra.mxu0 %v2397
    %v2551 = vpop.f32.mrf.mxu0
    %v2552 = vadd.f32 %v2374, %v2551
    %v2553 = vpop.f32.mrf.mxu0
    %v2554 = vpop.f32.mrf.mxu0
    %v2555 = vadd.f32 %v2379, %v2554
    %v2556 = vpop.f32.mrf.mxu0
    %2557 = vdwg.mxu0
    %v2558 = vmax.f32 %v2544, 0.0
    %v2559 = vmax.f32 %v2547, 0.0
    %v2560 = vmax.f32 %v2552, 0.0
    %v2561 = vmax.f32 %v2555, 0.0
    %v2562 = vpack.c.bf16 %v2348, %v2347
    %v2563 = vpack.c.bf16 %v2350, %v2349
    %2564 = vmatprep.subr.bf16.mxu0 0
    %2565 = vmatpush1.bf16.msra.mxu0 0
    %2566 = vmatprep.subr.bf16.mxu0 0
    %2567 = vmatpush1.bf16.msra.mxu0 0
    %2568 = vmatprep.subr.bf16.mxu0 0
    %2569 = vmatpush1.bf16.msra.mxu0 0
    %2570 = vmatprep.subr.bf16.mxu0 0
    %2571 = vmatpush1.bf16.msra.mxu0 0
    %2572 = vmatprep.subr.bf16.mxu0 0
    %2573 = vmatpush1.bf16.msra.mxu0 0
    %2574 = vmatprep.subr.bf16.mxu0 0
    %2575 = vmatpush1.bf16.msra.mxu0 0
    %2576 = vmatprep.subr.bf16.mxu0 0
    %2577 = vmatpush1.bf16.msra.mxu0 %v2563
    %2578 = vmatprep.subr.bf16.mxu0 0
    %2579 = vmatpush1.bf16.msra.mxu0 %v2562
    %2580 = vmatprep.subr.bf16.mxu0 0
    %2581 = vmatpush2.bf16.msra.mxu0 0
    %2582 = vmatprep.subr.bf16.mxu0 0
    %2583 = vmatpush2.bf16.msra.mxu0 0
    %2584 = vmatprep.subr.bf16.mxu0 0
    %2585 = vmatpush2.bf16.msra.mxu0 0
    %2586 = vmatprep.subr.bf16.mxu0 0
    %2587 = vmatpush2.bf16.msra.mxu0 0
    %2588 = vmatprep.subr.bf16.mxu0 0
    %2589 = vmatpush2.bf16.msra.mxu0 0
    %2590 = vmatprep.subr.bf16.mxu0 0
    %2591 = vmatpush2.bf16.msra.mxu0 0
    %2592 = vmatprep.subr.bf16.mxu0 0
    %2593 = vmatpush2.bf16.msra.mxu0 0
    %2594 = vmatprep.subr.bf16.mxu0 0
    %2595 = vmatpush2.bf16.msra.mxu0 0
    %2596 = vmatprep.mubr.bf16.mxu0 0
    %2597 = vmatmul.mubr.bf16.gmra.mxu0 %v2394
    %v2598 = vpop.f32.mrf.mxu0
    %v2599 = vadd.f32 %v2364, %v2598
    %v2600 = vpop.f32.mrf.mxu0
    %v2601 = vpop.f32.mrf.mxu0
    %v2602 = vadd.f32 %v2369, %v2601
    %v2603 = vpop.f32.mrf.mxu0
    %2604 = vmatprep.mubr.bf16.mxu0 0
    %2605 = vmatmul.mubr.bf16.gmra.mxu0 %v2397
    %v2606 = vpop.f32.mrf.mxu0
    %v2607 = vadd.f32 %v2374, %v2606
    %v2608 = vpop.f32.mrf.mxu0
    %v2609 = vpop.f32.mrf.mxu0
    %v2610 = vadd.f32 %v2379, %v2609
    %v2611 = vpop.f32.mrf.mxu0
    %2612 = vdwg.mxu0
    %v2613 = vmax.f32 %v2599, 0.0
    %v2614 = vmax.f32 %v2602, 0.0
    %v2615 = vmax.f32 %v2607, 0.0
    %v2616 = vmax.f32 %v2610, 0.0
    %v2617 = vpack.c.bf16 %v2449, %v2448
    %v2618 = vpack.c.bf16 %v2451, %v2450
    %v2620 = vsel %vm530, %v34, 0
    %2622 = vmatprep.subr.bf16.mxu0 0
    %2623 = vmatpush1.bf16.msra.mxu0 0
    %2624 = vmatprep.subr.bf16.mxu0 0
    %2625 = vmatpush1.bf16.msra.mxu0 0
    %2626 = vmatprep.subr.bf16.mxu0 0
    %2627 = vmatpush1.bf16.msra.mxu0 0
    %2628 = vmatprep.subr.bf16.mxu0 0
    %2629 = vmatpush1.bf16.msra.mxu0 0
    %2630 = vmatprep.subr.bf16.mxu0 0
    %2631 = vmatpush1.bf16.msra.mxu0 0
    %2632 = vmatprep.subr.bf16.mxu0 0
    %2633 = vmatpush1.bf16.msra.mxu0 0
    %2634 = vmatprep.subr.bf16.mxu0 0
    %2635 = vmatpush1.bf16.msra.mxu0 %v2618
    %2636 = vmatprep.subr.bf16.mxu0 0
    %2637 = vmatpush1.bf16.msra.mxu0 %v2617
    %2638 = vmatprep.subr.bf16.mxu0 0
    %2639 = vmatpush2.bf16.msra.mxu0 0
    %2640 = vmatprep.subr.bf16.mxu0 0
    %2641 = vmatpush2.bf16.msra.mxu0 0
    %2642 = vmatprep.subr.bf16.mxu0 0
    %2643 = vmatpush2.bf16.msra.mxu0 0
    %2644 = vmatprep.subr.bf16.mxu0 0
    %2645 = vmatpush2.bf16.msra.mxu0 0
    %2646 = vmatprep.subr.bf16.mxu0 0
    %2647 = vmatpush2.bf16.msra.mxu0 0
    %2648 = vmatprep.subr.bf16.mxu0 0
    %2649 = vmatpush2.bf16.msra.mxu0 0
    %2650 = vmatprep.subr.bf16.mxu0 0
    %2651 = vmatpush2.bf16.msra.mxu0 0
    %2652 = vmatprep.subr.bf16.mxu0 0
    %2653 = vmatpush2.bf16.msra.mxu0 0
    %2654 = vmatprep.mubr.bf16.mxu0 0
    %2655 = vmatmul.mubr.bf16.gmra.mxu0 %v2620
    %v2656 = vpop.f32.mrf.mxu0
    %v2657 = vadd.f32 %v68, %v2656
    %v2658 = vpop.f32.mrf.mxu0
    %v2659 = vpop.f32.mrf.mxu0
    %v2660 = vpop.f32.mrf.mxu0
    %2661 = vdwg.mxu0
    %v2662 = vlaneseq
    %vm2663 = vcmp.ge.s32.totalorder %v2662, 0
    %vm2664 = vcmp.lt.s32.totalorder %v2662, 128
    %vm2665 = vmand %vm2663, %vm2664
    %2666 = vst.msk [vmem:[#allocation3] sm:$0x1] %vm2665, %v2657
    %v2667 = vpack.c.bf16 %v2504, %v2503
    %v2668 = vpack.c.bf16 %v2506, %v2505
    %2669 = vmatprep.subr.bf16.mxu0 0
    %2670 = vmatpush1.bf16.msra.mxu0 0
    %2671 = vmatprep.subr.bf16.mxu0 0
    %2672 = vmatpush1.bf16.msra.mxu0 0
    %2673 = vmatprep.subr.bf16.mxu0 0
    %2674 = vmatpush1.bf16.msra.mxu0 0
    %2675 = vmatprep.subr.bf16.mxu0 0
    %2676 = vmatpush1.bf16.msra.mxu0 0
    %2677 = vmatprep.subr.bf16.mxu0 0
    %2678 = vmatpush1.bf16.msra.mxu0 0
    %2679 = vmatprep.subr.bf16.mxu0 0
    %2680 = vmatpush1.bf16.msra.mxu0 0
    %2681 = vmatprep.subr.bf16.mxu0 0
    %2682 = vmatpush1.bf16.msra.mxu0 %v2668
    %2683 = vmatprep.subr.bf16.mxu0 0
    %2684 = vmatpush1.bf16.msra.mxu0 %v2667
    %2685 = vmatprep.subr.bf16.mxu0 0
    %2686 = vmatpush2.bf16.msra.mxu0 0
    %2687 = vmatprep.subr.bf16.mxu0 0
    %2688 = vmatpush2.bf16.msra.mxu0 0
    %2689 = vmatprep.subr.bf16.mxu0 0
    %2690 = vmatpush2.bf16.msra.mxu0 0
    %2691 = vmatprep.subr.bf16.mxu0 0
    %2692 = vmatpush2.bf16.msra.mxu0 0
    %2693 = vmatprep.subr.bf16.mxu0 0
    %2694 = vmatpush2.bf16.msra.mxu0 0
    %2695 = vmatprep.subr.bf16.mxu0 0
    %2696 = vmatpush2.bf16.msra.mxu0 0
    %2697 = vmatprep.subr.bf16.mxu0 0
    %2698 = vmatpush2.bf16.msra.mxu0 0
    %2699 = vmatprep.subr.bf16.mxu0 0
    %2700 = vmatpush2.bf16.msra.mxu0 0
    %2701 = vmatprep.mubr.bf16.mxu0 0
    %2702 = vmatmul.mubr.bf16.gmra.mxu0 %v2620
    %v2703 = vpop.f32.mrf.mxu0
    %v2704 = vadd.f32 %v68, %v2703
    %v2705 = vpop.f32.mrf.mxu0
    %v2706 = vpop.f32.mrf.mxu0
    %v2707 = vpop.f32.mrf.mxu0
    %2708 = vdwg.mxu0
    %2709 = vst.msk [vmem:[#allocation3 + $0x1] sm:$0x1] %vm2665, %v2704
    %v2710 = vpack.c.bf16 %v2559, %v2558
    %v2711 = vpack.c.bf16 %v2561, %v2560
    %2712 = vmatprep.subr.bf16.mxu0 0
    %2713 = vmatpush1.bf16.msra.mxu0 0
    %2714 = vmatprep.subr.bf16.mxu0 0
    %2715 = vmatpush1.bf16.msra.mxu0 0
    %2716 = vmatprep.subr.bf16.mxu0 0
    %2717 = vmatpush1.bf16.msra.mxu0 0
    %2718 = vmatprep.subr.bf16.mxu0 0
    %2719 = vmatpush1.bf16.msra.mxu0 0
    %2720 = vmatprep.subr.bf16.mxu0 0
    %2721 = vmatpush1.bf16.msra.mxu0 0
    %2722 = vmatprep.subr.bf16.mxu0 0
    %2723 = vmatpush1.bf16.msra.mxu0 0
    %2724 = vmatprep.subr.bf16.mxu0 0
    %2725 = vmatpush1.bf16.msra.mxu0 %v2711
    %2726 = vmatprep.subr.bf16.mxu0 0
    %2727 = vmatpush1.bf16.msra.mxu0 %v2710
    %2728 = vmatprep.subr.bf16.mxu0 0
    %2729 = vmatpush2.bf16.msra.mxu0 0
    %2730 = vmatprep.subr.bf16.mxu0 0
    %2731 = vmatpush2.bf16.msra.mxu0 0
    %2732 = vmatprep.subr.bf16.mxu0 0
    %2733 = vmatpush2.bf16.msra.mxu0 0
    %2734 = vmatprep.subr.bf16.mxu0 0
    %2735 = vmatpush2.bf16.msra.mxu0 0
    %2736 = vmatprep.subr.bf16.mxu0 0
    %2737 = vmatpush2.bf16.msra.mxu0 0
    %2738 = vmatprep.subr.bf16.mxu0 0
    %2739 = vmatpush2.bf16.msra.mxu0 0
    %2740 = vmatprep.subr.bf16.mxu0 0
    %2741 = vmatpush2.bf16.msra.mxu0 0
    %2742 = vmatprep.subr.bf16.mxu0 0
    %2743 = vmatpush2.bf16.msra.mxu0 0
    %2744 = vmatprep.mubr.bf16.mxu0 0
    %2745 = vmatmul.mubr.bf16.gmra.mxu0 %v2620
    %v2746 = vpop.f32.mrf.mxu0
    %v2747 = vadd.f32 %v68, %v2746
    %v2748 = vpop.f32.mrf.mxu0
    %v2749 = vpop.f32.mrf.mxu0
    %v2750 = vpop.f32.mrf.mxu0
    %2751 = vdwg.mxu0
    %2752 = vst.msk [vmem:[#allocation3 + $0x2] sm:$0x1] %vm2665, %v2747
    %v2753 = vpack.c.bf16 %v2614, %v2613
    %v2754 = vpack.c.bf16 %v2616, %v2615
    %2755 = vmatprep.subr.bf16.mxu0 0
    %2756 = vmatpush1.bf16.msra.mxu0 0
    %2757 = vmatprep.subr.bf16.mxu0 0
    %2758 = vmatpush1.bf16.msra.mxu0 0
    %2759 = vmatprep.subr.bf16.mxu0 0
    %2760 = vmatpush1.bf16.msra.mxu0 0
    %2761 = vmatprep.subr.bf16.mxu0 0
    %2762 = vmatpush1.bf16.msra.mxu0 0
    %2763 = vmatprep.subr.bf16.mxu0 0
    %2764 = vmatpush1.bf16.msra.mxu0 0
    %2765 = vmatprep.subr.bf16.mxu0 0
    %2766 = vmatpush1.bf16.msra.mxu0 0
    %2767 = vmatprep.subr.bf16.mxu0 0
    %2768 = vmatpush1.bf16.msra.mxu0 %v2754
    %2769 = vmatprep.subr.bf16.mxu0 0
    %2770 = vmatpush1.bf16.msra.mxu0 %v2753
    %2771 = vmatprep.subr.bf16.mxu0 0
    %2772 = vmatpush2.bf16.msra.mxu0 0
    %2773 = vmatprep.subr.bf16.mxu0 0
    %2774 = vmatpush2.bf16.msra.mxu0 0
    %2775 = vmatprep.subr.bf16.mxu0 0
    %2776 = vmatpush2.bf16.msra.mxu0 0
    %2777 = vmatprep.subr.bf16.mxu0 0
    %2778 = vmatpush2.bf16.msra.mxu0 0
    %2779 = vmatprep.subr.bf16.mxu0 0
    %2780 = vmatpush2.bf16.msra.mxu0 0
    %2781 = vmatprep.subr.bf16.mxu0 0
    %2782 = vmatpush2.bf16.msra.mxu0 0
    %2783 = vmatprep.subr.bf16.mxu0 0
    %2784 = vmatpush2.bf16.msra.mxu0 0
    %2785 = vmatprep.subr.bf16.mxu0 0
    %2786 = vmatpush2.bf16.msra.mxu0 0
    %2787 = vmatprep.mubr.bf16.mxu0 0
    %2788 = vmatmul.mubr.bf16.gmra.mxu0 %v2620
    %v2789 = vpop.f32.mrf.mxu0
    %v2790 = vadd.f32 %v68, %v2789
    %v2791 = vpop.f32.mrf.mxu0
    %v2792 = vpop.f32.mrf.mxu0
    %v2793 = vpop.f32.mrf.mxu0
    %2794 = vdwg.mxu0
    %2795 = vst.msk [vmem:[#allocation3 + $0x3] sm:$0x1] %vm2665, %v2790
    // Predicated region
    $region30: #{tpu_custom_call.1} parent=1 // pred_check
      _
    $region31: #{tpu_custom_call.1} parent=1 // pred_check_branch
      %2797 = sbr.rel (0) target = $region33
    $region32: #{tpu_custom_call.1} parent=1 // pred_region
      %s2799 = ssub.s32 64, 64
      %2800 = vsyncadd [#allocation4], %s2799
      %s2802 = sshll.u32 [#allocation3], 4
      %s2803 = int_to_ptr.vmem [resolvable:$true] %s2802
      %2805 = dma.vmem_to_hbm [thread:$0]  %s2803, 64, %s7, [#allocation4]
    $region33: #{tpu_custom_call.1} parent=1 // pred_fallthru
      _
    // Predicated region
    $region34: #{tpu_custom_call.1} parent=1 // pred_check
      _
    $region35: #{tpu_custom_call.1} parent=1 // pred_check_branch
      %2807 = sbr.rel (0) target = $region37
    $region36: #{tpu_custom_call.1} parent=1 // pred_region
      %2808 = dma.done [#allocation4], 64
    $region37: #{tpu_custom_call.1} parent=1 // pred_fallthru
      _
    %2809 = vsyncpa [#allocation4], 1

// kernel: tpu_custom_call.1
$region0: #{tpu_custom_call.1}
  #allocation0 [shape = 'u32[]', space=smem, size = 0x4, offset = 0x4, fixed_abs, tag = 'smem constant byte address 0x4 - core index']
  #allocation1 [shape = 'u32[144,128]{1,0:T(1,128)}', space=vmem, size = 0x12000, scoped, tag = 'internal scratch']
  #allocation2 [shape = 'f32[1,1]{1,0:T(1,128)S(1)}', space=vmem, size = 0x200, scoped, tag = 'scoped memory for tpu_custom_call.1']
  %s0 = inlined_call_operand.vmem [shape: f32[2,512], index: 0, kind: input, shape index: {}]
  %s1 = inlined_call_operand.vmem [shape: bf16[32,2], index: 1, kind: input, shape index: {}]
  %s2 = inlined_call_operand.vmem [shape: f32[32,1], index: 2, kind: input, shape index: {}]
  %s3 = inlined_call_operand.vmem [shape: bf16[8,32,32], index: 3, kind: input, shape index: {}]
  %s4 = inlined_call_operand.vmem [shape: f32[8,32,1], index: 4, kind: input, shape index: {}]
  %s5 = inlined_call_operand.vmem [shape: bf16[1,32], index: 5, kind: input, shape index: {}]
  %s6 = inlined_call_operand.<no memory space> [shape: f32[1,1], index: 6, kind: input, shape index: {}]
  %s7 = inlined_call_operand.hbm [shape: f32[1,512], index: 7, kind: output, shape index: {}]
  %s8 = sld [smem:[#allocation0]]
  $region38: #{tpu_custom_call.1} parent=0
    _
  %s10 = ssub.s32 1, %s8
  %s11 = scalar_select 0, %s10, %s8
  %v12 = vstv %s6
  %13 = vst [vmem:[#allocation2] sm:$0x1] %v12
  $region1: #{tpu_custom_call.1} parent=0
    #allocation3 [shape = 'u8[2048]{0}', space=vmem, size = 0x800, scoped, tag = 'output window, operand 0, single buffered']
    #allocation4 [shape = 's32[1]{0}', space=sflag, size = 0x4, scoped, tag = 'scoped memory for tpu_custom_call.1']
    %14 = vsyncpa [#allocation4], 0
    // Predicated region
    $region2: #{tpu_custom_call.1} parent=1 // pred_check
      _
    $region3: #{tpu_custom_call.1} parent=1 // pred_check_branch
      %16 = sbr.rel (0) target = $region5
    $region4: #{tpu_custom_call.1} parent=1 // pred_region
      _
    $region5: #{tpu_custom_call.1} parent=1 // pred_fallthru
      _
    // Predicated region
    $region6: #{tpu_custom_call.1} parent=1 // pred_check
      _
    $region7: #{tpu_custom_call.1} parent=1 // pred_check_branch
      %18 = sbr.rel (0) target = $region9
    $region8: #{tpu_custom_call.1} parent=1 // pred_region
      _
    $region9: #{tpu_custom_call.1} parent=1 // pred_fallthru
      _
    // Predicated region
    $region10: #{tpu_custom_call.1} parent=1 // pred_check
      _
    $region11: #{tpu_custom_call.1} parent=1 // pred_check_branch
      %20 = sbr.rel (0) target = $region13
    $region12: #{tpu_custom_call.1} parent=1 // pred_region
      _
    $region13: #{tpu_custom_call.1} parent=1 // pred_fallthru
      _
    // Predicated region
    $region14: #{tpu_custom_call.1} parent=1 // pred_check
      _
    $region15: #{tpu_custom_call.1} parent=1 // pred_check_branch
      %22 = sbr.rel (0) target = $region17
    $region16: #{tpu_custom_call.1} parent=1 // pred_region
      _
    $region17: #{tpu_custom_call.1} parent=1 // pred_fallthru
      _
    // Predicated region
    $region18: #{tpu_custom_call.1} parent=1 // pred_check
      _
    $region19: #{tpu_custom_call.1} parent=1 // pred_check_branch
      %24 = sbr.rel (0) target = $region21
    $region20: #{tpu_custom_call.1} parent=1 // pred_region
      _
    $region21: #{tpu_custom_call.1} parent=1 // pred_fallthru
      _
    // Predicated region
    $region22: #{tpu_custom_call.1} parent=1 // pred_check
      _
    $region23: #{tpu_custom_call.1} parent=1 // pred_check_branch
      %26 = sbr.rel (0) target = $region25
    $region24: #{tpu_custom_call.1} parent=1 // pred_region
      _
    $region25: #{tpu_custom_call.1} parent=1 // pred_fallthru
      _
    // Predicated region
    $region26: #{tpu_custom_call.1} parent=1 // pred_check
      _
    $region27: #{tpu_custom_call.1} parent=1 // pred_check_branch
      %28 = sbr.rel (0) target = $region29
    $region28: #{tpu_custom_call.1} parent=1 // pred_region
      _
    $region29: #{tpu_custom_call.1} parent=1 // pred_fallthru
      _
    %v30 = vld [vmem:[%s1] sm:$0xf]
    %v31 = vld [vmem:[%s1 + $0x4] sm:$0xf]
    %v32 = vld [vmem:[%s1 + $0x8] sm:$0xf]
    %v33 = vld [vmem:[%s1 + $0xc] sm:$0xf]
    %v34 = vld [vmem:[%s5] sm:$0x1]
    %v35 = vld [vmem:[%s2] sm:$0xff]
    %v36 = vld [vmem:[%s2 + $0x8] sm:$0xff]
    %v37 = vld [vmem:[%s2 + $0x10] sm:$0xff]
    %v38 = vld [vmem:[%s2 + $0x18] sm:$0xff]
    %40 = vset.pattern.permute.xlu0 0
    %41 = vperm.xlu0 %40, %v35
    %v42 = vpop.permute.xlu0 %41
    %45 = vset.pattern.permute.xlu0 0
    %46 = vperm.xlu0 %45, %v36
    %v47 = vpop.permute.xlu0 %46
    %50 = vset.pattern.permute.xlu0 0
    %51 = vperm.xlu0 %50, %v37
    %v52 = vpop.permute.xlu0 %51
    %55 = vset.pattern.permute.xlu0 0
    %56 = vperm.xlu0 %55, %v38
    %v57 = vpop.permute.xlu0 %56
    %v59 = vld [vmem:[#allocation2] sm:$0x1]
    %61 = vset.pattern.permute.xlu0 0
    %62 = vperm.xlu0 %61, %v59
    %v63 = vpop.permute.xlu0 %62
    %v65 = vlaneseq
    %v66 = vshrl.u32 %v65, 7
    %v67 = vsub.s32 0, %v66
    %v68 = vrot.slane %v63, %v67
    %v69 = vld [vmem:[%s0] sm:$0x3]
    %v70 = vpack.c.bf16 %v69, %v69
    %v75 = vunpack.c.l.b16 %v30
    %v76 = vunpack.c.l.b16 %v31
    %v77 = vunpack.c.l.b16 %v32
    %v78 = vunpack.c.l.b16 %v33
    %v79 = vpack.c.b16 %v76, %v75
    %v80 = vpack.c.b16 %v78, %v77
    %vm81 = vcmask 15360
    %v83 = vsel %vm81, %v79, 0
    %v86 = vsel %vm81, %v80, 0
    %vm88 = vcmask 1040384
    %v90 = vsel %vm88, %v70, 0
    %92 = vmatprep.subr.bf16.mxu0 0
    %93 = vmatpush1.bf16.msra.mxu0 0
    %94 = vmatprep.subr.bf16.mxu0 0
    %95 = vmatpush1.bf16.msra.mxu0 0
    %96 = vmatprep.subr.bf16.mxu0 0
    %97 = vmatpush1.bf16.msra.mxu0 0
    %98 = vmatprep.subr.bf16.mxu0 0
    %99 = vmatpush1.bf16.msra.mxu0 0
    %100 = vmatprep.subr.bf16.mxu0 0
    %101 = vmatpush1.bf16.msra.mxu0 0
    %102 = vmatprep.subr.bf16.mxu0 0
    %103 = vmatpush1.bf16.msra.mxu0 0
    %104 = vmatprep.subr.bf16.mxu0 0
    %105 = vmatpush1.bf16.msra.mxu0 0
    %106 = vmatprep.subr.bf16.mxu0 0
    %107 = vmatpush1.bf16.msra.mxu0 %v90
    %108 = vmatprep.subr.bf16.mxu0 0
    %109 = vmatpush2.bf16.msra.mxu0 0
    %110 = vmatprep.subr.bf16.mxu0 0
    %111 = vmatpush2.bf16.msra.mxu0 0
    %112 = vmatprep.subr.bf16.mxu0 0
    %113 = vmatpush2.bf16.msra.mxu0 0
    %114 = vmatprep.subr.bf16.mxu0 0
    %115 = vmatpush2.bf16.msra.mxu0 0
    %116 = vmatprep.subr.bf16.mxu0 0
    %117 = vmatpush2.bf16.msra.mxu0 0
    %118 = vmatprep.subr.bf16.mxu0 0
    %119 = vmatpush2.bf16.msra.mxu0 0
    %120 = vmatprep.subr.bf16.mxu0 0
    %121 = vmatpush2.bf16.msra.mxu0 0
    %122 = vmatprep.subr.bf16.mxu0 0
    %123 = vmatpush2.bf16.msra.mxu0 0
    %124 = vmatprep.mubr.bf16.mxu0 0
    %125 = vmatmul.mubr.bf16.gmra.mxu0 %v83
    %v126 = vpop.f32.mrf.mxu0
    %v127 = vadd.f32 %v42, %v126
    %v128 = vpop.f32.mrf.mxu0
    %v129 = vpop.f32.mrf.mxu0
    %v130 = vadd.f32 %v47, %v129
    %v131 = vpop.f32.mrf.mxu0
    %132 = vmatprep.mubr.bf16.mxu0 0
    %133 = vmatmul.mubr.bf16.gmra.mxu0 %v86
    %v134 = vpop.f32.mrf.mxu0
    %v135 = vadd.f32 %v52, %v134
    %v136 = vpop.f32.mrf.mxu0
    %v137 = vpop.f32.mrf.mxu0
    %v138 = vadd.f32 %v57, %v137
    %v139 = vpop.f32.mrf.mxu0
    %140 = vdwg.mxu0
    %v141 = vmax.f32 %v127, 0.0
    %v142 = vmax.f32 %v130, 0.0
    %v143 = vmax.f32 %v135, 0.0
    %v144 = vmax.f32 %v138, 0.0
    %v145 = vld [vmem:[%s0 + $0x2] sm:$0x3]
    %v146 = vpack.c.bf16 %v145, %v145
    %v148 = vsel %vm88, %v146, 0
    %150 = vmatprep.subr.bf16.mxu0 0
    %151 = vmatpush1.bf16.msra.mxu0 0
    %152 = vmatprep.subr.bf16.mxu0 0
    %153 = vmatpush1.bf16.msra.mxu0 0
    %154 = vmatprep.subr.bf16.mxu0 0
    %155 = vmatpush1.bf16.msra.mxu0 0
    %156 = vmatprep.subr.bf16.mxu0 0
    %157 = vmatpush1.bf16.msra.mxu0 0
    %158 = vmatprep.subr.bf16.mxu0 0
    %159 = vmatpush1.bf16.msra.mxu0 0
    %160 = vmatprep.subr.bf16.mxu0 0
    %161 = vmatpush1.bf16.msra.mxu0 0
    %162 = vmatprep.subr.bf16.mxu0 0
    %163 = vmatpush1.bf16.msra.mxu0 0
    %164 = vmatprep.subr.bf16.mxu0 0
    %165 = vmatpush1.bf16.msra.mxu0 %v148
    %166 = vmatprep.subr.bf16.mxu0 0
    %167 = vmatpush2.bf16.msra.mxu0 0
    %168 = vmatprep.subr.bf16.mxu0 0
    %169 = vmatpush2.bf16.msra.mxu0 0
    %170 = vmatprep.subr.bf16.mxu0 0
    %171 = vmatpush2.bf16.msra.mxu0 0
    %172 = vmatprep.subr.bf16.mxu0 0
    %173 = vmatpush2.bf16.msra.mxu0 0
    %174 = vmatprep.subr.bf16.mxu0 0
    %175 = vmatpush2.bf16.msra.mxu0 0
    %176 = vmatprep.subr.bf16.mxu0 0
    %177 = vmatpush2.bf16.msra.mxu0 0
    %178 = vmatprep.subr.bf16.mxu0 0
    %179 = vmatpush2.bf16.msra.mxu0 0
    %180 = vmatprep.subr.bf16.mxu0 0
    %181 = vmatpush2.bf16.msra.mxu0 0
    %182 = vmatprep.mubr.bf16.mxu0 0
    %183 = vmatmul.mubr.bf16.gmra.mxu0 %v83
    %v184 = vpop.f32.mrf.mxu0
    %v185 = vadd.f32 %v42, %v184
    %v186 = vpop.f32.mrf.mxu0
    %v187 = vpop.f32.mrf.mxu0
    %v188 = vadd.f32 %v47, %v187
    %v189 = vpop.f32.mrf.mxu0
    %190 = vmatprep.mubr.bf16.mxu0 0
    %191 = vmatmul.mubr.bf16.gmra.mxu0 %v86
    %v192 = vpop.f32.mrf.mxu0
    %v193 = vadd.f32 %v52, %v192
    %v194 = vpop.f32.mrf.mxu0
    %v195 = vpop.f32.mrf.mxu0
    %v196 = vadd.f32 %v57, %v195
    %v197 = vpop.f32.mrf.mxu0
    %198 = vdwg.mxu0
    %v199 = vmax.f32 %v185, 0.0
    %v200 = vmax.f32 %v188, 0.0
    %v201 = vmax.f32 %v193, 0.0
    %v202 = vmax.f32 %v196, 0.0
    %v203 = vld [vmem:[%s0 + $0x4] sm:$0x3]
    %v204 = vpack.c.bf16 %v203, %v203
    %v206 = vsel %vm88, %v204, 0
    %208 = vmatprep.subr.bf16.mxu0 0
    %209 = vmatpush1.bf16.msra.mxu0 0
    %210 = vmatprep.subr.bf16.mxu0 0
    %211 = vmatpush1.bf16.msra.mxu0 0
    %212 = vmatprep.subr.bf16.mxu0 0
    %213 = vmatpush1.bf16.msra.mxu0 0
    %214 = vmatprep.subr.bf16.mxu0 0
    %215 = vmatpush1.bf16.msra.mxu0 0
    %216 = vmatprep.subr.bf16.mxu0 0
    %217 = vmatpush1.bf16.msra.mxu0 0
    %218 = vmatprep.subr.bf16.mxu0 0
    %219 = vmatpush1.bf16.msra.mxu0 0
    %220 = vmatprep.subr.bf16.mxu0 0
    %221 = vmatpush1.bf16.msra.mxu0 0
    %222 = vmatprep.subr.bf16.mxu0 0
    %223 = vmatpush1.bf16.msra.mxu0 %v206
    %224 = vmatprep.subr.bf16.mxu0 0
    %225 = vmatpush2.bf16.msra.mxu0 0
    %226 = vmatprep.subr.bf16.mxu0 0
    %227 = vmatpush2.bf16.msra.mxu0 0
    %228 = vmatprep.subr.bf16.mxu0 0
    %229 = vmatpush2.bf16.msra.mxu0 0
    %230 = vmatprep.subr.bf16.mxu0 0
    %231 = vmatpush2.bf16.msra.mxu0 0
    %232 = vmatprep.subr.bf16.mxu0 0
    %233 = vmatpush2.bf16.msra.mxu0 0
    %234 = vmatprep.subr.bf16.mxu0 0
    %235 = vmatpush2.bf16.msra.mxu0 0
    %236 = vmatprep.subr.bf16.mxu0 0
    %237 = vmatpush2.bf16.msra.mxu0 0
    %238 = vmatprep.subr.bf16.mxu0 0
    %239 = vmatpush2.bf16.msra.mxu0 0
    %240 = vmatprep.mubr.bf16.mxu0 0
    %241 = vmatmul.mubr.bf16.gmra.mxu0 %v83
    %v242 = vpop.f32.mrf.mxu0
    %v243 = vadd.f32 %v42, %v242
    %v244 = vpop.f32.mrf.mxu0
    %v245 = vpop.f32.mrf.mxu0
    %v246 = vadd.f32 %v47, %v245
    %v247 = vpop.f32.mrf.mxu0
    %248 = vmatprep.mubr.bf16.mxu0 0
    %249 = vmatmul.mubr.bf16.gmra.mxu0 %v86
    %v250 = vpop.f32.mrf.mxu0
    %v251 = vadd.f32 %v52, %v250
    %v252 = vpop.f32.mrf.mxu0
    %v253 = vpop.f32.mrf.mxu0
    %v254 = vadd.f32 %v57, %v253
    %v255 = vpop.f32.mrf.mxu0
    %256 = vdwg.mxu0
    %v257 = vmax.f32 %v243, 0.0
    %v258 = vmax.f32 %v246, 0.0
    %v259 = vmax.f32 %v251, 0.0
    %v260 = vmax.f32 %v254, 0.0
    %v261 = vld [vmem:[%s0 + $0x6] sm:$0x3]
    %v262 = vpack.c.bf16 %v261, %v261
    %v264 = vsel %vm88, %v262, 0
    %266 = vmatprep.subr.bf16.mxu0 0
    %267 = vmatpush1.bf16.msra.mxu0 0
    %268 = vmatprep.subr.bf16.mxu0 0
    %269 = vmatpush1.bf16.msra.mxu0 0
    %270 = vmatprep.subr.bf16.mxu0 0
    %271 = vmatpush1.bf16.msra.mxu0 0
    %272 = vmatprep.subr.bf16.mxu0 0
    %273 = vmatpush1.bf16.msra.mxu0 0
    %274 = vmatprep.subr.bf16.mxu0 0
    %275 = vmatpush1.bf16.msra.mxu0 0
    %276 = vmatprep.subr.bf16.mxu0 0
    %277 = vmatpush1.bf16.msra.mxu0 0
    %278 = vmatprep.subr.bf16.mxu0 0
    %279 = vmatpush1.bf16.msra.mxu0 0
    %280 = vmatprep.subr.bf16.mxu0 0
    %281 = vmatpush1.bf16.msra.mxu0 %v264
    %282 = vmatprep.subr.bf16.mxu0 0
    %283 = vmatpush2.bf16.msra.mxu0 0
    %284 = vmatprep.subr.bf16.mxu0 0
    %285 = vmatpush2.bf16.msra.mxu0 0
    %286 = vmatprep.subr.bf16.mxu0 0
    %287 = vmatpush2.bf16.msra.mxu0 0
    %288 = vmatprep.subr.bf16.mxu0 0
    %289 = vmatpush2.bf16.msra.mxu0 0
    %290 = vmatprep.subr.bf16.mxu0 0
    %291 = vmatpush2.bf16.msra.mxu0 0
    %292 = vmatprep.subr.bf16.mxu0 0
    %293 = vmatpush2.bf16.msra.mxu0 0
    %294 = vmatprep.subr.bf16.mxu0 0
    %295 = vmatpush2.bf16.msra.mxu0 0
    %296 = vmatprep.subr.bf16.mxu0 0
    %297 = vmatpush2.bf16.msra.mxu0 0
    %298 = vmatprep.mubr.bf16.mxu0 0
    %299 = vmatmul.mubr.bf16.gmra.mxu0 %v83
    %v300 = vpop.f32.mrf.mxu0
    %v301 = vadd.f32 %v42, %v300
    %v302 = vpop.f32.mrf.mxu0
    %v303 = vpop.f32.mrf.mxu0
    %v304 = vadd.f32 %v47, %v303
    %v305 = vpop.f32.mrf.mxu0
    %306 = vmatprep.mubr.bf16.mxu0 0
    %307 = vmatmul.mubr.bf16.gmra.mxu0 %v86
    %v308 = vpop.f32.mrf.mxu0
    %v309 = vadd.f32 %v52, %v308
    %v310 = vpop.f32.mrf.mxu0
    %v311 = vpop.f32.mrf.mxu0
    %v312 = vadd.f32 %v57, %v311
    %v313 = vpop.f32.mrf.mxu0
    %314 = vdwg.mxu0
    %v315 = vmax.f32 %v301, 0.0
    %v316 = vmax.f32 %v304, 0.0
    %v317 = vmax.f32 %v309, 0.0
    %v318 = vmax.f32 %v312, 0.0
    %v319 = vld [vmem:[%s3] sm:$0xf]
    %v320 = vld [vmem:[%s3 + $0x4] sm:$0xf]
    %v321 = vld [vmem:[%s3 + $0x8] sm:$0xf]
    %v322 = vld [vmem:[%s3 + $0xc] sm:$0xf]
    %v323 = vld [vmem:[%s4] sm:$0xff]
    %v324 = vld [vmem:[%s4 + $0x8] sm:$0xff]
    %v325 = vld [vmem:[%s4 + $0x10] sm:$0xff]
    %v326 = vld [vmem:[%s4 + $0x18] sm:$0xff]
    %328 = vset.pattern.permute.xlu0 0
    %329 = vperm.xlu0 %328, %v323
    %v330 = vpop.permute.xlu0 %329
    %333 = vset.pattern.permute.xlu0 0
    %334 = vperm.xlu0 %333, %v324
    %v335 = vpop.permute.xlu0 %334
    %338 = vset.pattern.permute.xlu0 0
    %339 = vperm.xlu0 %338, %v325
    %v340 = vpop.permute.xlu0 %339
    %343 = vset.pattern.permute.xlu0 0
    %344 = vperm.xlu0 %343, %v326
    %v345 = vpop.permute.xlu0 %344
    %v347 = vpack.c.bf16 %v142, %v141
    %v348 = vpack.c.bf16 %v144, %v143
    %v353 = vunpack.c.l.b16 %v319
    %v354 = vunpack.c.l.b16 %v320
    %v355 = vunpack.c.l.b16 %v321
    %v356 = vunpack.c.l.b16 %v322
    %v357 = vpack.c.b16 %v354, %v353
    %v358 = vpack.c.b16 %v356, %v355
    %vm359 = vcmask 261120
    %v361 = vsel %vm359, %v357, 0
    %v364 = vsel %vm359, %v358, 0
    %366 = vmatprep.subr.bf16.mxu0 0
    %367 = vmatpush1.bf16.msra.mxu0 0
    %368 = vmatprep.subr.bf16.mxu0 0
    %369 = vmatpush1.bf16.msra.mxu0 0
    %370 = vmatprep.subr.bf16.mxu0 0
    %371 = vmatpush1.bf16.msra.mxu0 0
    %372 = vmatprep.subr.bf16.mxu0 0
    %373 = vmatpush1.bf16.msra.mxu0 0
    %374 = vmatprep.subr.bf16.mxu0 0
    %375 = vmatpush1.bf16.msra.mxu0 0
    %376 = vmatprep.subr.bf16.mxu0 0
    %377 = vmatpush1.bf16.msra.mxu0 0
    %378 = vmatprep.subr.bf16.mxu0 0
    %379 = vmatpush1.bf16.msra.mxu0 %v348
    %380 = vmatprep.subr.bf16.mxu0 0
    %381 = vmatpush1.bf16.msra.mxu0 %v347
    %382 = vmatprep.subr.bf16.mxu0 0
    %383 = vmatpush2.bf16.msra.mxu0 0
    %384 = vmatprep.subr.bf16.mxu0 0
    %385 = vmatpush2.bf16.msra.mxu0 0
    %386 = vmatprep.subr.bf16.mxu0 0
    %387 = vmatpush2.bf16.msra.mxu0 0
    %388 = vmatprep.subr.bf16.mxu0 0
    %389 = vmatpush2.bf16.msra.mxu0 0
    %390 = vmatprep.subr.bf16.mxu0 0
    %391 = vmatpush2.bf16.msra.mxu0 0
    %392 = vmatprep.subr.bf16.mxu0 0
    %393 = vmatpush2.bf16.msra.mxu0 0
    %394 = vmatprep.subr.bf16.mxu0 0
    %395 = vmatpush2.bf16.msra.mxu0 0
    %396 = vmatprep.subr.bf16.mxu0 0
    %397 = vmatpush2.bf16.msra.mxu0 0
    %398 = vmatprep.mubr.bf16.mxu0 0
    %399 = vmatmul.mubr.bf16.gmra.mxu0 %v361
    %v400 = vpop.f32.mrf.mxu0
    %v401 = vadd.f32 %v330, %v400
    %v402 = vpop.f32.mrf.mxu0
    %v403 = vpop.f32.mrf.mxu0
    %v404 = vadd.f32 %v335, %v403
    %v405 = vpop.f32.mrf.mxu0
    %406 = vmatprep.mubr.bf16.mxu0 0
    %407 = vmatmul.mubr.bf16.gmra.mxu0 %v364
    %v408 = vpop.f32.mrf.mxu0
    %v409 = vadd.f32 %v340, %v408
    %v410 = vpop.f32.mrf.mxu0
    %v411 = vpop.f32.mrf.mxu0
    %v412 = vadd.f32 %v345, %v411
    %v413 = vpop.f32.mrf.mxu0
    %414 = vdwg.mxu0
    %v415 = vmax.f32 %v401, 0.0
    %v416 = vmax.f32 %v404, 0.0
    %v417 = vmax.f32 %v409, 0.0
    %v418 = vmax.f32 %v412, 0.0
    %v419 = vpack.c.bf16 %v200, %v199
    %v420 = vpack.c.bf16 %v202, %v201
    %421 = vmatprep.subr.bf16.mxu0 0
    %422 = vmatpush1.bf16.msra.mxu0 0
    %423 = vmatprep.subr.bf16.mxu0 0
    %424 = vmatpush1.bf16.msra.mxu0 0
    %425 = vmatprep.subr.bf16.mxu0 0
    %426 = vmatpush1.bf16.msra.mxu0 0
    %427 = vmatprep.subr.bf16.mxu0 0
    %428 = vmatpush1.bf16.msra.mxu0 0
    %429 = vmatprep.subr.bf16.mxu0 0
    %430 = vmatpush1.bf16.msra.mxu0 0
    %431 = vmatprep.subr.bf16.mxu0 0
    %432 = vmatpush1.bf16.msra.mxu0 0
    %433 = vmatprep.subr.bf16.mxu0 0
    %434 = vmatpush1.bf16.msra.mxu0 %v420
    %435 = vmatprep.subr.bf16.mxu0 0
    %436 = vmatpush1.bf16.msra.mxu0 %v419
    %437 = vmatprep.subr.bf16.mxu0 0
    %438 = vmatpush2.bf16.msra.mxu0 0
    %439 = vmatprep.subr.bf16.mxu0 0
    %440 = vmatpush2.bf16.msra.mxu0 0
    %441 = vmatprep.subr.bf16.mxu0 0
    %442 = vmatpush2.bf16.msra.mxu0 0
    %443 = vmatprep.subr.bf16.mxu0 0
    %444 = vmatpush2.bf16.msra.mxu0 0
    %445 = vmatprep.subr.bf16.mxu0 0
    %446 = vmatpush2.bf16.msra.mxu0 0
    %447 = vmatprep.subr.bf16.mxu0 0
    %448 = vmatpush2.bf16.msra.mxu0 0
    %449 = vmatprep.subr.bf16.mxu0 0
    %450 = vmatpush2.bf16.msra.mxu0 0
    %451 = vmatprep.subr.bf16.mxu0 0
    %452 = vmatpush2.bf16.msra.mxu0 0
    %453 = vmatprep.mubr.bf16.mxu0 0
    %454 = vmatmul.mubr.bf16.gmra.mxu0 %v361
    %v455 = vpop.f32.mrf.mxu0
    %v456 = vadd.f32 %v330, %v455
    %v457 = vpop.f32.mrf.mxu0
    %v458 = vpop.f32.mrf.mxu0
    %v459 = vadd.f32 %v335, %v458
    %v460 = vpop.f32.mrf.mxu0
    %461 = vmatprep.mubr.bf16.mxu0 0
    %462 = vmatmul.mubr.bf16.gmra.mxu0 %v364
    %v463 = vpop.f32.mrf.mxu0
    %v464 = vadd.f32 %v340, %v463
    %v465 = vpop.f32.mrf.mxu0
    %v466 = vpop.f32.mrf.mxu0
    %v467 = vadd.f32 %v345, %v466
    %v468 = vpop.f32.mrf.mxu0
    %469 = vdwg.mxu0
    %v470 = vmax.f32 %v456, 0.0
    %v471 = vmax.f32 %v459, 0.0
    %v472 = vmax.f32 %v464, 0.0
    %v473 = vmax.f32 %v467, 0.0
    %v474 = vpack.c.bf16 %v258, %v257
    %v475 = vpack.c.bf16 %v260, %v259
    %476 = vmatprep.subr.bf16.mxu0 0
    %477 = vmatpush1.bf16.msra.mxu0 0
    %478 = vmatprep.subr.bf16.mxu0 0
    %479 = vmatpush1.bf16.msra.mxu0 0
    %480 = vmatprep.subr.bf16.mxu0 0
    %481 = vmatpush1.bf16.msra.mxu0 0
    %482 = vmatprep.subr.bf16.mxu0 0
    %483 = vmatpush1.bf16.msra.mxu0 0
    %484 = vmatprep.subr.bf16.mxu0 0
    %485 = vmatpush1.bf16.msra.mxu0 0
    %486 = vmatprep.subr.bf16.mxu0 0
    %487 = vmatpush1.bf16.msra.mxu0 0
    %488 = vmatprep.subr.bf16.mxu0 0
    %489 = vmatpush1.bf16.msra.mxu0 %v475
    %490 = vmatprep.subr.bf16.mxu0 0
    %491 = vmatpush1.bf16.msra.mxu0 %v474
    %492 = vmatprep.subr.bf16.mxu0 0
    %493 = vmatpush2.bf16.msra.mxu0 0
    %494 = vmatprep.subr.bf16.mxu0 0
    %495 = vmatpush2.bf16.msra.mxu0 0
    %496 = vmatprep.subr.bf16.mxu0 0
    %497 = vmatpush2.bf16.msra.mxu0 0
    %498 = vmatprep.subr.bf16.mxu0 0
    %499 = vmatpush2.bf16.msra.mxu0 0
    %500 = vmatprep.subr.bf16.mxu0 0
    %501 = vmatpush2.bf16.msra.mxu0 0
    %502 = vmatprep.subr.bf16.mxu0 0
    %503 = vmatpush2.bf16.msra.mxu0 0
    %504 = vmatprep.subr.bf16.mxu0 0
    %505 = vmatpush2.bf16.msra.mxu0 0
    %506 = vmatprep.subr.bf16.mxu0 0
    %507 = vmatpush2.bf16.msra.mxu0 0
    %508 = vmatprep.mubr.bf16.mxu0 0
    %509 = vmatmul.mubr.bf16.gmra.mxu0 %v361
    %v510 = vpop.f32.mrf.mxu0
    %v511 = vadd.f32 %v330, %v510
    %v512 = vpop.f32.mrf.mxu0
    %v513 = vpop.f32.mrf.mxu0
    %v514 = vadd.f32 %v335, %v513
    %v515 = vpop.f32.mrf.mxu0
    %516 = vmatprep.mubr.bf16.mxu0 0
    %517 = vmatmul.mubr.bf16.gmra.mxu0 %v364
    %v518 = vpop.f32.mrf.mxu0
    %v519 = vadd.f32 %v340, %v518
    %v520 = vpop.f32.mrf.mxu0
    %v521 = vpop.f32.mrf.mxu0
    %v522 = vadd.f32 %v345, %v521
    %v523 = vpop.f32.mrf.mxu0
    %524 = vdwg.mxu0
    %v525 = vmax.f32 %v511, 0.0
    %v526 = vmax.f32 %v514, 0.0
    %v527 = vmax.f32 %v519, 0.0
    %v528 = vmax.f32 %v522, 0.0
    %v529 = vpack.c.bf16 %v316, %v315
    %v530 = vpack.c.bf16 %v318, %v317
    %531 = vmatprep.subr.bf16.mxu0 0
    %532 = vmatpush1.bf16.msra.mxu0 0
    %533 = vmatprep.subr.bf16.mxu0 0
    %534 = vmatpush1.bf16.msra.mxu0 0
    %535 = vmatprep.subr.bf16.mxu0 0
    %536 = vmatpush1.bf16.msra.mxu0 0
    %537 = vmatprep.subr.bf16.mxu0 0
    %538 = vmatpush1.bf16.msra.mxu0 0
    %539 = vmatprep.subr.bf16.mxu0 0
    %540 = vmatpush1.bf16.msra.mxu0 0
    %541 = vmatprep.subr.bf16.mxu0 0
    %542 = vmatpush1.bf16.msra.mxu0 0
    %543 = vmatprep.subr.bf16.mxu0 0
    %544 = vmatpush1.bf16.msra.mxu0 %v530
    %545 = vmatprep.subr.bf16.mxu0 0
    %546 = vmatpush1.bf16.msra.mxu0 %v529
    %547 = vmatprep.subr.bf16.mxu0 0
    %548 = vmatpush2.bf16.msra.mxu0 0
    %549 = vmatprep.subr.bf16.mxu0 0
    %550 = vmatpush2.bf16.msra.mxu0 0
    %551 = vmatprep.subr.bf16.mxu0 0
    %552 = vmatpush2.bf16.msra.mxu0 0
    %553 = vmatprep.subr.bf16.mxu0 0
    %554 = vmatpush2.bf16.msra.mxu0 0
    %555 = vmatprep.subr.bf16.mxu0 0
    %556 = vmatpush2.bf16.msra.mxu0 0
    %557 = vmatprep.subr.bf16.mxu0 0
    %558 = vmatpush2.bf16.msra.mxu0 0
    %559 = vmatprep.subr.bf16.mxu0 0
    %560 = vmatpush2.bf16.msra.mxu0 0
    %561 = vmatprep.subr.bf16.mxu0 0
    %562 = vmatpush2.bf16.msra.mxu0 0
    %563 = vmatprep.mubr.bf16.mxu0 0
    %564 = vmatmul.mubr.bf16.gmra.mxu0 %v361
    %v565 = vpop.f32.mrf.mxu0
    %v566 = vadd.f32 %v330, %v565
    %v567 = vpop.f32.mrf.mxu0
    %v568 = vpop.f32.mrf.mxu0
    %v569 = vadd.f32 %v335, %v568
    %v570 = vpop.f32.mrf.mxu0
    %571 = vmatprep.mubr.bf16.mxu0 0
    %572 = vmatmul.mubr.bf16.gmra.mxu0 %v364
    %v573 = vpop.f32.mrf.mxu0
    %v574 = vadd.f32 %v340, %v573
    %v575 = vpop.f32.mrf.mxu0
    %v576 = vpop.f32.mrf.mxu0
    %v577 = vadd.f32 %v345, %v576
    %v578 = vpop.f32.mrf.mxu0
    %579 = vdwg.mxu0
    %v580 = vmax.f32 %v566, 0.0
    %v581 = vmax.f32 %v569, 0.0
    %v582 = vmax.f32 %v574, 0.0
    %v583 = vmax.f32 %v577, 0.0
    %s584 = scalar_lea.vmem %s3, 16
    %v585 = vld [vmem:[%s584] sm:$0xf]
    %v586 = vld [vmem:[%s584 + $0x4] sm:$0xf]
    %v587 = vld [vmem:[%s584 + $0x8] sm:$0xf]
    %v588 = vld [vmem:[%s584 + $0xc] sm:$0xf]
    %s589 = scalar_lea.vmem %s4, 32
    %v590 = vld [vmem:[%s589] sm:$0xff]
    %v591 = vld [vmem:[%s589 + $0x8] sm:$0xff]
    %v592 = vld [vmem:[%s589 + $0x10] sm:$0xff]
    %v593 = vld [vmem:[%s589 + $0x18] sm:$0xff]
    %595 = vset.pattern.permute.xlu0 0
    %596 = vperm.xlu0 %595, %v590
    %v597 = vpop.permute.xlu0 %596
    %600 = vset.pattern.permute.xlu0 0
    %601 = vperm.xlu0 %600, %v591
    %v602 = vpop.permute.xlu0 %601
    %605 = vset.pattern.permute.xlu0 0
    %606 = vperm.xlu0 %605, %v592
    %v607 = vpop.permute.xlu0 %606
    %610 = vset.pattern.permute.xlu0 0
    %611 = vperm.xlu0 %610, %v593
    %v612 = vpop.permute.xlu0 %611
    %v614 = vpack.c.bf16 %v416, %v415
    %v615 = vpack.c.bf16 %v418, %v417
    %v620 = vunpack.c.l.b16 %v585
    %v621 = vunpack.c.l.b16 %v586
    %v622 = vunpack.c.l.b16 %v587
    %v623 = vunpack.c.l.b16 %v588
    %v624 = vpack.c.b16 %v621, %v620
    %v625 = vpack.c.b16 %v623, %v622
    %v627 = vsel %vm359, %v624, 0
    %v630 = vsel %vm359, %v625, 0
    %632 = vmatprep.subr.bf16.mxu0 0
    %633 = vmatpush1.bf16.msra.mxu0 0
    %634 = vmatprep.subr.bf16.mxu0 0
    %635 = vmatpush1.bf16.msra.mxu0 0
    %636 = vmatprep.subr.bf16.mxu0 0
    %637 = vmatpush1.bf16.msra.mxu0 0
    %638 = vmatprep.subr.bf16.mxu0 0
    %639 = vmatpush1.bf16.msra.mxu0 0
    %640 = vmatprep.subr.bf16.mxu0 0
    %641 = vmatpush1.bf16.msra.mxu0 0
    %642 = vmatprep.subr.bf16.mxu0 0
    %643 = vmatpush1.bf16.msra.mxu0 0
    %644 = vmatprep.subr.bf16.mxu0 0
    %645 = vmatpush1.bf16.msra.mxu0 %v615
    %646 = vmatprep.subr.bf16.mxu0 0
    %647 = vmatpush1.bf16.msra.mxu0 %v614
    %648 = vmatprep.subr.bf16.mxu0 0
    %649 = vmatpush2.bf16.msra.mxu0 0
    %650 = vmatprep.subr.bf16.mxu0 0
    %651 = vmatpush2.bf16.msra.mxu0 0
    %652 = vmatprep.subr.bf16.mxu0 0
    %653 = vmatpush2.bf16.msra.mxu0 0
    %654 = vmatprep.subr.bf16.mxu0 0
    %655 = vmatpush2.bf16.msra.mxu0 0
    %656 = vmatprep.subr.bf16.mxu0 0
    %657 = vmatpush2.bf16.msra.mxu0 0
    %658 = vmatprep.subr.bf16.mxu0 0
    %659 = vmatpush2.bf16.msra.mxu0 0
    %660 = vmatprep.subr.bf16.mxu0 0
    %661 = vmatpush2.bf16.msra.mxu0 0
    %662 = vmatprep.subr.bf16.mxu0 0
    %663 = vmatpush2.bf16.msra.mxu0 0
    %664 = vmatprep.mubr.bf16.mxu0 0
    %665 = vmatmul.mubr.bf16.gmra.mxu0 %v627
    %v666 = vpop.f32.mrf.mxu0
    %v667 = vadd.f32 %v597, %v666
    %v668 = vpop.f32.mrf.mxu0
    %v669 = vpop.f32.mrf.mxu0
    %v670 = vadd.f32 %v602, %v669
    %v671 = vpop.f32.mrf.mxu0
    %672 = vmatprep.mubr.bf16.mxu0 0
    %673 = vmatmul.mubr.bf16.gmra.mxu0 %v630
    %v674 = vpop.f32.mrf.mxu0
    %v675 = vadd.f32 %v607, %v674
    %v676 = vpop.f32.mrf.mxu0
    %v677 = vpop.f32.mrf.mxu0
    %v678 = vadd.f32 %v612, %v677
    %v679 = vpop.f32.mrf.mxu0
    %680 = vdwg.mxu0
    %v681 = vmax.f32 %v667, 0.0
    %v682 = vmax.f32 %v670, 0.0
    %v683 = vmax.f32 %v675, 0.0
    %v684 = vmax.f32 %v678, 0.0
    %v685 = vpack.c.bf16 %v471, %v470
    %v686 = vpack.c.bf16 %v473, %v472
    %687 = vmatprep.subr.bf16.mxu0 0
    %688 = vmatpush1.bf16.msra.mxu0 0
    %689 = vmatprep.subr.bf16.mxu0 0
    %690 = vmatpush1.bf16.msra.mxu0 0
    %691 = vmatprep.subr.bf16.mxu0 0
    %692 = vmatpush1.bf16.msra.mxu0 0
    %693 = vmatprep.subr.bf16.mxu0 0
    %694 = vmatpush1.bf16.msra.mxu0 0
    %695 = vmatprep.subr.bf16.mxu0 0
    %696 = vmatpush1.bf16.msra.mxu0 0
    %697 = vmatprep.subr.bf16.mxu0 0
    %698 = vmatpush1.bf16.msra.mxu0 0
    %699 = vmatprep.subr.bf16.mxu0 0
    %700 = vmatpush1.bf16.msra.mxu0 %v686
    %701 = vmatprep.subr.bf16.mxu0 0
    %702 = vmatpush1.bf16.msra.mxu0 %v685
    %703 = vmatprep.subr.bf16.mxu0 0
    %704 = vmatpush2.bf16.msra.mxu0 0
    %705 = vmatprep.subr.bf16.mxu0 0
    %706 = vmatpush2.bf16.msra.mxu0 0
    %707 = vmatprep.subr.bf16.mxu0 0
    %708 = vmatpush2.bf16.msra.mxu0 0
    %709 = vmatprep.subr.bf16.mxu0 0
    %710 = vmatpush2.bf16.msra.mxu0 0
    %711 = vmatprep.subr.bf16.mxu0 0
    %712 = vmatpush2.bf16.msra.mxu0 0
    %713 = vmatprep.subr.bf16.mxu0 0
    %714 = vmatpush2.bf16.msra.mxu0 0
    %715 = vmatprep.subr.bf16.mxu0 0
    %716 = vmatpush2.bf16.msra.mxu0 0
    %717 = vmatprep.subr.bf16.mxu0 0
    %718 = vmatpush2.bf16.msra.mxu0 0
    %719 = vmatprep.mubr.bf16.mxu0 0
    %720 = vmatmul.mubr.bf16.gmra.mxu0 %v627
    %v721 = vpop.f32.mrf.mxu0
    %v722 = vadd.f32 %v597, %v721
    %v723 = vpop.f32.mrf.mxu0
    %v724 = vpop.f32.mrf.mxu0
    %v725 = vadd.f32 %v602, %v724
    %v726 = vpop.f32.mrf.mxu0
    %727 = vmatprep.mubr.bf16.mxu0 0
    %728 = vmatmul.mubr.bf16.gmra.mxu0 %v630
    %v729 = vpop.f32.mrf.mxu0
    %v730 = vadd.f32 %v607, %v729
    %v731 = vpop.f32.mrf.mxu0
    %v732 = vpop.f32.mrf.mxu0
    %v733 = vadd.f32 %v612, %v732
    %v734 = vpop.f32.mrf.mxu0
    %735 = vdwg.mxu0
    %v736 = vmax.f32 %v722, 0.0
    %v737 = vmax.f32 %v725, 0.0
    %v738 = vmax.f32 %v730, 0.0
    %v739 = vmax.f32 %v733, 0.0
    %v740 = vpack.c.bf16 %v526, %v525
    %v741 = vpack.c.bf16 %v528, %v527
    %742 = vmatprep.subr.bf16.mxu0 0
    %743 = vmatpush1.bf16.msra.mxu0 0
    %744 = vmatprep.subr.bf16.mxu0 0
    %745 = vmatpush1.bf16.msra.mxu0 0
    %746 = vmatprep.subr.bf16.mxu0 0
    %747 = vmatpush1.bf16.msra.mxu0 0
    %748 = vmatprep.subr.bf16.mxu0 0
    %749 = vmatpush1.bf16.msra.mxu0 0
    %750 = vmatprep.subr.bf16.mxu0 0
    %751 = vmatpush1.bf16.msra.mxu0 0
    %752 = vmatprep.subr.bf16.mxu0 0
    %753 = vmatpush1.bf16.msra.mxu0 0
    %754 = vmatprep.subr.bf16.mxu0 0
    %755 = vmatpush1.bf16.msra.mxu0 %v741
    %756 = vmatprep.subr.bf16.mxu0 0
    %757 = vmatpush1.bf16.msra.mxu0 %v740
    %758 = vmatprep.subr.bf16.mxu0 0
    %759 = vmatpush2.bf16.msra.mxu0 0
    %760 = vmatprep.subr.bf16.mxu0 0
    %761 = vmatpush2.bf16.msra.mxu0 0
    %762 = vmatprep.subr.bf16.mxu0 0
    %763 = vmatpush2.bf16.msra.mxu0 0
    %764 = vmatprep.subr.bf16.mxu0 0
    %765 = vmatpush2.bf16.msra.mxu0 0
    %766 = vmatprep.subr.bf16.mxu0 0
    %767 = vmatpush2.bf16.msra.mxu0 0
    %768 = vmatprep.subr.bf16.mxu0 0
    %769 = vmatpush2.bf16.msra.mxu0 0
    %770 = vmatprep.subr.bf16.mxu0 0
    %771 = vmatpush2.bf16.msra.mxu0 0
    %772 = vmatprep.subr.bf16.mxu0 0
    %773 = vmatpush2.bf16.msra.mxu0 0
    %774 = vmatprep.mubr.bf16.mxu0 0
    %775 = vmatmul.mubr.bf16.gmra.mxu0 %v627
    %v776 = vpop.f32.mrf.mxu0
    %v777 = vadd.f32 %v597, %v776
    %v778 = vpop.f32.mrf.mxu0
    %v779 = vpop.f32.mrf.mxu0
    %v780 = vadd.f32 %v602, %v779
    %v781 = vpop.f32.mrf.mxu0
    %782 = vmatprep.mubr.bf16.mxu0 0
    %783 = vmatmul.mubr.bf16.gmra.mxu0 %v630
    %v784 = vpop.f32.mrf.mxu0
    %v785 = vadd.f32 %v607, %v784
    %v786 = vpop.f32.mrf.mxu0
    %v787 = vpop.f32.mrf.mxu0
    %v788 = vadd.f32 %v612, %v787
    %v789 = vpop.f32.mrf.mxu0
    %790 = vdwg.mxu0
    %v791 = vmax.f32 %v777, 0.0
    %v792 = vmax.f32 %v780, 0.0
    %v793 = vmax.f32 %v785, 0.0
    %v794 = vmax.f32 %v788, 0.0
    %v795 = vpack.c.bf16 %v581, %v580
    %v796 = vpack.c.bf16 %v583, %v582
    %797 = vmatprep.subr.bf16.mxu0 0
    %798 = vmatpush1.bf16.msra.mxu0 0
    %799 = vmatprep.subr.bf16.mxu0 0
    %800 = vmatpush1.bf16.msra.mxu0 0
    %801 = vmatprep.subr.bf16.mxu0 0
    %802 = vmatpush1.bf16.msra.mxu0 0
    %803 = vmatprep.subr.bf16.mxu0 0
    %804 = vmatpush1.bf16.msra.mxu0 0
    %805 = vmatprep.subr.bf16.mxu0 0
    %806 = vmatpush1.bf16.msra.mxu0 0
    %807 = vmatprep.subr.bf16.mxu0 0
    %808 = vmatpush1.bf16.msra.mxu0 0
    %809 = vmatprep.subr.bf16.mxu0 0
    %810 = vmatpush1.bf16.msra.mxu0 %v796
    %811 = vmatprep.subr.bf16.mxu0 0
    %812 = vmatpush1.bf16.msra.mxu0 %v795
    %813 = vmatprep.subr.bf16.mxu0 0
    %814 = vmatpush2.bf16.msra.mxu0 0
    %815 = vmatprep.subr.bf16.mxu0 0
    %816 = vmatpush2.bf16.msra.mxu0 0
    %817 = vmatprep.subr.bf16.mxu0 0
    %818 = vmatpush2.bf16.msra.mxu0 0
    %819 = vmatprep.subr.bf16.mxu0 0
    %820 = vmatpush2.bf16.msra.mxu0 0
    %821 = vmatprep.subr.bf16.mxu0 0
    %822 = vmatpush2.bf16.msra.mxu0 0
    %823 = vmatprep.subr.bf16.mxu0 0
    %824 = vmatpush2.bf16.msra.mxu0 0
    %825 = vmatprep.subr.bf16.mxu0 0
    %826 = vmatpush2.bf16.msra.mxu0 0
    %827 = vmatprep.subr.bf16.mxu0 0
    %828 = vmatpush2.bf16.msra.mxu0 0
    %829 = vmatprep.mubr.bf16.mxu0 0
    %830 = vmatmul.mubr.bf16.gmra.mxu0 %v627
    %v831 = vpop.f32.mrf.mxu0
    %v832 = vadd.f32 %v597, %v831
    %v833 = vpop.f32.mrf.mxu0
    %v834 = vpop.f32.mrf.mxu0
    %v835 = vadd.f32 %v602, %v834
    %v836 = vpop.f32.mrf.mxu0
    %837 = vmatprep.mubr.bf16.mxu0 0
    %838 = vmatmul.mubr.bf16.gmra.mxu0 %v630
    %v839 = vpop.f32.mrf.mxu0
    %v840 = vadd.f32 %v607, %v839
    %v841 = vpop.f32.mrf.mxu0
    %v842 = vpop.f32.mrf.mxu0
    %v843 = vadd.f32 %v612, %v842
    %v844 = vpop.f32.mrf.mxu0
    %845 = vdwg.mxu0
    %v846 = vmax.f32 %v832, 0.0
    %v847 = vmax.f32 %v835, 0.0
    %v848 = vmax.f32 %v840, 0.0
    %v849 = vmax.f32 %v843, 0.0
    %s850 = scalar_lea.vmem %s3, 32
    %v851 = vld [vmem:[%s850] sm:$0xf]
    %v852 = vld [vmem:[%s850 + $0x4] sm:$0xf]
    %v853 = vld [vmem:[%s850 + $0x8] sm:$0xf]
    %v854 = vld [vmem:[%s850 + $0xc] sm:$0xf]
    %s855 = scalar_lea.vmem %s4, 64
    %v856 = vld [vmem:[%s855] sm:$0xff]
    %v857 = vld [vmem:[%s855 + $0x8] sm:$0xff]
    %v858 = vld [vmem:[%s855 + $0x10] sm:$0xff]
    %v859 = vld [vmem:[%s855 + $0x18] sm:$0xff]
    %861 = vset.pattern.permute.xlu0 0
    %862 = vperm.xlu0 %861, %v856
    %v863 = vpop.permute.xlu0 %862
    %866 = vset.pattern.permute.xlu0 0
    %867 = vperm.xlu0 %866, %v857
    %v868 = vpop.permute.xlu0 %867
    %871 = vset.pattern.permute.xlu0 0
    %872 = vperm.xlu0 %871, %v858
    %v873 = vpop.permute.xlu0 %872
    %876 = vset.pattern.permute.xlu0 0
    %877 = vperm.xlu0 %876, %v859
    %v878 = vpop.permute.xlu0 %877
    %v880 = vpack.c.bf16 %v682, %v681
    %v881 = vpack.c.bf16 %v684, %v683
    %v886 = vunpack.c.l.b16 %v851
    %v887 = vunpack.c.l.b16 %v852
    %v888 = vunpack.c.l.b16 %v853
    %v889 = vunpack.c.l.b16 %v854
    %v890 = vpack.c.b16 %v887, %v886
    %v891 = vpack.c.b16 %v889, %v888
    %v893 = vsel %vm359, %v890, 0
    %v896 = vsel %vm359, %v891, 0
    %898 = vmatprep.subr.bf16.mxu0 0
    %899 = vmatpush1.bf16.msra.mxu0 0
    %900 = vmatprep.subr.bf16.mxu0 0
    %901 = vmatpush1.bf16.msra.mxu0 0
    %902 = vmatprep.subr.bf16.mxu0 0
    %903 = vmatpush1.bf16.msra.mxu0 0
    %904 = vmatprep.subr.bf16.mxu0 0
    %905 = vmatpush1.bf16.msra.mxu0 0
    %906 = vmatprep.subr.bf16.mxu0 0
    %907 = vmatpush1.bf16.msra.mxu0 0
    %908 = vmatprep.subr.bf16.mxu0 0
    %909 = vmatpush1.bf16.msra.mxu0 0
    %910 = vmatprep.subr.bf16.mxu0 0
    %911 = vmatpush1.bf16.msra.mxu0 %v881
    %912 = vmatprep.subr.bf16.mxu0 0
    %913 = vmatpush1.bf16.msra.mxu0 %v880
    %914 = vmatprep.subr.bf16.mxu0 0
    %915 = vmatpush2.bf16.msra.mxu0 0
    %916 = vmatprep.subr.bf16.mxu0 0
    %917 = vmatpush2.bf16.msra.mxu0 0
    %918 = vmatprep.subr.bf16.mxu0 0
    %919 = vmatpush2.bf16.msra.mxu0 0
    %920 = vmatprep.subr.bf16.mxu0 0
    %921 = vmatpush2.bf16.msra.mxu0 0
    %922 = vmatprep.subr.bf16.mxu0 0
    %923 = vmatpush2.bf16.msra.mxu0 0
    %924 = vmatprep.subr.bf16.mxu0 0
    %925 = vmatpush2.bf16.msra.mxu0 0
    %926 = vmatprep.subr.bf16.mxu0 0
    %927 = vmatpush2.bf16.msra.mxu0 0
    %928 = vmatprep.subr.bf16.mxu0 0
    %929 = vmatpush2.bf16.msra.mxu0 0
    %930 = vmatprep.mubr.bf16.mxu0 0
    %931 = vmatmul.mubr.bf16.gmra.mxu0 %v893
    %v932 = vpop.f32.mrf.mxu0
    %v933 = vadd.f32 %v863, %v932
    %v934 = vpop.f32.mrf.mxu0
    %v935 = vpop.f32.mrf.mxu0
    %v936 = vadd.f32 %v868, %v935
    %v937 = vpop.f32.mrf.mxu0
    %938 = vmatprep.mubr.bf16.mxu0 0
    %939 = vmatmul.mubr.bf16.gmra.mxu0 %v896
    %v940 = vpop.f32.mrf.mxu0
    %v941 = vadd.f32 %v873, %v940
    %v942 = vpop.f32.mrf.mxu0
    %v943 = vpop.f32.mrf.mxu0
    %v944 = vadd.f32 %v878, %v943
    %v945 = vpop.f32.mrf.mxu0
    %946 = vdwg.mxu0
    %v947 = vmax.f32 %v933, 0.0
    %v948 = vmax.f32 %v936, 0.0
    %v949 = vmax.f32 %v941, 0.0
    %v950 = vmax.f32 %v944, 0.0
    %v951 = vpack.c.bf16 %v737, %v736
    %v952 = vpack.c.bf16 %v739, %v738
    %953 = vmatprep.subr.bf16.mxu0 0
    %954 = vmatpush1.bf16.msra.mxu0 0
    %955 = vmatprep.subr.bf16.mxu0 0
    %956 = vmatpush1.bf16.msra.mxu0 0
    %957 = vmatprep.subr.bf16.mxu0 0
    %958 = vmatpush1.bf16.msra.mxu0 0
    %959 = vmatprep.subr.bf16.mxu0 0
    %960 = vmatpush1.bf16.msra.mxu0 0
    %961 = vmatprep.subr.bf16.mxu0 0
    %962 = vmatpush1.bf16.msra.mxu0 0
    %963 = vmatprep.subr.bf16.mxu0 0
    %964 = vmatpush1.bf16.msra.mxu0 0
    %965 = vmatprep.subr.bf16.mxu0 0
    %966 = vmatpush1.bf16.msra.mxu0 %v952
    %967 = vmatprep.subr.bf16.mxu0 0
    %968 = vmatpush1.bf16.msra.mxu0 %v951
    %969 = vmatprep.subr.bf16.mxu0 0
    %970 = vmatpush2.bf16.msra.mxu0 0
    %971 = vmatprep.subr.bf16.mxu0 0
    %972 = vmatpush2.bf16.msra.mxu0 0
    %973 = vmatprep.subr.bf16.mxu0 0
    %974 = vmatpush2.bf16.msra.mxu0 0
    %975 = vmatprep.subr.bf16.mxu0 0
    %976 = vmatpush2.bf16.msra.mxu0 0
    %977 = vmatprep.subr.bf16.mxu0 0
    %978 = vmatpush2.bf16.msra.mxu0 0
    %979 = vmatprep.subr.bf16.mxu0 0
    %980 = vmatpush2.bf16.msra.mxu0 0
    %981 = vmatprep.subr.bf16.mxu0 0
    %982 = vmatpush2.bf16.msra.mxu0 0
    %983 = vmatprep.subr.bf16.mxu0 0
    %984 = vmatpush2.bf16.msra.mxu0 0
    %985 = vmatprep.mubr.bf16.mxu0 0
    %986 = vmatmul.mubr.bf16.gmra.mxu0 %v893
    %v987 = vpop.f32.mrf.mxu0
    %v988 = vadd.f32 %v863, %v987
    %v989 = vpop.f32.mrf.mxu0
    %v990 = vpop.f32.mrf.mxu0
    %v991 = vadd.f32 %v868, %v990
    %v992 = vpop.f32.mrf.mxu0
    %993 = vmatprep.mubr.bf16.mxu0 0
    %994 = vmatmul.mubr.bf16.gmra.mxu0 %v896
    %v995 = vpop.f32.mrf.mxu0
    %v996 = vadd.f32 %v873, %v995
    %v997 = vpop.f32.mrf.mxu0
    %v998 = vpop.f32.mrf.mxu0
    %v999 = vadd.f32 %v878, %v998
    %v1000 = vpop.f32.mrf.mxu0
    %1001 = vdwg.mxu0
    %v1002 = vmax.f32 %v988, 0.0
    %v1003 = vmax.f32 %v991, 0.0
    %v1004 = vmax.f32 %v996, 0.0
    %v1005 = vmax.f32 %v999, 0.0
    %v1006 = vpack.c.bf16 %v792, %v791
    %v1007 = vpack.c.bf16 %v794, %v793
    %1008 = vmatprep.subr.bf16.mxu0 0
    %1009 = vmatpush1.bf16.msra.mxu0 0
    %1010 = vmatprep.subr.bf16.mxu0 0
    %1011 = vmatpush1.bf16.msra.mxu0 0
    %1012 = vmatprep.subr.bf16.mxu0 0
    %1013 = vmatpush1.bf16.msra.mxu0 0
    %1014 = vmatprep.subr.bf16.mxu0 0
    %1015 = vmatpush1.bf16.msra.mxu0 0
    %1016 = vmatprep.subr.bf16.mxu0 0
    %1017 = vmatpush1.bf16.msra.mxu0 0
    %1018 = vmatprep.subr.bf16.mxu0 0
    %1019 = vmatpush1.bf16.msra.mxu0 0
    %1020 = vmatprep.subr.bf16.mxu0 0
    %1021 = vmatpush1.bf16.msra.mxu0 %v1007
    %1022 = vmatprep.subr.bf16.mxu0 0
    %1023 = vmatpush1.bf16.msra.mxu0 %v1006
    %1024 = vmatprep.subr.bf16.mxu0 0
    %1025 = vmatpush2.bf16.msra.mxu0 0
    %1026 = vmatprep.subr.bf16.mxu0 0
    %1027 = vmatpush2.bf16.msra.mxu0 0
    %1028 = vmatprep.subr.bf16.mxu0 0
    %1029 = vmatpush2.bf16.msra.mxu0 0
    %1030 = vmatprep.subr.bf16.mxu0 0
    %1031 = vmatpush2.bf16.msra.mxu0 0
    %1032 = vmatprep.subr.bf16.mxu0 0
    %1033 = vmatpush2.bf16.msra.mxu0 0
    %1034 = vmatprep.subr.bf16.mxu0 0
    %1035 = vmatpush2.bf16.msra.mxu0 0
    %1036 = vmatprep.subr.bf16.mxu0 0
    %1037 = vmatpush2.bf16.msra.mxu0 0
    %1038 = vmatprep.subr.bf16.mxu0 0
    %1039 = vmatpush2.bf16.msra.mxu0 0
    %1040 = vmatprep.mubr.bf16.mxu0 0
    %1041 = vmatmul.mubr.bf16.gmra.mxu0 %v893
    %v1042 = vpop.f32.mrf.mxu0
    %v1043 = vadd.f32 %v863, %v1042
    %v1044 = vpop.f32.mrf.mxu0
    %v1045 = vpop.f32.mrf.mxu0
    %v1046 = vadd.f32 %v868, %v1045
    %v1047 = vpop.f32.mrf.mxu0
    %1048 = vmatprep.mubr.bf16.mxu0 0
    %1049 = vmatmul.mubr.bf16.gmra.mxu0 %v896
    %v1050 = vpop.f32.mrf.mxu0
    %v1051 = vadd.f32 %v873, %v1050
    %v1052 = vpop.f32.mrf.mxu0
    %v1053 = vpop.f32.mrf.mxu0
    %v1054 = vadd.f32 %v878, %v1053
    %v1055 = vpop.f32.mrf.mxu0
    %1056 = vdwg.mxu0
    %v1057 = vmax.f32 %v1043, 0.0
    %v1058 = vmax.f32 %v1046, 0.0
    %v1059 = vmax.f32 %v1051, 0.0
    %v1060 = vmax.f32 %v1054, 0.0
    %v1061 = vpack.c.bf16 %v847, %v846
    %v1062 = vpack.c.bf16 %v849, %v848
    %1063 = vmatprep.subr.bf16.mxu0 0
    %1064 = vmatpush1.bf16.msra.mxu0 0
    %1065 = vmatprep.subr.bf16.mxu0 0
    %1066 = vmatpush1.bf16.msra.mxu0 0
    %1067 = vmatprep.subr.bf16.mxu0 0
    %1068 = vmatpush1.bf16.msra.mxu0 0
    %1069 = vmatprep.subr.bf16.mxu0 0
    %1070 = vmatpush1.bf16.msra.mxu0 0
    %1071 = vmatprep.subr.bf16.mxu0 0
    %1072 = vmatpush1.bf16.msra.mxu0 0
    %1073 = vmatprep.subr.bf16.mxu0 0
    %1074 = vmatpush1.bf16.msra.mxu0 0
    %1075 = vmatprep.subr.bf16.mxu0 0
    %1076 = vmatpush1.bf16.msra.mxu0 %v1062
    %1077 = vmatprep.subr.bf16.mxu0 0
    %1078 = vmatpush1.bf16.msra.mxu0 %v1061
    %1079 = vmatprep.subr.bf16.mxu0 0
    %1080 = vmatpush2.bf16.msra.mxu0 0
    %1081 = vmatprep.subr.bf16.mxu0 0
    %1082 = vmatpush2.bf16.msra.mxu0 0
    %1083 = vmatprep.subr.bf16.mxu0 0
    %1084 = vmatpush2.bf16.msra.mxu0 0
    %1085 = vmatprep.subr.bf16.mxu0 0
    %1086 = vmatpush2.bf16.msra.mxu0 0
    %1087 = vmatprep.subr.bf16.mxu0 0
    %1088 = vmatpush2.bf16.msra.mxu0 0
    %1089 = vmatprep.subr.bf16.mxu0 0
    %1090 = vmatpush2.bf16.msra.mxu0 0
    %1091 = vmatprep.subr.bf16.mxu0 0
    %1092 = vmatpush2.bf16.msra.mxu0 0
    %1093 = vmatprep.subr.bf16.mxu0 0
    %1094 = vmatpush2.bf16.msra.mxu0 0
    %1095 = vmatprep.mubr.bf16.mxu0 0
    %1096 = vmatmul.mubr.bf16.gmra.mxu0 %v893
    %v1097 = vpop.f32.mrf.mxu0
    %v1098 = vadd.f32 %v863, %v1097
    %v1099 = vpop.f32.mrf.mxu0
    %v1100 = vpop.f32.mrf.mxu0
    %v1101 = vadd.f32 %v868, %v1100
    %v1102 = vpop.f32.mrf.mxu0
    %1103 = vmatprep.mubr.bf16.mxu0 0
    %1104 = vmatmul.mubr.bf16.gmra.mxu0 %v896
    %v1105 = vpop.f32.mrf.mxu0
    %v1106 = vadd.f32 %v873, %v1105
    %v1107 = vpop.f32.mrf.mxu0
    %v1108 = vpop.f32.mrf.mxu0
    %v1109 = vadd.f32 %v878, %v1108
    %v1110 = vpop.f32.mrf.mxu0
    %1111 = vdwg.mxu0
    %v1112 = vmax.f32 %v1098, 0.0
    %v1113 = vmax.f32 %v1101, 0.0
    %v1114 = vmax.f32 %v1106, 0.0
    %v1115 = vmax.f32 %v1109, 0.0
    %s1116 = scalar_lea.vmem %s3, 48
    %v1117 = vld [vmem:[%s1116] sm:$0xf]
    %v1118 = vld [vmem:[%s1116 + $0x4] sm:$0xf]
    %v1119 = vld [vmem:[%s1116 + $0x8] sm:$0xf]
    %v1120 = vld [vmem:[%s1116 + $0xc] sm:$0xf]
    %s1121 = scalar_lea.vmem %s4, 96
    %v1122 = vld [vmem:[%s1121] sm:$0xff]
    %v1123 = vld [vmem:[%s1121 + $0x8] sm:$0xff]
    %v1124 = vld [vmem:[%s1121 + $0x10] sm:$0xff]
    %v1125 = vld [vmem:[%s1121 + $0x18] sm:$0xff]
    %1127 = vset.pattern.permute.xlu0 0
    %1128 = vperm.xlu0 %1127, %v1122
    %v1129 = vpop.permute.xlu0 %1128
    %1132 = vset.pattern.permute.xlu0 0
    %1133 = vperm.xlu0 %1132, %v1123
    %v1134 = vpop.permute.xlu0 %1133
    %1137 = vset.pattern.permute.xlu0 0
    %1138 = vperm.xlu0 %1137, %v1124
    %v1139 = vpop.permute.xlu0 %1138
    %1142 = vset.pattern.permute.xlu0 0
    %1143 = vperm.xlu0 %1142, %v1125
    %v1144 = vpop.permute.xlu0 %1143
    %v1146 = vpack.c.bf16 %v948, %v947
    %v1147 = vpack.c.bf16 %v950, %v949
    %v1152 = vunpack.c.l.b16 %v1117
    %v1153 = vunpack.c.l.b16 %v1118
    %v1154 = vunpack.c.l.b16 %v1119
    %v1155 = vunpack.c.l.b16 %v1120
    %v1156 = vpack.c.b16 %v1153, %v1152
    %v1157 = vpack.c.b16 %v1155, %v1154
    %v1159 = vsel %vm359, %v1156, 0
    %v1162 = vsel %vm359, %v1157, 0
    %1164 = vmatprep.subr.bf16.mxu0 0
    %1165 = vmatpush1.bf16.msra.mxu0 0
    %1166 = vmatprep.subr.bf16.mxu0 0
    %1167 = vmatpush1.bf16.msra.mxu0 0
    %1168 = vmatprep.subr.bf16.mxu0 0
    %1169 = vmatpush1.bf16.msra.mxu0 0
    %1170 = vmatprep.subr.bf16.mxu0 0
    %1171 = vmatpush1.bf16.msra.mxu0 0
    %1172 = vmatprep.subr.bf16.mxu0 0
    %1173 = vmatpush1.bf16.msra.mxu0 0
    %1174 = vmatprep.subr.bf16.mxu0 0
    %1175 = vmatpush1.bf16.msra.mxu0 0
    %1176 = vmatprep.subr.bf16.mxu0 0
    %1177 = vmatpush1.bf16.msra.mxu0 %v1147
    %1178 = vmatprep.subr.bf16.mxu0 0
    %1179 = vmatpush1.bf16.msra.mxu0 %v1146
    %1180 = vmatprep.subr.bf16.mxu0 0
    %1181 = vmatpush2.bf16.msra.mxu0 0
    %1182 = vmatprep.subr.bf16.mxu0 0
    %1183 = vmatpush2.bf16.msra.mxu0 0
    %1184 = vmatprep.subr.bf16.mxu0 0
    %1185 = vmatpush2.bf16.msra.mxu0 0
    %1186 = vmatprep.subr.bf16.mxu0 0
    %1187 = vmatpush2.bf16.msra.mxu0 0
    %1188 = vmatprep.subr.bf16.mxu0 0
    %1189 = vmatpush2.bf16.msra.mxu0 0
    %1190 = vmatprep.subr.bf16.mxu0 0
    %1191 = vmatpush2.bf16.msra.mxu0 0
    %1192 = vmatprep.subr.bf16.mxu0 0
    %1193 = vmatpush2.bf16.msra.mxu0 0
    %1194 = vmatprep.subr.bf16.mxu0 0
    %1195 = vmatpush2.bf16.msra.mxu0 0
    %1196 = vmatprep.mubr.bf16.mxu0 0
    %1197 = vmatmul.mubr.bf16.gmra.mxu0 %v1159
    %v1198 = vpop.f32.mrf.mxu0
    %v1199 = vadd.f32 %v1129, %v1198
    %v1200 = vpop.f32.mrf.mxu0
    %v1201 = vpop.f32.mrf.mxu0
    %v1202 = vadd.f32 %v1134, %v1201
    %v1203 = vpop.f32.mrf.mxu0
    %1204 = vmatprep.mubr.bf16.mxu0 0
    %1205 = vmatmul.mubr.bf16.gmra.mxu0 %v1162
    %v1206 = vpop.f32.mrf.mxu0
    %v1207 = vadd.f32 %v1139, %v1206
    %v1208 = vpop.f32.mrf.mxu0
    %v1209 = vpop.f32.mrf.mxu0
    %v1210 = vadd.f32 %v1144, %v1209
    %v1211 = vpop.f32.mrf.mxu0
    %1212 = vdwg.mxu0
    %v1213 = vmax.f32 %v1199, 0.0
    %v1214 = vmax.f32 %v1202, 0.0
    %v1215 = vmax.f32 %v1207, 0.0
    %v1216 = vmax.f32 %v1210, 0.0
    %v1217 = vpack.c.bf16 %v1003, %v1002
    %v1218 = vpack.c.bf16 %v1005, %v1004
    %1219 = vmatprep.subr.bf16.mxu0 0
    %1220 = vmatpush1.bf16.msra.mxu0 0
    %1221 = vmatprep.subr.bf16.mxu0 0
    %1222 = vmatpush1.bf16.msra.mxu0 0
    %1223 = vmatprep.subr.bf16.mxu0 0
    %1224 = vmatpush1.bf16.msra.mxu0 0
    %1225 = vmatprep.subr.bf16.mxu0 0
    %1226 = vmatpush1.bf16.msra.mxu0 0
    %1227 = vmatprep.subr.bf16.mxu0 0
    %1228 = vmatpush1.bf16.msra.mxu0 0
    %1229 = vmatprep.subr.bf16.mxu0 0
    %1230 = vmatpush1.bf16.msra.mxu0 0
    %1231 = vmatprep.subr.bf16.mxu0 0
    %1232 = vmatpush1.bf16.msra.mxu0 %v1218
    %1233 = vmatprep.subr.bf16.mxu0 0
    %1234 = vmatpush1.bf16.msra.mxu0 %v1217
    %1235 = vmatprep.subr.bf16.mxu0 0
    %1236 = vmatpush2.bf16.msra.mxu0 0
    %1237 = vmatprep.subr.bf16.mxu0 0
    %1238 = vmatpush2.bf16.msra.mxu0 0
    %1239 = vmatprep.subr.bf16.mxu0 0
    %1240 = vmatpush2.bf16.msra.mxu0 0
    %1241 = vmatprep.subr.bf16.mxu0 0
    %1242 = vmatpush2.bf16.msra.mxu0 0
    %1243 = vmatprep.subr.bf16.mxu0 0
    %1244 = vmatpush2.bf16.msra.mxu0 0
    %1245 = vmatprep.subr.bf16.mxu0 0
    %1246 = vmatpush2.bf16.msra.mxu0 0
    %1247 = vmatprep.subr.bf16.mxu0 0
    %1248 = vmatpush2.bf16.msra.mxu0 0
    %1249 = vmatprep.subr.bf16.mxu0 0
    %1250 = vmatpush2.bf16.msra.mxu0 0
    %1251 = vmatprep.mubr.bf16.mxu0 0
    %1252 = vmatmul.mubr.bf16.gmra.mxu0 %v1159
    %v1253 = vpop.f32.mrf.mxu0
    %v1254 = vadd.f32 %v1129, %v1253
    %v1255 = vpop.f32.mrf.mxu0
    %v1256 = vpop.f32.mrf.mxu0
    %v1257 = vadd.f32 %v1134, %v1256
    %v1258 = vpop.f32.mrf.mxu0
    %1259 = vmatprep.mubr.bf16.mxu0 0
    %1260 = vmatmul.mubr.bf16.gmra.mxu0 %v1162
    %v1261 = vpop.f32.mrf.mxu0
    %v1262 = vadd.f32 %v1139, %v1261
    %v1263 = vpop.f32.mrf.mxu0
    %v1264 = vpop.f32.mrf.mxu0
    %v1265 = vadd.f32 %v1144, %v1264
    %v1266 = vpop.f32.mrf.mxu0
    %1267 = vdwg.mxu0
    %v1268 = vmax.f32 %v1254, 0.0
    %v1269 = vmax.f32 %v1257, 0.0
    %v1270 = vmax.f32 %v1262, 0.0
    %v1271 = vmax.f32 %v1265, 0.0
    %v1272 = vpack.c.bf16 %v1058, %v1057
    %v1273 = vpack.c.bf16 %v1060, %v1059
    %1274 = vmatprep.subr.bf16.mxu0 0
    %1275 = vmatpush1.bf16.msra.mxu0 0
    %1276 = vmatprep.subr.bf16.mxu0 0
    %1277 = vmatpush1.bf16.msra.mxu0 0
    %1278 = vmatprep.subr.bf16.mxu0 0
    %1279 = vmatpush1.bf16.msra.mxu0 0
    %1280 = vmatprep.subr.bf16.mxu0 0
    %1281 = vmatpush1.bf16.msra.mxu0 0
    %1282 = vmatprep.subr.bf16.mxu0 0
    %1283 = vmatpush1.bf16.msra.mxu0 0
    %1284 = vmatprep.subr.bf16.mxu0 0
    %1285 = vmatpush1.bf16.msra.mxu0 0
    %1286 = vmatprep.subr.bf16.mxu0 0
    %1287 = vmatpush1.bf16.msra.mxu0 %v1273
    %1288 = vmatprep.subr.bf16.mxu0 0
    %1289 = vmatpush1.bf16.msra.mxu0 %v1272
    %1290 = vmatprep.subr.bf16.mxu0 0
    %1291 = vmatpush2.bf16.msra.mxu0 0
    %1292 = vmatprep.subr.bf16.mxu0 0
    %1293 = vmatpush2.bf16.msra.mxu0 0
    %1294 = vmatprep.subr.bf16.mxu0 0
    %1295 = vmatpush2.bf16.msra.mxu0 0
    %1296 = vmatprep.subr.bf16.mxu0 0
    %1297 = vmatpush2.bf16.msra.mxu0 0
    %1298 = vmatprep.subr.bf16.mxu0 0
    %1299 = vmatpush2.bf16.msra.mxu0 0
    %1300 = vmatprep.subr.bf16.mxu0 0
    %1301 = vmatpush2.bf16.msra.mxu0 0
    %1302 = vmatprep.subr.bf16.mxu0 0
    %1303 = vmatpush2.bf16.msra.mxu0 0
    %1304 = vmatprep.subr.bf16.mxu0 0
    %1305 = vmatpush2.bf16.msra.mxu0 0
    %1306 = vmatprep.mubr.bf16.mxu0 0
    %1307 = vmatmul.mubr.bf16.gmra.mxu0 %v1159
    %v1308 = vpop.f32.mrf.mxu0
    %v1309 = vadd.f32 %v1129, %v1308
    %v1310 = vpop.f32.mrf.mxu0
    %v1311 = vpop.f32.mrf.mxu0
    %v1312 = vadd.f32 %v1134, %v1311
    %v1313 = vpop.f32.mrf.mxu0
    %1314 = vmatprep.mubr.bf16.mxu0 0
    %1315 = vmatmul.mubr.bf16.gmra.mxu0 %v1162
    %v1316 = vpop.f32.mrf.mxu0
    %v1317 = vadd.f32 %v1139, %v1316
    %v1318 = vpop.f32.mrf.mxu0
    %v1319 = vpop.f32.mrf.mxu0
    %v1320 = vadd.f32 %v1144, %v1319
    %v1321 = vpop.f32.mrf.mxu0
    %1322 = vdwg.mxu0
    %v1323 = vmax.f32 %v1309, 0.0
    %v1324 = vmax.f32 %v1312, 0.0
    %v1325 = vmax.f32 %v1317, 0.0
    %v1326 = vmax.f32 %v1320, 0.0
    %v1327 = vpack.c.bf16 %v1113, %v1112
    %v1328 = vpack.c.bf16 %v1115, %v1114
    %1329 = vmatprep.subr.bf16.mxu0 0
    %1330 = vmatpush1.bf16.msra.mxu0 0
    %1331 = vmatprep.subr.bf16.mxu0 0
    %1332 = vmatpush1.bf16.msra.mxu0 0
    %1333 = vmatprep.subr.bf16.mxu0 0
    %1334 = vmatpush1.bf16.msra.mxu0 0
    %1335 = vmatprep.subr.bf16.mxu0 0
    %1336 = vmatpush1.bf16.msra.mxu0 0
    %1337 = vmatprep.subr.bf16.mxu0 0
    %1338 = vmatpush1.bf16.msra.mxu0 0
    %1339 = vmatprep.subr.bf16.mxu0 0
    %1340 = vmatpush1.bf16.msra.mxu0 0
    %1341 = vmatprep.subr.bf16.mxu0 0
    %1342 = vmatpush1.bf16.msra.mxu0 %v1328
    %1343 = vmatprep.subr.bf16.mxu0 0
    %1344 = vmatpush1.bf16.msra.mxu0 %v1327
    %1345 = vmatprep.subr.bf16.mxu0 0
    %1346 = vmatpush2.bf16.msra.mxu0 0
    %1347 = vmatprep.subr.bf16.mxu0 0
    %1348 = vmatpush2.bf16.msra.mxu0 0
    %1349 = vmatprep.subr.bf16.mxu0 0
    %1350 = vmatpush2.bf16.msra.mxu0 0
    %1351 = vmatprep.subr.bf16.mxu0 0
    %1352 = vmatpush2.bf16.msra.mxu0 0
    %1353 = vmatprep.subr.bf16.mxu0 0
    %1354 = vmatpush2.bf16.msra.mxu0 0
    %1355 = vmatprep.subr.bf16.mxu0 0
    %1356 = vmatpush2.bf16.msra.mxu0 0
    %1357 = vmatprep.subr.bf16.mxu0 0
    %1358 = vmatpush2.bf16.msra.mxu0 0
    %1359 = vmatprep.subr.bf16.mxu0 0
    %1360 = vmatpush2.bf16.msra.mxu0 0
    %1361 = vmatprep.mubr.bf16.mxu0 0
    %1362 = vmatmul.mubr.bf16.gmra.mxu0 %v1159
    %v1363 = vpop.f32.mrf.mxu0
    %v1364 = vadd.f32 %v1129, %v1363
    %v1365 = vpop.f32.mrf.mxu0
    %v1366 = vpop.f32.mrf.mxu0
    %v1367 = vadd.f32 %v1134, %v1366
    %v1368 = vpop.f32.mrf.mxu0
    %1369 = vmatprep.mubr.bf16.mxu0 0
    %1370 = vmatmul.mubr.bf16.gmra.mxu0 %v1162
    %v1371 = vpop.f32.mrf.mxu0
    %v1372 = vadd.f32 %v1139, %v1371
    %v1373 = vpop.f32.mrf.mxu0
    %v1374 = vpop.f32.mrf.mxu0
    %v1375 = vadd.f32 %v1144, %v1374
    %v1376 = vpop.f32.mrf.mxu0
    %1377 = vdwg.mxu0
    %v1378 = vmax.f32 %v1364, 0.0
    %v1379 = vmax.f32 %v1367, 0.0
    %v1380 = vmax.f32 %v1372, 0.0
    %v1381 = vmax.f32 %v1375, 0.0
    %s1382 = scalar_lea.vmem %s3, 64
    %v1383 = vld [vmem:[%s1382] sm:$0xf]
    %v1384 = vld [vmem:[%s1382 + $0x4] sm:$0xf]
    %v1385 = vld [vmem:[%s1382 + $0x8] sm:$0xf]
    %v1386 = vld [vmem:[%s1382 + $0xc] sm:$0xf]
    %s1387 = scalar_lea.vmem %s4, 128
    %v1388 = vld [vmem:[%s1387] sm:$0xff]
    %v1389 = vld [vmem:[%s1387 + $0x8] sm:$0xff]
    %v1390 = vld [vmem:[%s1387 + $0x10] sm:$0xff]
    %v1391 = vld [vmem:[%s1387 + $0x18] sm:$0xff]
    %1393 = vset.pattern.permute.xlu0 0
    %1394 = vperm.xlu0 %1393, %v1388
    %v1395 = vpop.permute.xlu0 %1394
    %1398 = vset.pattern.permute.xlu0 0
    %1399 = vperm.xlu0 %1398, %v1389
    %v1400 = vpop.permute.xlu0 %1399
    %1403 = vset.pattern.permute.xlu0 0
    %1404 = vperm.xlu0 %1403, %v1390
    %v1405 = vpop.permute.xlu0 %1404
    %1408 = vset.pattern.permute.xlu0 0
    %1409 = vperm.xlu0 %1408, %v1391
    %v1410 = vpop.permute.xlu0 %1409
    %v1412 = vpack.c.bf16 %v1214, %v1213
    %v1413 = vpack.c.bf16 %v1216, %v1215
    %v1418 = vunpack.c.l.b16 %v1383
    %v1419 = vunpack.c.l.b16 %v1384
    %v1420 = vunpack.c.l.b16 %v1385
    %v1421 = vunpack.c.l.b16 %v1386
    %v1422 = vpack.c.b16 %v1419, %v1418
    %v1423 = vpack.c.b16 %v1421, %v1420
    %v1425 = vsel %vm359, %v1422, 0
    %v1428 = vsel %vm359, %v1423, 0
    %1430 = vmatprep.subr.bf16.mxu0 0
    %1431 = vmatpush1.bf16.msra.mxu0 0
    %1432 = vmatprep.subr.bf16.mxu0 0
    %1433 = vmatpush1.bf16.msra.mxu0 0
    %1434 = vmatprep.subr.bf16.mxu0 0
    %1435 = vmatpush1.bf16.msra.mxu0 0
    %1436 = vmatprep.subr.bf16.mxu0 0
    %1437 = vmatpush1.bf16.msra.mxu0 0
    %1438 = vmatprep.subr.bf16.mxu0 0
    %1439 = vmatpush1.bf16.msra.mxu0 0
    %1440 = vmatprep.subr.bf16.mxu0 0
    %1441 = vmatpush1.bf16.msra.mxu0 0
    %1442 = vmatprep.subr.bf16.mxu0 0
    %1443 = vmatpush1.bf16.msra.mxu0 %v1413
    %1444 = vmatprep.subr.bf16.mxu0 0
    %1445 = vmatpush1.bf16.msra.mxu0 %v1412
    %1446 = vmatprep.subr.bf16.mxu0 0
    %1447 = vmatpush2.bf16.msra.mxu0 0
    %1448 = vmatprep.subr.bf16.mxu0 0
    %1449 = vmatpush2.bf16.msra.mxu0 0
    %1450 = vmatprep.subr.bf16.mxu0 0
    %1451 = vmatpush2.bf16.msra.mxu0 0
    %1452 = vmatprep.subr.bf16.mxu0 0
    %1453 = vmatpush2.bf16.msra.mxu0 0
    %1454 = vmatprep.subr.bf16.mxu0 0
    %1455 = vmatpush2.bf16.msra.mxu0 0
    %1456 = vmatprep.subr.bf16.mxu0 0
    %1457 = vmatpush2.bf16.msra.mxu0 0
    %1458 = vmatprep.subr.bf16.mxu0 0
    %1459 = vmatpush2.bf16.msra.mxu0 0
    %1460 = vmatprep.subr.bf16.mxu0 0
    %1461 = vmatpush2.bf16.msra.mxu0 0
    %1462 = vmatprep.mubr.bf16.mxu0 0
    %1463 = vmatmul.mubr.bf16.gmra.mxu0 %v1425
    %v1464 = vpop.f32.mrf.mxu0
    %v1465 = vadd.f32 %v1395, %v1464
    %v1466 = vpop.f32.mrf.mxu0
    %v1467 = vpop.f32.mrf.mxu0
    %v1468 = vadd.f32 %v1400, %v1467
    %v1469 = vpop.f32.mrf.mxu0
    %1470 = vmatprep.mubr.bf16.mxu0 0
    %1471 = vmatmul.mubr.bf16.gmra.mxu0 %v1428
    %v1472 = vpop.f32.mrf.mxu0
    %v1473 = vadd.f32 %v1405, %v1472
    %v1474 = vpop.f32.mrf.mxu0
    %v1475 = vpop.f32.mrf.mxu0
    %v1476 = vadd.f32 %v1410, %v1475
    %v1477 = vpop.f32.mrf.mxu0
    %1478 = vdwg.mxu0
    %v1479 = vmax.f32 %v1465, 0.0
    %v1480 = vmax.f32 %v1468, 0.0
    %v1481 = vmax.f32 %v1473, 0.0
    %v1482 = vmax.f32 %v1476, 0.0
    %v1483 = vpack.c.bf16 %v1269, %v1268
    %v1484 = vpack.c.bf16 %v1271, %v1270
    %1485 = vmatprep.subr.bf16.mxu0 0
    %1486 = vmatpush1.bf16.msra.mxu0 0
    %1487 = vmatprep.subr.bf16.mxu0 0
    %1488 = vmatpush1.bf16.msra.mxu0 0
    %1489 = vmatprep.subr.bf16.mxu0 0
    %1490 = vmatpush1.bf16.msra.mxu0 0
    %1491 = vmatprep.subr.bf16.mxu0 0
    %1492 = vmatpush1.bf16.msra.mxu0 0
    %1493 = vmatprep.subr.bf16.mxu0 0
    %1494 = vmatpush1.bf16.msra.mxu0 0
    %1495 = vmatprep.subr.bf16.mxu0 0
    %1496 = vmatpush1.bf16.msra.mxu0 0
    %1497 = vmatprep.subr.bf16.mxu0 0
    %1498 = vmatpush1.bf16.msra.mxu0 %v1484
    %1499 = vmatprep.subr.bf16.mxu0 0
    %1500 = vmatpush1.bf16.msra.mxu0 %v1483
    %1501 = vmatprep.subr.bf16.mxu0 0
    %1502 = vmatpush2.bf16.msra.mxu0 0
    %1503 = vmatprep.subr.bf16.mxu0 0
    %1504 = vmatpush2.bf16.msra.mxu0 0
    %1505 = vmatprep.subr.bf16.mxu0 0
    %1506 = vmatpush2.bf16.msra.mxu0 0
    %1507 = vmatprep.subr.bf16.mxu0 0
    %1508 = vmatpush2.bf16.msra.mxu0 0
    %1509 = vmatprep.subr.bf16.mxu0 0
    %1510 = vmatpush2.bf16.msra.mxu0 0
    %1511 = vmatprep.subr.bf16.mxu0 0
    %1512 = vmatpush2.bf16.msra.mxu0 0
    %1513 = vmatprep.subr.bf16.mxu0 0
    %1514 = vmatpush2.bf16.msra.mxu0 0
    %1515 = vmatprep.subr.bf16.mxu0 0
    %1516 = vmatpush2.bf16.msra.mxu0 0
    %1517 = vmatprep.mubr.bf16.mxu0 0
    %1518 = vmatmul.mubr.bf16.gmra.mxu0 %v1425
    %v1519 = vpop.f32.mrf.mxu0
    %v1520 = vadd.f32 %v1395, %v1519
    %v1521 = vpop.f32.mrf.mxu0
    %v1522 = vpop.f32.mrf.mxu0
    %v1523 = vadd.f32 %v1400, %v1522
    %v1524 = vpop.f32.mrf.mxu0
    %1525 = vmatprep.mubr.bf16.mxu0 0
    %1526 = vmatmul.mubr.bf16.gmra.mxu0 %v1428
    %v1527 = vpop.f32.mrf.mxu0
    %v1528 = vadd.f32 %v1405, %v1527
    %v1529 = vpop.f32.mrf.mxu0
    %v1530 = vpop.f32.mrf.mxu0
    %v1531 = vadd.f32 %v1410, %v1530
    %v1532 = vpop.f32.mrf.mxu0
    %1533 = vdwg.mxu0
    %v1534 = vmax.f32 %v1520, 0.0
    %v1535 = vmax.f32 %v1523, 0.0
    %v1536 = vmax.f32 %v1528, 0.0
    %v1537 = vmax.f32 %v1531, 0.0
    %v1538 = vpack.c.bf16 %v1324, %v1323
    %v1539 = vpack.c.bf16 %v1326, %v1325
    %1540 = vmatprep.subr.bf16.mxu0 0
    %1541 = vmatpush1.bf16.msra.mxu0 0
    %1542 = vmatprep.subr.bf16.mxu0 0
    %1543 = vmatpush1.bf16.msra.mxu0 0
    %1544 = vmatprep.subr.bf16.mxu0 0
    %1545 = vmatpush1.bf16.msra.mxu0 0
    %1546 = vmatprep.subr.bf16.mxu0 0
    %1547 = vmatpush1.bf16.msra.mxu0 0
    %1548 = vmatprep.subr.bf16.mxu0 0
    %1549 = vmatpush1.bf16.msra.mxu0 0
    %1550 = vmatprep.subr.bf16.mxu0 0
    %1551 = vmatpush1.bf16.msra.mxu0 0
    %1552 = vmatprep.subr.bf16.mxu0 0
    %1553 = vmatpush1.bf16.msra.mxu0 %v1539
    %1554 = vmatprep.subr.bf16.mxu0 0
    %1555 = vmatpush1.bf16.msra.mxu0 %v1538
    %1556 = vmatprep.subr.bf16.mxu0 0
    %1557 = vmatpush2.bf16.msra.mxu0 0
    %1558 = vmatprep.subr.bf16.mxu0 0
    %1559 = vmatpush2.bf16.msra.mxu0 0
    %1560 = vmatprep.subr.bf16.mxu0 0
    %1561 = vmatpush2.bf16.msra.mxu0 0
    %1562 = vmatprep.subr.bf16.mxu0 0
    %1563 = vmatpush2.bf16.msra.mxu0 0
    %1564 = vmatprep.subr.bf16.mxu0 0
    %1565 = vmatpush2.bf16.msra.mxu0 0
    %1566 = vmatprep.subr.bf16.mxu0 0
    %1567 = vmatpush2.bf16.msra.mxu0 0
    %1568 = vmatprep.subr.bf16.mxu0 0
    %1569 = vmatpush2.bf16.msra.mxu0 0
    %1570 = vmatprep.subr.bf16.mxu0 0
    %1571 = vmatpush2.bf16.msra.mxu0 0
    %1572 = vmatprep.mubr.bf16.mxu0 0
    %1573 = vmatmul.mubr.bf16.gmra.mxu0 %v1425
    %v1574 = vpop.f32.mrf.mxu0
    %v1575 = vadd.f32 %v1395, %v1574
    %v1576 = vpop.f32.mrf.mxu0
    %v1577 = vpop.f32.mrf.mxu0
    %v1578 = vadd.f32 %v1400, %v1577
    %v1579 = vpop.f32.mrf.mxu0
    %1580 = vmatprep.mubr.bf16.mxu0 0
    %1581 = vmatmul.mubr.bf16.gmra.mxu0 %v1428
    %v1582 = vpop.f32.mrf.mxu0
    %v1583 = vadd.f32 %v1405, %v1582
    %v1584 = vpop.f32.mrf.mxu0
    %v1585 = vpop.f32.mrf.mxu0
    %v1586 = vadd.f32 %v1410, %v1585
    %v1587 = vpop.f32.mrf.mxu0
    %1588 = vdwg.mxu0
    %v1589 = vmax.f32 %v1575, 0.0
    %v1590 = vmax.f32 %v1578, 0.0
    %v1591 = vmax.f32 %v1583, 0.0
    %v1592 = vmax.f32 %v1586, 0.0
    %v1593 = vpack.c.bf16 %v1379, %v1378
    %v1594 = vpack.c.bf16 %v1381, %v1380
    %1595 = vmatprep.subr.bf16.mxu0 0
    %1596 = vmatpush1.bf16.msra.mxu0 0
    %1597 = vmatprep.subr.bf16.mxu0 0
    %1598 = vmatpush1.bf16.msra.mxu0 0
    %1599 = vmatprep.subr.bf16.mxu0 0
    %1600 = vmatpush1.bf16.msra.mxu0 0
    %1601 = vmatprep.subr.bf16.mxu0 0
    %1602 = vmatpush1.bf16.msra.mxu0 0
    %1603 = vmatprep.subr.bf16.mxu0 0
    %1604 = vmatpush1.bf16.msra.mxu0 0
    %1605 = vmatprep.subr.bf16.mxu0 0
    %1606 = vmatpush1.bf16.msra.mxu0 0
    %1607 = vmatprep.subr.bf16.mxu0 0
    %1608 = vmatpush1.bf16.msra.mxu0 %v1594
    %1609 = vmatprep.subr.bf16.mxu0 0
    %1610 = vmatpush1.bf16.msra.mxu0 %v1593
    %1611 = vmatprep.subr.bf16.mxu0 0
    %1612 = vmatpush2.bf16.msra.mxu0 0
    %1613 = vmatprep.subr.bf16.mxu0 0
    %1614 = vmatpush2.bf16.msra.mxu0 0
    %1615 = vmatprep.subr.bf16.mxu0 0
    %1616 = vmatpush2.bf16.msra.mxu0 0
    %1617 = vmatprep.subr.bf16.mxu0 0
    %1618 = vmatpush2.bf16.msra.mxu0 0
    %1619 = vmatprep.subr.bf16.mxu0 0
    %1620 = vmatpush2.bf16.msra.mxu0 0
    %1621 = vmatprep.subr.bf16.mxu0 0
    %1622 = vmatpush2.bf16.msra.mxu0 0
    %1623 = vmatprep.subr.bf16.mxu0 0
    %1624 = vmatpush2.bf16.msra.mxu0 0
    %1625 = vmatprep.subr.bf16.mxu0 0
    %1626 = vmatpush2.bf16.msra.mxu0 0
    %1627 = vmatprep.mubr.bf16.mxu0 0
    %1628 = vmatmul.mubr.bf16.gmra.mxu0 %v1425
    %v1629 = vpop.f32.mrf.mxu0
    %v1630 = vadd.f32 %v1395, %v1629
    %v1631 = vpop.f32.mrf.mxu0
    %v1632 = vpop.f32.mrf.mxu0
    %v1633 = vadd.f32 %v1400, %v1632
    %v1634 = vpop.f32.mrf.mxu0
    %1635 = vmatprep.mubr.bf16.mxu0 0
    %1636 = vmatmul.mubr.bf16.gmra.mxu0 %v1428
    %v1637 = vpop.f32.mrf.mxu0
    %v1638 = vadd.f32 %v1405, %v1637
    %v1639 = vpop.f32.mrf.mxu0
    %v1640 = vpop.f32.mrf.mxu0
    %v1641 = vadd.f32 %v1410, %v1640
    %v1642 = vpop.f32.mrf.mxu0
    %1643 = vdwg.mxu0
    %v1644 = vmax.f32 %v1630, 0.0
    %v1645 = vmax.f32 %v1633, 0.0
    %v1646 = vmax.f32 %v1638, 0.0
    %v1647 = vmax.f32 %v1641, 0.0
    %s1648 = scalar_lea.vmem %s3, 80
    %v1649 = vld [vmem:[%s1648] sm:$0xf]
    %v1650 = vld [vmem:[%s1648 + $0x4] sm:$0xf]
    %v1651 = vld [vmem:[%s1648 + $0x8] sm:$0xf]
    %v1652 = vld [vmem:[%s1648 + $0xc] sm:$0xf]
    %s1653 = scalar_lea.vmem %s4, 160
    %v1654 = vld [vmem:[%s1653] sm:$0xff]
    %v1655 = vld [vmem:[%s1653 + $0x8] sm:$0xff]
    %v1656 = vld [vmem:[%s1653 + $0x10] sm:$0xff]
    %v1657 = vld [vmem:[%s1653 + $0x18] sm:$0xff]
    %1659 = vset.pattern.permute.xlu0 0
    %1660 = vperm.xlu0 %1659, %v1654
    %v1661 = vpop.permute.xlu0 %1660
    %1664 = vset.pattern.permute.xlu0 0
    %1665 = vperm.xlu0 %1664, %v1655
    %v1666 = vpop.permute.xlu0 %1665
    %1669 = vset.pattern.permute.xlu0 0
    %1670 = vperm.xlu0 %1669, %v1656
    %v1671 = vpop.permute.xlu0 %1670
    %1674 = vset.pattern.permute.xlu0 0
    %1675 = vperm.xlu0 %1674, %v1657
    %v1676 = vpop.permute.xlu0 %1675
    %v1678 = vpack.c.bf16 %v1480, %v1479
    %v1679 = vpack.c.bf16 %v1482, %v1481
    %v1684 = vunpack.c.l.b16 %v1649
    %v1685 = vunpack.c.l.b16 %v1650
    %v1686 = vunpack.c.l.b16 %v1651
    %v1687 = vunpack.c.l.b16 %v1652
    %v1688 = vpack.c.b16 %v1685, %v1684
    %v1689 = vpack.c.b16 %v1687, %v1686
    %v1691 = vsel %vm359, %v1688, 0
    %v1694 = vsel %vm359, %v1689, 0
    %1696 = vmatprep.subr.bf16.mxu0 0
    %1697 = vmatpush1.bf16.msra.mxu0 0
    %1698 = vmatprep.subr.bf16.mxu0 0
    %1699 = vmatpush1.bf16.msra.mxu0 0
    %1700 = vmatprep.subr.bf16.mxu0 0
    %1701 = vmatpush1.bf16.msra.mxu0 0
    %1702 = vmatprep.subr.bf16.mxu0 0
    %1703 = vmatpush1.bf16.msra.mxu0 0
    %1704 = vmatprep.subr.bf16.mxu0 0
    %1705 = vmatpush1.bf16.msra.mxu0 0
    %1706 = vmatprep.subr.bf16.mxu0 0
    %1707 = vmatpush1.bf16.msra.mxu0 0
    %1708 = vmatprep.subr.bf16.mxu0 0
    %1709 = vmatpush1.bf16.msra.mxu0 %v1679
    %1710 = vmatprep.subr.bf16.mxu0 0
    %1711 = vmatpush1.bf16.msra.mxu0 %v1678
    %1712 = vmatprep.subr.bf16.mxu0 0
    %1713 = vmatpush2.bf16.msra.mxu0 0
    %1714 = vmatprep.subr.bf16.mxu0 0
    %1715 = vmatpush2.bf16.msra.mxu0 0
    %1716 = vmatprep.subr.bf16.mxu0 0
    %1717 = vmatpush2.bf16.msra.mxu0 0
    %1718 = vmatprep.subr.bf16.mxu0 0
    %1719 = vmatpush2.bf16.msra.mxu0 0
    %1720 = vmatprep.subr.bf16.mxu0 0
    %1721 = vmatpush2.bf16.msra.mxu0 0
    %1722 = vmatprep.subr.bf16.mxu0 0
    %1723 = vmatpush2.bf16.msra.mxu0 0
    %1724 = vmatprep.subr.bf16.mxu0 0
    %1725 = vmatpush2.bf16.msra.mxu0 0
    %1726 = vmatprep.subr.bf16.mxu0 0
    %1727 = vmatpush2.bf16.msra.mxu0 0
    %1728 = vmatprep.mubr.bf16.mxu0 0
    %1729 = vmatmul.mubr.bf16.gmra.mxu0 %v1691
    %v1730 = vpop.f32.mrf.mxu0
    %v1731 = vadd.f32 %v1661, %v1730
    %v1732 = vpop.f32.mrf.mxu0
    %v1733 = vpop.f32.mrf.mxu0
    %v1734 = vadd.f32 %v1666, %v1733
    %v1735 = vpop.f32.mrf.mxu0
    %1736 = vmatprep.mubr.bf16.mxu0 0
    %1737 = vmatmul.mubr.bf16.gmra.mxu0 %v1694
    %v1738 = vpop.f32.mrf.mxu0
    %v1739 = vadd.f32 %v1671, %v1738
    %v1740 = vpop.f32.mrf.mxu0
    %v1741 = vpop.f32.mrf.mxu0
    %v1742 = vadd.f32 %v1676, %v1741
    %v1743 = vpop.f32.mrf.mxu0
    %1744 = vdwg.mxu0
    %v1745 = vmax.f32 %v1731, 0.0
    %v1746 = vmax.f32 %v1734, 0.0
    %v1747 = vmax.f32 %v1739, 0.0
    %v1748 = vmax.f32 %v1742, 0.0
    %v1749 = vpack.c.bf16 %v1535, %v1534
    %v1750 = vpack.c.bf16 %v1537, %v1536
    %1751 = vmatprep.subr.bf16.mxu0 0
    %1752 = vmatpush1.bf16.msra.mxu0 0
    %1753 = vmatprep.subr.bf16.mxu0 0
    %1754 = vmatpush1.bf16.msra.mxu0 0
    %1755 = vmatprep.subr.bf16.mxu0 0
    %1756 = vmatpush1.bf16.msra.mxu0 0
    %1757 = vmatprep.subr.bf16.mxu0 0
    %1758 = vmatpush1.bf16.msra.mxu0 0
    %1759 = vmatprep.subr.bf16.mxu0 0
    %1760 = vmatpush1.bf16.msra.mxu0 0
    %1761 = vmatprep.subr.bf16.mxu0 0
    %1762 = vmatpush1.bf16.msra.mxu0 0
    %1763 = vmatprep.subr.bf16.mxu0 0
    %1764 = vmatpush1.bf16.msra.mxu0 %v1750
    %1765 = vmatprep.subr.bf16.mxu0 0
    %1766 = vmatpush1.bf16.msra.mxu0 %v1749
    %1767 = vmatprep.subr.bf16.mxu0 0
    %1768 = vmatpush2.bf16.msra.mxu0 0
    %1769 = vmatprep.subr.bf16.mxu0 0
    %1770 = vmatpush2.bf16.msra.mxu0 0
    %1771 = vmatprep.subr.bf16.mxu0 0
    %1772 = vmatpush2.bf16.msra.mxu0 0
    %1773 = vmatprep.subr.bf16.mxu0 0
    %1774 = vmatpush2.bf16.msra.mxu0 0
    %1775 = vmatprep.subr.bf16.mxu0 0
    %1776 = vmatpush2.bf16.msra.mxu0 0
    %1777 = vmatprep.subr.bf16.mxu0 0
    %1778 = vmatpush2.bf16.msra.mxu0 0
    %1779 = vmatprep.subr.bf16.mxu0 0
    %1780 = vmatpush2.bf16.msra.mxu0 0
    %1781 = vmatprep.subr.bf16.mxu0 0
    %1782 = vmatpush2.bf16.msra.mxu0 0
    %1783 = vmatprep.mubr.bf16.mxu0 0
    %1784 = vmatmul.mubr.bf16.gmra.mxu0 %v1691
    %v1785 = vpop.f32.mrf.mxu0
    %v1786 = vadd.f32 %v1661, %v1785
    %v1787 = vpop.f32.mrf.mxu0
    %v1788 = vpop.f32.mrf.mxu0
    %v1789 = vadd.f32 %v1666, %v1788
    %v1790 = vpop.f32.mrf.mxu0
    %1791 = vmatprep.mubr.bf16.mxu0 0
    %1792 = vmatmul.mubr.bf16.gmra.mxu0 %v1694
    %v1793 = vpop.f32.mrf.mxu0
    %v1794 = vadd.f32 %v1671, %v1793
    %v1795 = vpop.f32.mrf.mxu0
    %v1796 = vpop.f32.mrf.mxu0
    %v1797 = vadd.f32 %v1676, %v1796
    %v1798 = vpop.f32.mrf.mxu0
    %1799 = vdwg.mxu0
    %v1800 = vmax.f32 %v1786, 0.0
    %v1801 = vmax.f32 %v1789, 0.0
    %v1802 = vmax.f32 %v1794, 0.0
    %v1803 = vmax.f32 %v1797, 0.0
    %v1804 = vpack.c.bf16 %v1590, %v1589
    %v1805 = vpack.c.bf16 %v1592, %v1591
    %1806 = vmatprep.subr.bf16.mxu0 0
    %1807 = vmatpush1.bf16.msra.mxu0 0
    %1808 = vmatprep.subr.bf16.mxu0 0
    %1809 = vmatpush1.bf16.msra.mxu0 0
    %1810 = vmatprep.subr.bf16.mxu0 0
    %1811 = vmatpush1.bf16.msra.mxu0 0
    %1812 = vmatprep.subr.bf16.mxu0 0
    %1813 = vmatpush1.bf16.msra.mxu0 0
    %1814 = vmatprep.subr.bf16.mxu0 0
    %1815 = vmatpush1.bf16.msra.mxu0 0
    %1816 = vmatprep.subr.bf16.mxu0 0
    %1817 = vmatpush1.bf16.msra.mxu0 0
    %1818 = vmatprep.subr.bf16.mxu0 0
    %1819 = vmatpush1.bf16.msra.mxu0 %v1805
    %1820 = vmatprep.subr.bf16.mxu0 0
    %1821 = vmatpush1.bf16.msra.mxu0 %v1804
    %1822 = vmatprep.subr.bf16.mxu0 0
    %1823 = vmatpush2.bf16.msra.mxu0 0
    %1824 = vmatprep.subr.bf16.mxu0 0
    %1825 = vmatpush2.bf16.msra.mxu0 0
    %1826 = vmatprep.subr.bf16.mxu0 0
    %1827 = vmatpush2.bf16.msra.mxu0 0
    %1828 = vmatprep.subr.bf16.mxu0 0
    %1829 = vmatpush2.bf16.msra.mxu0 0
    %1830 = vmatprep.subr.bf16.mxu0 0
    %1831 = vmatpush2.bf16.msra.mxu0 0
    %1832 = vmatprep.subr.bf16.mxu0 0
    %1833 = vmatpush2.bf16.msra.mxu0 0
    %1834 = vmatprep.subr.bf16.mxu0 0
    %1835 = vmatpush2.bf16.msra.mxu0 0
    %1836 = vmatprep.subr.bf16.mxu0 0
    %1837 = vmatpush2.bf16.msra.mxu0 0
    %1838 = vmatprep.mubr.bf16.mxu0 0
    %1839 = vmatmul.mubr.bf16.gmra.mxu0 %v1691
    %v1840 = vpop.f32.mrf.mxu0
    %v1841 = vadd.f32 %v1661, %v1840
    %v1842 = vpop.f32.mrf.mxu0
    %v1843 = vpop.f32.mrf.mxu0
    %v1844 = vadd.f32 %v1666, %v1843
    %v1845 = vpop.f32.mrf.mxu0
    %1846 = vmatprep.mubr.bf16.mxu0 0
    %1847 = vmatmul.mubr.bf16.gmra.mxu0 %v1694
    %v1848 = vpop.f32.mrf.mxu0
    %v1849 = vadd.f32 %v1671, %v1848
    %v1850 = vpop.f32.mrf.mxu0
    %v1851 = vpop.f32.mrf.mxu0
    %v1852 = vadd.f32 %v1676, %v1851
    %v1853 = vpop.f32.mrf.mxu0
    %1854 = vdwg.mxu0
    %v1855 = vmax.f32 %v1841, 0.0
    %v1856 = vmax.f32 %v1844, 0.0
    %v1857 = vmax.f32 %v1849, 0.0
    %v1858 = vmax.f32 %v1852, 0.0
    %v1859 = vpack.c.bf16 %v1645, %v1644
    %v1860 = vpack.c.bf16 %v1647, %v1646
    %1861 = vmatprep.subr.bf16.mxu0 0
    %1862 = vmatpush1.bf16.msra.mxu0 0
    %1863 = vmatprep.subr.bf16.mxu0 0
    %1864 = vmatpush1.bf16.msra.mxu0 0
    %1865 = vmatprep.subr.bf16.mxu0 0
    %1866 = vmatpush1.bf16.msra.mxu0 0
    %1867 = vmatprep.subr.bf16.mxu0 0
    %1868 = vmatpush1.bf16.msra.mxu0 0
    %1869 = vmatprep.subr.bf16.mxu0 0
    %1870 = vmatpush1.bf16.msra.mxu0 0
    %1871 = vmatprep.subr.bf16.mxu0 0
    %1872 = vmatpush1.bf16.msra.mxu0 0
    %1873 = vmatprep.subr.bf16.mxu0 0
    %1874 = vmatpush1.bf16.msra.mxu0 %v1860
    %1875 = vmatprep.subr.bf16.mxu0 0
    %1876 = vmatpush1.bf16.msra.mxu0 %v1859
    %1877 = vmatprep.subr.bf16.mxu0 0
    %1878 = vmatpush2.bf16.msra.mxu0 0
    %1879 = vmatprep.subr.bf16.mxu0 0
    %1880 = vmatpush2.bf16.msra.mxu0 0
    %1881 = vmatprep.subr.bf16.mxu0 0
    %1882 = vmatpush2.bf16.msra.mxu0 0
    %1883 = vmatprep.subr.bf16.mxu0 0
    %1884 = vmatpush2.bf16.msra.mxu0 0
    %1885 = vmatprep.subr.bf16.mxu0 0
    %1886 = vmatpush2.bf16.msra.mxu0 0
    %1887 = vmatprep.subr.bf16.mxu0 0
    %1888 = vmatpush2.bf16.msra.mxu0 0
    %1889 = vmatprep.subr.bf16.mxu0 0
    %1890 = vmatpush2.bf16.msra.mxu0 0
    %1891 = vmatprep.subr.bf16.mxu0 0
    %1892 = vmatpush2.bf16.msra.mxu0 0
    %1893 = vmatprep.mubr.bf16.mxu0 0
    %1894 = vmatmul.mubr.bf16.gmra.mxu0 %v1691
    %v1895 = vpop.f32.mrf.mxu0
    %v1896 = vadd.f32 %v1661, %v1895
    %v1897 = vpop.f32.mrf.mxu0
    %v1898 = vpop.f32.mrf.mxu0
    %v1899 = vadd.f32 %v1666, %v1898
    %v1900 = vpop.f32.mrf.mxu0
    %1901 = vmatprep.mubr.bf16.mxu0 0
    %1902 = vmatmul.mubr.bf16.gmra.mxu0 %v1694
    %v1903 = vpop.f32.mrf.mxu0
    %v1904 = vadd.f32 %v1671, %v1903
    %v1905 = vpop.f32.mrf.mxu0
    %v1906 = vpop.f32.mrf.mxu0
    %v1907 = vadd.f32 %v1676, %v1906
    %v1908 = vpop.f32.mrf.mxu0
    %1909 = vdwg.mxu0
    %v1910 = vmax.f32 %v1896, 0.0
    %v1911 = vmax.f32 %v1899, 0.0
    %v1912 = vmax.f32 %v1904, 0.0
    %v1913 = vmax.f32 %v1907, 0.0
    %s1914 = scalar_lea.vmem %s3, 96
    %v1915 = vld [vmem:[%s1914] sm:$0xf]
    %v1916 = vld [vmem:[%s1914 + $0x4] sm:$0xf]
    %v1917 = vld [vmem:[%s1914 + $0x8] sm:$0xf]
    %v1918 = vld [vmem:[%s1914 + $0xc] sm:$0xf]
    %s1919 = scalar_lea.vmem %s4, 192
    %v1920 = vld [vmem:[%s1919] sm:$0xff]
    %v1921 = vld [vmem:[%s1919 + $0x8] sm:$0xff]
    %v1922 = vld [vmem:[%s1919 + $0x10] sm:$0xff]
    %v1923 = vld [vmem:[%s1919 + $0x18] sm:$0xff]
    %1925 = vset.pattern.permute.xlu0 0
    %1926 = vperm.xlu0 %1925, %v1920
    %v1927 = vpop.permute.xlu0 %1926
    %1930 = vset.pattern.permute.xlu0 0
    %1931 = vperm.xlu0 %1930, %v1921
    %v1932 = vpop.permute.xlu0 %1931
    %1935 = vset.pattern.permute.xlu0 0
    %1936 = vperm.xlu0 %1935, %v1922
    %v1937 = vpop.permute.xlu0 %1936
    %1940 = vset.pattern.permute.xlu0 0
    %1941 = vperm.xlu0 %1940, %v1923
    %v1942 = vpop.permute.xlu0 %1941
    %v1944 = vpack.c.bf16 %v1746, %v1745
    %v1945 = vpack.c.bf16 %v1748, %v1747
    %v1950 = vunpack.c.l.b16 %v1915
    %v1951 = vunpack.c.l.b16 %v1916
    %v1952 = vunpack.c.l.b16 %v1917
    %v1953 = vunpack.c.l.b16 %v1918
    %v1954 = vpack.c.b16 %v1951, %v1950
    %v1955 = vpack.c.b16 %v1953, %v1952
    %v1957 = vsel %vm359, %v1954, 0
    %v1960 = vsel %vm359, %v1955, 0
    %1962 = vmatprep.subr.bf16.mxu0 0
    %1963 = vmatpush1.bf16.msra.mxu0 0
    %1964 = vmatprep.subr.bf16.mxu0 0
    %1965 = vmatpush1.bf16.msra.mxu0 0
    %1966 = vmatprep.subr.bf16.mxu0 0
    %1967 = vmatpush1.bf16.msra.mxu0 0
    %1968 = vmatprep.subr.bf16.mxu0 0
    %1969 = vmatpush1.bf16.msra.mxu0 0
    %1970 = vmatprep.subr.bf16.mxu0 0
    %1971 = vmatpush1.bf16.msra.mxu0 0
    %1972 = vmatprep.subr.bf16.mxu0 0
    %1973 = vmatpush1.bf16.msra.mxu0 0
    %1974 = vmatprep.subr.bf16.mxu0 0
    %1975 = vmatpush1.bf16.msra.mxu0 %v1945
    %1976 = vmatprep.subr.bf16.mxu0 0
    %1977 = vmatpush1.bf16.msra.mxu0 %v1944
    %1978 = vmatprep.subr.bf16.mxu0 0
    %1979 = vmatpush2.bf16.msra.mxu0 0
    %1980 = vmatprep.subr.bf16.mxu0 0
    %1981 = vmatpush2.bf16.msra.mxu0 0
    %1982 = vmatprep.subr.bf16.mxu0 0
    %1983 = vmatpush2.bf16.msra.mxu0 0
    %1984 = vmatprep.subr.bf16.mxu0 0
    %1985 = vmatpush2.bf16.msra.mxu0 0
    %1986 = vmatprep.subr.bf16.mxu0 0
    %1987 = vmatpush2.bf16.msra.mxu0 0
    %1988 = vmatprep.subr.bf16.mxu0 0
    %1989 = vmatpush2.bf16.msra.mxu0 0
    %1990 = vmatprep.subr.bf16.mxu0 0
    %1991 = vmatpush2.bf16.msra.mxu0 0
    %1992 = vmatprep.subr.bf16.mxu0 0
    %1993 = vmatpush2.bf16.msra.mxu0 0
    %1994 = vmatprep.mubr.bf16.mxu0 0
    %1995 = vmatmul.mubr.bf16.gmra.mxu0 %v1957
    %v1996 = vpop.f32.mrf.mxu0
    %v1997 = vadd.f32 %v1927, %v1996
    %v1998 = vpop.f32.mrf.mxu0
    %v1999 = vpop.f32.mrf.mxu0
    %v2000 = vadd.f32 %v1932, %v1999
    %v2001 = vpop.f32.mrf.mxu0
    %2002 = vmatprep.mubr.bf16.mxu0 0
    %2003 = vmatmul.mubr.bf16.gmra.mxu0 %v1960
    %v2004 = vpop.f32.mrf.mxu0
    %v2005 = vadd.f32 %v1937, %v2004
    %v2006 = vpop.f32.mrf.mxu0
    %v2007 = vpop.f32.mrf.mxu0
    %v2008 = vadd.f32 %v1942, %v2007
    %v2009 = vpop.f32.mrf.mxu0
    %2010 = vdwg.mxu0
    %v2011 = vmax.f32 %v1997, 0.0
    %v2012 = vmax.f32 %v2000, 0.0
    %v2013 = vmax.f32 %v2005, 0.0
    %v2014 = vmax.f32 %v2008, 0.0
    %v2015 = vpack.c.bf16 %v1801, %v1800
    %v2016 = vpack.c.bf16 %v1803, %v1802
    %2017 = vmatprep.subr.bf16.mxu0 0
    %2018 = vmatpush1.bf16.msra.mxu0 0
    %2019 = vmatprep.subr.bf16.mxu0 0
    %2020 = vmatpush1.bf16.msra.mxu0 0
    %2021 = vmatprep.subr.bf16.mxu0 0
    %2022 = vmatpush1.bf16.msra.mxu0 0
    %2023 = vmatprep.subr.bf16.mxu0 0
    %2024 = vmatpush1.bf16.msra.mxu0 0
    %2025 = vmatprep.subr.bf16.mxu0 0
    %2026 = vmatpush1.bf16.msra.mxu0 0
    %2027 = vmatprep.subr.bf16.mxu0 0
    %2028 = vmatpush1.bf16.msra.mxu0 0
    %2029 = vmatprep.subr.bf16.mxu0 0
    %2030 = vmatpush1.bf16.msra.mxu0 %v2016
    %2031 = vmatprep.subr.bf16.mxu0 0
    %2032 = vmatpush1.bf16.msra.mxu0 %v2015
    %2033 = vmatprep.subr.bf16.mxu0 0
    %2034 = vmatpush2.bf16.msra.mxu0 0
    %2035 = vmatprep.subr.bf16.mxu0 0
    %2036 = vmatpush2.bf16.msra.mxu0 0
    %2037 = vmatprep.subr.bf16.mxu0 0
    %2038 = vmatpush2.bf16.msra.mxu0 0
    %2039 = vmatprep.subr.bf16.mxu0 0
    %2040 = vmatpush2.bf16.msra.mxu0 0
    %2041 = vmatprep.subr.bf16.mxu0 0
    %2042 = vmatpush2.bf16.msra.mxu0 0
    %2043 = vmatprep.subr.bf16.mxu0 0
    %2044 = vmatpush2.bf16.msra.mxu0 0
    %2045 = vmatprep.subr.bf16.mxu0 0
    %2046 = vmatpush2.bf16.msra.mxu0 0
    %2047 = vmatprep.subr.bf16.mxu0 0
    %2048 = vmatpush2.bf16.msra.mxu0 0
    %2049 = vmatprep.mubr.bf16.mxu0 0
    %2050 = vmatmul.mubr.bf16.gmra.mxu0 %v1957
    %v2051 = vpop.f32.mrf.mxu0
    %v2052 = vadd.f32 %v1927, %v2051
    %v2053 = vpop.f32.mrf.mxu0
    %v2054 = vpop.f32.mrf.mxu0
    %v2055 = vadd.f32 %v1932, %v2054
    %v2056 = vpop.f32.mrf.mxu0
    %2057 = vmatprep.mubr.bf16.mxu0 0
    %2058 = vmatmul.mubr.bf16.gmra.mxu0 %v1960
    %v2059 = vpop.f32.mrf.mxu0
    %v2060 = vadd.f32 %v1937, %v2059
    %v2061 = vpop.f32.mrf.mxu0
    %v2062 = vpop.f32.mrf.mxu0
    %v2063 = vadd.f32 %v1942, %v2062
    %v2064 = vpop.f32.mrf.mxu0
    %2065 = vdwg.mxu0
    %v2066 = vmax.f32 %v2052, 0.0
    %v2067 = vmax.f32 %v2055, 0.0
    %v2068 = vmax.f32 %v2060, 0.0
    %v2069 = vmax.f32 %v2063, 0.0
    %v2070 = vpack.c.bf16 %v1856, %v1855
    %v2071 = vpack.c.bf16 %v1858, %v1857
    %2072 = vmatprep.subr.bf16.mxu0 0
    %2073 = vmatpush1.bf16.msra.mxu0 0
    %2074 = vmatprep.subr.bf16.mxu0 0
    %2075 = vmatpush1.bf16.msra.mxu0 0
    %2076 = vmatprep.subr.bf16.mxu0 0
    %2077 = vmatpush1.bf16.msra.mxu0 0
    %2078 = vmatprep.subr.bf16.mxu0 0
    %2079 = vmatpush1.bf16.msra.mxu0 0
    %2080 = vmatprep.subr.bf16.mxu0 0
    %2081 = vmatpush1.bf16.msra.mxu0 0
    %2082 = vmatprep.subr.bf16.mxu0 0
    %2083 = vmatpush1.bf16.msra.mxu0 0
    %2084 = vmatprep.subr.bf16.mxu0 0
    %2085 = vmatpush1.bf16.msra.mxu0 %v2071
    %2086 = vmatprep.subr.bf16.mxu0 0
    %2087 = vmatpush1.bf16.msra.mxu0 %v2070
    %2088 = vmatprep.subr.bf16.mxu0 0
    %2089 = vmatpush2.bf16.msra.mxu0 0
    %2090 = vmatprep.subr.bf16.mxu0 0
    %2091 = vmatpush2.bf16.msra.mxu0 0
    %2092 = vmatprep.subr.bf16.mxu0 0
    %2093 = vmatpush2.bf16.msra.mxu0 0
    %2094 = vmatprep.subr.bf16.mxu0 0
    %2095 = vmatpush2.bf16.msra.mxu0 0
    %2096 = vmatprep.subr.bf16.mxu0 0
    %2097 = vmatpush2.bf16.msra.mxu0 0
    %2098 = vmatprep.subr.bf16.mxu0 0
    %2099 = vmatpush2.bf16.msra.mxu0 0
    %2100 = vmatprep.subr.bf16.mxu0 0
    %2101 = vmatpush2.bf16.msra.mxu0 0
    %2102 = vmatprep.subr.bf16.mxu0 0
    %2103 = vmatpush2.bf16.msra.mxu0 0
    %2104 = vmatprep.mubr.bf16.mxu0 0
    %2105 = vmatmul.mubr.bf16.gmra.mxu0 %v1957
    %v2106 = vpop.f32.mrf.mxu0
    %v2107 = vadd.f32 %v1927, %v2106
    %v2108 = vpop.f32.mrf.mxu0
    %v2109 = vpop.f32.mrf.mxu0
    %v2110 = vadd.f32 %v1932, %v2109
    %v2111 = vpop.f32.mrf.mxu0
    %2112 = vmatprep.mubr.bf16.mxu0 0
    %2113 = vmatmul.mubr.bf16.gmra.mxu0 %v1960
    %v2114 = vpop.f32.mrf.mxu0
    %v2115 = vadd.f32 %v1937, %v2114
    %v2116 = vpop.f32.mrf.mxu0
    %v2117 = vpop.f32.mrf.mxu0
    %v2118 = vadd.f32 %v1942, %v2117
    %v2119 = vpop.f32.mrf.mxu0
    %2120 = vdwg.mxu0
    %v2121 = vmax.f32 %v2107, 0.0
    %v2122 = vmax.f32 %v2110, 0.0
    %v2123 = vmax.f32 %v2115, 0.0
    %v2124 = vmax.f32 %v2118, 0.0
    %v2125 = vpack.c.bf16 %v1911, %v1910
    %v2126 = vpack.c.bf16 %v1913, %v1912
    %2127 = vmatprep.subr.bf16.mxu0 0
    %2128 = vmatpush1.bf16.msra.mxu0 0
    %2129 = vmatprep.subr.bf16.mxu0 0
    %2130 = vmatpush1.bf16.msra.mxu0 0
    %2131 = vmatprep.subr.bf16.mxu0 0
    %2132 = vmatpush1.bf16.msra.mxu0 0
    %2133 = vmatprep.subr.bf16.mxu0 0
    %2134 = vmatpush1.bf16.msra.mxu0 0
    %2135 = vmatprep.subr.bf16.mxu0 0
    %2136 = vmatpush1.bf16.msra.mxu0 0
    %2137 = vmatprep.subr.bf16.mxu0 0
    %2138 = vmatpush1.bf16.msra.mxu0 0
    %2139 = vmatprep.subr.bf16.mxu0 0
    %2140 = vmatpush1.bf16.msra.mxu0 %v2126
    %2141 = vmatprep.subr.bf16.mxu0 0
    %2142 = vmatpush1.bf16.msra.mxu0 %v2125
    %2143 = vmatprep.subr.bf16.mxu0 0
    %2144 = vmatpush2.bf16.msra.mxu0 0
    %2145 = vmatprep.subr.bf16.mxu0 0
    %2146 = vmatpush2.bf16.msra.mxu0 0
    %2147 = vmatprep.subr.bf16.mxu0 0
    %2148 = vmatpush2.bf16.msra.mxu0 0
    %2149 = vmatprep.subr.bf16.mxu0 0
    %2150 = vmatpush2.bf16.msra.mxu0 0
    %2151 = vmatprep.subr.bf16.mxu0 0
    %2152 = vmatpush2.bf16.msra.mxu0 0
    %2153 = vmatprep.subr.bf16.mxu0 0
    %2154 = vmatpush2.bf16.msra.mxu0 0
    %2155 = vmatprep.subr.bf16.mxu0 0
    %2156 = vmatpush2.bf16.msra.mxu0 0
    %2157 = vmatprep.subr.bf16.mxu0 0
    %2158 = vmatpush2.bf16.msra.mxu0 0
    %2159 = vmatprep.mubr.bf16.mxu0 0
    %2160 = vmatmul.mubr.bf16.gmra.mxu0 %v1957
    %v2161 = vpop.f32.mrf.mxu0
    %v2162 = vadd.f32 %v1927, %v2161
    %v2163 = vpop.f32.mrf.mxu0
    %v2164 = vpop.f32.mrf.mxu0
    %v2165 = vadd.f32 %v1932, %v2164
    %v2166 = vpop.f32.mrf.mxu0
    %2167 = vmatprep.mubr.bf16.mxu0 0
    %2168 = vmatmul.mubr.bf16.gmra.mxu0 %v1960
    %v2169 = vpop.f32.mrf.mxu0
    %v2170 = vadd.f32 %v1937, %v2169
    %v2171 = vpop.f32.mrf.mxu0
    %v2172 = vpop.f32.mrf.mxu0
    %v2173 = vadd.f32 %v1942, %v2172
    %v2174 = vpop.f32.mrf.mxu0
    %2175 = vdwg.mxu0
    %v2176 = vmax.f32 %v2162, 0.0
    %v2177 = vmax.f32 %v2165, 0.0
    %v2178 = vmax.f32 %v2170, 0.0
    %v2179 = vmax.f32 %v2173, 0.0
    %s2180 = scalar_lea.vmem %s3, 112
    %v2181 = vld [vmem:[%s2180] sm:$0xf]
    %v2182 = vld [vmem:[%s2180 + $0x4] sm:$0xf]
    %v2183 = vld [vmem:[%s2180 + $0x8] sm:$0xf]
    %v2184 = vld [vmem:[%s2180 + $0xc] sm:$0xf]
    %s2185 = scalar_lea.vmem %s4, 224
    %v2186 = vld [vmem:[%s2185] sm:$0xff]
    %v2187 = vld [vmem:[%s2185 + $0x8] sm:$0xff]
    %v2188 = vld [vmem:[%s2185 + $0x10] sm:$0xff]
    %v2189 = vld [vmem:[%s2185 + $0x18] sm:$0xff]
    %2191 = vset.pattern.permute.xlu0 0
    %2192 = vperm.xlu0 %2191, %v2186
    %v2193 = vpop.permute.xlu0 %2192
    %2196 = vset.pattern.permute.xlu0 0
    %2197 = vperm.xlu0 %2196, %v2187
    %v2198 = vpop.permute.xlu0 %2197
    %2201 = vset.pattern.permute.xlu0 0
    %2202 = vperm.xlu0 %2201, %v2188
    %v2203 = vpop.permute.xlu0 %2202
    %2206 = vset.pattern.permute.xlu0 0
    %2207 = vperm.xlu0 %2206, %v2189
    %v2208 = vpop.permute.xlu0 %2207
    %v2210 = vpack.c.bf16 %v2012, %v2011
    %v2211 = vpack.c.bf16 %v2014, %v2013
    %v2216 = vunpack.c.l.b16 %v2181
    %v2217 = vunpack.c.l.b16 %v2182
    %v2218 = vunpack.c.l.b16 %v2183
    %v2219 = vunpack.c.l.b16 %v2184
    %v2220 = vpack.c.b16 %v2217, %v2216
    %v2221 = vpack.c.b16 %v2219, %v2218
    %v2223 = vsel %vm359, %v2220, 0
    %v2226 = vsel %vm359, %v2221, 0
    %2228 = vmatprep.subr.bf16.mxu0 0
    %2229 = vmatpush1.bf16.msra.mxu0 0
    %2230 = vmatprep.subr.bf16.mxu0 0
    %2231 = vmatpush1.bf16.msra.mxu0 0
    %2232 = vmatprep.subr.bf16.mxu0 0
    %2233 = vmatpush1.bf16.msra.mxu0 0
    %2234 = vmatprep.subr.bf16.mxu0 0
    %2235 = vmatpush1.bf16.msra.mxu0 0
    %2236 = vmatprep.subr.bf16.mxu0 0
    %2237 = vmatpush1.bf16.msra.mxu0 0
    %2238 = vmatprep.subr.bf16.mxu0 0
    %2239 = vmatpush1.bf16.msra.mxu0 0
    %2240 = vmatprep.subr.bf16.mxu0 0
    %2241 = vmatpush1.bf16.msra.mxu0 %v2211
    %2242 = vmatprep.subr.bf16.mxu0 0
    %2243 = vmatpush1.bf16.msra.mxu0 %v2210
    %2244 = vmatprep.subr.bf16.mxu0 0
    %2245 = vmatpush2.bf16.msra.mxu0 0
    %2246 = vmatprep.subr.bf16.mxu0 0
    %2247 = vmatpush2.bf16.msra.mxu0 0
    %2248 = vmatprep.subr.bf16.mxu0 0
    %2249 = vmatpush2.bf16.msra.mxu0 0
    %2250 = vmatprep.subr.bf16.mxu0 0
    %2251 = vmatpush2.bf16.msra.mxu0 0
    %2252 = vmatprep.subr.bf16.mxu0 0
    %2253 = vmatpush2.bf16.msra.mxu0 0
    %2254 = vmatprep.subr.bf16.mxu0 0
    %2255 = vmatpush2.bf16.msra.mxu0 0
    %2256 = vmatprep.subr.bf16.mxu0 0
    %2257 = vmatpush2.bf16.msra.mxu0 0
    %2258 = vmatprep.subr.bf16.mxu0 0
    %2259 = vmatpush2.bf16.msra.mxu0 0
    %2260 = vmatprep.mubr.bf16.mxu0 0
    %2261 = vmatmul.mubr.bf16.gmra.mxu0 %v2223
    %v2262 = vpop.f32.mrf.mxu0
    %v2263 = vadd.f32 %v2193, %v2262
    %v2264 = vpop.f32.mrf.mxu0
    %v2265 = vpop.f32.mrf.mxu0
    %v2266 = vadd.f32 %v2198, %v2265
    %v2267 = vpop.f32.mrf.mxu0
    %2268 = vmatprep.mubr.bf16.mxu0 0
    %2269 = vmatmul.mubr.bf16.gmra.mxu0 %v2226
    %v2270 = vpop.f32.mrf.mxu0
    %v2271 = vadd.f32 %v2203, %v2270
    %v2272 = vpop.f32.mrf.mxu0
    %v2273 = vpop.f32.mrf.mxu0
    %v2274 = vadd.f32 %v2208, %v2273
    %v2275 = vpop.f32.mrf.mxu0
    %2276 = vdwg.mxu0
    %v2277 = vmax.f32 %v2263, 0.0
    %v2278 = vmax.f32 %v2266, 0.0
    %v2279 = vmax.f32 %v2271, 0.0
    %v2280 = vmax.f32 %v2274, 0.0
    %v2281 = vpack.c.bf16 %v2067, %v2066
    %v2282 = vpack.c.bf16 %v2069, %v2068
    %2283 = vmatprep.subr.bf16.mxu0 0
    %2284 = vmatpush1.bf16.msra.mxu0 0
    %2285 = vmatprep.subr.bf16.mxu0 0
    %2286 = vmatpush1.bf16.msra.mxu0 0
    %2287 = vmatprep.subr.bf16.mxu0 0
    %2288 = vmatpush1.bf16.msra.mxu0 0
    %2289 = vmatprep.subr.bf16.mxu0 0
    %2290 = vmatpush1.bf16.msra.mxu0 0
    %2291 = vmatprep.subr.bf16.mxu0 0
    %2292 = vmatpush1.bf16.msra.mxu0 0
    %2293 = vmatprep.subr.bf16.mxu0 0
    %2294 = vmatpush1.bf16.msra.mxu0 0
    %2295 = vmatprep.subr.bf16.mxu0 0
    %2296 = vmatpush1.bf16.msra.mxu0 %v2282
    %2297 = vmatprep.subr.bf16.mxu0 0
    %2298 = vmatpush1.bf16.msra.mxu0 %v2281
    %2299 = vmatprep.subr.bf16.mxu0 0
    %2300 = vmatpush2.bf16.msra.mxu0 0
    %2301 = vmatprep.subr.bf16.mxu0 0
    %2302 = vmatpush2.bf16.msra.mxu0 0
    %2303 = vmatprep.subr.bf16.mxu0 0
    %2304 = vmatpush2.bf16.msra.mxu0 0
    %2305 = vmatprep.subr.bf16.mxu0 0
    %2306 = vmatpush2.bf16.msra.mxu0 0
    %2307 = vmatprep.subr.bf16.mxu0 0
    %2308 = vmatpush2.bf16.msra.mxu0 0
    %2309 = vmatprep.subr.bf16.mxu0 0
    %2310 = vmatpush2.bf16.msra.mxu0 0
    %2311 = vmatprep.subr.bf16.mxu0 0
    %2312 = vmatpush2.bf16.msra.mxu0 0
    %2313 = vmatprep.subr.bf16.mxu0 0
    %2314 = vmatpush2.bf16.msra.mxu0 0
    %2315 = vmatprep.mubr.bf16.mxu0 0
    %2316 = vmatmul.mubr.bf16.gmra.mxu0 %v2223
    %v2317 = vpop.f32.mrf.mxu0
    %v2318 = vadd.f32 %v2193, %v2317
    %v2319 = vpop.f32.mrf.mxu0
    %v2320 = vpop.f32.mrf.mxu0
    %v2321 = vadd.f32 %v2198, %v2320
    %v2322 = vpop.f32.mrf.mxu0
    %2323 = vmatprep.mubr.bf16.mxu0 0
    %2324 = vmatmul.mubr.bf16.gmra.mxu0 %v2226
    %v2325 = vpop.f32.mrf.mxu0
    %v2326 = vadd.f32 %v2203, %v2325
    %v2327 = vpop.f32.mrf.mxu0
    %v2328 = vpop.f32.mrf.mxu0
    %v2329 = vadd.f32 %v2208, %v2328
    %v2330 = vpop.f32.mrf.mxu0
    %2331 = vdwg.mxu0
    %v2332 = vmax.f32 %v2318, 0.0
    %v2333 = vmax.f32 %v2321, 0.0
    %v2334 = vmax.f32 %v2326, 0.0
    %v2335 = vmax.f32 %v2329, 0.0
    %v2336 = vpack.c.bf16 %v2122, %v2121
    %v2337 = vpack.c.bf16 %v2124, %v2123
    %2338 = vmatprep.subr.bf16.mxu0 0
    %2339 = vmatpush1.bf16.msra.mxu0 0
    %2340 = vmatprep.subr.bf16.mxu0 0
    %2341 = vmatpush1.bf16.msra.mxu0 0
    %2342 = vmatprep.subr.bf16.mxu0 0
    %2343 = vmatpush1.bf16.msra.mxu0 0
    %2344 = vmatprep.subr.bf16.mxu0 0
    %2345 = vmatpush1.bf16.msra.mxu0 0
    %2346 = vmatprep.subr.bf16.mxu0 0
    %2347 = vmatpush1.bf16.msra.mxu0 0
    %2348 = vmatprep.subr.bf16.mxu0 0
    %2349 = vmatpush1.bf16.msra.mxu0 0
    %2350 = vmatprep.subr.bf16.mxu0 0
    %2351 = vmatpush1.bf16.msra.mxu0 %v2337
    %2352 = vmatprep.subr.bf16.mxu0 0
    %2353 = vmatpush1.bf16.msra.mxu0 %v2336
    %2354 = vmatprep.subr.bf16.mxu0 0
    %2355 = vmatpush2.bf16.msra.mxu0 0
    %2356 = vmatprep.subr.bf16.mxu0 0
    %2357 = vmatpush2.bf16.msra.mxu0 0
    %2358 = vmatprep.subr.bf16.mxu0 0
    %2359 = vmatpush2.bf16.msra.mxu0 0
    %2360 = vmatprep.subr.bf16.mxu0 0
    %2361 = vmatpush2.bf16.msra.mxu0 0
    %2362 = vmatprep.subr.bf16.mxu0 0
    %2363 = vmatpush2.bf16.msra.mxu0 0
    %2364 = vmatprep.subr.bf16.mxu0 0
    %2365 = vmatpush2.bf16.msra.mxu0 0
    %2366 = vmatprep.subr.bf16.mxu0 0
    %2367 = vmatpush2.bf16.msra.mxu0 0
    %2368 = vmatprep.subr.bf16.mxu0 0
    %2369 = vmatpush2.bf16.msra.mxu0 0
    %2370 = vmatprep.mubr.bf16.mxu0 0
    %2371 = vmatmul.mubr.bf16.gmra.mxu0 %v2223
    %v2372 = vpop.f32.mrf.mxu0
    %v2373 = vadd.f32 %v2193, %v2372
    %v2374 = vpop.f32.mrf.mxu0
    %v2375 = vpop.f32.mrf.mxu0
    %v2376 = vadd.f32 %v2198, %v2375
    %v2377 = vpop.f32.mrf.mxu0
    %2378 = vmatprep.mubr.bf16.mxu0 0
    %2379 = vmatmul.mubr.bf16.gmra.mxu0 %v2226
    %v2380 = vpop.f32.mrf.mxu0
    %v2381 = vadd.f32 %v2203, %v2380
    %v2382 = vpop.f32.mrf.mxu0
    %v2383 = vpop.f32.mrf.mxu0
    %v2384 = vadd.f32 %v2208, %v2383
    %v2385 = vpop.f32.mrf.mxu0
    %2386 = vdwg.mxu0
    %v2387 = vmax.f32 %v2373, 0.0
    %v2388 = vmax.f32 %v2376, 0.0
    %v2389 = vmax.f32 %v2381, 0.0
    %v2390 = vmax.f32 %v2384, 0.0
    %v2391 = vpack.c.bf16 %v2177, %v2176
    %v2392 = vpack.c.bf16 %v2179, %v2178
    %2393 = vmatprep.subr.bf16.mxu0 0
    %2394 = vmatpush1.bf16.msra.mxu0 0
    %2395 = vmatprep.subr.bf16.mxu0 0
    %2396 = vmatpush1.bf16.msra.mxu0 0
    %2397 = vmatprep.subr.bf16.mxu0 0
    %2398 = vmatpush1.bf16.msra.mxu0 0
    %2399 = vmatprep.subr.bf16.mxu0 0
    %2400 = vmatpush1.bf16.msra.mxu0 0
    %2401 = vmatprep.subr.bf16.mxu0 0
    %2402 = vmatpush1.bf16.msra.mxu0 0
    %2403 = vmatprep.subr.bf16.mxu0 0
    %2404 = vmatpush1.bf16.msra.mxu0 0
    %2405 = vmatprep.subr.bf16.mxu0 0
    %2406 = vmatpush1.bf16.msra.mxu0 %v2392
    %2407 = vmatprep.subr.bf16.mxu0 0
    %2408 = vmatpush1.bf16.msra.mxu0 %v2391
    %2409 = vmatprep.subr.bf16.mxu0 0
    %2410 = vmatpush2.bf16.msra.mxu0 0
    %2411 = vmatprep.subr.bf16.mxu0 0
    %2412 = vmatpush2.bf16.msra.mxu0 0
    %2413 = vmatprep.subr.bf16.mxu0 0
    %2414 = vmatpush2.bf16.msra.mxu0 0
    %2415 = vmatprep.subr.bf16.mxu0 0
    %2416 = vmatpush2.bf16.msra.mxu0 0
    %2417 = vmatprep.subr.bf16.mxu0 0
    %2418 = vmatpush2.bf16.msra.mxu0 0
    %2419 = vmatprep.subr.bf16.mxu0 0
    %2420 = vmatpush2.bf16.msra.mxu0 0
    %2421 = vmatprep.subr.bf16.mxu0 0
    %2422 = vmatpush2.bf16.msra.mxu0 0
    %2423 = vmatprep.subr.bf16.mxu0 0
    %2424 = vmatpush2.bf16.msra.mxu0 0
    %2425 = vmatprep.mubr.bf16.mxu0 0
    %2426 = vmatmul.mubr.bf16.gmra.mxu0 %v2223
    %v2427 = vpop.f32.mrf.mxu0
    %v2428 = vadd.f32 %v2193, %v2427
    %v2429 = vpop.f32.mrf.mxu0
    %v2430 = vpop.f32.mrf.mxu0
    %v2431 = vadd.f32 %v2198, %v2430
    %v2432 = vpop.f32.mrf.mxu0
    %2433 = vmatprep.mubr.bf16.mxu0 0
    %2434 = vmatmul.mubr.bf16.gmra.mxu0 %v2226
    %v2435 = vpop.f32.mrf.mxu0
    %v2436 = vadd.f32 %v2203, %v2435
    %v2437 = vpop.f32.mrf.mxu0
    %v2438 = vpop.f32.mrf.mxu0
    %v2439 = vadd.f32 %v2208, %v2438
    %v2440 = vpop.f32.mrf.mxu0
    %2441 = vdwg.mxu0
    %v2442 = vmax.f32 %v2428, 0.0
    %v2443 = vmax.f32 %v2431, 0.0
    %v2444 = vmax.f32 %v2436, 0.0
    %v2445 = vmax.f32 %v2439, 0.0
    %v2446 = vpack.c.bf16 %v2278, %v2277
    %v2447 = vpack.c.bf16 %v2280, %v2279
    %v2449 = vsel %vm359, %v34, 0
    %2451 = vmatprep.subr.bf16.mxu0 0
    %2452 = vmatpush1.bf16.msra.mxu0 0
    %2453 = vmatprep.subr.bf16.mxu0 0
    %2454 = vmatpush1.bf16.msra.mxu0 0
    %2455 = vmatprep.subr.bf16.mxu0 0
    %2456 = vmatpush1.bf16.msra.mxu0 0
    %2457 = vmatprep.subr.bf16.mxu0 0
    %2458 = vmatpush1.bf16.msra.mxu0 0
    %2459 = vmatprep.subr.bf16.mxu0 0
    %2460 = vmatpush1.bf16.msra.mxu0 0
    %2461 = vmatprep.subr.bf16.mxu0 0
    %2462 = vmatpush1.bf16.msra.mxu0 0
    %2463 = vmatprep.subr.bf16.mxu0 0
    %2464 = vmatpush1.bf16.msra.mxu0 %v2447
    %2465 = vmatprep.subr.bf16.mxu0 0
    %2466 = vmatpush1.bf16.msra.mxu0 %v2446
    %2467 = vmatprep.subr.bf16.mxu0 0
    %2468 = vmatpush2.bf16.msra.mxu0 0
    %2469 = vmatprep.subr.bf16.mxu0 0
    %2470 = vmatpush2.bf16.msra.mxu0 0
    %2471 = vmatprep.subr.bf16.mxu0 0
    %2472 = vmatpush2.bf16.msra.mxu0 0
    %2473 = vmatprep.subr.bf16.mxu0 0
    %2474 = vmatpush2.bf16.msra.mxu0 0
    %2475 = vmatprep.subr.bf16.mxu0 0
    %2476 = vmatpush2.bf16.msra.mxu0 0
    %2477 = vmatprep.subr.bf16.mxu0 0
    %2478 = vmatpush2.bf16.msra.mxu0 0
    %2479 = vmatprep.subr.bf16.mxu0 0
    %2480 = vmatpush2.bf16.msra.mxu0 0
    %2481 = vmatprep.subr.bf16.mxu0 0
    %2482 = vmatpush2.bf16.msra.mxu0 0
    %2483 = vmatprep.mubr.bf16.mxu0 0
    %2484 = vmatmul.mubr.bf16.gmra.mxu0 %v2449
    %v2485 = vpop.f32.mrf.mxu0
    %v2486 = vadd.f32 %v68, %v2485
    %v2487 = vpop.f32.mrf.mxu0
    %v2488 = vpop.f32.mrf.mxu0
    %v2489 = vpop.f32.mrf.mxu0
    %2490 = vdwg.mxu0
    %v2491 = vlaneseq
    %vm2492 = vcmp.ge.s32.totalorder %v2491, 0
    %vm2493 = vcmp.lt.s32.totalorder %v2491, 128
    %vm2494 = vmand %vm2492, %vm2493
    %2495 = vst.msk [vmem:[#allocation3] sm:$0x1] %vm2494, %v2486
    %v2496 = vpack.c.bf16 %v2333, %v2332
    %v2497 = vpack.c.bf16 %v2335, %v2334
    %2498 = vmatprep.subr.bf16.mxu0 0
    %2499 = vmatpush1.bf16.msra.mxu0 0
    %2500 = vmatprep.subr.bf16.mxu0 0
    %2501 = vmatpush1.bf16.msra.mxu0 0
    %2502 = vmatprep.subr.bf16.mxu0 0
    %2503 = vmatpush1.bf16.msra.mxu0 0
    %2504 = vmatprep.subr.bf16.mxu0 0
    %2505 = vmatpush1.bf16.msra.mxu0 0
    %2506 = vmatprep.subr.bf16.mxu0 0
    %2507 = vmatpush1.bf16.msra.mxu0 0
    %2508 = vmatprep.subr.bf16.mxu0 0
    %2509 = vmatpush1.bf16.msra.mxu0 0
    %2510 = vmatprep.subr.bf16.mxu0 0
    %2511 = vmatpush1.bf16.msra.mxu0 %v2497
    %2512 = vmatprep.subr.bf16.mxu0 0
    %2513 = vmatpush1.bf16.msra.mxu0 %v2496
    %2514 = vmatprep.subr.bf16.mxu0 0
    %2515 = vmatpush2.bf16.msra.mxu0 0
    %2516 = vmatprep.subr.bf16.mxu0 0
    %2517 = vmatpush2.bf16.msra.mxu0 0
    %2518 = vmatprep.subr.bf16.mxu0 0
    %2519 = vmatpush2.bf16.msra.mxu0 0
    %2520 = vmatprep.subr.bf16.mxu0 0
    %2521 = vmatpush2.bf16.msra.mxu0 0
    %2522 = vmatprep.subr.bf16.mxu0 0
    %2523 = vmatpush2.bf16.msra.mxu0 0
    %2524 = vmatprep.subr.bf16.mxu0 0
    %2525 = vmatpush2.bf16.msra.mxu0 0
    %2526 = vmatprep.subr.bf16.mxu0 0
    %2527 = vmatpush2.bf16.msra.mxu0 0
    %2528 = vmatprep.subr.bf16.mxu0 0
    %2529 = vmatpush2.bf16.msra.mxu0 0
    %2530 = vmatprep.mubr.bf16.mxu0 0
    %2531 = vmatmul.mubr.bf16.gmra.mxu0 %v2449
    %v2532 = vpop.f32.mrf.mxu0
    %v2533 = vadd.f32 %v68, %v2532
    %v2534 = vpop.f32.mrf.mxu0
    %v2535 = vpop.f32.mrf.mxu0
    %v2536 = vpop.f32.mrf.mxu0
    %2537 = vdwg.mxu0
    %2538 = vst.msk [vmem:[#allocation3 + $0x1] sm:$0x1] %vm2494, %v2533
    %v2539 = vpack.c.bf16 %v2388, %v2387
    %v2540 = vpack.c.bf16 %v2390, %v2389
    %2541 = vmatprep.subr.bf16.mxu0 0
    %2542 = vmatpush1.bf16.msra.mxu0 0
    %2543 = vmatprep.subr.bf16.mxu0 0
    %2544 = vmatpush1.bf16.msra.mxu0 0
    %2545 = vmatprep.subr.bf16.mxu0 0
    %2546 = vmatpush1.bf16.msra.mxu0 0
    %2547 = vmatprep.subr.bf16.mxu0 0
    %2548 = vmatpush1.bf16.msra.mxu0 0
    %2549 = vmatprep.subr.bf16.mxu0 0
    %2550 = vmatpush1.bf16.msra.mxu0 0
    %2551 = vmatprep.subr.bf16.mxu0 0
    %2552 = vmatpush1.bf16.msra.mxu0 0
    %2553 = vmatprep.subr.bf16.mxu0 0
    %2554 = vmatpush1.bf16.msra.mxu0 %v2540
    %2555 = vmatprep.subr.bf16.mxu0 0
    %2556 = vmatpush1.bf16.msra.mxu0 %v2539
    %2557 = vmatprep.subr.bf16.mxu0 0
    %2558 = vmatpush2.bf16.msra.mxu0 0
    %2559 = vmatprep.subr.bf16.mxu0 0
    %2560 = vmatpush2.bf16.msra.mxu0 0
    %2561 = vmatprep.subr.bf16.mxu0 0
    %2562 = vmatpush2.bf16.msra.mxu0 0
    %2563 = vmatprep.subr.bf16.mxu0 0
    %2564 = vmatpush2.bf16.msra.mxu0 0
    %2565 = vmatprep.subr.bf16.mxu0 0
    %2566 = vmatpush2.bf16.msra.mxu0 0
    %2567 = vmatprep.subr.bf16.mxu0 0
    %2568 = vmatpush2.bf16.msra.mxu0 0
    %2569 = vmatprep.subr.bf16.mxu0 0
    %2570 = vmatpush2.bf16.msra.mxu0 0
    %2571 = vmatprep.subr.bf16.mxu0 0
    %2572 = vmatpush2.bf16.msra.mxu0 0
    %2573 = vmatprep.mubr.bf16.mxu0 0
    %2574 = vmatmul.mubr.bf16.gmra.mxu0 %v2449
    %v2575 = vpop.f32.mrf.mxu0
    %v2576 = vadd.f32 %v68, %v2575
    %v2577 = vpop.f32.mrf.mxu0
    %v2578 = vpop.f32.mrf.mxu0
    %v2579 = vpop.f32.mrf.mxu0
    %2580 = vdwg.mxu0
    %2581 = vst.msk [vmem:[#allocation3 + $0x2] sm:$0x1] %vm2494, %v2576
    %v2582 = vpack.c.bf16 %v2443, %v2442
    %v2583 = vpack.c.bf16 %v2445, %v2444
    %2584 = vmatprep.subr.bf16.mxu0 0
    %2585 = vmatpush1.bf16.msra.mxu0 0
    %2586 = vmatprep.subr.bf16.mxu0 0
    %2587 = vmatpush1.bf16.msra.mxu0 0
    %2588 = vmatprep.subr.bf16.mxu0 0
    %2589 = vmatpush1.bf16.msra.mxu0 0
    %2590 = vmatprep.subr.bf16.mxu0 0
    %2591 = vmatpush1.bf16.msra.mxu0 0
    %2592 = vmatprep.subr.bf16.mxu0 0
    %2593 = vmatpush1.bf16.msra.mxu0 0
    %2594 = vmatprep.subr.bf16.mxu0 0
    %2595 = vmatpush1.bf16.msra.mxu0 0
    %2596 = vmatprep.subr.bf16.mxu0 0
    %2597 = vmatpush1.bf16.msra.mxu0 %v2583
    %2598 = vmatprep.subr.bf16.mxu0 0
    %2599 = vmatpush1.bf16.msra.mxu0 %v2582
    %2600 = vmatprep.subr.bf16.mxu0 0
    %2601 = vmatpush2.bf16.msra.mxu0 0
    %2602 = vmatprep.subr.bf16.mxu0 0
    %2603 = vmatpush2.bf16.msra.mxu0 0
    %2604 = vmatprep.subr.bf16.mxu0 0
    %2605 = vmatpush2.bf16.msra.mxu0 0
    %2606 = vmatprep.subr.bf16.mxu0 0
    %2607 = vmatpush2.bf16.msra.mxu0 0
    %2608 = vmatprep.subr.bf16.mxu0 0
    %2609 = vmatpush2.bf16.msra.mxu0 0
    %2610 = vmatprep.subr.bf16.mxu0 0
    %2611 = vmatpush2.bf16.msra.mxu0 0
    %2612 = vmatprep.subr.bf16.mxu0 0
    %2613 = vmatpush2.bf16.msra.mxu0 0
    %2614 = vmatprep.subr.bf16.mxu0 0
    %2615 = vmatpush2.bf16.msra.mxu0 0
    %2616 = vmatprep.mubr.bf16.mxu0 0
    %2617 = vmatmul.mubr.bf16.gmra.mxu0 %v2449
    %v2618 = vpop.f32.mrf.mxu0
    %v2619 = vadd.f32 %v68, %v2618
    %v2620 = vpop.f32.mrf.mxu0
    %v2621 = vpop.f32.mrf.mxu0
    %v2622 = vpop.f32.mrf.mxu0
    %2623 = vdwg.mxu0
    %2624 = vst.msk [vmem:[#allocation3 + $0x3] sm:$0x1] %vm2494, %v2619
    // Predicated region
    $region30: #{tpu_custom_call.1} parent=1 // pred_check
      _
    $region31: #{tpu_custom_call.1} parent=1 // pred_check_branch
      %2626 = sbr.rel (0) target = $region33
    $region32: #{tpu_custom_call.1} parent=1 // pred_region
      %s2628 = ssub.s32 64, 64
      %2629 = vsyncadd [#allocation4], %s2628
      %s2631 = sshll.u32 [#allocation3], 4
      %s2632 = int_to_ptr.vmem [resolvable:$true] %s2631
      %2634 = dma.vmem_to_hbm [thread:$0]  %s2632, 64, %s7, [#allocation4]
    $region33: #{tpu_custom_call.1} parent=1 // pred_fallthru
      _
    // Predicated region
    $region34: #{tpu_custom_call.1} parent=1 // pred_check
      _
    $region35: #{tpu_custom_call.1} parent=1 // pred_check_branch
      %2636 = sbr.rel (0) target = $region37
    $region36: #{tpu_custom_call.1} parent=1 // pred_region
      %2637 = dma.done [#allocation4], 64
    $region37: #{tpu_custom_call.1} parent=1 // pred_fallthru
      _
    %2638 = vsyncpa [#allocation4], 1

</llo_original>
